<compile_context>
chip_gen: v7x
topology: tpu7x:2x2x1
jax: 0.10.0
libtpu: 0.0.40
codegen_flags: <defaults>
</compile_context>

<pallas_src>
import functools

import jax
import jax.numpy as jnp
from jax import lax
from jax.experimental import pallas as pl
from jax.experimental.pallas import tpu as pltpu


def _round_up(x, m):
    return (x + m - 1) // m * m


def _pick_tile(padded_dim, candidates=(512, 384, 256, 128)):
    """Largest lane-aligned tile that evenly divides the padded dimension."""
    for c in candidates:
        if padded_dim % c == 0:
            return c
    return 128


# ----------------------------------------------------------------------------
# Pallas kernel: K-tiled GEMM + per-channel affine (+ residual) (+ ReLU)
# ----------------------------------------------------------------------------
def _conv_gemm_kernel(a_ref, w_ref, scale_ref, shift_ref, *rest, relu, has_residual):
    if has_residual:
        r_ref, o_ref, acc_ref = rest
    else:
        o_ref, acc_ref = rest
    k = pl.program_id(2)

    @pl.when(k == 0)
    def _init():
        acc_ref[...] = jnp.zeros_like(acc_ref)

    acc_ref[...] += jnp.dot(a_ref[...], w_ref[...],
                            preferred_element_type=jnp.float32)

    @pl.when(k == pl.num_programs(2) - 1)
    def _finalize():
        y = acc_ref[...] * scale_ref[...] + shift_ref[...]     # folded BN / bias
        if has_residual:
            y = y + r_ref[...]                                 # ResnetBlock skip
        if relu:
            y = jnp.maximum(y, 0.0)
        o_ref[...] = y.astype(o_ref.dtype)


def conv_gemm(a, w_gemm, scale, shift, *, relu, residual=None, tm=256):
    """a: (M, K) bf16/f32, w_gemm: (K, C) f32, scale/shift: (C,) f32 -> (M, C) f32."""
    M, K = a.shape
    K2, C = w_gemm.shape
    assert K == K2
    Kp = _round_up(K, 128)                 # contraction depth (lane dim of A)
    Cp = _round_up(C, 128)                 # lane-dense output width
    tm = min(tm, _round_up(M, 8))
    Mp = _round_up(M, tm)
    tk = _pick_tile(Kp)
    tn = _pick_tile(Cp)

    a_p = jnp.pad(a.astype(jnp.bfloat16), ((0, Mp - M), (0, Kp - K)))
    w_p = jnp.pad(w_gemm.astype(jnp.bfloat16), ((0, Kp - K), (0, Cp - C)))
    scale_p = jnp.pad(scale.astype(jnp.float32).reshape(1, C), ((0, 0), (0, Cp - C)))
    shift_p = jnp.pad(shift.astype(jnp.float32).reshape(1, C), ((0, 0), (0, Cp - C)))

    in_specs = [
        pl.BlockSpec((tm, tk), lambda i, j, k: (i, k)),   # A: streamed along M/K
        pl.BlockSpec((tk, tn), lambda i, j, k: (k, j)),   # W: streamed along K/N
        pl.BlockSpec((1, tn), lambda i, j, k: (0, j)),    # scale: resident across K
        pl.BlockSpec((1, tn), lambda i, j, k: (0, j)),    # shift: resident across K
    ]
    args = [a_p, w_p, scale_p, shift_p]

    has_residual = residual is not None
    if has_residual:
        r_p = jnp.pad(residual.astype(jnp.float32), ((0, Mp - M), (0, Cp - C)))
        in_specs.append(pl.BlockSpec((tm, tn), lambda i, j, k: (i, j)))
        args.append(r_p)

    kernel = functools.partial(_conv_gemm_kernel, relu=relu, has_residual=has_residual)
    out = pl.pallas_call(
        kernel,
        out_shape=jax.ShapeDtypeStruct((Mp, Cp), jnp.float32),
        grid=(Mp // tm, Cp // tn, Kp // tk),
        in_specs=in_specs,
        out_specs=pl.BlockSpec((tm, tn), lambda i, j, k: (i, j)),
        scratch_shapes=[pltpu.VMEM((tm, tn), jnp.float32)],
        compiler_params=pltpu.CompilerParams(
            dimension_semantics=("parallel", "parallel", "arbitrary")),
    )(*args)
    return out[:M, :C]


# ----------------------------------------------------------------------------
# Glue: im2col, conv wrapper, conv-transpose dilation
# ----------------------------------------------------------------------------
def _extract_patches(x_nhwc, kh, kw, stride):
    """x must already carry its spatial padding. Returns (N*Ho*Wo, kh*kw*C)."""
    N, H, W, C = x_nhwc.shape
    Ho = (H - kh) // stride + 1
    Wo = (W - kw) // stride + 1
    cols = []
    for i in range(kh):
        for j in range(kw):
            cols.append(x_nhwc[:, i:i + stride * Ho:stride, j:j + stride * Wo:stride, :])
    patches = jnp.stack(cols, axis=3)                       # (N, Ho, Wo, kh*kw, C)
    return patches.reshape(N * Ho * Wo, kh * kw * C), Ho, Wo


def conv2d(x_nhwc, w_oihw, scale, shift, *, stride=1, relu=False, residual=None):
    cout, cin, kh, kw = w_oihw.shape
    # Cast to bf16 on the compact tensor (before the kh*kw im2col expansion) —
    # bit-identical to the reference's per-conv bf16 cast, half the HBM glue traffic.
    a, Ho, Wo = _extract_patches(x_nhwc.astype(jnp.bfloat16), kh, kw, stride)
    w_gemm = jnp.transpose(w_oihw, (2, 3, 1, 0)).reshape(kh * kw * cin, cout)
    N = x_nhwc.shape[0]
    res_flat = residual.reshape(N * Ho * Wo, cout) if residual is not None else None
    y = conv_gemm(a, w_gemm, scale, shift, relu=relu, residual=res_flat)
    return y.reshape(N, Ho, Wo, cout)


def _dilate_and_pad_for_convT(x_nhwc, stride, k, pad, out_pad):
    """ConvTranspose2d(x) == conv(dilate(x), flip(W^T)); this builds the dilated+padded input."""
    N, H, W, C = x_nhwc.shape
    Hd = (H - 1) * stride + 1
    Wd = (W - 1) * stride + 1
    xd = jnp.zeros((N, Hd, Wd, C), x_nhwc.dtype).at[:, ::stride, ::stride, :].set(x_nhwc)
    lo = k - 1 - pad
    hi = k - 1 - pad + out_pad
    return jnp.pad(xd, ((0, 0), (lo, hi), (lo, hi), (0, 0)))


# ----------------------------------------------------------------------------
# Synthetic parameters matching the PyTorch module's shapes (BatchNorm2d norm,
# eval mode -> per-channel affine; conv bias=False except the final 7x7 conv).
# ----------------------------------------------------------------------------
def _conv_weight(key, cout, cin, k):
    fan_in = cin * k * k
    bound = 1.0 / (fan_in ** 0.5)
    return jax.random.uniform(key, (cout, cin, k, k), jnp.float32, -bound, bound)


def _convT_weight(key, cin, cout, k):
    fan_in = cout * k * k
    bound = 1.0 / (fan_in ** 0.5)
    return jax.random.uniform(key, (cin, cout, k, k), jnp.float32, -bound, bound)


def _bn_affine(key, c, eps=1e-5):
    k1, k2, k3 = jax.random.split(key, 3)
    gamma = 1.0 + 0.1 * jax.random.normal(k1, (c,), jnp.float32)
    beta = 0.1 * jax.random.normal(k2, (c,), jnp.float32)
    running_mean = 0.05 * jax.random.normal(k3, (c,), jnp.float32)
    running_var = jnp.ones((c,), jnp.float32)
    scale = gamma / jnp.sqrt(running_var + eps)
    shift = beta - running_mean * scale
    return scale, shift


def init_resnet_generator_params(key, input_nc, output_nc, ngf=64, n_blocks=6):
    n_down = 2
    params = {}

    key, k1, k2 = jax.random.split(key, 3)
    s, b = _bn_affine(k2, ngf)
    params["stem"] = dict(w=_conv_weight(k1, ngf, input_nc, 7), scale=s, shift=b)

    down = []
    for i in range(n_down):
        mult = 2 ** i
        cin, cout = ngf * mult, ngf * mult * 2
        key, k1, k2 = jax.random.split(key, 3)
        s, b = _bn_affine(k2, cout)
        down.append(dict(w=_conv_weight(k1, cout, cin, 3), scale=s, shift=b))
    params["down"] = down

    dim = ngf * (2 ** n_down)
    blocks = []
    for _ in range(n_blocks):
        key, k1, k2, k3, k4 = jax.random.split(key, 5)
        s1, b1 = _bn_affine(k2, dim)
        s2, b2 = _bn_affine(k4, dim)
        blocks.append(dict(w1=_conv_weight(k1, dim, dim, 3), scale1=s1, shift1=b1,
                           w2=_conv_weight(k3, dim, dim, 3), scale2=s2, shift2=b2))
    params["blocks"] = blocks

    up = []
    for i in range(n_down):
        mult = 2 ** (n_down - i)
        cin, cout = ngf * mult, ngf * mult // 2
        key, k1, k2 = jax.random.split(key, 3)
        s, b = _bn_affine(k2, cout)
        up.append(dict(w=_convT_weight(k1, cin, cout, 3), scale=s, shift=b))
    params["up"] = up

    key, k1, k2 = jax.random.split(key, 3)
    params["final"] = dict(w=_conv_weight(k1, output_nc, ngf, 7),
                           b=0.1 * jax.random.normal(k2, (output_nc,), jnp.float32))
    return params


# ----------------------------------------------------------------------------
# Forward pass (Pallas path)
# ----------------------------------------------------------------------------
def resnet_generator_forward(params, x_nchw):
    h = jnp.transpose(x_nchw, (0, 2, 3, 1))                       # NCHW -> NHWC

    # Stem: ReflectionPad(3) -> Conv7 -> BN -> ReLU
    p = params["stem"]
    h = jnp.pad(h, ((0, 0), (3, 3), (3, 3), (0, 0)), mode="reflect")
    h = conv2d(h, p["w"], p["scale"], p["shift"], stride=1, relu=True)

    # Downsampling: Conv3 s2 p1 -> BN -> ReLU
    for p in params["down"]:
        hp = jnp.pad(h, ((0, 0), (1, 1), (1, 1), (0, 0)))
        h = conv2d(hp, p["w"], p["scale"], p["shift"], stride=2, relu=True)

    # Resnet blocks: (ReflPad1 Conv3 BN ReLU ReflPad1 Conv3 BN) + skip
    for blk in params["blocks"]:
        t = jnp.pad(h, ((0, 0), (1, 1), (1, 1), (0, 0)), mode="reflect")
        t = conv2d(t, blk["w1"], blk["scale1"], blk["shift1"], stride=1, relu=True)
        t = jnp.pad(t, ((0, 0), (1, 1), (1, 1), (0, 0)), mode="reflect")
        h = conv2d(t, blk["w2"], blk["scale2"], blk["shift2"], stride=1,
                   relu=False, residual=h)                        # skip fused in kernel

    # Upsampling: ConvTranspose3 s2 p1 op1 -> BN -> ReLU (as dilate + conv)
    for p in params["up"]:
        hd = _dilate_and_pad_for_convT(h, stride=2, k=3, pad=1, out_pad=1)
        w_conv = jnp.transpose(p["w"], (1, 0, 2, 3))[:, :, ::-1, ::-1]
        h = conv2d(hd, w_conv, p["scale"], p["shift"], stride=1, relu=True)

    # Final: ReflectionPad(3) -> Conv7 (bias=True, no norm, no activation)
    p = params["final"]
    h = jnp.pad(h, ((0, 0), (3, 3), (3, 3), (0, 0)), mode="reflect")
    cout = p["w"].shape[0]
    h = conv2d(h, p["w"], jnp.ones((cout,), jnp.float32), p["b"], stride=1, relu=False)

    return jnp.transpose(h, (0, 3, 1, 2))                         # NHWC -> NCHW


# ----------------------------------------------------------------------------
# Pure-JAX reference (lax.conv_general_dilated) for a correctness check.
# Uses the same bf16-input / f32-accumulate precision as the kernel.
# ----------------------------------------------------------------------------
def _ref_conv(x, w_oihw, scale, shift, *, stride=1, relu=False, residual=None,
              lhs_dilation=(1, 1), padding="VALID"):
    w_hwio = jnp.transpose(w_oihw, (2, 3, 1, 0))
    y = lax.conv_general_dilated(
        x.astype(jnp.bfloat16), w_hwio.astype(jnp.bfloat16),
        window_strides=(stride, stride), padding=padding, lhs_dilation=lhs_dilation,
        dimension_numbers=("NHWC", "HWIO", "NHWC"),
        preferred_element_type=jnp.float32)
    y = y * scale.reshape(1, 1, 1, -1) + shift.reshape(1, 1, 1, -1)
    if residual is not None:
        y = y + residual
    if relu:
        y = jnp.maximum(y, 0.0)
    return y


def resnet_generator_reference(params, x_nchw):
    h = jnp.transpose(x_nchw, (0, 2, 3, 1))
    p = params["stem"]
    h = jnp.pad(h, ((0, 0), (3, 3), (3, 3), (0, 0)), mode="reflect")
    h = _ref_conv(h, p["w"], p["scale"], p["shift"], relu=True)
    for p in params["down"]:
        h = _ref_conv(h, p["w"], p["scale"], p["shift"], stride=2, relu=True,
                      padding=[(1, 1), (1, 1)])
    for blk in params["blocks"]:
        t = jnp.pad(h, ((0, 0), (1, 1), (1, 1), (0, 0)), mode="reflect")
        t = _ref_conv(t, blk["w1"], blk["scale1"], blk["shift1"], relu=True)
        t = jnp.pad(t, ((0, 0), (1, 1), (1, 1), (0, 0)), mode="reflect")
        h = _ref_conv(t, blk["w2"], blk["scale2"], blk["shift2"], relu=False, residual=h)
    for p in params["up"]:
        w_conv = jnp.transpose(p["w"], (1, 0, 2, 3))[:, :, ::-1, ::-1]
        h = _ref_conv(h, w_conv, p["scale"], p["shift"], relu=True,
                      lhs_dilation=(2, 2), padding=[(1, 2), (1, 2)])
    p = params["final"]
    h = jnp.pad(h, ((0, 0), (3, 3), (3, 3), (0, 0)), mode="reflect")
    cout = p["w"].shape[0]
    h = _ref_conv(h, p["w"], jnp.ones((cout,), jnp.float32), p["b"], relu=False)
    return jnp.transpose(h, (0, 3, 1, 2))


if __name__ == "__main__":
    key = jax.random.PRNGKey(0)
    kx, kp = jax.random.split(key)

    # Small but structurally valid config: input_nc=output_nc=3, ngf=8,
    # n_blocks=2, batch=2, spatial 32x32 (32 -> 16 -> 8 -> blocks -> 16 -> 32).
    input_nc, output_nc, ngf, n_blocks = 3, 3, 8, 2
    x = jax.random.normal(kx, (2, input_nc, 32, 32), jnp.float32)
    params = init_resnet_generator_params(kp, input_nc, output_nc, ngf=ngf, n_blocks=n_blocks)

    fwd = jax.jit(resnet_generator_forward)
    out = jax.block_until_ready(fwd(params, x))
    assert out.shape == (2, output_nc, 32, 32), out.shape
    assert bool(jnp.all(jnp.isfinite(out)))

    ref = jax.block_until_ready(jax.jit(resnet_generator_reference)(params, x))
    max_err = float(jnp.max(jnp.abs(out - ref)))
    tol = 1e-2 * (1.0 + float(jnp.max(jnp.abs(ref))))
    assert max_err < tol, (max_err, tol)

    print("KERNEL_OK")
</pallas_src>

<mosaic_0001>
module attributes {stable_mosaic.version = 11 : i64} {
  func.func @_conv_gemm_kernel(%arg0: i32, %arg1: i32, %arg2: i32, %arg3: memref<256x256xbf16, #tpu.memory_space<vmem>>, %arg4: memref<256x128xbf16, #tpu.memory_space<vmem>>, %arg5: memref<1x128xf32, #tpu.memory_space<vmem>>, %arg6: memref<1x128xf32, #tpu.memory_space<vmem>>, %arg7: memref<256x128xf32, #tpu.memory_space<vmem>>, %arg8: memref<256x128xf32, #tpu.memory_space<vmem>>) attributes {dimension_semantics = [#tpu.dimension_semantics<parallel>, #tpu.dimension_semantics<parallel>, #tpu.dimension_semantics<arbitrary>], iteration_bounds = array<i64: 8, 1, 1>, scalar_prefetch = 0 : i64, scratch_operands = 1 : i64, tpu.core_type = #tpu.core_type<tc>, window_params = [{transform_indices = @transform_0, window_bounds = array<i64: 256, 256>}, {transform_indices = @transform_1, window_bounds = array<i64: 256, 128>}, {transform_indices = @transform_2, window_bounds = array<i64: 1, 128>}, {transform_indices = @transform_3, window_bounds = array<i64: 1, 128>}, {transform_indices = @transform_4, window_bounds = array<i64: 256, 128>}]} {
    %c0_i32 = arith.constant 0 : i32
    %0 = arith.cmpi eq, %arg2, %c0_i32 : i32
    %1 = arith.extui %0 : i1 to i32
    %c0_i32_0 = arith.constant 0 : i32
    %2 = arith.cmpi ne, %1, %c0_i32_0 : i32
    scf.if %2 {
      %cst_10 = arith.constant 0.000000e+00 : f32
      %12 = vector.broadcast %cst_10 : f32 to vector<256x128xf32>
      %c0_11 = arith.constant 0 : index
      %c0_12 = arith.constant 0 : index
      %13 = vector.load %arg8[%c0_11, %c0_12] : memref<256x128xf32, #tpu.memory_space<vmem>>, vector<256x128xf32>
      tpu.vector_store %arg8[%c0_11, %c0_12], %12 {strides = array<i32>} : memref<256x128xf32, #tpu.memory_space<vmem>>, vector<256x128xf32>,
    } else {
    }
    %c0 = arith.constant 0 : index
    %c0_1 = arith.constant 0 : index
    %3 = vector.load %arg8[%c0, %c0_1] : memref<256x128xf32, #tpu.memory_space<vmem>>, vector<256x128xf32>
    %c0_2 = arith.constant 0 : index
    %c0_3 = arith.constant 0 : index
    %4 = vector.load %arg3[%c0_2, %c0_3] : memref<256x256xbf16, #tpu.memory_space<vmem>>, vector<256x256xbf16>
    %c0_4 = arith.constant 0 : index
    %c0_5 = arith.constant 0 : index
    %5 = vector.load %arg4[%c0_4, %c0_5] : memref<256x128xbf16, #tpu.memory_space<vmem>>, vector<256x128xbf16>
    %cst = arith.constant dense<0.000000e+00> : vector<256x128xf32>
    %6 = tpu.matmul %4, %5, %cst {dimension_numbers = #tpu.dot_dimension_numbers<[1], [0], [0], [1], [0, 0, 1, 1], [], []>} : vector<256x256xbf16>, vector<256x128xbf16>, vector<256x128xf32> -> vector<256x128xf32>
    %7 = arith.addf %3, %6 : vector<256x128xf32>
    %c0_6 = arith.constant 0 : index
    %c0_7 = arith.constant 0 : index
    %8 = vector.load %arg8[%c0_6, %c0_7] : memref<256x128xf32, #tpu.memory_space<vmem>>, vector<256x128xf32>
    tpu.vector_store %arg8[%c0_6, %c0_7], %7 {strides = array<i32>} : memref<256x128xf32, #tpu.memory_space<vmem>>, vector<256x128xf32>,
    %c0_i32_8 = arith.constant 0 : i32
    %9 = arith.cmpi eq, %arg2, %c0_i32_8 : i32
    %10 = arith.extui %9 : i1 to i32
    %c0_i32_9 = arith.constant 0 : i32
    %11 = arith.cmpi ne, %10, %c0_i32_9 : i32
    scf.if %11 {
      %c0_10 = arith.constant 0 : index
      %c0_11 = arith.constant 0 : index
      %12 = vector.load %arg8[%c0_10, %c0_11] : memref<256x128xf32, #tpu.memory_space<vmem>>, vector<256x128xf32>
      %c0_12 = arith.constant 0 : index
      %c0_13 = arith.constant 0 : index
      %13 = vector.load %arg5[%c0_12, %c0_13] : memref<1x128xf32, #tpu.memory_space<vmem>>, vector<1x128xf32>
      %14 = vector.broadcast %13 : vector<1x128xf32> to vector<256x128xf32>
      %15 = arith.mulf %12, %14 : vector<256x128xf32>
      %c0_14 = arith.constant 0 : index
      %c0_15 = arith.constant 0 : index
      %16 = vector.load %arg6[%c0_14, %c0_15] : memref<1x128xf32, #tpu.memory_space<vmem>>, vector<1x128xf32>
      %17 = vector.broadcast %16 : vector<1x128xf32> to vector<256x128xf32>
      %18 = arith.addf %15, %17 : vector<256x128xf32>
      %cst_16 = arith.constant 0.000000e+00 : f32
      %19 = vector.broadcast %cst_16 : f32 to vector<256x128xf32>
      %20 = arith.maximumf %18, %19 : vector<256x128xf32>
      %c0_17 = arith.constant 0 : index
      %c0_18 = arith.constant 0 : index
      %21 = vector.load %arg7[%c0_17, %c0_18] : memref<256x128xf32, #tpu.memory_space<vmem>>, vector<256x128xf32>
      tpu.vector_store %arg7[%c0_17, %c0_18], %20 {strides = array<i32>} : memref<256x128xf32, #tpu.memory_space<vmem>>, vector<256x128xf32>,
    } else {
    }
    return
  }
  func.func @transform_0(%arg0: i32, %arg1: i32, %arg2: i32) -> (i32, i32) {
    %c0_i32 = arith.constant 0 : i32
    return %arg0, %arg2 : i32, i32
  }
  func.func @transform_1(%arg0: i32, %arg1: i32, %arg2: i32) -> (i32, i32) {
    %c0_i32 = arith.constant 0 : i32
    return %arg2, %arg1 : i32, i32
  }
  func.func @transform_2(%arg0: i32, %arg1: i32, %arg2: i32) -> (i32, i32) {
    %c0_i32 = arith.constant 0 : i32
    %c0_i32_0 = arith.constant 0 : i32
    return %c0_i32, %arg1 : i32, i32
  }
  func.func @transform_3(%arg0: i32, %arg1: i32, %arg2: i32) -> (i32, i32) {
    %c0_i32 = arith.constant 0 : i32
    %c0_i32_0 = arith.constant 0 : i32
    return %c0_i32, %arg1 : i32, i32
  }
  func.func @transform_4(%arg0: i32, %arg1: i32, %arg2: i32) -> (i32, i32) {
    %c0_i32 = arith.constant 0 : i32
    return %arg0, %arg1 : i32, i32
  }
}

module attributes {stable_mosaic.version = 11 : i64} {
  func.func @_conv_gemm_kernel(%arg0: i32, %arg1: i32, %arg2: i32, %arg3: memref<256x128xbf16, #tpu.memory_space<vmem>>, %arg4: memref<128x128xbf16, #tpu.memory_space<vmem>>, %arg5: memref<1x128xf32, #tpu.memory_space<vmem>>, %arg6: memref<1x128xf32, #tpu.memory_space<vmem>>, %arg7: memref<256x128xf32, #tpu.memory_space<vmem>>, %arg8: memref<256x128xf32, #tpu.memory_space<vmem>>) attributes {dimension_semantics = [#tpu.dimension_semantics<parallel>, #tpu.dimension_semantics<parallel>, #tpu.dimension_semantics<arbitrary>], iteration_bounds = array<i64: 2, 1, 1>, scalar_prefetch = 0 : i64, scratch_operands = 1 : i64, tpu.core_type = #tpu.core_type<tc>, window_params = [{transform_indices = @transform_0, window_bounds = array<i64: 256, 128>}, {transform_indices = @transform_1, window_bounds = array<i64: 128, 128>}, {transform_indices = @transform_2, window_bounds = array<i64: 1, 128>}, {transform_indices = @transform_3, window_bounds = array<i64: 1, 128>}, {transform_indices = @transform_4, window_bounds = array<i64: 256, 128>}]} {
    %c0_i32 = arith.constant 0 : i32
    %0 = arith.cmpi eq, %arg2, %c0_i32 : i32
    %1 = arith.extui %0 : i1 to i32
    %c0_i32_0 = arith.constant 0 : i32
    %2 = arith.cmpi ne, %1, %c0_i32_0 : i32
    scf.if %2 {
      %cst_10 = arith.constant 0.000000e+00 : f32
      %12 = vector.broadcast %cst_10 : f32 to vector<256x128xf32>
      %c0_11 = arith.constant 0 : index
      %c0_12 = arith.constant 0 : index
      %13 = vector.load %arg8[%c0_11, %c0_12] : memref<256x128xf32, #tpu.memory_space<vmem>>, vector<256x128xf32>
      tpu.vector_store %arg8[%c0_11, %c0_12], %12 {strides = array<i32>} : memref<256x128xf32, #tpu.memory_space<vmem>>, vector<256x128xf32>,
    } else {
    }
    %c0 = arith.constant 0 : index
    %c0_1 = arith.constant 0 : index
    %3 = vector.load %arg8[%c0, %c0_1] : memref<256x128xf32, #tpu.memory_space<vmem>>, vector<256x128xf32>
    %c0_2 = arith.constant 0 : index
    %c0_3 = arith.constant 0 : index
    %4 = vector.load %arg3[%c0_2, %c0_3] : memref<256x128xbf16, #tpu.memory_space<vmem>>, vector<256x128xbf16>
    %c0_4 = arith.constant 0 : index
    %c0_5 = arith.constant 0 : index
    %5 = vector.load %arg4[%c0_4, %c0_5] : memref<128x128xbf16, #tpu.memory_space<vmem>>, vector<128x128xbf16>
    %cst = arith.constant dense<0.000000e+00> : vector<256x128xf32>
    %6 = tpu.matmul %4, %5, %cst {dimension_numbers = #tpu.dot_dimension_numbers<[1], [0], [0], [1], [0, 0, 1, 1], [], []>} : vector<256x128xbf16>, vector<128x128xbf16>, vector<256x128xf32> -> vector<256x128xf32>
    %7 = arith.addf %3, %6 : vector<256x128xf32>
    %c0_6 = arith.constant 0 : index
    %c0_7 = arith.constant 0 : index
    %8 = vector.load %arg8[%c0_6, %c0_7] : memref<256x128xf32, #tpu.memory_space<vmem>>, vector<256x128xf32>
    tpu.vector_store %arg8[%c0_6, %c0_7], %7 {strides = array<i32>} : memref<256x128xf32, #tpu.memory_space<vmem>>, vector<256x128xf32>,
    %c0_i32_8 = arith.constant 0 : i32
    %9 = arith.cmpi eq, %arg2, %c0_i32_8 : i32
    %10 = arith.extui %9 : i1 to i32
    %c0_i32_9 = arith.constant 0 : i32
    %11 = arith.cmpi ne, %10, %c0_i32_9 : i32
    scf.if %11 {
      %c0_10 = arith.constant 0 : index
      %c0_11 = arith.constant 0 : index
      %12 = vector.load %arg8[%c0_10, %c0_11] : memref<256x128xf32, #tpu.memory_space<vmem>>, vector<256x128xf32>
      %c0_12 = arith.constant 0 : index
      %c0_13 = arith.constant 0 : index
      %13 = vector.load %arg5[%c0_12, %c0_13] : memref<1x128xf32, #tpu.memory_space<vmem>>, vector<1x128xf32>
      %14 = vector.broadcast %13 : vector<1x128xf32> to vector<256x128xf32>
      %15 = arith.mulf %12, %14 : vector<256x128xf32>
      %c0_14 = arith.constant 0 : index
      %c0_15 = arith.constant 0 : index
      %16 = vector.load %arg6[%c0_14, %c0_15] : memref<1x128xf32, #tpu.memory_space<vmem>>, vector<1x128xf32>
      %17 = vector.broadcast %16 : vector<1x128xf32> to vector<256x128xf32>
      %18 = arith.addf %15, %17 : vector<256x128xf32>
      %cst_16 = arith.constant 0.000000e+00 : f32
      %19 = vector.broadcast %cst_16 : f32 to vector<256x128xf32>
      %20 = arith.maximumf %18, %19 : vector<256x128xf32>
      %c0_17 = arith.constant 0 : index
      %c0_18 = arith.constant 0 : index
      %21 = vector.load %arg7[%c0_17, %c0_18] : memref<256x128xf32, #tpu.memory_space<vmem>>, vector<256x128xf32>
      tpu.vector_store %arg7[%c0_17, %c0_18], %20 {strides = array<i32>} : memref<256x128xf32, #tpu.memory_space<vmem>>, vector<256x128xf32>,
    } else {
    }
    return
  }
  func.func @transform_0(%arg0: i32, %arg1: i32, %arg2: i32) -> (i32, i32) {
    %c0_i32 = arith.constant 0 : i32
    return %arg0, %arg2 : i32, i32
  }
  func.func @transform_1(%arg0: i32, %arg1: i32, %arg2: i32) -> (i32, i32) {
    %c0_i32 = arith.constant 0 : i32
    return %arg2, %arg1 : i32, i32
  }
  func.func @transform_2(%arg0: i32, %arg1: i32, %arg2: i32) -> (i32, i32) {
    %c0_i32 = arith.constant 0 : i32
    %c0_i32_0 = arith.constant 0 : i32
    return %c0_i32, %arg1 : i32, i32
  }
  func.func @transform_3(%arg0: i32, %arg1: i32, %arg2: i32) -> (i32, i32) {
    %c0_i32 = arith.constant 0 : i32
    %c0_i32_0 = arith.constant 0 : i32
    return %c0_i32, %arg1 : i32, i32
  }
  func.func @transform_4(%arg0: i32, %arg1: i32, %arg2: i32) -> (i32, i32) {
    %c0_i32 = arith.constant 0 : i32
    return %arg0, %arg1 : i32, i32
  }
}

module attributes {stable_mosaic.version = 11 : i64} {
  func.func @_conv_gemm_kernel(%arg0: i32, %arg1: i32, %arg2: i32, %arg3: memref<128x256xbf16, #tpu.memory_space<vmem>>, %arg4: memref<256x128xbf16, #tpu.memory_space<vmem>>, %arg5: memref<1x128xf32, #tpu.memory_space<vmem>>, %arg6: memref<1x128xf32, #tpu.memory_space<vmem>>, %arg7: memref<128x128xf32, #tpu.memory_space<vmem>>, %arg8: memref<128x128xf32, #tpu.memory_space<vmem>>) attributes {dimension_semantics = [#tpu.dimension_semantics<parallel>, #tpu.dimension_semantics<parallel>, #tpu.dimension_semantics<arbitrary>], iteration_bounds = array<i64: 1, 1, 1>, scalar_prefetch = 0 : i64, scratch_operands = 1 : i64, tpu.core_type = #tpu.core_type<tc>, window_params = [{transform_indices = @transform_0, window_bounds = array<i64: 128, 256>}, {transform_indices = @transform_1, window_bounds = array<i64: 256, 128>}, {transform_indices = @transform_2, window_bounds = array<i64: 1, 128>}, {transform_indices = @transform_3, window_bounds = array<i64: 1, 128>}, {transform_indices = @transform_4, window_bounds = array<i64: 128, 128>}]} {
    %c0_i32 = arith.constant 0 : i32
    %0 = arith.cmpi eq, %arg2, %c0_i32 : i32
    %1 = arith.extui %0 : i1 to i32
    %c0_i32_0 = arith.constant 0 : i32
    %2 = arith.cmpi ne, %1, %c0_i32_0 : i32
    scf.if %2 {
      %cst_10 = arith.constant 0.000000e+00 : f32
      %12 = vector.broadcast %cst_10 : f32 to vector<128x128xf32>
      %c0_11 = arith.constant 0 : index
      %c0_12 = arith.constant 0 : index
      %13 = vector.load %arg8[%c0_11, %c0_12] : memref<128x128xf32, #tpu.memory_space<vmem>>, vector<128x128xf32>
      tpu.vector_store %arg8[%c0_11, %c0_12], %12 {strides = array<i32>} : memref<128x128xf32, #tpu.memory_space<vmem>>, vector<128x128xf32>,
    } else {
    }
    %c0 = arith.constant 0 : index
    %c0_1 = arith.constant 0 : index
    %3 = vector.load %arg8[%c0, %c0_1] : memref<128x128xf32, #tpu.memory_space<vmem>>, vector<128x128xf32>
    %c0_2 = arith.constant 0 : index
    %c0_3 = arith.constant 0 : index
    %4 = vector.load %arg3[%c0_2, %c0_3] : memref<128x256xbf16, #tpu.memory_space<vmem>>, vector<128x256xbf16>
    %c0_4 = arith.constant 0 : index
    %c0_5 = arith.constant 0 : index
    %5 = vector.load %arg4[%c0_4, %c0_5] : memref<256x128xbf16, #tpu.memory_space<vmem>>, vector<256x128xbf16>
    %cst = arith.constant dense<0.000000e+00> : vector<128x128xf32>
    %6 = tpu.matmul %4, %5, %cst {dimension_numbers = #tpu.dot_dimension_numbers<[1], [0], [0], [1], [0, 0, 1, 1], [], []>} : vector<128x256xbf16>, vector<256x128xbf16>, vector<128x128xf32> -> vector<128x128xf32>
    %7 = arith.addf %3, %6 : vector<128x128xf32>
    %c0_6 = arith.constant 0 : index
    %c0_7 = arith.constant 0 : index
    %8 = vector.load %arg8[%c0_6, %c0_7] : memref<128x128xf32, #tpu.memory_space<vmem>>, vector<128x128xf32>
    tpu.vector_store %arg8[%c0_6, %c0_7], %7 {strides = array<i32>} : memref<128x128xf32, #tpu.memory_space<vmem>>, vector<128x128xf32>,
    %c0_i32_8 = arith.constant 0 : i32
    %9 = arith.cmpi eq, %arg2, %c0_i32_8 : i32
    %10 = arith.extui %9 : i1 to i32
    %c0_i32_9 = arith.constant 0 : i32
    %11 = arith.cmpi ne, %10, %c0_i32_9 : i32
    scf.if %11 {
      %c0_10 = arith.constant 0 : index
      %c0_11 = arith.constant 0 : index
      %12 = vector.load %arg8[%c0_10, %c0_11] : memref<128x128xf32, #tpu.memory_space<vmem>>, vector<128x128xf32>
      %c0_12 = arith.constant 0 : index
      %c0_13 = arith.constant 0 : index
      %13 = vector.load %arg5[%c0_12, %c0_13] : memref<1x128xf32, #tpu.memory_space<vmem>>, vector<1x128xf32>
      %14 = vector.broadcast %13 : vector<1x128xf32> to vector<128x128xf32>
      %15 = arith.mulf %12, %14 : vector<128x128xf32>
      %c0_14 = arith.constant 0 : index
      %c0_15 = arith.constant 0 : index
      %16 = vector.load %arg6[%c0_14, %c0_15] : memref<1x128xf32, #tpu.memory_space<vmem>>, vector<1x128xf32>
      %17 = vector.broadcast %16 : vector<1x128xf32> to vector<128x128xf32>
      %18 = arith.addf %15, %17 : vector<128x128xf32>
      %cst_16 = arith.constant 0.000000e+00 : f32
      %19 = vector.broadcast %cst_16 : f32 to vector<128x128xf32>
      %20 = arith.maximumf %18, %19 : vector<128x128xf32>
      %c0_17 = arith.constant 0 : index
      %c0_18 = arith.constant 0 : index
      %21 = vector.load %arg7[%c0_17, %c0_18] : memref<128x128xf32, #tpu.memory_space<vmem>>, vector<128x128xf32>
      tpu.vector_store %arg7[%c0_17, %c0_18], %20 {strides = array<i32>} : memref<128x128xf32, #tpu.memory_space<vmem>>, vector<128x128xf32>,
    } else {
    }
    return
  }
  func.func @transform_0(%arg0: i32, %arg1: i32, %arg2: i32) -> (i32, i32) {
    %c0_i32 = arith.constant 0 : i32
    return %arg0, %arg2 : i32, i32
  }
  func.func @transform_1(%arg0: i32, %arg1: i32, %arg2: i32) -> (i32, i32) {
    %c0_i32 = arith.constant 0 : i32
    return %arg2, %arg1 : i32, i32
  }
  func.func @transform_2(%arg0: i32, %arg1: i32, %arg2: i32) -> (i32, i32) {
    %c0_i32 = arith.constant 0 : i32
    %c0_i32_0 = arith.constant 0 : i32
    return %c0_i32, %arg1 : i32, i32
  }
  func.func @transform_3(%arg0: i32, %arg1: i32, %arg2: i32) -> (i32, i32) {
    %c0_i32 = arith.constant 0 : i32
    %c0_i32_0 = arith.constant 0 : i32
    return %c0_i32, %arg1 : i32, i32
  }
  func.func @transform_4(%arg0: i32, %arg1: i32, %arg2: i32) -> (i32, i32) {
    %c0_i32 = arith.constant 0 : i32
    return %arg0, %arg1 : i32, i32
  }
}

module attributes {stable_mosaic.version = 11 : i64} {
  func.func @_conv_gemm_kernel(%arg0: i32, %arg1: i32, %arg2: i32, %arg3: memref<128x384xbf16, #tpu.memory_space<vmem>>, %arg4: memref<384x128xbf16, #tpu.memory_space<vmem>>, %arg5: memref<1x128xf32, #tpu.memory_space<vmem>>, %arg6: memref<1x128xf32, #tpu.memory_space<vmem>>, %arg7: memref<128x128xf32, #tpu.memory_space<vmem>>, %arg8: memref<128x128xf32, #tpu.memory_space<vmem>>) attributes {dimension_semantics = [#tpu.dimension_semantics<parallel>, #tpu.dimension_semantics<parallel>, #tpu.dimension_semantics<arbitrary>], iteration_bounds = array<i64: 1, 1, 1>, scalar_prefetch = 0 : i64, scratch_operands = 1 : i64, tpu.core_type = #tpu.core_type<tc>, window_params = [{transform_indices = @transform_0, window_bounds = array<i64: 128, 384>}, {transform_indices = @transform_1, window_bounds = array<i64: 384, 128>}, {transform_indices = @transform_2, window_bounds = array<i64: 1, 128>}, {transform_indices = @transform_3, window_bounds = array<i64: 1, 128>}, {transform_indices = @transform_4, window_bounds = array<i64: 128, 128>}]} {
    %c0_i32 = arith.constant 0 : i32
    %0 = arith.cmpi eq, %arg2, %c0_i32 : i32
    %1 = arith.extui %0 : i1 to i32
    %c0_i32_0 = arith.constant 0 : i32
    %2 = arith.cmpi ne, %1, %c0_i32_0 : i32
    scf.if %2 {
      %cst_10 = arith.constant 0.000000e+00 : f32
      %12 = vector.broadcast %cst_10 : f32 to vector<128x128xf32>
      %c0_11 = arith.constant 0 : index
      %c0_12 = arith.constant 0 : index
      %13 = vector.load %arg8[%c0_11, %c0_12] : memref<128x128xf32, #tpu.memory_space<vmem>>, vector<128x128xf32>
      tpu.vector_store %arg8[%c0_11, %c0_12], %12 {strides = array<i32>} : memref<128x128xf32, #tpu.memory_space<vmem>>, vector<128x128xf32>,
    } else {
    }
    %c0 = arith.constant 0 : index
    %c0_1 = arith.constant 0 : index
    %3 = vector.load %arg8[%c0, %c0_1] : memref<128x128xf32, #tpu.memory_space<vmem>>, vector<128x128xf32>
    %c0_2 = arith.constant 0 : index
    %c0_3 = arith.constant 0 : index
    %4 = vector.load %arg3[%c0_2, %c0_3] : memref<128x384xbf16, #tpu.memory_space<vmem>>, vector<128x384xbf16>
    %c0_4 = arith.constant 0 : index
    %c0_5 = arith.constant 0 : index
    %5 = vector.load %arg4[%c0_4, %c0_5] : memref<384x128xbf16, #tpu.memory_space<vmem>>, vector<384x128xbf16>
    %cst = arith.constant dense<0.000000e+00> : vector<128x128xf32>
    %6 = tpu.matmul %4, %5, %cst {dimension_numbers = #tpu.dot_dimension_numbers<[1], [0], [0], [1], [0, 0, 1, 1], [], []>} : vector<128x384xbf16>, vector<384x128xbf16>, vector<128x128xf32> -> vector<128x128xf32>
    %7 = arith.addf %3, %6 : vector<128x128xf32>
    %c0_6 = arith.constant 0 : index
    %c0_7 = arith.constant 0 : index
    %8 = vector.load %arg8[%c0_6, %c0_7] : memref<128x128xf32, #tpu.memory_space<vmem>>, vector<128x128xf32>
    tpu.vector_store %arg8[%c0_6, %c0_7], %7 {strides = array<i32>} : memref<128x128xf32, #tpu.memory_space<vmem>>, vector<128x128xf32>,
    %c0_i32_8 = arith.constant 0 : i32
    %9 = arith.cmpi eq, %arg2, %c0_i32_8 : i32
    %10 = arith.extui %9 : i1 to i32
    %c0_i32_9 = arith.constant 0 : i32
    %11 = arith.cmpi ne, %10, %c0_i32_9 : i32
    scf.if %11 {
      %c0_10 = arith.constant 0 : index
      %c0_11 = arith.constant 0 : index
      %12 = vector.load %arg8[%c0_10, %c0_11] : memref<128x128xf32, #tpu.memory_space<vmem>>, vector<128x128xf32>
      %c0_12 = arith.constant 0 : index
      %c0_13 = arith.constant 0 : index
      %13 = vector.load %arg5[%c0_12, %c0_13] : memref<1x128xf32, #tpu.memory_space<vmem>>, vector<1x128xf32>
      %14 = vector.broadcast %13 : vector<1x128xf32> to vector<128x128xf32>
      %15 = arith.mulf %12, %14 : vector<128x128xf32>
      %c0_14 = arith.constant 0 : index
      %c0_15 = arith.constant 0 : index
      %16 = vector.load %arg6[%c0_14, %c0_15] : memref<1x128xf32, #tpu.memory_space<vmem>>, vector<1x128xf32>
      %17 = vector.broadcast %16 : vector<1x128xf32> to vector<128x128xf32>
      %18 = arith.addf %15, %17 : vector<128x128xf32>
      %cst_16 = arith.constant 0.000000e+00 : f32
      %19 = vector.broadcast %cst_16 : f32 to vector<128x128xf32>
      %20 = arith.maximumf %18, %19 : vector<128x128xf32>
      %c0_17 = arith.constant 0 : index
      %c0_18 = arith.constant 0 : index
      %21 = vector.load %arg7[%c0_17, %c0_18] : memref<128x128xf32, #tpu.memory_space<vmem>>, vector<128x128xf32>
      tpu.vector_store %arg7[%c0_17, %c0_18], %20 {strides = array<i32>} : memref<128x128xf32, #tpu.memory_space<vmem>>, vector<128x128xf32>,
    } else {
    }
    return
  }
  func.func @transform_0(%arg0: i32, %arg1: i32, %arg2: i32) -> (i32, i32) {
    %c0_i32 = arith.constant 0 : i32
    return %arg0, %arg2 : i32, i32
  }
  func.func @transform_1(%arg0: i32, %arg1: i32, %arg2: i32) -> (i32, i32) {
    %c0_i32 = arith.constant 0 : i32
    return %arg2, %arg1 : i32, i32
  }
  func.func @transform_2(%arg0: i32, %arg1: i32, %arg2: i32) -> (i32, i32) {
    %c0_i32 = arith.constant 0 : i32
    %c0_i32_0 = arith.constant 0 : i32
    return %c0_i32, %arg1 : i32, i32
  }
  func.func @transform_3(%arg0: i32, %arg1: i32, %arg2: i32) -> (i32, i32) {
    %c0_i32 = arith.constant 0 : i32
    %c0_i32_0 = arith.constant 0 : i32
    return %c0_i32, %arg1 : i32, i32
  }
  func.func @transform_4(%arg0: i32, %arg1: i32, %arg2: i32) -> (i32, i32) {
    %c0_i32 = arith.constant 0 : i32
    return %arg0, %arg1 : i32, i32
  }
}

module attributes {stable_mosaic.version = 11 : i64} {
  func.func @_conv_gemm_kernel(%arg0: i32, %arg1: i32, %arg2: i32, %arg3: memref<128x384xbf16, #tpu.memory_space<vmem>>, %arg4: memref<384x128xbf16, #tpu.memory_space<vmem>>, %arg5: memref<1x128xf32, #tpu.memory_space<vmem>>, %arg6: memref<1x128xf32, #tpu.memory_space<vmem>>, %arg7: memref<128x128xf32, #tpu.memory_space<vmem>>, %arg8: memref<128x128xf32, #tpu.memory_space<vmem>>, %arg9: memref<128x128xf32, #tpu.memory_space<vmem>>) attributes {dimension_semantics = [#tpu.dimension_semantics<parallel>, #tpu.dimension_semantics<parallel>, #tpu.dimension_semantics<arbitrary>], iteration_bounds = array<i64: 1, 1, 1>, scalar_prefetch = 0 : i64, scratch_operands = 1 : i64, tpu.core_type = #tpu.core_type<tc>, window_params = [{transform_indices = @transform_0, window_bounds = array<i64: 128, 384>}, {transform_indices = @transform_1, window_bounds = array<i64: 384, 128>}, {transform_indices = @transform_2, window_bounds = array<i64: 1, 128>}, {transform_indices = @transform_3, window_bounds = array<i64: 1, 128>}, {transform_indices = @transform_4, window_bounds = array<i64: 128, 128>}, {transform_indices = @transform_5, window_bounds = array<i64: 128, 128>}]} {
    %c0_i32 = arith.constant 0 : i32
    %0 = arith.cmpi eq, %arg2, %c0_i32 : i32
    %1 = arith.extui %0 : i1 to i32
    %c0_i32_0 = arith.constant 0 : i32
    %2 = arith.cmpi ne, %1, %c0_i32_0 : i32
    scf.if %2 {
      %cst_10 = arith.constant 0.000000e+00 : f32
      %12 = vector.broadcast %cst_10 : f32 to vector<128x128xf32>
      %c0_11 = arith.constant 0 : index
      %c0_12 = arith.constant 0 : index
      %13 = vector.load %arg9[%c0_11, %c0_12] : memref<128x128xf32, #tpu.memory_space<vmem>>, vector<128x128xf32>
      tpu.vector_store %arg9[%c0_11, %c0_12], %12 {strides = array<i32>} : memref<128x128xf32, #tpu.memory_space<vmem>>, vector<128x128xf32>,
    } else {
    }
    %c0 = arith.constant 0 : index
    %c0_1 = arith.constant 0 : index
    %3 = vector.load %arg9[%c0, %c0_1] : memref<128x128xf32, #tpu.memory_space<vmem>>, vector<128x128xf32>
    %c0_2 = arith.constant 0 : index
    %c0_3 = arith.constant 0 : index
    %4 = vector.load %arg3[%c0_2, %c0_3] : memref<128x384xbf16, #tpu.memory_space<vmem>>, vector<128x384xbf16>
    %c0_4 = arith.constant 0 : index
    %c0_5 = arith.constant 0 : index
    %5 = vector.load %arg4[%c0_4, %c0_5] : memref<384x128xbf16, #tpu.memory_space<vmem>>, vector<384x128xbf16>
    %cst = arith.constant dense<0.000000e+00> : vector<128x128xf32>
    %6 = tpu.matmul %4, %5, %cst {dimension_numbers = #tpu.dot_dimension_numbers<[1], [0], [0], [1], [0, 0, 1, 1], [], []>} : vector<128x384xbf16>, vector<384x128xbf16>, vector<128x128xf32> -> vector<128x128xf32>
    %7 = arith.addf %3, %6 : vector<128x128xf32>
    %c0_6 = arith.constant 0 : index
    %c0_7 = arith.constant 0 : index
    %8 = vector.load %arg9[%c0_6, %c0_7] : memref<128x128xf32, #tpu.memory_space<vmem>>, vector<128x128xf32>
    tpu.vector_store %arg9[%c0_6, %c0_7], %7 {strides = array<i32>} : memref<128x128xf32, #tpu.memory_space<vmem>>, vector<128x128xf32>,
    %c0_i32_8 = arith.constant 0 : i32
    %9 = arith.cmpi eq, %arg2, %c0_i32_8 : i32
    %10 = arith.extui %9 : i1 to i32
    %c0_i32_9 = arith.constant 0 : i32
    %11 = arith.cmpi ne, %10, %c0_i32_9 : i32
    scf.if %11 {
      %c0_10 = arith.constant 0 : index
      %c0_11 = arith.constant 0 : index
      %12 = vector.load %arg9[%c0_10, %c0_11] : memref<128x128xf32, #tpu.memory_space<vmem>>, vector<128x128xf32>
      %c0_12 = arith.constant 0 : index
      %c0_13 = arith.constant 0 : index
      %13 = vector.load %arg5[%c0_12, %c0_13] : memref<1x128xf32, #tpu.memory_space<vmem>>, vector<1x128xf32>
      %14 = vector.broadcast %13 : vector<1x128xf32> to vector<128x128xf32>
      %15 = arith.mulf %12, %14 : vector<128x128xf32>
      %c0_14 = arith.constant 0 : index
      %c0_15 = arith.constant 0 : index
      %16 = vector.load %arg6[%c0_14, %c0_15] : memref<1x128xf32, #tpu.memory_space<vmem>>, vector<1x128xf32>
      %17 = vector.broadcast %16 : vector<1x128xf32> to vector<128x128xf32>
      %18 = arith.addf %15, %17 : vector<128x128xf32>
      %c0_16 = arith.constant 0 : index
      %c0_17 = arith.constant 0 : index
      %19 = vector.load %arg7[%c0_16, %c0_17] : memref<128x128xf32, #tpu.memory_space<vmem>>, vector<128x128xf32>
      %20 = arith.addf %18, %19 : vector<128x128xf32>
      %c0_18 = arith.constant 0 : index
      %c0_19 = arith.constant 0 : index
      %21 = vector.load %arg8[%c0_18, %c0_19] : memref<128x128xf32, #tpu.memory_space<vmem>>, vector<128x128xf32>
      tpu.vector_store %arg8[%c0_18, %c0_19], %20 {strides = array<i32>} : memref<128x128xf32, #tpu.memory_space<vmem>>, vector<128x128xf32>,
    } else {
    }
    return
  }
  func.func @transform_0(%arg0: i32, %arg1: i32, %arg2: i32) -> (i32, i32) {
    %c0_i32 = arith.constant 0 : i32
    return %arg0, %arg2 : i32, i32
  }
  func.func @transform_1(%arg0: i32, %arg1: i32, %arg2: i32) -> (i32, i32) {
    %c0_i32 = arith.constant 0 : i32
    return %arg2, %arg1 : i32, i32
  }
  func.func @transform_2(%arg0: i32, %arg1: i32, %arg2: i32) -> (i32, i32) {
    %c0_i32 = arith.constant 0 : i32
    %c0_i32_0 = arith.constant 0 : i32
    return %c0_i32, %arg1 : i32, i32
  }
  func.func @transform_3(%arg0: i32, %arg1: i32, %arg2: i32) -> (i32, i32) {
    %c0_i32 = arith.constant 0 : i32
    %c0_i32_0 = arith.constant 0 : i32
    return %c0_i32, %arg1 : i32, i32
  }
  func.func @transform_4(%arg0: i32, %arg1: i32, %arg2: i32) -> (i32, i32) {
    %c0_i32 = arith.constant 0 : i32
    return %arg0, %arg1 : i32, i32
  }
  func.func @transform_5(%arg0: i32, %arg1: i32, %arg2: i32) -> (i32, i32) {
    %c0_i32 = arith.constant 0 : i32
    return %arg0, %arg1 : i32, i32
  }
}

module attributes {stable_mosaic.version = 11 : i64} {
  func.func @_conv_gemm_kernel(%arg0: i32, %arg1: i32, %arg2: i32, %arg3: memref<256x384xbf16, #tpu.memory_space<vmem>>, %arg4: memref<384x128xbf16, #tpu.memory_space<vmem>>, %arg5: memref<1x128xf32, #tpu.memory_space<vmem>>, %arg6: memref<1x128xf32, #tpu.memory_space<vmem>>, %arg7: memref<256x128xf32, #tpu.memory_space<vmem>>, %arg8: memref<256x128xf32, #tpu.memory_space<vmem>>) attributes {dimension_semantics = [#tpu.dimension_semantics<parallel>, #tpu.dimension_semantics<parallel>, #tpu.dimension_semantics<arbitrary>], iteration_bounds = array<i64: 2, 1, 1>, scalar_prefetch = 0 : i64, scratch_operands = 1 : i64, tpu.core_type = #tpu.core_type<tc>, window_params = [{transform_indices = @transform_0, window_bounds = array<i64: 256, 384>}, {transform_indices = @transform_1, window_bounds = array<i64: 384, 128>}, {transform_indices = @transform_2, window_bounds = array<i64: 1, 128>}, {transform_indices = @transform_3, window_bounds = array<i64: 1, 128>}, {transform_indices = @transform_4, window_bounds = array<i64: 256, 128>}]} {
    %c0_i32 = arith.constant 0 : i32
    %0 = arith.cmpi eq, %arg2, %c0_i32 : i32
    %1 = arith.extui %0 : i1 to i32
    %c0_i32_0 = arith.constant 0 : i32
    %2 = arith.cmpi ne, %1, %c0_i32_0 : i32
    scf.if %2 {
      %cst_10 = arith.constant 0.000000e+00 : f32
      %12 = vector.broadcast %cst_10 : f32 to vector<256x128xf32>
      %c0_11 = arith.constant 0 : index
      %c0_12 = arith.constant 0 : index
      %13 = vector.load %arg8[%c0_11, %c0_12] : memref<256x128xf32, #tpu.memory_space<vmem>>, vector<256x128xf32>
      tpu.vector_store %arg8[%c0_11, %c0_12], %12 {strides = array<i32>} : memref<256x128xf32, #tpu.memory_space<vmem>>, vector<256x128xf32>,
    } else {
    }
    %c0 = arith.constant 0 : index
    %c0_1 = arith.constant 0 : index
    %3 = vector.load %arg8[%c0, %c0_1] : memref<256x128xf32, #tpu.memory_space<vmem>>, vector<256x128xf32>
    %c0_2 = arith.constant 0 : index
    %c0_3 = arith.constant 0 : index
    %4 = vector.load %arg3[%c0_2, %c0_3] : memref<256x384xbf16, #tpu.memory_space<vmem>>, vector<256x384xbf16>
    %c0_4 = arith.constant 0 : index
    %c0_5 = arith.constant 0 : index
    %5 = vector.load %arg4[%c0_4, %c0_5] : memref<384x128xbf16, #tpu.memory_space<vmem>>, vector<384x128xbf16>
    %cst = arith.constant dense<0.000000e+00> : vector<256x128xf32>
    %6 = tpu.matmul %4, %5, %cst {dimension_numbers = #tpu.dot_dimension_numbers<[1], [0], [0], [1], [0, 0, 1, 1], [], []>} : vector<256x384xbf16>, vector<384x128xbf16>, vector<256x128xf32> -> vector<256x128xf32>
    %7 = arith.addf %3, %6 : vector<256x128xf32>
    %c0_6 = arith.constant 0 : index
    %c0_7 = arith.constant 0 : index
    %8 = vector.load %arg8[%c0_6, %c0_7] : memref<256x128xf32, #tpu.memory_space<vmem>>, vector<256x128xf32>
    tpu.vector_store %arg8[%c0_6, %c0_7], %7 {strides = array<i32>} : memref<256x128xf32, #tpu.memory_space<vmem>>, vector<256x128xf32>,
    %c0_i32_8 = arith.constant 0 : i32
    %9 = arith.cmpi eq, %arg2, %c0_i32_8 : i32
    %10 = arith.extui %9 : i1 to i32
    %c0_i32_9 = arith.constant 0 : i32
    %11 = arith.cmpi ne, %10, %c0_i32_9 : i32
    scf.if %11 {
      %c0_10 = arith.constant 0 : index
      %c0_11 = arith.constant 0 : index
      %12 = vector.load %arg8[%c0_10, %c0_11] : memref<256x128xf32, #tpu.memory_space<vmem>>, vector<256x128xf32>
      %c0_12 = arith.constant 0 : index
      %c0_13 = arith.constant 0 : index
      %13 = vector.load %arg5[%c0_12, %c0_13] : memref<1x128xf32, #tpu.memory_space<vmem>>, vector<1x128xf32>
      %14 = vector.broadcast %13 : vector<1x128xf32> to vector<256x128xf32>
      %15 = arith.mulf %12, %14 : vector<256x128xf32>
      %c0_14 = arith.constant 0 : index
      %c0_15 = arith.constant 0 : index
      %16 = vector.load %arg6[%c0_14, %c0_15] : memref<1x128xf32, #tpu.memory_space<vmem>>, vector<1x128xf32>
      %17 = vector.broadcast %16 : vector<1x128xf32> to vector<256x128xf32>
      %18 = arith.addf %15, %17 : vector<256x128xf32>
      %cst_16 = arith.constant 0.000000e+00 : f32
      %19 = vector.broadcast %cst_16 : f32 to vector<256x128xf32>
      %20 = arith.maximumf %18, %19 : vector<256x128xf32>
      %c0_17 = arith.constant 0 : index
      %c0_18 = arith.constant 0 : index
      %21 = vector.load %arg7[%c0_17, %c0_18] : memref<256x128xf32, #tpu.memory_space<vmem>>, vector<256x128xf32>
      tpu.vector_store %arg7[%c0_17, %c0_18], %20 {strides = array<i32>} : memref<256x128xf32, #tpu.memory_space<vmem>>, vector<256x128xf32>,
    } else {
    }
    return
  }
  func.func @transform_0(%arg0: i32, %arg1: i32, %arg2: i32) -> (i32, i32) {
    %c0_i32 = arith.constant 0 : i32
    return %arg0, %arg2 : i32, i32
  }
  func.func @transform_1(%arg0: i32, %arg1: i32, %arg2: i32) -> (i32, i32) {
    %c0_i32 = arith.constant 0 : i32
    return %arg2, %arg1 : i32, i32
  }
  func.func @transform_2(%arg0: i32, %arg1: i32, %arg2: i32) -> (i32, i32) {
    %c0_i32 = arith.constant 0 : i32
    %c0_i32_0 = arith.constant 0 : i32
    return %c0_i32, %arg1 : i32, i32
  }
  func.func @transform_3(%arg0: i32, %arg1: i32, %arg2: i32) -> (i32, i32) {
    %c0_i32 = arith.constant 0 : i32
    %c0_i32_0 = arith.constant 0 : i32
    return %c0_i32, %arg1 : i32, i32
  }
  func.func @transform_4(%arg0: i32, %arg1: i32, %arg2: i32) -> (i32, i32) {
    %c0_i32 = arith.constant 0 : i32
    return %arg0, %arg1 : i32, i32
  }
}

module attributes {stable_mosaic.version = 11 : i64} {
  func.func @_conv_gemm_kernel(%arg0: i32, %arg1: i32, %arg2: i32, %arg3: memref<256x512xbf16, #tpu.memory_space<vmem>>, %arg4: memref<512x128xbf16, #tpu.memory_space<vmem>>, %arg5: memref<1x128xf32, #tpu.memory_space<vmem>>, %arg6: memref<1x128xf32, #tpu.memory_space<vmem>>, %arg7: memref<256x128xf32, #tpu.memory_space<vmem>>, %arg8: memref<256x128xf32, #tpu.memory_space<vmem>>) attributes {dimension_semantics = [#tpu.dimension_semantics<parallel>, #tpu.dimension_semantics<parallel>, #tpu.dimension_semantics<arbitrary>], iteration_bounds = array<i64: 8, 1, 1>, scalar_prefetch = 0 : i64, scratch_operands = 1 : i64, tpu.core_type = #tpu.core_type<tc>, window_params = [{transform_indices = @transform_0, window_bounds = array<i64: 256, 512>}, {transform_indices = @transform_1, window_bounds = array<i64: 512, 128>}, {transform_indices = @transform_2, window_bounds = array<i64: 1, 128>}, {transform_indices = @transform_3, window_bounds = array<i64: 1, 128>}, {transform_indices = @transform_4, window_bounds = array<i64: 256, 128>}]} {
    %c0_i32 = arith.constant 0 : i32
    %0 = arith.cmpi eq, %arg2, %c0_i32 : i32
    %1 = arith.extui %0 : i1 to i32
    %c0_i32_0 = arith.constant 0 : i32
    %2 = arith.cmpi ne, %1, %c0_i32_0 : i32
    scf.if %2 {
      %cst_10 = arith.constant 0.000000e+00 : f32
      %12 = vector.broadcast %cst_10 : f32 to vector<256x128xf32>
      %c0_11 = arith.constant 0 : index
      %c0_12 = arith.constant 0 : index
      %13 = vector.load %arg8[%c0_11, %c0_12] : memref<256x128xf32, #tpu.memory_space<vmem>>, vector<256x128xf32>
      tpu.vector_store %arg8[%c0_11, %c0_12], %12 {strides = array<i32>} : memref<256x128xf32, #tpu.memory_space<vmem>>, vector<256x128xf32>,
    } else {
    }
    %c0 = arith.constant 0 : index
    %c0_1 = arith.constant 0 : index
    %3 = vector.load %arg8[%c0, %c0_1] : memref<256x128xf32, #tpu.memory_space<vmem>>, vector<256x128xf32>
    %c0_2 = arith.constant 0 : index
    %c0_3 = arith.constant 0 : index
    %4 = vector.load %arg3[%c0_2, %c0_3] : memref<256x512xbf16, #tpu.memory_space<vmem>>, vector<256x512xbf16>
    %c0_4 = arith.constant 0 : index
    %c0_5 = arith.constant 0 : index
    %5 = vector.load %arg4[%c0_4, %c0_5] : memref<512x128xbf16, #tpu.memory_space<vmem>>, vector<512x128xbf16>
    %cst = arith.constant dense<0.000000e+00> : vector<256x128xf32>
    %6 = tpu.matmul %4, %5, %cst {dimension_numbers = #tpu.dot_dimension_numbers<[1], [0], [0], [1], [0, 0, 1, 1], [], []>} : vector<256x512xbf16>, vector<512x128xbf16>, vector<256x128xf32> -> vector<256x128xf32>
    %7 = arith.addf %3, %6 : vector<256x128xf32>
    %c0_6 = arith.constant 0 : index
    %c0_7 = arith.constant 0 : index
    %8 = vector.load %arg8[%c0_6, %c0_7] : memref<256x128xf32, #tpu.memory_space<vmem>>, vector<256x128xf32>
    tpu.vector_store %arg8[%c0_6, %c0_7], %7 {strides = array<i32>} : memref<256x128xf32, #tpu.memory_space<vmem>>, vector<256x128xf32>,
    %c0_i32_8 = arith.constant 0 : i32
    %9 = arith.cmpi eq, %arg2, %c0_i32_8 : i32
    %10 = arith.extui %9 : i1 to i32
    %c0_i32_9 = arith.constant 0 : i32
    %11 = arith.cmpi ne, %10, %c0_i32_9 : i32
    scf.if %11 {
      %c0_10 = arith.constant 0 : index
      %c0_11 = arith.constant 0 : index
      %12 = vector.load %arg8[%c0_10, %c0_11] : memref<256x128xf32, #tpu.memory_space<vmem>>, vector<256x128xf32>
      %c0_12 = arith.constant 0 : index
      %c0_13 = arith.constant 0 : index
      %13 = vector.load %arg5[%c0_12, %c0_13] : memref<1x128xf32, #tpu.memory_space<vmem>>, vector<1x128xf32>
      %14 = vector.broadcast %13 : vector<1x128xf32> to vector<256x128xf32>
      %15 = arith.mulf %12, %14 : vector<256x128xf32>
      %c0_14 = arith.constant 0 : index
      %c0_15 = arith.constant 0 : index
      %16 = vector.load %arg6[%c0_14, %c0_15] : memref<1x128xf32, #tpu.memory_space<vmem>>, vector<1x128xf32>
      %17 = vector.broadcast %16 : vector<1x128xf32> to vector<256x128xf32>
      %18 = arith.addf %15, %17 : vector<256x128xf32>
      %c0_16 = arith.constant 0 : index
      %c0_17 = arith.constant 0 : index
      %19 = vector.load %arg7[%c0_16, %c0_17] : memref<256x128xf32, #tpu.memory_space<vmem>>, vector<256x128xf32>
      tpu.vector_store %arg7[%c0_16, %c0_17], %18 {strides = array<i32>} : memref<256x128xf32, #tpu.memory_space<vmem>>, vector<256x128xf32>,
    } else {
    }
    return
  }
  func.func @transform_0(%arg0: i32, %arg1: i32, %arg2: i32) -> (i32, i32) {
    %c0_i32 = arith.constant 0 : i32
    return %arg0, %arg2 : i32, i32
  }
  func.func @transform_1(%arg0: i32, %arg1: i32, %arg2: i32) -> (i32, i32) {
    %c0_i32 = arith.constant 0 : i32
    return %arg2, %arg1 : i32, i32
  }
  func.func @transform_2(%arg0: i32, %arg1: i32, %arg2: i32) -> (i32, i32) {
    %c0_i32 = arith.constant 0 : i32
    %c0_i32_0 = arith.constant 0 : i32
    return %c0_i32, %arg1 : i32, i32
  }
  func.func @transform_3(%arg0: i32, %arg1: i32, %arg2: i32) -> (i32, i32) {
    %c0_i32 = arith.constant 0 : i32
    %c0_i32_0 = arith.constant 0 : i32
    return %c0_i32, %arg1 : i32, i32
  }
  func.func @transform_4(%arg0: i32, %arg1: i32, %arg2: i32) -> (i32, i32) {
    %c0_i32 = arith.constant 0 : i32
    return %arg0, %arg1 : i32, i32
  }
}

</mosaic_0001>

<llo_original>
// kernel: resnet_generator_forward.10
$region0: #{resnet_generator_forward.10}
  #allocation0 [shape = 'u32[]', space=smem, size = 0x4, offset = 0x4, fixed_abs, tag = 'smem constant byte address 0x4 - core index']
  #allocation1 [shape = 'u32[144,128]{1,0:T(1,128)}', space=vmem, size = 0x12000, scoped, tag = 'internal scratch']
  #allocation2 [shape = 'f32[256,128]{1,0:T(8,128)}', space=vmem, size = 0x20000, scoped, tag = 'scratch operand']
  %s0 = inlined_call_operand.vmem [shape: bf16[2048,256], index: 0, kind: input, shape index: {}]
  %s1 = inlined_call_operand.vmem [shape: bf16[256,128], index: 1, kind: input, shape index: {}]
  %s2 = inlined_call_operand.vmem [shape: f32[1,128], index: 2, kind: input, shape index: {}]
  %s3 = inlined_call_operand.vmem [shape: f32[1,128], index: 3, kind: input, shape index: {}]
  %s4 = inlined_call_operand.vmem [shape: f32[2048,128], index: 4, kind: output, shape index: {}]
  %s5 = sld [smem:[#allocation0]]
  $region57: #{resnet_generator_forward.10} parent=0
    _
  %s7 = ssub.s32 1, %s5
  %s8 = scalar_select 0, %s7, %s5
  loop: start=0, step=1, limit=10
  $region2: #{resnet_generator_forward.10} parent=0 // loop_pre_header
    _
  $region3: #{resnet_generator_forward.10} parent=0 // loop_header
    %s10 = sphi 0, %s14
    %p11 = scmp.ge.s32.totalorder %s10, 10
    %s17 = sphi 0, %s36
    %s18 = sphi 0, %s32
    %s19 = sphi 0, %s28
    %s20 = sphi 0, %s17
    %s21 = sphi 0, %s18
    %s22 = sphi 0, %s19
    %s23 = sphi 0, %s20
    %s24 = sphi 0, %s21
    %s25 = sphi 0, %s22
    %s41 = sphi 0, %s43
    %s44 = sphi 0, %s41
    %s45 = sphi 0, %s44
    %s61 = sphi 0, %s45
    %s69 = sphi 0, %s71
    %s72 = sphi 0, %s69
    %s73 = sphi 0, %s72
    %s89 = sphi 0, %s73
    %s95 = sphi 0, %s97
    %s98 = sphi 0, %s95
    %s99 = sphi 0, %s98
    %s115 = sphi 0, %s99
    %s121 = sphi 0, %s123
    %s124 = sphi 0, %s121
    %s125 = sphi 0, %s124
    %s141 = sphi 0, %s125
    %s149 = sphi 0, %s151
    %s152 = sphi 0, %s149
    %s153 = sphi 0, %s152
    %s169 = sphi 0, %s153
  $region4: #{resnet_generator_forward.10} parent=0 // loop_header_branch
    %13 = sbr.rel (%p11) target = $region8
  $region5: #{resnet_generator_forward.10} parent=0 // loop_body
    %s15 = ssub.s32 %s10, 1
    %s16 = ssub.s32 %s10, 2
    %s26 = sadd.s32 1, %s19
    %p27 = scmp.ge.s32.totalorder %s26, 1
    %s28 = scalar_select %p27, 0, %s26
    %s29 = sadd.s32 1, %s18
    %s30 = scalar_select %p27, %s29, %s18
    %p31 = scmp.ge.s32.totalorder %s30, 1
    %s32 = scalar_select %p31, 0, %s30
    %s33 = sadd.s32 1, %s17
    %s34 = scalar_select %p31, %s33, %s17
    %p35 = scmp.ge.s32.totalorder %s34, 8
    %s36 = scalar_select %p35, 0, %s34
    %s37 = ssub.s32 %s17, %s36
    %s38 = ssub.s32 %s19, %s28
    %s39 = sor.u32 %s37, %s38
    %p40 = scmp.eq.s32.totalorder %s39, 0
    %s42 = sadd.s32 %s41, 1
    %s43 = scalar_select %p40, %s41, %s42
    %p46 = pneg %p40
    %p47 = scmp.eq.s32.totalorder %s10, 7
    %p48 = por %p46, %p47
    %p49 = scmp.ne.s32.totalorder %s41, %s44
    %p50 = scmp.eq.s32.totalorder %s10, 0
    %p51 = por %p49, %p50
    %p52 = scmp.ne.s32.totalorder %s41, %s44
    %p53 = scmp.eq.s32.totalorder %s15, 7
    %p54 = por %p52, %p53
    %p55 = scmp.ne.s32.totalorder %s44, %s45
    %p56 = scmp.eq.s32.totalorder %s15, 0
    %p57 = por %p55, %p56
    %p58 = scmp.ne.s32.totalorder %s44, %s45
    %p59 = scmp.eq.s32.totalorder %s16, 7
    %p60 = por %p58, %p59
    %p62 = scmp.ne.s32.totalorder %s45, %s61
    %p63 = scmp.eq.s32.totalorder %s16, 0
    %p64 = por %p62, %p63
    %s65 = ssub.s32 %s19, %s28
    %s66 = ssub.s32 %s18, %s32
    %s67 = sor.u32 %s65, %s66
    %p68 = scmp.eq.s32.totalorder %s67, 0
    %s70 = sadd.s32 %s69, 1
    %s71 = scalar_select %p68, %s69, %s70
    %p74 = pneg %p68
    %p75 = scmp.eq.s32.totalorder %s10, 7
    %p76 = por %p74, %p75
    %p77 = scmp.ne.s32.totalorder %s69, %s72
    %p78 = scmp.eq.s32.totalorder %s10, 0
    %p79 = por %p77, %p78
    %p80 = scmp.ne.s32.totalorder %s69, %s72
    %p81 = scmp.eq.s32.totalorder %s15, 7
    %p82 = por %p80, %p81
    %p83 = scmp.ne.s32.totalorder %s72, %s73
    %p84 = scmp.eq.s32.totalorder %s15, 0
    %p85 = por %p83, %p84
    %p86 = scmp.ne.s32.totalorder %s72, %s73
    %p87 = scmp.eq.s32.totalorder %s16, 7
    %p88 = por %p86, %p87
    %p90 = scmp.ne.s32.totalorder %s73, %s89
    %p91 = scmp.eq.s32.totalorder %s16, 0
    %p92 = por %p90, %p91
    %s93 = ssub.s32 %s18, %s32
    %p94 = scmp.eq.s32.totalorder %s93, 0
    %s96 = sadd.s32 %s95, 1
    %s97 = scalar_select %p94, %s95, %s96
    %p100 = pneg %p94
    %p101 = scmp.eq.s32.totalorder %s10, 7
    %p102 = por %p100, %p101
    %p103 = scmp.ne.s32.totalorder %s95, %s98
    %p104 = scmp.eq.s32.totalorder %s10, 0
    %p105 = por %p103, %p104
    %p106 = scmp.ne.s32.totalorder %s95, %s98
    %p107 = scmp.eq.s32.totalorder %s15, 7
    %p108 = por %p106, %p107
    %p109 = scmp.ne.s32.totalorder %s98, %s99
    %p110 = scmp.eq.s32.totalorder %s15, 0
    %p111 = por %p109, %p110
    %p112 = scmp.ne.s32.totalorder %s98, %s99
    %p113 = scmp.eq.s32.totalorder %s16, 7
    %p114 = por %p112, %p113
    %p116 = scmp.ne.s32.totalorder %s99, %s115
    %p117 = scmp.eq.s32.totalorder %s16, 0
    %p118 = por %p116, %p117
    %s119 = ssub.s32 %s18, %s32
    %p120 = scmp.eq.s32.totalorder %s119, 0
    %s122 = sadd.s32 %s121, 1
    %s123 = scalar_select %p120, %s121, %s122
    %p126 = pneg %p120
    %p127 = scmp.eq.s32.totalorder %s10, 7
    %p128 = por %p126, %p127
    %p129 = scmp.ne.s32.totalorder %s121, %s124
    %p130 = scmp.eq.s32.totalorder %s10, 0
    %p131 = por %p129, %p130
    %p132 = scmp.ne.s32.totalorder %s121, %s124
    %p133 = scmp.eq.s32.totalorder %s15, 7
    %p134 = por %p132, %p133
    %p135 = scmp.ne.s32.totalorder %s124, %s125
    %p136 = scmp.eq.s32.totalorder %s15, 0
    %p137 = por %p135, %p136
    %p138 = scmp.ne.s32.totalorder %s124, %s125
    %p139 = scmp.eq.s32.totalorder %s16, 7
    %p140 = por %p138, %p139
    %p142 = scmp.ne.s32.totalorder %s125, %s141
    %p143 = scmp.eq.s32.totalorder %s16, 0
    %p144 = por %p142, %p143
    %s145 = ssub.s32 %s17, %s36
    %s146 = ssub.s32 %s18, %s32
    %s147 = sor.u32 %s145, %s146
    %p148 = scmp.eq.s32.totalorder %s147, 0
    %s150 = sadd.s32 %s149, 1
    %s151 = scalar_select %p148, %s149, %s150
    %p154 = pneg %p148
    %p155 = scmp.eq.s32.totalorder %s10, 7
    %p156 = por %p154, %p155
    %p157 = scmp.ne.s32.totalorder %s149, %s152
    %p158 = scmp.eq.s32.totalorder %s10, 0
    %p159 = por %p157, %p158
    %p160 = scmp.ne.s32.totalorder %s149, %s152
    %p161 = scmp.eq.s32.totalorder %s15, 7
    %p162 = por %p160, %p161
    %p163 = scmp.ne.s32.totalorder %s152, %s153
    %p164 = scmp.eq.s32.totalorder %s15, 0
    %p165 = por %p163, %p164
    %p166 = scmp.ne.s32.totalorder %s152, %s153
    %p167 = scmp.eq.s32.totalorder %s16, 7
    %p168 = por %p166, %p167
    %p170 = scmp.ne.s32.totalorder %s153, %s169
    %p171 = scmp.eq.s32.totalorder %s16, 0
    %p172 = por %p170, %p171
    %p173 = scmp.le.s32.totalorder 1, %s10
    %p174 = scmp.lt.s32.totalorder %s10, 9
    %p175 = pnand %p173, %p174
    %p176 = pneg %p175
    // Predicated region
    $region9: #{resnet_generator_forward.10} parent=5 // pred_check
      _
    $region10: #{resnet_generator_forward.10} parent=5 // pred_check_branch
      %178 = sbr.rel (%p175) target = $region12
    $region11: #{resnet_generator_forward.10} parent=5 // pred_region
      %s179 = ssub.s32 %s10, 1
      // Predicated region
      $region13: #{resnet_generator_forward.10} parent=11 // pred_check
        %p180 = pneg %p85
      $region14: #{resnet_generator_forward.10} parent=11 // pred_check_branch
        %182 = sbr.rel (%p180) target = $region16
      $region15: #{resnet_generator_forward.10} parent=11 // pred_region
        %s183 = smul.u32 32, %s22
        %p184 = scmp.lt.s32.totalorder %s183, 31
        %s185 = scalar_select %p184, %s183, 31
        %p186 = scmp.lt.s32.totalorder %s21, 0
        %s187 = scalar_select %p186, %s21, 0
        %s188 = sadd.s32 %s187, %s185
        %s189 = smul.addr %s188, 4
        %s190 = scalar_lea.vmem %s1, %s189
        %s191 = smul.u32 32, %s22
      $region16: #{resnet_generator_forward.10} parent=11 // pred_fallthru
        _
      // Predicated region
      $region17: #{resnet_generator_forward.10} parent=11 // pred_check
        %p192 = pneg %p111
      $region18: #{resnet_generator_forward.10} parent=11 // pred_check_branch
        %194 = sbr.rel (%p192) target = $region20
      $region19: #{resnet_generator_forward.10} parent=11 // pred_region
        %p195 = scmp.lt.s32.totalorder %s21, 0
        %s196 = scalar_select %p195, %s21, 0
        %s197 = scalar_lea.vmem %s2, %s196
      $region20: #{resnet_generator_forward.10} parent=11 // pred_fallthru
        _
      // Predicated region
      $region21: #{resnet_generator_forward.10} parent=11 // pred_check
        %p198 = pneg %p137
      $region22: #{resnet_generator_forward.10} parent=11 // pred_check_branch
        %200 = sbr.rel (%p198) target = $region24
      $region23: #{resnet_generator_forward.10} parent=11 // pred_region
        %p201 = scmp.lt.s32.totalorder %s21, 0
        %s202 = scalar_select %p201, %s21, 0
        %s203 = scalar_lea.vmem %s3, %s202
      $region24: #{resnet_generator_forward.10} parent=11 // pred_fallthru
        _
    $region12: #{resnet_generator_forward.10} parent=5 // pred_fallthru
      _
    %p204 = scmp.lt.s32.totalorder %s10, 8
    // Predicated region
    $region25: #{resnet_generator_forward.10} parent=5 // pred_check
      %p205 = pneg %p204
    $region26: #{resnet_generator_forward.10} parent=5 // pred_check_branch
      %207 = sbr.rel (%p205) target = $region28
    $region27: #{resnet_generator_forward.10} parent=5 // pred_region
      // Predicated region
      $region29: #{resnet_generator_forward.10} parent=27 // pred_check
        %p208 = pneg %p51
      $region30: #{resnet_generator_forward.10} parent=27 // pred_check_branch
        %210 = sbr.rel (%p208) target = $region32
      $region31: #{resnet_generator_forward.10} parent=27 // pred_region
        %s211 = smul.u32 32, %s17
        %s212 = smul.u32 2, %s19
        %p213 = scmp.lt.s32.totalorder %s211, 255
        %s214 = scalar_select %p213, %s211, 255
        %p215 = scmp.lt.s32.totalorder %s212, 1
        %s216 = scalar_select %p215, %s212, 1
        %s217 = smul.addr %s214, 2
        %s218 = sadd.s32 %s216, %s217
        %s219 = smul.addr %s218, 4
        %s220 = scalar_lea.vmem %s0, %s219
        %s221 = smul.u32 32, %s17
        %s222 = smul.u32 2, %s19
      $region32: #{resnet_generator_forward.10} parent=27 // pred_fallthru
        _
    $region28: #{resnet_generator_forward.10} parent=5 // pred_fallthru
      _
    %p223 = scmp.le.s32.totalorder 1, %s10
    %p224 = scmp.lt.s32.totalorder %s10, 9
    %p225 = pnand %p223, %p224
    %p226 = pneg %p225
    // Predicated region
    $region33: #{resnet_generator_forward.10} parent=5 // pred_check
      _
    $region34: #{resnet_generator_forward.10} parent=5 // pred_check_branch
      %228 = sbr.rel (%p225) target = $region36
    $region35: #{resnet_generator_forward.10} parent=5 // pred_region
      %s229 = ssub.s32 %s10, 1
      %s230 = smul.u32 32, %s20
      %s231 = smul.u32 2, %s22
      %p232 = scmp.lt.s32.totalorder %s230, 255
      %s233 = scalar_select %p232, %s230, 255
      %p234 = scmp.lt.s32.totalorder %s231, 1
      %s235 = scalar_select %p234, %s231, 1
      %s236 = smul.addr %s233, 2
      %s237 = sadd.s32 %s235, %s236
      %s238 = smul.addr %s237, 4
      %s239 = scalar_lea.vmem %s0, %s238
      %p240 = pneg %p57
      %p241 = pneg %p54
      %s242 = smul.u32 32, %s22
      %p243 = scmp.lt.s32.totalorder %s242, 31
      %s244 = scalar_select %p243, %s242, 31
      %p245 = scmp.lt.s32.totalorder %s21, 0
      %s246 = scalar_select %p245, %s21, 0
      %s247 = sadd.s32 %s246, %s244
      %s248 = smul.addr %s247, 4
      %s249 = scalar_lea.vmem %s1, %s248
      %p250 = pneg %p85
      %p251 = pneg %p82
      %p252 = scmp.lt.s32.totalorder %s21, 0
      %s253 = scalar_select %p252, %s21, 0
      %s254 = scalar_lea.vmem %s2, %s253
      %p255 = pneg %p111
      %p256 = pneg %p108
      %p257 = scmp.lt.s32.totalorder %s21, 0
      %s258 = scalar_select %p257, %s21, 0
      %s259 = scalar_lea.vmem %s3, %s258
      %p260 = pneg %p137
      %p261 = pneg %p134
      %p262 = pneg %p165
      %p263 = pneg %p162
      %s264 = smul.u32 32, %s20
      %p265 = scmp.lt.s32.totalorder %s264, 255
      %s266 = scalar_select %p265, %s264, 255
      %p267 = scmp.lt.s32.totalorder %s21, 0
      %s268 = scalar_select %p267, %s21, 0
      %s269 = sadd.s32 %s268, %s266
      %s270 = smul.addr %s269, 8
      %s271 = scalar_lea.vmem %s4, %s270
      %s272 = smul.u32 32, %s20
      %s273 = smul.u32 2, %s22
      %p274 = scmp.lt.s32.totalorder %s272, 255
      %s275 = scalar_select %p274, %s272, 255
      %p276 = scmp.lt.s32.totalorder %s273, 1
      %s277 = scalar_select %p276, %s273, 1
      %s278 = smul.addr %s275, 2
      %s279 = sadd.s32 %s277, %s278
      %s280 = smul.addr %s279, 4
      %s281 = scalar_lea.vmem %s0, %s280
      %s282 = smul.u32 32, %s20
      %s283 = smul.u32 2, %s22
      %s284 = smul.u32 32, %s22
      %p285 = scmp.lt.s32.totalorder %s284, 31
      %s286 = scalar_select %p285, %s284, 31
      %p287 = scmp.lt.s32.totalorder %s21, 0
      %s288 = scalar_select %p287, %s21, 0
      %s289 = sadd.s32 %s288, %s286
      %s290 = smul.addr %s289, 4
      %s291 = scalar_lea.vmem %s1, %s290
      %s292 = smul.u32 32, %s22
      %p293 = scmp.lt.s32.totalorder %s21, 0
      %s294 = scalar_select %p293, %s21, 0
      %s295 = scalar_lea.vmem %s2, %s294
      %p296 = scmp.lt.s32.totalorder %s21, 0
      %s297 = scalar_select %p296, %s21, 0
      %s298 = scalar_lea.vmem %s3, %s297
      %s299 = smul.u32 32, %s20
      %p300 = scmp.lt.s32.totalorder %s299, 255
      %s301 = scalar_select %p300, %s299, 255
      %p302 = scmp.lt.s32.totalorder %s21, 0
      %s303 = scalar_select %p302, %s21, 0
      %s304 = sadd.s32 %s303, %s301
      %s305 = smul.addr %s304, 8
      %s306 = scalar_lea.vmem %s4, %s305
      %s307 = smul.u32 32, %s20
      %p309 = scmp.eq.s32.totalorder %s22, 0
      // Predicated region
      $region37: #{resnet_generator_forward.10} parent=35 // pred_check
        %p310 = pneg %p309
      $region38: #{resnet_generator_forward.10} parent=35 // pred_check_branch
        %312 = sbr.rel (%p310) target = $region40
      $region39: #{resnet_generator_forward.10} parent=35 // pred_region
        %313 = vst [vmem:[#allocation2] sm:$0xff] 0.0
        %314 = vst [vmem:[#allocation2 + $0x8] sm:$0xff] 0.0
        %315 = vst [vmem:[#allocation2 + $0x10] sm:$0xff] 0.0
        %316 = vst [vmem:[#allocation2 + $0x18] sm:$0xff] 0.0
        %317 = vst [vmem:[#allocation2 + $0x20] sm:$0xff] 0.0
        %318 = vst [vmem:[#allocation2 + $0x28] sm:$0xff] 0.0
        %319 = vst [vmem:[#allocation2 + $0x30] sm:$0xff] 0.0
        %320 = vst [vmem:[#allocation2 + $0x38] sm:$0xff] 0.0
        %321 = vst [vmem:[#allocation2 + $0x40] sm:$0xff] 0.0
        %322 = vst [vmem:[#allocation2 + $0x48] sm:$0xff] 0.0
        %323 = vst [vmem:[#allocation2 + $0x50] sm:$0xff] 0.0
        %324 = vst [vmem:[#allocation2 + $0x58] sm:$0xff] 0.0
        %325 = vst [vmem:[#allocation2 + $0x60] sm:$0xff] 0.0
        %326 = vst [vmem:[#allocation2 + $0x68] sm:$0xff] 0.0
        %327 = vst [vmem:[#allocation2 + $0x70] sm:$0xff] 0.0
        %328 = vst [vmem:[#allocation2 + $0x78] sm:$0xff] 0.0
        %329 = vst [vmem:[#allocation2 + $0x80] sm:$0xff] 0.0
        %330 = vst [vmem:[#allocation2 + $0x88] sm:$0xff] 0.0
        %331 = vst [vmem:[#allocation2 + $0x90] sm:$0xff] 0.0
        %332 = vst [vmem:[#allocation2 + $0x98] sm:$0xff] 0.0
        %333 = vst [vmem:[#allocation2 + $0xa0] sm:$0xff] 0.0
        %334 = vst [vmem:[#allocation2 + $0xa8] sm:$0xff] 0.0
        %335 = vst [vmem:[#allocation2 + $0xb0] sm:$0xff] 0.0
        %336 = vst [vmem:[#allocation2 + $0xb8] sm:$0xff] 0.0
        %337 = vst [vmem:[#allocation2 + $0xc0] sm:$0xff] 0.0
        %338 = vst [vmem:[#allocation2 + $0xc8] sm:$0xff] 0.0
        %339 = vst [vmem:[#allocation2 + $0xd0] sm:$0xff] 0.0
        %340 = vst [vmem:[#allocation2 + $0xd8] sm:$0xff] 0.0
        %341 = vst [vmem:[#allocation2 + $0xe0] sm:$0xff] 0.0
        %342 = vst [vmem:[#allocation2 + $0xe8] sm:$0xff] 0.0
        %343 = vst [vmem:[#allocation2 + $0xf0] sm:$0xff] 0.0
        %344 = vst [vmem:[#allocation2 + $0xf8] sm:$0xff] 0.0
      $region40: #{resnet_generator_forward.10} parent=35 // pred_fallthru
        _
      %v345 = vld [vmem:[#allocation2] sm:$0xff]
      %v346 = vld [vmem:[#allocation2 + $0x8] sm:$0xff]
      %v347 = vld [vmem:[#allocation2 + $0x10] sm:$0xff]
      %v348 = vld [vmem:[#allocation2 + $0x18] sm:$0xff]
      %v349 = vld [vmem:[#allocation2 + $0x20] sm:$0xff]
      %v350 = vld [vmem:[#allocation2 + $0x28] sm:$0xff]
      %v351 = vld [vmem:[#allocation2 + $0x30] sm:$0xff]
      %v352 = vld [vmem:[#allocation2 + $0x38] sm:$0xff]
      %v353 = vld [vmem:[#allocation2 + $0x40] sm:$0xff]
      %v354 = vld [vmem:[#allocation2 + $0x48] sm:$0xff]
      %v355 = vld [vmem:[#allocation2 + $0x50] sm:$0xff]
      %v356 = vld [vmem:[#allocation2 + $0x58] sm:$0xff]
      %v357 = vld [vmem:[#allocation2 + $0x60] sm:$0xff]
      %v358 = vld [vmem:[#allocation2 + $0x68] sm:$0xff]
      %v359 = vld [vmem:[#allocation2 + $0x70] sm:$0xff]
      %v360 = vld [vmem:[#allocation2 + $0x78] sm:$0xff]
      %v361 = vld [vmem:[#allocation2 + $0x80] sm:$0xff]
      %v362 = vld [vmem:[#allocation2 + $0x88] sm:$0xff]
      %v363 = vld [vmem:[#allocation2 + $0x90] sm:$0xff]
      %v364 = vld [vmem:[#allocation2 + $0x98] sm:$0xff]
      %v365 = vld [vmem:[#allocation2 + $0xa0] sm:$0xff]
      %v366 = vld [vmem:[#allocation2 + $0xa8] sm:$0xff]
      %v367 = vld [vmem:[#allocation2 + $0xb0] sm:$0xff]
      %v368 = vld [vmem:[#allocation2 + $0xb8] sm:$0xff]
      %v369 = vld [vmem:[#allocation2 + $0xc0] sm:$0xff]
      %v370 = vld [vmem:[#allocation2 + $0xc8] sm:$0xff]
      %v371 = vld [vmem:[#allocation2 + $0xd0] sm:$0xff]
      %v372 = vld [vmem:[#allocation2 + $0xd8] sm:$0xff]
      %v373 = vld [vmem:[#allocation2 + $0xe0] sm:$0xff]
      %v374 = vld [vmem:[#allocation2 + $0xe8] sm:$0xff]
      %v375 = vld [vmem:[#allocation2 + $0xf0] sm:$0xff]
      %v376 = vld [vmem:[#allocation2 + $0xf8] sm:$0xff]
      %v377 = vld [vmem:[%s281] sm:$0xff]
      %v378 = vld [vmem:[%s281 + $0x8] sm:$0xff]
      %v379 = vld [vmem:[%s281 + $0x10] sm:$0xff]
      %v380 = vld [vmem:[%s281 + $0x18] sm:$0xff]
      %v381 = vld [vmem:[%s281 + $0x20] sm:$0xff]
      %v382 = vld [vmem:[%s281 + $0x28] sm:$0xff]
      %v383 = vld [vmem:[%s281 + $0x30] sm:$0xff]
      %v384 = vld [vmem:[%s281 + $0x38] sm:$0xff]
      %v385 = vld [vmem:[%s281 + $0x40] sm:$0xff]
      %v386 = vld [vmem:[%s281 + $0x48] sm:$0xff]
      %v387 = vld [vmem:[%s281 + $0x50] sm:$0xff]
      %v388 = vld [vmem:[%s281 + $0x58] sm:$0xff]
      %v389 = vld [vmem:[%s281 + $0x60] sm:$0xff]
      %v390 = vld [vmem:[%s281 + $0x68] sm:$0xff]
      %v391 = vld [vmem:[%s281 + $0x70] sm:$0xff]
      %v392 = vld [vmem:[%s281 + $0x78] sm:$0xff]
      %v393 = vld [vmem:[%s281 + $0x80] sm:$0xff]
      %v394 = vld [vmem:[%s281 + $0x88] sm:$0xff]
      %v395 = vld [vmem:[%s281 + $0x90] sm:$0xff]
      %v396 = vld [vmem:[%s281 + $0x98] sm:$0xff]
      %v397 = vld [vmem:[%s281 + $0xa0] sm:$0xff]
      %v398 = vld [vmem:[%s281 + $0xa8] sm:$0xff]
      %v399 = vld [vmem:[%s281 + $0xb0] sm:$0xff]
      %v400 = vld [vmem:[%s281 + $0xb8] sm:$0xff]
      %v401 = vld [vmem:[%s281 + $0xc0] sm:$0xff]
      %v402 = vld [vmem:[%s281 + $0xc8] sm:$0xff]
      %v403 = vld [vmem:[%s281 + $0xd0] sm:$0xff]
      %v404 = vld [vmem:[%s281 + $0xd8] sm:$0xff]
      %v405 = vld [vmem:[%s281 + $0xe0] sm:$0xff]
      %v406 = vld [vmem:[%s281 + $0xe8] sm:$0xff]
      %v407 = vld [vmem:[%s281 + $0xf0] sm:$0xff]
      %v408 = vld [vmem:[%s281 + $0xf8] sm:$0xff]
      %v409 = vld [vmem:[%s291] sm:$0xf]
      %v410 = vld [vmem:[%s291 + $0x4] sm:$0xf]
      %v411 = vld [vmem:[%s291 + $0x8] sm:$0xf]
      %v412 = vld [vmem:[%s291 + $0xc] sm:$0xf]
      %v413 = vld [vmem:[%s291 + $0x10] sm:$0xf]
      %v414 = vld [vmem:[%s291 + $0x14] sm:$0xf]
      %v415 = vld [vmem:[%s291 + $0x18] sm:$0xf]
      %v416 = vld [vmem:[%s291 + $0x1c] sm:$0xf]
      %v417 = vld [vmem:[%s291 + $0x20] sm:$0xf]
      %v418 = vld [vmem:[%s291 + $0x24] sm:$0xf]
      %v419 = vld [vmem:[%s291 + $0x28] sm:$0xf]
      %v420 = vld [vmem:[%s291 + $0x2c] sm:$0xf]
      %v421 = vld [vmem:[%s291 + $0x30] sm:$0xf]
      %v422 = vld [vmem:[%s291 + $0x34] sm:$0xf]
      %v423 = vld [vmem:[%s291 + $0x38] sm:$0xf]
      %v424 = vld [vmem:[%s291 + $0x3c] sm:$0xf]
      %v425 = vld [vmem:[%s291 + $0x40] sm:$0xf]
      %v426 = vld [vmem:[%s291 + $0x44] sm:$0xf]
      %v427 = vld [vmem:[%s291 + $0x48] sm:$0xf]
      %v428 = vld [vmem:[%s291 + $0x4c] sm:$0xf]
      %v429 = vld [vmem:[%s291 + $0x50] sm:$0xf]
      %v430 = vld [vmem:[%s291 + $0x54] sm:$0xf]
      %v431 = vld [vmem:[%s291 + $0x58] sm:$0xf]
      %v432 = vld [vmem:[%s291 + $0x5c] sm:$0xf]
      %v433 = vld [vmem:[%s291 + $0x60] sm:$0xf]
      %v434 = vld [vmem:[%s291 + $0x64] sm:$0xf]
      %v435 = vld [vmem:[%s291 + $0x68] sm:$0xf]
      %v436 = vld [vmem:[%s291 + $0x6c] sm:$0xf]
      %v437 = vld [vmem:[%s291 + $0x70] sm:$0xf]
      %v438 = vld [vmem:[%s291 + $0x74] sm:$0xf]
      %v439 = vld [vmem:[%s291 + $0x78] sm:$0xf]
      %v440 = vld [vmem:[%s291 + $0x7c] sm:$0xf]
      %v473 = vunpack.c.l.b16 %v377
      %v474 = vunpack.c.h.b16 %v377
      %v475 = vunpack.c.l.b16 %v378
      %v476 = vunpack.c.h.b16 %v378
      %v477 = vunpack.c.l.b16 %v379
      %v478 = vunpack.c.h.b16 %v379
      %v479 = vunpack.c.l.b16 %v380
      %v480 = vunpack.c.h.b16 %v380
      %v481 = vunpack.c.l.b16 %v381
      %v482 = vunpack.c.h.b16 %v381
      %v483 = vunpack.c.l.b16 %v382
      %v484 = vunpack.c.h.b16 %v382
      %v485 = vunpack.c.l.b16 %v383
      %v486 = vunpack.c.h.b16 %v383
      %v487 = vunpack.c.l.b16 %v384
      %v488 = vunpack.c.h.b16 %v384
      %v489 = vunpack.c.l.b16 %v385
      %v490 = vunpack.c.h.b16 %v385
      %v491 = vunpack.c.l.b16 %v386
      %v492 = vunpack.c.h.b16 %v386
      %v493 = vunpack.c.l.b16 %v387
      %v494 = vunpack.c.h.b16 %v387
      %v495 = vunpack.c.l.b16 %v388
      %v496 = vunpack.c.h.b16 %v388
      %v497 = vunpack.c.l.b16 %v389
      %v498 = vunpack.c.h.b16 %v389
      %v499 = vunpack.c.l.b16 %v390
      %v500 = vunpack.c.h.b16 %v390
      %v501 = vunpack.c.l.b16 %v391
      %v502 = vunpack.c.h.b16 %v391
      %v503 = vunpack.c.l.b16 %v392
      %v504 = vunpack.c.h.b16 %v392
      %v505 = vunpack.c.l.b16 %v393
      %v506 = vunpack.c.h.b16 %v393
      %v507 = vunpack.c.l.b16 %v394
      %v508 = vunpack.c.h.b16 %v394
      %v509 = vunpack.c.l.b16 %v395
      %v510 = vunpack.c.h.b16 %v395
      %v511 = vunpack.c.l.b16 %v396
      %v512 = vunpack.c.h.b16 %v396
      %v513 = vunpack.c.l.b16 %v397
      %v514 = vunpack.c.h.b16 %v397
      %v515 = vunpack.c.l.b16 %v398
      %v516 = vunpack.c.h.b16 %v398
      %v517 = vunpack.c.l.b16 %v399
      %v518 = vunpack.c.h.b16 %v399
      %v519 = vunpack.c.l.b16 %v400
      %v520 = vunpack.c.h.b16 %v400
      %v521 = vunpack.c.l.b16 %v401
      %v522 = vunpack.c.h.b16 %v401
      %v523 = vunpack.c.l.b16 %v402
      %v524 = vunpack.c.h.b16 %v402
      %v525 = vunpack.c.l.b16 %v403
      %v526 = vunpack.c.h.b16 %v403
      %v527 = vunpack.c.l.b16 %v404
      %v528 = vunpack.c.h.b16 %v404
      %v529 = vunpack.c.l.b16 %v405
      %v530 = vunpack.c.h.b16 %v405
      %v531 = vunpack.c.l.b16 %v406
      %v532 = vunpack.c.h.b16 %v406
      %v533 = vunpack.c.l.b16 %v407
      %v534 = vunpack.c.h.b16 %v407
      %v535 = vunpack.c.l.b16 %v408
      %v536 = vunpack.c.h.b16 %v408
      %v537 = vpack.c.b16 %v475, %v473
      %v538 = vpack.c.b16 %v476, %v474
      %v539 = vpack.c.b16 %v479, %v477
      %v540 = vpack.c.b16 %v480, %v478
      %v541 = vpack.c.b16 %v483, %v481
      %v542 = vpack.c.b16 %v484, %v482
      %v543 = vpack.c.b16 %v487, %v485
      %v544 = vpack.c.b16 %v488, %v486
      %v545 = vpack.c.b16 %v491, %v489
      %v546 = vpack.c.b16 %v492, %v490
      %v547 = vpack.c.b16 %v495, %v493
      %v548 = vpack.c.b16 %v496, %v494
      %v549 = vpack.c.b16 %v499, %v497
      %v550 = vpack.c.b16 %v500, %v498
      %v551 = vpack.c.b16 %v503, %v501
      %v552 = vpack.c.b16 %v504, %v502
      %v553 = vpack.c.b16 %v507, %v505
      %v554 = vpack.c.b16 %v508, %v506
      %v555 = vpack.c.b16 %v511, %v509
      %v556 = vpack.c.b16 %v512, %v510
      %v557 = vpack.c.b16 %v515, %v513
      %v558 = vpack.c.b16 %v516, %v514
      %v559 = vpack.c.b16 %v519, %v517
      %v560 = vpack.c.b16 %v520, %v518
      %v561 = vpack.c.b16 %v523, %v521
      %v562 = vpack.c.b16 %v524, %v522
      %v563 = vpack.c.b16 %v527, %v525
      %v564 = vpack.c.b16 %v528, %v526
      %v565 = vpack.c.b16 %v531, %v529
      %v566 = vpack.c.b16 %v532, %v530
      %v567 = vpack.c.b16 %v535, %v533
      %v568 = vpack.c.b16 %v536, %v534
      %v633 = vunpack.c.l.b16 %v409
      %v634 = vunpack.c.l.b16 %v410
      %v635 = vunpack.c.l.b16 %v411
      %v636 = vunpack.c.l.b16 %v412
      %v637 = vunpack.c.l.b16 %v413
      %v638 = vunpack.c.l.b16 %v414
      %v639 = vunpack.c.l.b16 %v415
      %v640 = vunpack.c.l.b16 %v416
      %v641 = vunpack.c.l.b16 %v417
      %v642 = vunpack.c.l.b16 %v418
      %v643 = vunpack.c.l.b16 %v419
      %v644 = vunpack.c.l.b16 %v420
      %v645 = vunpack.c.l.b16 %v421
      %v646 = vunpack.c.l.b16 %v422
      %v647 = vunpack.c.l.b16 %v423
      %v648 = vunpack.c.l.b16 %v424
      %v649 = vunpack.c.l.b16 %v425
      %v650 = vunpack.c.l.b16 %v426
      %v651 = vunpack.c.l.b16 %v427
      %v652 = vunpack.c.l.b16 %v428
      %v653 = vunpack.c.l.b16 %v429
      %v654 = vunpack.c.l.b16 %v430
      %v655 = vunpack.c.l.b16 %v431
      %v656 = vunpack.c.l.b16 %v432
      %v657 = vunpack.c.l.b16 %v433
      %v658 = vunpack.c.l.b16 %v434
      %v659 = vunpack.c.l.b16 %v435
      %v660 = vunpack.c.l.b16 %v436
      %v661 = vunpack.c.l.b16 %v437
      %v662 = vunpack.c.l.b16 %v438
      %v663 = vunpack.c.l.b16 %v439
      %v664 = vunpack.c.l.b16 %v440
      %v665 = vpack.c.b16 %v634, %v633
      %v666 = vpack.c.b16 %v636, %v635
      %v667 = vpack.c.b16 %v638, %v637
      %v668 = vpack.c.b16 %v640, %v639
      %v669 = vpack.c.b16 %v642, %v641
      %v670 = vpack.c.b16 %v644, %v643
      %v671 = vpack.c.b16 %v646, %v645
      %v672 = vpack.c.b16 %v648, %v647
      %v673 = vpack.c.b16 %v650, %v649
      %v674 = vpack.c.b16 %v652, %v651
      %v675 = vpack.c.b16 %v654, %v653
      %v676 = vpack.c.b16 %v656, %v655
      %v677 = vpack.c.b16 %v658, %v657
      %v678 = vpack.c.b16 %v660, %v659
      %v679 = vpack.c.b16 %v662, %v661
      %v680 = vpack.c.b16 %v664, %v663
      %697 = vmatprep.subr.bf16.mxu0 0
      %698 = vmatpush1.bf16.msra.mxu0 %v665
      %699 = vmatprep.subr.bf16.mxu0 0
      %700 = vmatpush1.bf16.msra.mxu0 %v666
      %701 = vmatprep.subr.bf16.mxu0 0
      %702 = vmatpush1.bf16.msra.mxu0 %v667
      %703 = vmatprep.subr.bf16.mxu0 0
      %704 = vmatpush1.bf16.msra.mxu0 %v668
      %705 = vmatprep.subr.bf16.mxu0 0
      %706 = vmatpush1.bf16.msra.mxu0 %v669
      %707 = vmatprep.subr.bf16.mxu0 0
      %708 = vmatpush1.bf16.msra.mxu0 %v670
      %709 = vmatprep.subr.bf16.mxu0 0
      %710 = vmatpush1.bf16.msra.mxu0 %v671
      %711 = vmatprep.subr.bf16.mxu0 0
      %712 = vmatpush1.bf16.msra.mxu0 %v672
      %713 = vmatprep.subr.bf16.mxu0 0
      %714 = vmatpush1.bf16.msra.mxu0 %v673
      %715 = vmatprep.subr.bf16.mxu0 0
      %716 = vmatpush1.bf16.msra.mxu0 %v674
      %717 = vmatprep.subr.bf16.mxu0 0
      %718 = vmatpush1.bf16.msra.mxu0 %v675
      %719 = vmatprep.subr.bf16.mxu0 0
      %720 = vmatpush1.bf16.msra.mxu0 %v676
      %721 = vmatprep.subr.bf16.mxu0 0
      %722 = vmatpush1.bf16.msra.mxu0 %v677
      %723 = vmatprep.subr.bf16.mxu0 0
      %724 = vmatpush1.bf16.msra.mxu0 %v678
      %725 = vmatprep.subr.bf16.mxu0 0
      %726 = vmatpush1.bf16.msra.mxu0 %v679
      %727 = vmatprep.subr.bf16.mxu0 0
      %728 = vmatpush1.bf16.msra.mxu0 %v680
      %729 = vmatprep.mubr.bf16.mxu0 %v538
      %730 = vmatmul.mubr.bf16.gmra.mrb[0].mxu0 %v537
      %v731 = vpop.f32.mrb[0].mxu0
      %v732 = vadd.f32 0.0, %v731
      %v733 = vpop.f32.mrb[0].mxu0
      %v734 = vpop.f32.mrb[0].mxu0
      %v735 = vadd.f32 0.0, %v734
      %v736 = vpop.f32.mrb[0].mxu0
      %737 = vmatprep.mubr.bf16.mxu0 %v540
      %738 = vmatmul.mubr.bf16.gmra.mrb[0].mxu0 %v539
      %v739 = vpop.f32.mrb[0].mxu0
      %v740 = vadd.f32 0.0, %v739
      %v741 = vpop.f32.mrb[0].mxu0
      %v742 = vpop.f32.mrb[0].mxu0
      %v743 = vadd.f32 0.0, %v742
      %v744 = vpop.f32.mrb[0].mxu0
      %745 = vmatprep.mubr.bf16.mxu0 %v542
      %746 = vmatmul.mubr.bf16.gmra.mrb[0].mxu0 %v541
      %v747 = vpop.f32.mrb[0].mxu0
      %v748 = vadd.f32 0.0, %v747
      %v749 = vpop.f32.mrb[0].mxu0
      %v750 = vpop.f32.mrb[0].mxu0
      %v751 = vadd.f32 0.0, %v750
      %v752 = vpop.f32.mrb[0].mxu0
      %753 = vmatprep.mubr.bf16.mxu0 %v544
      %754 = vmatmul.mubr.bf16.gmra.mrb[0].mxu0 %v543
      %v755 = vpop.f32.mrb[0].mxu0
      %v756 = vadd.f32 0.0, %v755
      %v757 = vpop.f32.mrb[0].mxu0
      %v758 = vpop.f32.mrb[0].mxu0
      %v759 = vadd.f32 0.0, %v758
      %v760 = vpop.f32.mrb[0].mxu0
      %761 = vmatprep.mubr.bf16.mxu0 %v546
      %762 = vmatmul.mubr.bf16.gmra.mrb[0].mxu0 %v545
      %v763 = vpop.f32.mrb[0].mxu0
      %v764 = vadd.f32 0.0, %v763
      %v765 = vpop.f32.mrb[0].mxu0
      %v766 = vpop.f32.mrb[0].mxu0
      %v767 = vadd.f32 0.0, %v766
      %v768 = vpop.f32.mrb[0].mxu0
      %769 = vmatprep.mubr.bf16.mxu0 %v548
      %770 = vmatmul.mubr.bf16.gmra.mrb[0].mxu0 %v547
      %v771 = vpop.f32.mrb[0].mxu0
      %v772 = vadd.f32 0.0, %v771
      %v773 = vpop.f32.mrb[0].mxu0
      %v774 = vpop.f32.mrb[0].mxu0
      %v775 = vadd.f32 0.0, %v774
      %v776 = vpop.f32.mrb[0].mxu0
      %777 = vmatprep.mubr.bf16.mxu0 %v550
      %778 = vmatmul.mubr.bf16.gmra.mrb[0].mxu0 %v549
      %v779 = vpop.f32.mrb[0].mxu0
      %v780 = vadd.f32 0.0, %v779
      %v781 = vpop.f32.mrb[0].mxu0
      %v782 = vpop.f32.mrb[0].mxu0
      %v783 = vadd.f32 0.0, %v782
      %v784 = vpop.f32.mrb[0].mxu0
      %785 = vmatprep.mubr.bf16.mxu0 %v552
      %786 = vmatmul.mubr.bf16.gmra.mrb[0].mxu0 %v551
      %v787 = vpop.f32.mrb[0].mxu0
      %v788 = vadd.f32 0.0, %v787
      %v789 = vpop.f32.mrb[0].mxu0
      %v790 = vpop.f32.mrb[0].mxu0
      %v791 = vadd.f32 0.0, %v790
      %v792 = vpop.f32.mrb[0].mxu0
      %793 = vmatprep.mubr.bf16.mxu0 %v554
      %794 = vmatmul.mubr.bf16.gmra.mrb[0].mxu0 %v553
      %v795 = vpop.f32.mrb[0].mxu0
      %v796 = vadd.f32 0.0, %v795
      %v797 = vpop.f32.mrb[0].mxu0
      %v798 = vpop.f32.mrb[0].mxu0
      %v799 = vadd.f32 0.0, %v798
      %v800 = vpop.f32.mrb[0].mxu0
      %801 = vmatprep.mubr.bf16.mxu0 %v556
      %802 = vmatmul.mubr.bf16.gmra.mrb[0].mxu0 %v555
      %v803 = vpop.f32.mrb[0].mxu0
      %v804 = vadd.f32 0.0, %v803
      %v805 = vpop.f32.mrb[0].mxu0
      %v806 = vpop.f32.mrb[0].mxu0
      %v807 = vadd.f32 0.0, %v806
      %v808 = vpop.f32.mrb[0].mxu0
      %809 = vmatprep.mubr.bf16.mxu0 %v558
      %810 = vmatmul.mubr.bf16.gmra.mrb[0].mxu0 %v557
      %v811 = vpop.f32.mrb[0].mxu0
      %v812 = vadd.f32 0.0, %v811
      %v813 = vpop.f32.mrb[0].mxu0
      %v814 = vpop.f32.mrb[0].mxu0
      %v815 = vadd.f32 0.0, %v814
      %v816 = vpop.f32.mrb[0].mxu0
      %817 = vmatprep.mubr.bf16.mxu0 %v560
      %818 = vmatmul.mubr.bf16.gmra.mrb[0].mxu0 %v559
      %v819 = vpop.f32.mrb[0].mxu0
      %v820 = vadd.f32 0.0, %v819
      %v821 = vpop.f32.mrb[0].mxu0
      %v822 = vpop.f32.mrb[0].mxu0
      %v823 = vadd.f32 0.0, %v822
      %v824 = vpop.f32.mrb[0].mxu0
      %825 = vmatprep.mubr.bf16.mxu0 %v562
      %826 = vmatmul.mubr.bf16.gmra.mrb[0].mxu0 %v561
      %v827 = vpop.f32.mrb[0].mxu0
      %v828 = vadd.f32 0.0, %v827
      %v829 = vpop.f32.mrb[0].mxu0
      %v830 = vpop.f32.mrb[0].mxu0
      %v831 = vadd.f32 0.0, %v830
      %v832 = vpop.f32.mrb[0].mxu0
      %833 = vmatprep.mubr.bf16.mxu0 %v564
      %834 = vmatmul.mubr.bf16.gmra.mrb[0].mxu0 %v563
      %v835 = vpop.f32.mrb[0].mxu0
      %v836 = vadd.f32 0.0, %v835
      %v837 = vpop.f32.mrb[0].mxu0
      %v838 = vpop.f32.mrb[0].mxu0
      %v839 = vadd.f32 0.0, %v838
      %v840 = vpop.f32.mrb[0].mxu0
      %841 = vmatprep.mubr.bf16.mxu0 %v566
      %842 = vmatmul.mubr.bf16.gmra.mrb[0].mxu0 %v565
      %v843 = vpop.f32.mrb[0].mxu0
      %v844 = vadd.f32 0.0, %v843
      %v845 = vpop.f32.mrb[0].mxu0
      %v846 = vpop.f32.mrb[0].mxu0
      %v847 = vadd.f32 0.0, %v846
      %v848 = vpop.f32.mrb[0].mxu0
      %849 = vmatprep.mubr.bf16.mxu0 %v568
      %850 = vmatmul.mubr.bf16.gmra.mrb[0].mxu0 %v567
      %v851 = vpop.f32.mrb[0].mxu0
      %v852 = vadd.f32 0.0, %v851
      %v853 = vpop.f32.mrb[0].mxu0
      %v854 = vpop.f32.mrb[0].mxu0
      %v855 = vadd.f32 0.0, %v854
      %v856 = vpop.f32.mrb[0].mxu0
      %857 = vdwg.mxu0
      %v858 = vadd.f32 %v345, %v732
      %v859 = vadd.f32 %v346, %v735
      %v860 = vadd.f32 %v347, %v740
      %v861 = vadd.f32 %v348, %v743
      %v862 = vadd.f32 %v349, %v748
      %v863 = vadd.f32 %v350, %v751
      %v864 = vadd.f32 %v351, %v756
      %v865 = vadd.f32 %v352, %v759
      %v866 = vadd.f32 %v353, %v764
      %v867 = vadd.f32 %v354, %v767
      %v868 = vadd.f32 %v355, %v772
      %v869 = vadd.f32 %v356, %v775
      %v870 = vadd.f32 %v357, %v780
      %v871 = vadd.f32 %v358, %v783
      %v872 = vadd.f32 %v359, %v788
      %v873 = vadd.f32 %v360, %v791
      %v874 = vadd.f32 %v361, %v796
      %v875 = vadd.f32 %v362, %v799
      %v876 = vadd.f32 %v363, %v804
      %v877 = vadd.f32 %v364, %v807
      %v878 = vadd.f32 %v365, %v812
      %v879 = vadd.f32 %v366, %v815
      %v880 = vadd.f32 %v367, %v820
      %v881 = vadd.f32 %v368, %v823
      %v882 = vadd.f32 %v369, %v828
      %v883 = vadd.f32 %v370, %v831
      %v884 = vadd.f32 %v371, %v836
      %v885 = vadd.f32 %v372, %v839
      %v886 = vadd.f32 %v373, %v844
      %v887 = vadd.f32 %v374, %v847
      %v888 = vadd.f32 %v375, %v852
      %v889 = vadd.f32 %v376, %v855
      %890 = vst [vmem:[#allocation2] sm:$0xff] %v858
      %891 = vst [vmem:[#allocation2 + $0x8] sm:$0xff] %v859
      %892 = vst [vmem:[#allocation2 + $0x10] sm:$0xff] %v860
      %893 = vst [vmem:[#allocation2 + $0x18] sm:$0xff] %v861
      %894 = vst [vmem:[#allocation2 + $0x20] sm:$0xff] %v862
      %895 = vst [vmem:[#allocation2 + $0x28] sm:$0xff] %v863
      %896 = vst [vmem:[#allocation2 + $0x30] sm:$0xff] %v864
      %897 = vst [vmem:[#allocation2 + $0x38] sm:$0xff] %v865
      %898 = vst [vmem:[#allocation2 + $0x40] sm:$0xff] %v866
      %899 = vst [vmem:[#allocation2 + $0x48] sm:$0xff] %v867
      %900 = vst [vmem:[#allocation2 + $0x50] sm:$0xff] %v868
      %901 = vst [vmem:[#allocation2 + $0x58] sm:$0xff] %v869
      %902 = vst [vmem:[#allocation2 + $0x60] sm:$0xff] %v870
      %903 = vst [vmem:[#allocation2 + $0x68] sm:$0xff] %v871
      %904 = vst [vmem:[#allocation2 + $0x70] sm:$0xff] %v872
      %905 = vst [vmem:[#allocation2 + $0x78] sm:$0xff] %v873
      %906 = vst [vmem:[#allocation2 + $0x80] sm:$0xff] %v874
      %907 = vst [vmem:[#allocation2 + $0x88] sm:$0xff] %v875
      %908 = vst [vmem:[#allocation2 + $0x90] sm:$0xff] %v876
      %909 = vst [vmem:[#allocation2 + $0x98] sm:$0xff] %v877
      %910 = vst [vmem:[#allocation2 + $0xa0] sm:$0xff] %v878
      %911 = vst [vmem:[#allocation2 + $0xa8] sm:$0xff] %v879
      %912 = vst [vmem:[#allocation2 + $0xb0] sm:$0xff] %v880
      %913 = vst [vmem:[#allocation2 + $0xb8] sm:$0xff] %v881
      %914 = vst [vmem:[#allocation2 + $0xc0] sm:$0xff] %v882
      %915 = vst [vmem:[#allocation2 + $0xc8] sm:$0xff] %v883
      %916 = vst [vmem:[#allocation2 + $0xd0] sm:$0xff] %v884
      %917 = vst [vmem:[#allocation2 + $0xd8] sm:$0xff] %v885
      %918 = vst [vmem:[#allocation2 + $0xe0] sm:$0xff] %v886
      %919 = vst [vmem:[#allocation2 + $0xe8] sm:$0xff] %v887
      %920 = vst [vmem:[#allocation2 + $0xf0] sm:$0xff] %v888
      %921 = vst [vmem:[#allocation2 + $0xf8] sm:$0xff] %v889
      // Predicated region
      $region41: #{resnet_generator_forward.10} parent=35 // pred_check
        %p922 = pneg %p309
      $region42: #{resnet_generator_forward.10} parent=35 // pred_check_branch
        %924 = sbr.rel (%p922) target = $region44
      $region43: #{resnet_generator_forward.10} parent=35 // pred_region
        %v925 = vld [vmem:[#allocation2] sm:$0xff]
        %v926 = vld [vmem:[#allocation2 + $0x8] sm:$0xff]
        %v927 = vld [vmem:[#allocation2 + $0x10] sm:$0xff]
        %v928 = vld [vmem:[#allocation2 + $0x18] sm:$0xff]
        %v929 = vld [vmem:[#allocation2 + $0x20] sm:$0xff]
        %v930 = vld [vmem:[#allocation2 + $0x28] sm:$0xff]
        %v931 = vld [vmem:[#allocation2 + $0x30] sm:$0xff]
        %v932 = vld [vmem:[#allocation2 + $0x38] sm:$0xff]
        %v933 = vld [vmem:[#allocation2 + $0x40] sm:$0xff]
        %v934 = vld [vmem:[#allocation2 + $0x48] sm:$0xff]
        %v935 = vld [vmem:[#allocation2 + $0x50] sm:$0xff]
        %v936 = vld [vmem:[#allocation2 + $0x58] sm:$0xff]
        %v937 = vld [vmem:[#allocation2 + $0x60] sm:$0xff]
        %v938 = vld [vmem:[#allocation2 + $0x68] sm:$0xff]
        %v939 = vld [vmem:[#allocation2 + $0x70] sm:$0xff]
        %v940 = vld [vmem:[#allocation2 + $0x78] sm:$0xff]
        %v941 = vld [vmem:[#allocation2 + $0x80] sm:$0xff]
        %v942 = vld [vmem:[#allocation2 + $0x88] sm:$0xff]
        %v943 = vld [vmem:[#allocation2 + $0x90] sm:$0xff]
        %v944 = vld [vmem:[#allocation2 + $0x98] sm:$0xff]
        %v945 = vld [vmem:[#allocation2 + $0xa0] sm:$0xff]
        %v946 = vld [vmem:[#allocation2 + $0xa8] sm:$0xff]
        %v947 = vld [vmem:[#allocation2 + $0xb0] sm:$0xff]
        %v948 = vld [vmem:[#allocation2 + $0xb8] sm:$0xff]
        %v949 = vld [vmem:[#allocation2 + $0xc0] sm:$0xff]
        %v950 = vld [vmem:[#allocation2 + $0xc8] sm:$0xff]
        %v951 = vld [vmem:[#allocation2 + $0xd0] sm:$0xff]
        %v952 = vld [vmem:[#allocation2 + $0xd8] sm:$0xff]
        %v953 = vld [vmem:[#allocation2 + $0xe0] sm:$0xff]
        %v954 = vld [vmem:[#allocation2 + $0xe8] sm:$0xff]
        %v955 = vld [vmem:[#allocation2 + $0xf0] sm:$0xff]
        %v956 = vld [vmem:[#allocation2 + $0xf8] sm:$0xff]
        %v957 = vld [vmem:[%s295] sm:$0x1]
        %v959 = vlaneseq
        %v960 = vshrl.u32 %v959, 7
        %v961 = vsub.s32 0, %v960
        %v962 = vrot.slane %v957, %v961
        %v964 = vmul.f32 %v925, %v962
        %v965 = vmul.f32 %v926, %v962
        %v966 = vmul.f32 %v927, %v962
        %v967 = vmul.f32 %v928, %v962
        %v968 = vmul.f32 %v929, %v962
        %v969 = vmul.f32 %v930, %v962
        %v970 = vmul.f32 %v931, %v962
        %v971 = vmul.f32 %v932, %v962
        %v972 = vmul.f32 %v933, %v962
        %v973 = vmul.f32 %v934, %v962
        %v974 = vmul.f32 %v935, %v962
        %v975 = vmul.f32 %v936, %v962
        %v976 = vmul.f32 %v937, %v962
        %v977 = vmul.f32 %v938, %v962
        %v978 = vmul.f32 %v939, %v962
        %v979 = vmul.f32 %v940, %v962
        %v980 = vmul.f32 %v941, %v962
        %v981 = vmul.f32 %v942, %v962
        %v982 = vmul.f32 %v943, %v962
        %v983 = vmul.f32 %v944, %v962
        %v984 = vmul.f32 %v945, %v962
        %v985 = vmul.f32 %v946, %v962
        %v986 = vmul.f32 %v947, %v962
        %v987 = vmul.f32 %v948, %v962
        %v988 = vmul.f32 %v949, %v962
        %v989 = vmul.f32 %v950, %v962
        %v990 = vmul.f32 %v951, %v962
        %v991 = vmul.f32 %v952, %v962
        %v992 = vmul.f32 %v953, %v962
        %v993 = vmul.f32 %v954, %v962
        %v994 = vmul.f32 %v955, %v962
        %v995 = vmul.f32 %v956, %v962
        %v996 = vld [vmem:[%s298] sm:$0x1]
        %v998 = vlaneseq
        %v999 = vshrl.u32 %v998, 7
        %v1000 = vsub.s32 0, %v999
        %v1001 = vrot.slane %v996, %v1000
        %v1003 = vadd.f32 %v964, %v1001
        %v1004 = vadd.f32 %v965, %v1001
        %v1005 = vadd.f32 %v966, %v1001
        %v1006 = vadd.f32 %v967, %v1001
        %v1007 = vadd.f32 %v968, %v1001
        %v1008 = vadd.f32 %v969, %v1001
        %v1009 = vadd.f32 %v970, %v1001
        %v1010 = vadd.f32 %v971, %v1001
        %v1011 = vadd.f32 %v972, %v1001
        %v1012 = vadd.f32 %v973, %v1001
        %v1013 = vadd.f32 %v974, %v1001
        %v1014 = vadd.f32 %v975, %v1001
        %v1015 = vadd.f32 %v976, %v1001
        %v1016 = vadd.f32 %v977, %v1001
        %v1017 = vadd.f32 %v978, %v1001
        %v1018 = vadd.f32 %v979, %v1001
        %v1019 = vadd.f32 %v980, %v1001
        %v1020 = vadd.f32 %v981, %v1001
        %v1021 = vadd.f32 %v982, %v1001
        %v1022 = vadd.f32 %v983, %v1001
        %v1023 = vadd.f32 %v984, %v1001
        %v1024 = vadd.f32 %v985, %v1001
        %v1025 = vadd.f32 %v986, %v1001
        %v1026 = vadd.f32 %v987, %v1001
        %v1027 = vadd.f32 %v988, %v1001
        %v1028 = vadd.f32 %v989, %v1001
        %v1029 = vadd.f32 %v990, %v1001
        %v1030 = vadd.f32 %v991, %v1001
        %v1031 = vadd.f32 %v992, %v1001
        %v1032 = vadd.f32 %v993, %v1001
        %v1033 = vadd.f32 %v994, %v1001
        %v1034 = vadd.f32 %v995, %v1001
        %v1035 = vmax.f32 %v1003, 0.0
        %v1036 = vmax.f32 %v1004, 0.0
        %v1037 = vmax.f32 %v1005, 0.0
        %v1038 = vmax.f32 %v1006, 0.0
        %v1039 = vmax.f32 %v1007, 0.0
        %v1040 = vmax.f32 %v1008, 0.0
        %v1041 = vmax.f32 %v1009, 0.0
        %v1042 = vmax.f32 %v1010, 0.0
        %v1043 = vmax.f32 %v1011, 0.0
        %v1044 = vmax.f32 %v1012, 0.0
        %v1045 = vmax.f32 %v1013, 0.0
        %v1046 = vmax.f32 %v1014, 0.0
        %v1047 = vmax.f32 %v1015, 0.0
        %v1048 = vmax.f32 %v1016, 0.0
        %v1049 = vmax.f32 %v1017, 0.0
        %v1050 = vmax.f32 %v1018, 0.0
        %v1051 = vmax.f32 %v1019, 0.0
        %v1052 = vmax.f32 %v1020, 0.0
        %v1053 = vmax.f32 %v1021, 0.0
        %v1054 = vmax.f32 %v1022, 0.0
        %v1055 = vmax.f32 %v1023, 0.0
        %v1056 = vmax.f32 %v1024, 0.0
        %v1057 = vmax.f32 %v1025, 0.0
        %v1058 = vmax.f32 %v1026, 0.0
        %v1059 = vmax.f32 %v1027, 0.0
        %v1060 = vmax.f32 %v1028, 0.0
        %v1061 = vmax.f32 %v1029, 0.0
        %v1062 = vmax.f32 %v1030, 0.0
        %v1063 = vmax.f32 %v1031, 0.0
        %v1064 = vmax.f32 %v1032, 0.0
        %v1065 = vmax.f32 %v1033, 0.0
        %v1066 = vmax.f32 %v1034, 0.0
        %1067 = vst [vmem:[%s306] sm:$0xff] %v1035
        %1068 = vst [vmem:[%s306 + $0x8] sm:$0xff] %v1036
        %1069 = vst [vmem:[%s306 + $0x10] sm:$0xff] %v1037
        %1070 = vst [vmem:[%s306 + $0x18] sm:$0xff] %v1038
        %1071 = vst [vmem:[%s306 + $0x20] sm:$0xff] %v1039
        %1072 = vst [vmem:[%s306 + $0x28] sm:$0xff] %v1040
        %1073 = vst [vmem:[%s306 + $0x30] sm:$0xff] %v1041
        %1074 = vst [vmem:[%s306 + $0x38] sm:$0xff] %v1042
        %1075 = vst [vmem:[%s306 + $0x40] sm:$0xff] %v1043
        %1076 = vst [vmem:[%s306 + $0x48] sm:$0xff] %v1044
        %1077 = vst [vmem:[%s306 + $0x50] sm:$0xff] %v1045
        %1078 = vst [vmem:[%s306 + $0x58] sm:$0xff] %v1046
        %1079 = vst [vmem:[%s306 + $0x60] sm:$0xff] %v1047
        %1080 = vst [vmem:[%s306 + $0x68] sm:$0xff] %v1048
        %1081 = vst [vmem:[%s306 + $0x70] sm:$0xff] %v1049
        %1082 = vst [vmem:[%s306 + $0x78] sm:$0xff] %v1050
        %1083 = vst [vmem:[%s306 + $0x80] sm:$0xff] %v1051
        %1084 = vst [vmem:[%s306 + $0x88] sm:$0xff] %v1052
        %1085 = vst [vmem:[%s306 + $0x90] sm:$0xff] %v1053
        %1086 = vst [vmem:[%s306 + $0x98] sm:$0xff] %v1054
        %1087 = vst [vmem:[%s306 + $0xa0] sm:$0xff] %v1055
        %1088 = vst [vmem:[%s306 + $0xa8] sm:$0xff] %v1056
        %1089 = vst [vmem:[%s306 + $0xb0] sm:$0xff] %v1057
        %1090 = vst [vmem:[%s306 + $0xb8] sm:$0xff] %v1058
        %1091 = vst [vmem:[%s306 + $0xc0] sm:$0xff] %v1059
        %1092 = vst [vmem:[%s306 + $0xc8] sm:$0xff] %v1060
        %1093 = vst [vmem:[%s306 + $0xd0] sm:$0xff] %v1061
        %1094 = vst [vmem:[%s306 + $0xd8] sm:$0xff] %v1062
        %1095 = vst [vmem:[%s306 + $0xe0] sm:$0xff] %v1063
        %1096 = vst [vmem:[%s306 + $0xe8] sm:$0xff] %v1064
        %1097 = vst [vmem:[%s306 + $0xf0] sm:$0xff] %v1065
        %1098 = vst [vmem:[%s306 + $0xf8] sm:$0xff] %v1066
      $region44: #{resnet_generator_forward.10} parent=35 // pred_fallthru
        _
      %s1099 = smul.u32 32, %s20
      %p1100 = scmp.lt.s32.totalorder %s1099, 255
      %s1101 = scalar_select %p1100, %s1099, 255
      %p1102 = scmp.lt.s32.totalorder %s21, 0
      %s1103 = scalar_select %p1102, %s21, 0
      %s1104 = sadd.s32 %s1103, %s1101
      %s1105 = smul.addr %s1104, 8
      %s1106 = scalar_lea.vmem %s4, %s1105
      // Predicated region
      $region45: #{resnet_generator_forward.10} parent=35 // pred_check
        %p1107 = pneg %p162
      $region46: #{resnet_generator_forward.10} parent=35 // pred_check_branch
        %1109 = sbr.rel (%p1107) target = $region48
      $region47: #{resnet_generator_forward.10} parent=35 // pred_region
        %s1110 = smul.u32 32, %s20
      $region48: #{resnet_generator_forward.10} parent=35 // pred_fallthru
        _
    $region36: #{resnet_generator_forward.10} parent=5 // pred_fallthru
      _
    %p1111 = scmp.le.s32.totalorder 2, %s10
    // Predicated region
    $region49: #{resnet_generator_forward.10} parent=5 // pred_check
      %p1112 = pneg %p1111
    $region50: #{resnet_generator_forward.10} parent=5 // pred_check_branch
      %1114 = sbr.rel (%p1112) target = $region52
    $region51: #{resnet_generator_forward.10} parent=5 // pred_region
      %s1115 = ssub.s32 %s10, 2
      // Predicated region
      $region53: #{resnet_generator_forward.10} parent=51 // pred_check
        %p1116 = pneg %p168
      $region54: #{resnet_generator_forward.10} parent=51 // pred_check_branch
        %1118 = sbr.rel (%p1116) target = $region56
      $region55: #{resnet_generator_forward.10} parent=51 // pred_region
        %s1119 = smul.u32 32, %s23
        %p1120 = scmp.lt.s32.totalorder %s1119, 255
        %s1121 = scalar_select %p1120, %s1119, 255
        %p1122 = scmp.lt.s32.totalorder %s24, 0
        %s1123 = scalar_select %p1122, %s24, 0
        %s1124 = sadd.s32 %s1123, %s1121
        %s1125 = smul.addr %s1124, 8
        %s1126 = scalar_lea.vmem %s4, %s1125
      $region56: #{resnet_generator_forward.10} parent=51 // pred_fallthru
        _
    $region52: #{resnet_generator_forward.10} parent=5 // pred_fallthru
      _
  $region6: #{resnet_generator_forward.10} parent=0 // loop_footer
    %s14 = sadd.s32 1, %s10
  $region7: #{resnet_generator_forward.10} parent=0 // loop_footer_branch
    %9 = sbr.rel target = $region3
  $region8: #{resnet_generator_forward.10} parent=0 // loop_exit
    _

// kernel: resnet_generator_forward.11
$region0: #{resnet_generator_forward.11}
  #allocation0 [shape = 'u32[]', space=smem, size = 0x4, offset = 0x4, fixed_abs, tag = 'smem constant byte address 0x4 - core index']
  #allocation1 [shape = 'u32[144,128]{1,0:T(1,128)}', space=vmem, size = 0x12000, scoped, tag = 'internal scratch']
  #allocation2 [shape = 'f32[256,128]{1,0:T(8,128)}', space=vmem, size = 0x20000, scoped, tag = 'scratch operand']
  %s0 = inlined_call_operand.vmem [shape: bf16[512,128], index: 0, kind: input, shape index: {}]
  %s1 = inlined_call_operand.vmem [shape: bf16[128,128], index: 1, kind: input, shape index: {}]
  %s2 = inlined_call_operand.vmem [shape: f32[1,128], index: 2, kind: input, shape index: {}]
  %s3 = inlined_call_operand.vmem [shape: f32[1,128], index: 3, kind: input, shape index: {}]
  %s4 = inlined_call_operand.vmem [shape: f32[512,128], index: 4, kind: output, shape index: {}]
  %s5 = sld [smem:[#allocation0]]
  $region57: #{resnet_generator_forward.11} parent=0
    _
  %s7 = ssub.s32 1, %s5
  %s8 = scalar_select 0, %s7, %s5
  loop: start=0, step=1, limit=4
  $region2: #{resnet_generator_forward.11} parent=0 // loop_pre_header
    _
  $region3: #{resnet_generator_forward.11} parent=0 // loop_header
    %s10 = sphi 0, %s14
    %p11 = scmp.ge.s32.totalorder %s10, 4
    %s17 = sphi 0, %s36
    %s18 = sphi 0, %s32
    %s19 = sphi 0, %s28
    %s20 = sphi 0, %s17
    %s21 = sphi 0, %s18
    %s22 = sphi 0, %s19
    %s23 = sphi 0, %s20
    %s24 = sphi 0, %s21
    %s25 = sphi 0, %s22
    %s41 = sphi 0, %s43
    %s44 = sphi 0, %s41
    %s45 = sphi 0, %s44
    %s61 = sphi 0, %s45
    %s69 = sphi 0, %s71
    %s72 = sphi 0, %s69
    %s73 = sphi 0, %s72
    %s89 = sphi 0, %s73
    %s95 = sphi 0, %s97
    %s98 = sphi 0, %s95
    %s99 = sphi 0, %s98
    %s115 = sphi 0, %s99
    %s121 = sphi 0, %s123
    %s124 = sphi 0, %s121
    %s125 = sphi 0, %s124
    %s141 = sphi 0, %s125
    %s149 = sphi 0, %s151
    %s152 = sphi 0, %s149
    %s153 = sphi 0, %s152
    %s169 = sphi 0, %s153
  $region4: #{resnet_generator_forward.11} parent=0 // loop_header_branch
    %13 = sbr.rel (%p11) target = $region8
  $region5: #{resnet_generator_forward.11} parent=0 // loop_body
    %s15 = ssub.s32 %s10, 1
    %s16 = ssub.s32 %s10, 2
    %s26 = sadd.s32 1, %s19
    %p27 = scmp.ge.s32.totalorder %s26, 1
    %s28 = scalar_select %p27, 0, %s26
    %s29 = sadd.s32 1, %s18
    %s30 = scalar_select %p27, %s29, %s18
    %p31 = scmp.ge.s32.totalorder %s30, 1
    %s32 = scalar_select %p31, 0, %s30
    %s33 = sadd.s32 1, %s17
    %s34 = scalar_select %p31, %s33, %s17
    %p35 = scmp.ge.s32.totalorder %s34, 2
    %s36 = scalar_select %p35, 0, %s34
    %s37 = ssub.s32 %s17, %s36
    %s38 = ssub.s32 %s19, %s28
    %s39 = sor.u32 %s37, %s38
    %p40 = scmp.eq.s32.totalorder %s39, 0
    %s42 = sadd.s32 %s41, 1
    %s43 = scalar_select %p40, %s41, %s42
    %p46 = pneg %p40
    %p47 = scmp.eq.s32.totalorder %s10, 1
    %p48 = por %p46, %p47
    %p49 = scmp.ne.s32.totalorder %s41, %s44
    %p50 = scmp.eq.s32.totalorder %s10, 0
    %p51 = por %p49, %p50
    %p52 = scmp.ne.s32.totalorder %s41, %s44
    %p53 = scmp.eq.s32.totalorder %s15, 1
    %p54 = por %p52, %p53
    %p55 = scmp.ne.s32.totalorder %s44, %s45
    %p56 = scmp.eq.s32.totalorder %s15, 0
    %p57 = por %p55, %p56
    %p58 = scmp.ne.s32.totalorder %s44, %s45
    %p59 = scmp.eq.s32.totalorder %s16, 1
    %p60 = por %p58, %p59
    %p62 = scmp.ne.s32.totalorder %s45, %s61
    %p63 = scmp.eq.s32.totalorder %s16, 0
    %p64 = por %p62, %p63
    %s65 = ssub.s32 %s19, %s28
    %s66 = ssub.s32 %s18, %s32
    %s67 = sor.u32 %s65, %s66
    %p68 = scmp.eq.s32.totalorder %s67, 0
    %s70 = sadd.s32 %s69, 1
    %s71 = scalar_select %p68, %s69, %s70
    %p74 = pneg %p68
    %p75 = scmp.eq.s32.totalorder %s10, 1
    %p76 = por %p74, %p75
    %p77 = scmp.ne.s32.totalorder %s69, %s72
    %p78 = scmp.eq.s32.totalorder %s10, 0
    %p79 = por %p77, %p78
    %p80 = scmp.ne.s32.totalorder %s69, %s72
    %p81 = scmp.eq.s32.totalorder %s15, 1
    %p82 = por %p80, %p81
    %p83 = scmp.ne.s32.totalorder %s72, %s73
    %p84 = scmp.eq.s32.totalorder %s15, 0
    %p85 = por %p83, %p84
    %p86 = scmp.ne.s32.totalorder %s72, %s73
    %p87 = scmp.eq.s32.totalorder %s16, 1
    %p88 = por %p86, %p87
    %p90 = scmp.ne.s32.totalorder %s73, %s89
    %p91 = scmp.eq.s32.totalorder %s16, 0
    %p92 = por %p90, %p91
    %s93 = ssub.s32 %s18, %s32
    %p94 = scmp.eq.s32.totalorder %s93, 0
    %s96 = sadd.s32 %s95, 1
    %s97 = scalar_select %p94, %s95, %s96
    %p100 = pneg %p94
    %p101 = scmp.eq.s32.totalorder %s10, 1
    %p102 = por %p100, %p101
    %p103 = scmp.ne.s32.totalorder %s95, %s98
    %p104 = scmp.eq.s32.totalorder %s10, 0
    %p105 = por %p103, %p104
    %p106 = scmp.ne.s32.totalorder %s95, %s98
    %p107 = scmp.eq.s32.totalorder %s15, 1
    %p108 = por %p106, %p107
    %p109 = scmp.ne.s32.totalorder %s98, %s99
    %p110 = scmp.eq.s32.totalorder %s15, 0
    %p111 = por %p109, %p110
    %p112 = scmp.ne.s32.totalorder %s98, %s99
    %p113 = scmp.eq.s32.totalorder %s16, 1
    %p114 = por %p112, %p113
    %p116 = scmp.ne.s32.totalorder %s99, %s115
    %p117 = scmp.eq.s32.totalorder %s16, 0
    %p118 = por %p116, %p117
    %s119 = ssub.s32 %s18, %s32
    %p120 = scmp.eq.s32.totalorder %s119, 0
    %s122 = sadd.s32 %s121, 1
    %s123 = scalar_select %p120, %s121, %s122
    %p126 = pneg %p120
    %p127 = scmp.eq.s32.totalorder %s10, 1
    %p128 = por %p126, %p127
    %p129 = scmp.ne.s32.totalorder %s121, %s124
    %p130 = scmp.eq.s32.totalorder %s10, 0
    %p131 = por %p129, %p130
    %p132 = scmp.ne.s32.totalorder %s121, %s124
    %p133 = scmp.eq.s32.totalorder %s15, 1
    %p134 = por %p132, %p133
    %p135 = scmp.ne.s32.totalorder %s124, %s125
    %p136 = scmp.eq.s32.totalorder %s15, 0
    %p137 = por %p135, %p136
    %p138 = scmp.ne.s32.totalorder %s124, %s125
    %p139 = scmp.eq.s32.totalorder %s16, 1
    %p140 = por %p138, %p139
    %p142 = scmp.ne.s32.totalorder %s125, %s141
    %p143 = scmp.eq.s32.totalorder %s16, 0
    %p144 = por %p142, %p143
    %s145 = ssub.s32 %s17, %s36
    %s146 = ssub.s32 %s18, %s32
    %s147 = sor.u32 %s145, %s146
    %p148 = scmp.eq.s32.totalorder %s147, 0
    %s150 = sadd.s32 %s149, 1
    %s151 = scalar_select %p148, %s149, %s150
    %p154 = pneg %p148
    %p155 = scmp.eq.s32.totalorder %s10, 1
    %p156 = por %p154, %p155
    %p157 = scmp.ne.s32.totalorder %s149, %s152
    %p158 = scmp.eq.s32.totalorder %s10, 0
    %p159 = por %p157, %p158
    %p160 = scmp.ne.s32.totalorder %s149, %s152
    %p161 = scmp.eq.s32.totalorder %s15, 1
    %p162 = por %p160, %p161
    %p163 = scmp.ne.s32.totalorder %s152, %s153
    %p164 = scmp.eq.s32.totalorder %s15, 0
    %p165 = por %p163, %p164
    %p166 = scmp.ne.s32.totalorder %s152, %s153
    %p167 = scmp.eq.s32.totalorder %s16, 1
    %p168 = por %p166, %p167
    %p170 = scmp.ne.s32.totalorder %s153, %s169
    %p171 = scmp.eq.s32.totalorder %s16, 0
    %p172 = por %p170, %p171
    %p173 = scmp.le.s32.totalorder 1, %s10
    %p174 = scmp.lt.s32.totalorder %s10, 3
    %p175 = pnand %p173, %p174
    %p176 = pneg %p175
    // Predicated region
    $region9: #{resnet_generator_forward.11} parent=5 // pred_check
      _
    $region10: #{resnet_generator_forward.11} parent=5 // pred_check_branch
      %178 = sbr.rel (%p175) target = $region12
    $region11: #{resnet_generator_forward.11} parent=5 // pred_region
      %s179 = ssub.s32 %s10, 1
      // Predicated region
      $region13: #{resnet_generator_forward.11} parent=11 // pred_check
        %p180 = pneg %p85
      $region14: #{resnet_generator_forward.11} parent=11 // pred_check_branch
        %182 = sbr.rel (%p180) target = $region16
      $region15: #{resnet_generator_forward.11} parent=11 // pred_region
        %s183 = smul.u32 16, %s22
        %p184 = scmp.lt.s32.totalorder %s183, 15
        %s185 = scalar_select %p184, %s183, 15
        %p186 = scmp.lt.s32.totalorder %s21, 0
        %s187 = scalar_select %p186, %s21, 0
        %s188 = sadd.s32 %s187, %s185
        %s189 = smul.addr %s188, 4
        %s190 = scalar_lea.vmem %s1, %s189
        %s191 = smul.u32 16, %s22
      $region16: #{resnet_generator_forward.11} parent=11 // pred_fallthru
        _
      // Predicated region
      $region17: #{resnet_generator_forward.11} parent=11 // pred_check
        %p192 = pneg %p111
      $region18: #{resnet_generator_forward.11} parent=11 // pred_check_branch
        %194 = sbr.rel (%p192) target = $region20
      $region19: #{resnet_generator_forward.11} parent=11 // pred_region
        %p195 = scmp.lt.s32.totalorder %s21, 0
        %s196 = scalar_select %p195, %s21, 0
        %s197 = scalar_lea.vmem %s2, %s196
      $region20: #{resnet_generator_forward.11} parent=11 // pred_fallthru
        _
      // Predicated region
      $region21: #{resnet_generator_forward.11} parent=11 // pred_check
        %p198 = pneg %p137
      $region22: #{resnet_generator_forward.11} parent=11 // pred_check_branch
        %200 = sbr.rel (%p198) target = $region24
      $region23: #{resnet_generator_forward.11} parent=11 // pred_region
        %p201 = scmp.lt.s32.totalorder %s21, 0
        %s202 = scalar_select %p201, %s21, 0
        %s203 = scalar_lea.vmem %s3, %s202
      $region24: #{resnet_generator_forward.11} parent=11 // pred_fallthru
        _
    $region12: #{resnet_generator_forward.11} parent=5 // pred_fallthru
      _
    %p204 = scmp.lt.s32.totalorder %s10, 2
    // Predicated region
    $region25: #{resnet_generator_forward.11} parent=5 // pred_check
      %p205 = pneg %p204
    $region26: #{resnet_generator_forward.11} parent=5 // pred_check_branch
      %207 = sbr.rel (%p205) target = $region28
    $region27: #{resnet_generator_forward.11} parent=5 // pred_region
      // Predicated region
      $region29: #{resnet_generator_forward.11} parent=27 // pred_check
        %p208 = pneg %p51
      $region30: #{resnet_generator_forward.11} parent=27 // pred_check_branch
        %210 = sbr.rel (%p208) target = $region32
      $region31: #{resnet_generator_forward.11} parent=27 // pred_region
        %s211 = smul.u32 32, %s17
        %p212 = scmp.lt.s32.totalorder %s211, 63
        %s213 = scalar_select %p212, %s211, 63
        %p214 = scmp.lt.s32.totalorder %s19, 0
        %s215 = scalar_select %p214, %s19, 0
        %s216 = sadd.s32 %s215, %s213
        %s217 = smul.addr %s216, 4
        %s218 = scalar_lea.vmem %s0, %s217
        %s219 = smul.u32 32, %s17
      $region32: #{resnet_generator_forward.11} parent=27 // pred_fallthru
        _
    $region28: #{resnet_generator_forward.11} parent=5 // pred_fallthru
      _
    %p220 = scmp.le.s32.totalorder 1, %s10
    %p221 = scmp.lt.s32.totalorder %s10, 3
    %p222 = pnand %p220, %p221
    %p223 = pneg %p222
    // Predicated region
    $region33: #{resnet_generator_forward.11} parent=5 // pred_check
      _
    $region34: #{resnet_generator_forward.11} parent=5 // pred_check_branch
      %225 = sbr.rel (%p222) target = $region36
    $region35: #{resnet_generator_forward.11} parent=5 // pred_region
      %s226 = ssub.s32 %s10, 1
      %s227 = smul.u32 32, %s20
      %p228 = scmp.lt.s32.totalorder %s227, 63
      %s229 = scalar_select %p228, %s227, 63
      %p230 = scmp.lt.s32.totalorder %s22, 0
      %s231 = scalar_select %p230, %s22, 0
      %s232 = sadd.s32 %s231, %s229
      %s233 = smul.addr %s232, 4
      %s234 = scalar_lea.vmem %s0, %s233
      %p235 = pneg %p57
      %p236 = pneg %p54
      %s237 = smul.u32 16, %s22
      %p238 = scmp.lt.s32.totalorder %s237, 15
      %s239 = scalar_select %p238, %s237, 15
      %p240 = scmp.lt.s32.totalorder %s21, 0
      %s241 = scalar_select %p240, %s21, 0
      %s242 = sadd.s32 %s241, %s239
      %s243 = smul.addr %s242, 4
      %s244 = scalar_lea.vmem %s1, %s243
      %p245 = pneg %p85
      %p246 = pneg %p82
      %p247 = scmp.lt.s32.totalorder %s21, 0
      %s248 = scalar_select %p247, %s21, 0
      %s249 = scalar_lea.vmem %s2, %s248
      %p250 = pneg %p111
      %p251 = pneg %p108
      %p252 = scmp.lt.s32.totalorder %s21, 0
      %s253 = scalar_select %p252, %s21, 0
      %s254 = scalar_lea.vmem %s3, %s253
      %p255 = pneg %p137
      %p256 = pneg %p134
      %p257 = pneg %p165
      %p258 = pneg %p162
      %s259 = smul.u32 32, %s20
      %p260 = scmp.lt.s32.totalorder %s259, 63
      %s261 = scalar_select %p260, %s259, 63
      %p262 = scmp.lt.s32.totalorder %s21, 0
      %s263 = scalar_select %p262, %s21, 0
      %s264 = sadd.s32 %s263, %s261
      %s265 = smul.addr %s264, 8
      %s266 = scalar_lea.vmem %s4, %s265
      %s267 = smul.u32 32, %s20
      %p268 = scmp.lt.s32.totalorder %s267, 63
      %s269 = scalar_select %p268, %s267, 63
      %p270 = scmp.lt.s32.totalorder %s22, 0
      %s271 = scalar_select %p270, %s22, 0
      %s272 = sadd.s32 %s271, %s269
      %s273 = smul.addr %s272, 4
      %s274 = scalar_lea.vmem %s0, %s273
      %s275 = smul.u32 32, %s20
      %s276 = smul.u32 16, %s22
      %p277 = scmp.lt.s32.totalorder %s276, 15
      %s278 = scalar_select %p277, %s276, 15
      %p279 = scmp.lt.s32.totalorder %s21, 0
      %s280 = scalar_select %p279, %s21, 0
      %s281 = sadd.s32 %s280, %s278
      %s282 = smul.addr %s281, 4
      %s283 = scalar_lea.vmem %s1, %s282
      %s284 = smul.u32 16, %s22
      %p285 = scmp.lt.s32.totalorder %s21, 0
      %s286 = scalar_select %p285, %s21, 0
      %s287 = scalar_lea.vmem %s2, %s286
      %p288 = scmp.lt.s32.totalorder %s21, 0
      %s289 = scalar_select %p288, %s21, 0
      %s290 = scalar_lea.vmem %s3, %s289
      %s291 = smul.u32 32, %s20
      %p292 = scmp.lt.s32.totalorder %s291, 63
      %s293 = scalar_select %p292, %s291, 63
      %p294 = scmp.lt.s32.totalorder %s21, 0
      %s295 = scalar_select %p294, %s21, 0
      %s296 = sadd.s32 %s295, %s293
      %s297 = smul.addr %s296, 8
      %s298 = scalar_lea.vmem %s4, %s297
      %s299 = smul.u32 32, %s20
      %p301 = scmp.eq.s32.totalorder %s22, 0
      // Predicated region
      $region37: #{resnet_generator_forward.11} parent=35 // pred_check
        %p302 = pneg %p301
      $region38: #{resnet_generator_forward.11} parent=35 // pred_check_branch
        %304 = sbr.rel (%p302) target = $region40
      $region39: #{resnet_generator_forward.11} parent=35 // pred_region
        %305 = vst [vmem:[#allocation2] sm:$0xff] 0.0
        %306 = vst [vmem:[#allocation2 + $0x8] sm:$0xff] 0.0
        %307 = vst [vmem:[#allocation2 + $0x10] sm:$0xff] 0.0
        %308 = vst [vmem:[#allocation2 + $0x18] sm:$0xff] 0.0
        %309 = vst [vmem:[#allocation2 + $0x20] sm:$0xff] 0.0
        %310 = vst [vmem:[#allocation2 + $0x28] sm:$0xff] 0.0
        %311 = vst [vmem:[#allocation2 + $0x30] sm:$0xff] 0.0
        %312 = vst [vmem:[#allocation2 + $0x38] sm:$0xff] 0.0
        %313 = vst [vmem:[#allocation2 + $0x40] sm:$0xff] 0.0
        %314 = vst [vmem:[#allocation2 + $0x48] sm:$0xff] 0.0
        %315 = vst [vmem:[#allocation2 + $0x50] sm:$0xff] 0.0
        %316 = vst [vmem:[#allocation2 + $0x58] sm:$0xff] 0.0
        %317 = vst [vmem:[#allocation2 + $0x60] sm:$0xff] 0.0
        %318 = vst [vmem:[#allocation2 + $0x68] sm:$0xff] 0.0
        %319 = vst [vmem:[#allocation2 + $0x70] sm:$0xff] 0.0
        %320 = vst [vmem:[#allocation2 + $0x78] sm:$0xff] 0.0
        %321 = vst [vmem:[#allocation2 + $0x80] sm:$0xff] 0.0
        %322 = vst [vmem:[#allocation2 + $0x88] sm:$0xff] 0.0
        %323 = vst [vmem:[#allocation2 + $0x90] sm:$0xff] 0.0
        %324 = vst [vmem:[#allocation2 + $0x98] sm:$0xff] 0.0
        %325 = vst [vmem:[#allocation2 + $0xa0] sm:$0xff] 0.0
        %326 = vst [vmem:[#allocation2 + $0xa8] sm:$0xff] 0.0
        %327 = vst [vmem:[#allocation2 + $0xb0] sm:$0xff] 0.0
        %328 = vst [vmem:[#allocation2 + $0xb8] sm:$0xff] 0.0
        %329 = vst [vmem:[#allocation2 + $0xc0] sm:$0xff] 0.0
        %330 = vst [vmem:[#allocation2 + $0xc8] sm:$0xff] 0.0
        %331 = vst [vmem:[#allocation2 + $0xd0] sm:$0xff] 0.0
        %332 = vst [vmem:[#allocation2 + $0xd8] sm:$0xff] 0.0
        %333 = vst [vmem:[#allocation2 + $0xe0] sm:$0xff] 0.0
        %334 = vst [vmem:[#allocation2 + $0xe8] sm:$0xff] 0.0
        %335 = vst [vmem:[#allocation2 + $0xf0] sm:$0xff] 0.0
        %336 = vst [vmem:[#allocation2 + $0xf8] sm:$0xff] 0.0
      $region40: #{resnet_generator_forward.11} parent=35 // pred_fallthru
        _
      %v337 = vld [vmem:[#allocation2] sm:$0xff]
      %v338 = vld [vmem:[#allocation2 + $0x8] sm:$0xff]
      %v339 = vld [vmem:[#allocation2 + $0x10] sm:$0xff]
      %v340 = vld [vmem:[#allocation2 + $0x18] sm:$0xff]
      %v341 = vld [vmem:[#allocation2 + $0x20] sm:$0xff]
      %v342 = vld [vmem:[#allocation2 + $0x28] sm:$0xff]
      %v343 = vld [vmem:[#allocation2 + $0x30] sm:$0xff]
      %v344 = vld [vmem:[#allocation2 + $0x38] sm:$0xff]
      %v345 = vld [vmem:[#allocation2 + $0x40] sm:$0xff]
      %v346 = vld [vmem:[#allocation2 + $0x48] sm:$0xff]
      %v347 = vld [vmem:[#allocation2 + $0x50] sm:$0xff]
      %v348 = vld [vmem:[#allocation2 + $0x58] sm:$0xff]
      %v349 = vld [vmem:[#allocation2 + $0x60] sm:$0xff]
      %v350 = vld [vmem:[#allocation2 + $0x68] sm:$0xff]
      %v351 = vld [vmem:[#allocation2 + $0x70] sm:$0xff]
      %v352 = vld [vmem:[#allocation2 + $0x78] sm:$0xff]
      %v353 = vld [vmem:[#allocation2 + $0x80] sm:$0xff]
      %v354 = vld [vmem:[#allocation2 + $0x88] sm:$0xff]
      %v355 = vld [vmem:[#allocation2 + $0x90] sm:$0xff]
      %v356 = vld [vmem:[#allocation2 + $0x98] sm:$0xff]
      %v357 = vld [vmem:[#allocation2 + $0xa0] sm:$0xff]
      %v358 = vld [vmem:[#allocation2 + $0xa8] sm:$0xff]
      %v359 = vld [vmem:[#allocation2 + $0xb0] sm:$0xff]
      %v360 = vld [vmem:[#allocation2 + $0xb8] sm:$0xff]
      %v361 = vld [vmem:[#allocation2 + $0xc0] sm:$0xff]
      %v362 = vld [vmem:[#allocation2 + $0xc8] sm:$0xff]
      %v363 = vld [vmem:[#allocation2 + $0xd0] sm:$0xff]
      %v364 = vld [vmem:[#allocation2 + $0xd8] sm:$0xff]
      %v365 = vld [vmem:[#allocation2 + $0xe0] sm:$0xff]
      %v366 = vld [vmem:[#allocation2 + $0xe8] sm:$0xff]
      %v367 = vld [vmem:[#allocation2 + $0xf0] sm:$0xff]
      %v368 = vld [vmem:[#allocation2 + $0xf8] sm:$0xff]
      %v369 = vld [vmem:[%s274] sm:$0xf]
      %v370 = vld [vmem:[%s274 + $0x4] sm:$0xf]
      %v371 = vld [vmem:[%s274 + $0x8] sm:$0xf]
      %v372 = vld [vmem:[%s274 + $0xc] sm:$0xf]
      %v373 = vld [vmem:[%s274 + $0x10] sm:$0xf]
      %v374 = vld [vmem:[%s274 + $0x14] sm:$0xf]
      %v375 = vld [vmem:[%s274 + $0x18] sm:$0xf]
      %v376 = vld [vmem:[%s274 + $0x1c] sm:$0xf]
      %v377 = vld [vmem:[%s274 + $0x20] sm:$0xf]
      %v378 = vld [vmem:[%s274 + $0x24] sm:$0xf]
      %v379 = vld [vmem:[%s274 + $0x28] sm:$0xf]
      %v380 = vld [vmem:[%s274 + $0x2c] sm:$0xf]
      %v381 = vld [vmem:[%s274 + $0x30] sm:$0xf]
      %v382 = vld [vmem:[%s274 + $0x34] sm:$0xf]
      %v383 = vld [vmem:[%s274 + $0x38] sm:$0xf]
      %v384 = vld [vmem:[%s274 + $0x3c] sm:$0xf]
      %v385 = vld [vmem:[%s274 + $0x40] sm:$0xf]
      %v386 = vld [vmem:[%s274 + $0x44] sm:$0xf]
      %v387 = vld [vmem:[%s274 + $0x48] sm:$0xf]
      %v388 = vld [vmem:[%s274 + $0x4c] sm:$0xf]
      %v389 = vld [vmem:[%s274 + $0x50] sm:$0xf]
      %v390 = vld [vmem:[%s274 + $0x54] sm:$0xf]
      %v391 = vld [vmem:[%s274 + $0x58] sm:$0xf]
      %v392 = vld [vmem:[%s274 + $0x5c] sm:$0xf]
      %v393 = vld [vmem:[%s274 + $0x60] sm:$0xf]
      %v394 = vld [vmem:[%s274 + $0x64] sm:$0xf]
      %v395 = vld [vmem:[%s274 + $0x68] sm:$0xf]
      %v396 = vld [vmem:[%s274 + $0x6c] sm:$0xf]
      %v397 = vld [vmem:[%s274 + $0x70] sm:$0xf]
      %v398 = vld [vmem:[%s274 + $0x74] sm:$0xf]
      %v399 = vld [vmem:[%s274 + $0x78] sm:$0xf]
      %v400 = vld [vmem:[%s274 + $0x7c] sm:$0xf]
      %v401 = vld [vmem:[%s283] sm:$0xf]
      %v402 = vld [vmem:[%s283 + $0x4] sm:$0xf]
      %v403 = vld [vmem:[%s283 + $0x8] sm:$0xf]
      %v404 = vld [vmem:[%s283 + $0xc] sm:$0xf]
      %v405 = vld [vmem:[%s283 + $0x10] sm:$0xf]
      %v406 = vld [vmem:[%s283 + $0x14] sm:$0xf]
      %v407 = vld [vmem:[%s283 + $0x18] sm:$0xf]
      %v408 = vld [vmem:[%s283 + $0x1c] sm:$0xf]
      %v409 = vld [vmem:[%s283 + $0x20] sm:$0xf]
      %v410 = vld [vmem:[%s283 + $0x24] sm:$0xf]
      %v411 = vld [vmem:[%s283 + $0x28] sm:$0xf]
      %v412 = vld [vmem:[%s283 + $0x2c] sm:$0xf]
      %v413 = vld [vmem:[%s283 + $0x30] sm:$0xf]
      %v414 = vld [vmem:[%s283 + $0x34] sm:$0xf]
      %v415 = vld [vmem:[%s283 + $0x38] sm:$0xf]
      %v416 = vld [vmem:[%s283 + $0x3c] sm:$0xf]
      %v449 = vunpack.c.l.b16 %v369
      %v450 = vunpack.c.l.b16 %v370
      %v451 = vunpack.c.l.b16 %v371
      %v452 = vunpack.c.l.b16 %v372
      %v453 = vunpack.c.l.b16 %v373
      %v454 = vunpack.c.l.b16 %v374
      %v455 = vunpack.c.l.b16 %v375
      %v456 = vunpack.c.l.b16 %v376
      %v457 = vunpack.c.l.b16 %v377
      %v458 = vunpack.c.l.b16 %v378
      %v459 = vunpack.c.l.b16 %v379
      %v460 = vunpack.c.l.b16 %v380
      %v461 = vunpack.c.l.b16 %v381
      %v462 = vunpack.c.l.b16 %v382
      %v463 = vunpack.c.l.b16 %v383
      %v464 = vunpack.c.l.b16 %v384
      %v465 = vunpack.c.l.b16 %v385
      %v466 = vunpack.c.l.b16 %v386
      %v467 = vunpack.c.l.b16 %v387
      %v468 = vunpack.c.l.b16 %v388
      %v469 = vunpack.c.l.b16 %v389
      %v470 = vunpack.c.l.b16 %v390
      %v471 = vunpack.c.l.b16 %v391
      %v472 = vunpack.c.l.b16 %v392
      %v473 = vunpack.c.l.b16 %v393
      %v474 = vunpack.c.l.b16 %v394
      %v475 = vunpack.c.l.b16 %v395
      %v476 = vunpack.c.l.b16 %v396
      %v477 = vunpack.c.l.b16 %v397
      %v478 = vunpack.c.l.b16 %v398
      %v479 = vunpack.c.l.b16 %v399
      %v480 = vunpack.c.l.b16 %v400
      %v481 = vpack.c.b16 %v450, %v449
      %v482 = vpack.c.b16 %v452, %v451
      %v483 = vpack.c.b16 %v454, %v453
      %v484 = vpack.c.b16 %v456, %v455
      %v485 = vpack.c.b16 %v458, %v457
      %v486 = vpack.c.b16 %v460, %v459
      %v487 = vpack.c.b16 %v462, %v461
      %v488 = vpack.c.b16 %v464, %v463
      %v489 = vpack.c.b16 %v466, %v465
      %v490 = vpack.c.b16 %v468, %v467
      %v491 = vpack.c.b16 %v470, %v469
      %v492 = vpack.c.b16 %v472, %v471
      %v493 = vpack.c.b16 %v474, %v473
      %v494 = vpack.c.b16 %v476, %v475
      %v495 = vpack.c.b16 %v478, %v477
      %v496 = vpack.c.b16 %v480, %v479
      %v529 = vunpack.c.l.b16 %v401
      %v530 = vunpack.c.l.b16 %v402
      %v531 = vunpack.c.l.b16 %v403
      %v532 = vunpack.c.l.b16 %v404
      %v533 = vunpack.c.l.b16 %v405
      %v534 = vunpack.c.l.b16 %v406
      %v535 = vunpack.c.l.b16 %v407
      %v536 = vunpack.c.l.b16 %v408
      %v537 = vunpack.c.l.b16 %v409
      %v538 = vunpack.c.l.b16 %v410
      %v539 = vunpack.c.l.b16 %v411
      %v540 = vunpack.c.l.b16 %v412
      %v541 = vunpack.c.l.b16 %v413
      %v542 = vunpack.c.l.b16 %v414
      %v543 = vunpack.c.l.b16 %v415
      %v544 = vunpack.c.l.b16 %v416
      %v545 = vpack.c.b16 %v530, %v529
      %v546 = vpack.c.b16 %v532, %v531
      %v547 = vpack.c.b16 %v534, %v533
      %v548 = vpack.c.b16 %v536, %v535
      %v549 = vpack.c.b16 %v538, %v537
      %v550 = vpack.c.b16 %v540, %v539
      %v551 = vpack.c.b16 %v542, %v541
      %v552 = vpack.c.b16 %v544, %v543
      %561 = vmatprep.subr.bf16.mxu0 0
      %562 = vmatpush1.bf16.msra.mxu0 %v545
      %563 = vmatprep.subr.bf16.mxu0 0
      %564 = vmatpush1.bf16.msra.mxu0 %v546
      %565 = vmatprep.subr.bf16.mxu0 0
      %566 = vmatpush1.bf16.msra.mxu0 %v547
      %567 = vmatprep.subr.bf16.mxu0 0
      %568 = vmatpush1.bf16.msra.mxu0 %v548
      %569 = vmatprep.subr.bf16.mxu0 0
      %570 = vmatpush1.bf16.msra.mxu0 %v549
      %571 = vmatprep.subr.bf16.mxu0 0
      %572 = vmatpush1.bf16.msra.mxu0 %v550
      %573 = vmatprep.subr.bf16.mxu0 0
      %574 = vmatpush1.bf16.msra.mxu0 %v551
      %575 = vmatprep.subr.bf16.mxu0 0
      %576 = vmatpush1.bf16.msra.mxu0 %v552
      %577 = vmatprep.subr.bf16.mxu0 0
      %578 = vmatpush1.bf16.msra.mxu0 0
      %579 = vmatprep.subr.bf16.mxu0 0
      %580 = vmatpush1.bf16.msra.mxu0 0
      %581 = vmatprep.subr.bf16.mxu0 0
      %582 = vmatpush1.bf16.msra.mxu0 0
      %583 = vmatprep.subr.bf16.mxu0 0
      %584 = vmatpush1.bf16.msra.mxu0 0
      %585 = vmatprep.subr.bf16.mxu0 0
      %586 = vmatpush1.bf16.msra.mxu0 0
      %587 = vmatprep.subr.bf16.mxu0 0
      %588 = vmatpush1.bf16.msra.mxu0 0
      %589 = vmatprep.subr.bf16.mxu0 0
      %590 = vmatpush1.bf16.msra.mxu0 0
      %591 = vmatprep.subr.bf16.mxu0 0
      %592 = vmatpush1.bf16.msra.mxu0 0
      %593 = vmatprep.mubr.bf16.mxu0 0
      %594 = vmatmul.mubr.bf16.gmra.mrb[0].mxu0 %v481
      %v595 = vpop.f32.mrb[0].mxu0
      %v596 = vadd.f32 0.0, %v595
      %v597 = vpop.f32.mrb[0].mxu0
      %v598 = vpop.f32.mrb[0].mxu0
      %v599 = vadd.f32 0.0, %v598
      %v600 = vpop.f32.mrb[0].mxu0
      %601 = vmatprep.mubr.bf16.mxu0 0
      %602 = vmatmul.mubr.bf16.gmra.mrb[0].mxu0 %v482
      %v603 = vpop.f32.mrb[0].mxu0
      %v604 = vadd.f32 0.0, %v603
      %v605 = vpop.f32.mrb[0].mxu0
      %v606 = vpop.f32.mrb[0].mxu0
      %v607 = vadd.f32 0.0, %v606
      %v608 = vpop.f32.mrb[0].mxu0
      %609 = vmatprep.mubr.bf16.mxu0 0
      %610 = vmatmul.mubr.bf16.gmra.mrb[0].mxu0 %v483
      %v611 = vpop.f32.mrb[0].mxu0
      %v612 = vadd.f32 0.0, %v611
      %v613 = vpop.f32.mrb[0].mxu0
      %v614 = vpop.f32.mrb[0].mxu0
      %v615 = vadd.f32 0.0, %v614
      %v616 = vpop.f32.mrb[0].mxu0
      %617 = vmatprep.mubr.bf16.mxu0 0
      %618 = vmatmul.mubr.bf16.gmra.mrb[0].mxu0 %v484
      %v619 = vpop.f32.mrb[0].mxu0
      %v620 = vadd.f32 0.0, %v619
      %v621 = vpop.f32.mrb[0].mxu0
      %v622 = vpop.f32.mrb[0].mxu0
      %v623 = vadd.f32 0.0, %v622
      %v624 = vpop.f32.mrb[0].mxu0
      %625 = vmatprep.mubr.bf16.mxu0 0
      %626 = vmatmul.mubr.bf16.gmra.mrb[0].mxu0 %v485
      %v627 = vpop.f32.mrb[0].mxu0
      %v628 = vadd.f32 0.0, %v627
      %v629 = vpop.f32.mrb[0].mxu0
      %v630 = vpop.f32.mrb[0].mxu0
      %v631 = vadd.f32 0.0, %v630
      %v632 = vpop.f32.mrb[0].mxu0
      %633 = vmatprep.mubr.bf16.mxu0 0
      %634 = vmatmul.mubr.bf16.gmra.mrb[0].mxu0 %v486
      %v635 = vpop.f32.mrb[0].mxu0
      %v636 = vadd.f32 0.0, %v635
      %v637 = vpop.f32.mrb[0].mxu0
      %v638 = vpop.f32.mrb[0].mxu0
      %v639 = vadd.f32 0.0, %v638
      %v640 = vpop.f32.mrb[0].mxu0
      %641 = vmatprep.mubr.bf16.mxu0 0
      %642 = vmatmul.mubr.bf16.gmra.mrb[0].mxu0 %v487
      %v643 = vpop.f32.mrb[0].mxu0
      %v644 = vadd.f32 0.0, %v643
      %v645 = vpop.f32.mrb[0].mxu0
      %v646 = vpop.f32.mrb[0].mxu0
      %v647 = vadd.f32 0.0, %v646
      %v648 = vpop.f32.mrb[0].mxu0
      %649 = vmatprep.mubr.bf16.mxu0 0
      %650 = vmatmul.mubr.bf16.gmra.mrb[0].mxu0 %v488
      %v651 = vpop.f32.mrb[0].mxu0
      %v652 = vadd.f32 0.0, %v651
      %v653 = vpop.f32.mrb[0].mxu0
      %v654 = vpop.f32.mrb[0].mxu0
      %v655 = vadd.f32 0.0, %v654
      %v656 = vpop.f32.mrb[0].mxu0
      %657 = vmatprep.mubr.bf16.mxu0 0
      %658 = vmatmul.mubr.bf16.gmra.mrb[0].mxu0 %v489
      %v659 = vpop.f32.mrb[0].mxu0
      %v660 = vadd.f32 0.0, %v659
      %v661 = vpop.f32.mrb[0].mxu0
      %v662 = vpop.f32.mrb[0].mxu0
      %v663 = vadd.f32 0.0, %v662
      %v664 = vpop.f32.mrb[0].mxu0
      %665 = vmatprep.mubr.bf16.mxu0 0
      %666 = vmatmul.mubr.bf16.gmra.mrb[0].mxu0 %v490
      %v667 = vpop.f32.mrb[0].mxu0
      %v668 = vadd.f32 0.0, %v667
      %v669 = vpop.f32.mrb[0].mxu0
      %v670 = vpop.f32.mrb[0].mxu0
      %v671 = vadd.f32 0.0, %v670
      %v672 = vpop.f32.mrb[0].mxu0
      %673 = vmatprep.mubr.bf16.mxu0 0
      %674 = vmatmul.mubr.bf16.gmra.mrb[0].mxu0 %v491
      %v675 = vpop.f32.mrb[0].mxu0
      %v676 = vadd.f32 0.0, %v675
      %v677 = vpop.f32.mrb[0].mxu0
      %v678 = vpop.f32.mrb[0].mxu0
      %v679 = vadd.f32 0.0, %v678
      %v680 = vpop.f32.mrb[0].mxu0
      %681 = vmatprep.mubr.bf16.mxu0 0
      %682 = vmatmul.mubr.bf16.gmra.mrb[0].mxu0 %v492
      %v683 = vpop.f32.mrb[0].mxu0
      %v684 = vadd.f32 0.0, %v683
      %v685 = vpop.f32.mrb[0].mxu0
      %v686 = vpop.f32.mrb[0].mxu0
      %v687 = vadd.f32 0.0, %v686
      %v688 = vpop.f32.mrb[0].mxu0
      %689 = vmatprep.mubr.bf16.mxu0 0
      %690 = vmatmul.mubr.bf16.gmra.mrb[0].mxu0 %v493
      %v691 = vpop.f32.mrb[0].mxu0
      %v692 = vadd.f32 0.0, %v691
      %v693 = vpop.f32.mrb[0].mxu0
      %v694 = vpop.f32.mrb[0].mxu0
      %v695 = vadd.f32 0.0, %v694
      %v696 = vpop.f32.mrb[0].mxu0
      %697 = vmatprep.mubr.bf16.mxu0 0
      %698 = vmatmul.mubr.bf16.gmra.mrb[0].mxu0 %v494
      %v699 = vpop.f32.mrb[0].mxu0
      %v700 = vadd.f32 0.0, %v699
      %v701 = vpop.f32.mrb[0].mxu0
      %v702 = vpop.f32.mrb[0].mxu0
      %v703 = vadd.f32 0.0, %v702
      %v704 = vpop.f32.mrb[0].mxu0
      %705 = vmatprep.mubr.bf16.mxu0 0
      %706 = vmatmul.mubr.bf16.gmra.mrb[0].mxu0 %v495
      %v707 = vpop.f32.mrb[0].mxu0
      %v708 = vadd.f32 0.0, %v707
      %v709 = vpop.f32.mrb[0].mxu0
      %v710 = vpop.f32.mrb[0].mxu0
      %v711 = vadd.f32 0.0, %v710
      %v712 = vpop.f32.mrb[0].mxu0
      %713 = vmatprep.mubr.bf16.mxu0 0
      %714 = vmatmul.mubr.bf16.gmra.mrb[0].mxu0 %v496
      %v715 = vpop.f32.mrb[0].mxu0
      %v716 = vadd.f32 0.0, %v715
      %v717 = vpop.f32.mrb[0].mxu0
      %v718 = vpop.f32.mrb[0].mxu0
      %v719 = vadd.f32 0.0, %v718
      %v720 = vpop.f32.mrb[0].mxu0
      %721 = vdwg.mxu0
      %v722 = vadd.f32 %v337, %v596
      %v723 = vadd.f32 %v338, %v599
      %v724 = vadd.f32 %v339, %v604
      %v725 = vadd.f32 %v340, %v607
      %v726 = vadd.f32 %v341, %v612
      %v727 = vadd.f32 %v342, %v615
      %v728 = vadd.f32 %v343, %v620
      %v729 = vadd.f32 %v344, %v623
      %v730 = vadd.f32 %v345, %v628
      %v731 = vadd.f32 %v346, %v631
      %v732 = vadd.f32 %v347, %v636
      %v733 = vadd.f32 %v348, %v639
      %v734 = vadd.f32 %v349, %v644
      %v735 = vadd.f32 %v350, %v647
      %v736 = vadd.f32 %v351, %v652
      %v737 = vadd.f32 %v352, %v655
      %v738 = vadd.f32 %v353, %v660
      %v739 = vadd.f32 %v354, %v663
      %v740 = vadd.f32 %v355, %v668
      %v741 = vadd.f32 %v356, %v671
      %v742 = vadd.f32 %v357, %v676
      %v743 = vadd.f32 %v358, %v679
      %v744 = vadd.f32 %v359, %v684
      %v745 = vadd.f32 %v360, %v687
      %v746 = vadd.f32 %v361, %v692
      %v747 = vadd.f32 %v362, %v695
      %v748 = vadd.f32 %v363, %v700
      %v749 = vadd.f32 %v364, %v703
      %v750 = vadd.f32 %v365, %v708
      %v751 = vadd.f32 %v366, %v711
      %v752 = vadd.f32 %v367, %v716
      %v753 = vadd.f32 %v368, %v719
      %754 = vst [vmem:[#allocation2] sm:$0xff] %v722
      %755 = vst [vmem:[#allocation2 + $0x8] sm:$0xff] %v723
      %756 = vst [vmem:[#allocation2 + $0x10] sm:$0xff] %v724
      %757 = vst [vmem:[#allocation2 + $0x18] sm:$0xff] %v725
      %758 = vst [vmem:[#allocation2 + $0x20] sm:$0xff] %v726
      %759 = vst [vmem:[#allocation2 + $0x28] sm:$0xff] %v727
      %760 = vst [vmem:[#allocation2 + $0x30] sm:$0xff] %v728
      %761 = vst [vmem:[#allocation2 + $0x38] sm:$0xff] %v729
      %762 = vst [vmem:[#allocation2 + $0x40] sm:$0xff] %v730
      %763 = vst [vmem:[#allocation2 + $0x48] sm:$0xff] %v731
      %764 = vst [vmem:[#allocation2 + $0x50] sm:$0xff] %v732
      %765 = vst [vmem:[#allocation2 + $0x58] sm:$0xff] %v733
      %766 = vst [vmem:[#allocation2 + $0x60] sm:$0xff] %v734
      %767 = vst [vmem:[#allocation2 + $0x68] sm:$0xff] %v735
      %768 = vst [vmem:[#allocation2 + $0x70] sm:$0xff] %v736
      %769 = vst [vmem:[#allocation2 + $0x78] sm:$0xff] %v737
      %770 = vst [vmem:[#allocation2 + $0x80] sm:$0xff] %v738
      %771 = vst [vmem:[#allocation2 + $0x88] sm:$0xff] %v739
      %772 = vst [vmem:[#allocation2 + $0x90] sm:$0xff] %v740
      %773 = vst [vmem:[#allocation2 + $0x98] sm:$0xff] %v741
      %774 = vst [vmem:[#allocation2 + $0xa0] sm:$0xff] %v742
      %775 = vst [vmem:[#allocation2 + $0xa8] sm:$0xff] %v743
      %776 = vst [vmem:[#allocation2 + $0xb0] sm:$0xff] %v744
      %777 = vst [vmem:[#allocation2 + $0xb8] sm:$0xff] %v745
      %778 = vst [vmem:[#allocation2 + $0xc0] sm:$0xff] %v746
      %779 = vst [vmem:[#allocation2 + $0xc8] sm:$0xff] %v747
      %780 = vst [vmem:[#allocation2 + $0xd0] sm:$0xff] %v748
      %781 = vst [vmem:[#allocation2 + $0xd8] sm:$0xff] %v749
      %782 = vst [vmem:[#allocation2 + $0xe0] sm:$0xff] %v750
      %783 = vst [vmem:[#allocation2 + $0xe8] sm:$0xff] %v751
      %784 = vst [vmem:[#allocation2 + $0xf0] sm:$0xff] %v752
      %785 = vst [vmem:[#allocation2 + $0xf8] sm:$0xff] %v753
      // Predicated region
      $region41: #{resnet_generator_forward.11} parent=35 // pred_check
        %p786 = pneg %p301
      $region42: #{resnet_generator_forward.11} parent=35 // pred_check_branch
        %788 = sbr.rel (%p786) target = $region44
      $region43: #{resnet_generator_forward.11} parent=35 // pred_region
        %v789 = vld [vmem:[#allocation2] sm:$0xff]
        %v790 = vld [vmem:[#allocation2 + $0x8] sm:$0xff]
        %v791 = vld [vmem:[#allocation2 + $0x10] sm:$0xff]
        %v792 = vld [vmem:[#allocation2 + $0x18] sm:$0xff]
        %v793 = vld [vmem:[#allocation2 + $0x20] sm:$0xff]
        %v794 = vld [vmem:[#allocation2 + $0x28] sm:$0xff]
        %v795 = vld [vmem:[#allocation2 + $0x30] sm:$0xff]
        %v796 = vld [vmem:[#allocation2 + $0x38] sm:$0xff]
        %v797 = vld [vmem:[#allocation2 + $0x40] sm:$0xff]
        %v798 = vld [vmem:[#allocation2 + $0x48] sm:$0xff]
        %v799 = vld [vmem:[#allocation2 + $0x50] sm:$0xff]
        %v800 = vld [vmem:[#allocation2 + $0x58] sm:$0xff]
        %v801 = vld [vmem:[#allocation2 + $0x60] sm:$0xff]
        %v802 = vld [vmem:[#allocation2 + $0x68] sm:$0xff]
        %v803 = vld [vmem:[#allocation2 + $0x70] sm:$0xff]
        %v804 = vld [vmem:[#allocation2 + $0x78] sm:$0xff]
        %v805 = vld [vmem:[#allocation2 + $0x80] sm:$0xff]
        %v806 = vld [vmem:[#allocation2 + $0x88] sm:$0xff]
        %v807 = vld [vmem:[#allocation2 + $0x90] sm:$0xff]
        %v808 = vld [vmem:[#allocation2 + $0x98] sm:$0xff]
        %v809 = vld [vmem:[#allocation2 + $0xa0] sm:$0xff]
        %v810 = vld [vmem:[#allocation2 + $0xa8] sm:$0xff]
        %v811 = vld [vmem:[#allocation2 + $0xb0] sm:$0xff]
        %v812 = vld [vmem:[#allocation2 + $0xb8] sm:$0xff]
        %v813 = vld [vmem:[#allocation2 + $0xc0] sm:$0xff]
        %v814 = vld [vmem:[#allocation2 + $0xc8] sm:$0xff]
        %v815 = vld [vmem:[#allocation2 + $0xd0] sm:$0xff]
        %v816 = vld [vmem:[#allocation2 + $0xd8] sm:$0xff]
        %v817 = vld [vmem:[#allocation2 + $0xe0] sm:$0xff]
        %v818 = vld [vmem:[#allocation2 + $0xe8] sm:$0xff]
        %v819 = vld [vmem:[#allocation2 + $0xf0] sm:$0xff]
        %v820 = vld [vmem:[#allocation2 + $0xf8] sm:$0xff]
        %v821 = vld [vmem:[%s287] sm:$0x1]
        %v823 = vlaneseq
        %v824 = vshrl.u32 %v823, 7
        %v825 = vsub.s32 0, %v824
        %v826 = vrot.slane %v821, %v825
        %v828 = vmul.f32 %v789, %v826
        %v829 = vmul.f32 %v790, %v826
        %v830 = vmul.f32 %v791, %v826
        %v831 = vmul.f32 %v792, %v826
        %v832 = vmul.f32 %v793, %v826
        %v833 = vmul.f32 %v794, %v826
        %v834 = vmul.f32 %v795, %v826
        %v835 = vmul.f32 %v796, %v826
        %v836 = vmul.f32 %v797, %v826
        %v837 = vmul.f32 %v798, %v826
        %v838 = vmul.f32 %v799, %v826
        %v839 = vmul.f32 %v800, %v826
        %v840 = vmul.f32 %v801, %v826
        %v841 = vmul.f32 %v802, %v826
        %v842 = vmul.f32 %v803, %v826
        %v843 = vmul.f32 %v804, %v826
        %v844 = vmul.f32 %v805, %v826
        %v845 = vmul.f32 %v806, %v826
        %v846 = vmul.f32 %v807, %v826
        %v847 = vmul.f32 %v808, %v826
        %v848 = vmul.f32 %v809, %v826
        %v849 = vmul.f32 %v810, %v826
        %v850 = vmul.f32 %v811, %v826
        %v851 = vmul.f32 %v812, %v826
        %v852 = vmul.f32 %v813, %v826
        %v853 = vmul.f32 %v814, %v826
        %v854 = vmul.f32 %v815, %v826
        %v855 = vmul.f32 %v816, %v826
        %v856 = vmul.f32 %v817, %v826
        %v857 = vmul.f32 %v818, %v826
        %v858 = vmul.f32 %v819, %v826
        %v859 = vmul.f32 %v820, %v826
        %v860 = vld [vmem:[%s290] sm:$0x1]
        %v862 = vlaneseq
        %v863 = vshrl.u32 %v862, 7
        %v864 = vsub.s32 0, %v863
        %v865 = vrot.slane %v860, %v864
        %v867 = vadd.f32 %v828, %v865
        %v868 = vadd.f32 %v829, %v865
        %v869 = vadd.f32 %v830, %v865
        %v870 = vadd.f32 %v831, %v865
        %v871 = vadd.f32 %v832, %v865
        %v872 = vadd.f32 %v833, %v865
        %v873 = vadd.f32 %v834, %v865
        %v874 = vadd.f32 %v835, %v865
        %v875 = vadd.f32 %v836, %v865
        %v876 = vadd.f32 %v837, %v865
        %v877 = vadd.f32 %v838, %v865
        %v878 = vadd.f32 %v839, %v865
        %v879 = vadd.f32 %v840, %v865
        %v880 = vadd.f32 %v841, %v865
        %v881 = vadd.f32 %v842, %v865
        %v882 = vadd.f32 %v843, %v865
        %v883 = vadd.f32 %v844, %v865
        %v884 = vadd.f32 %v845, %v865
        %v885 = vadd.f32 %v846, %v865
        %v886 = vadd.f32 %v847, %v865
        %v887 = vadd.f32 %v848, %v865
        %v888 = vadd.f32 %v849, %v865
        %v889 = vadd.f32 %v850, %v865
        %v890 = vadd.f32 %v851, %v865
        %v891 = vadd.f32 %v852, %v865
        %v892 = vadd.f32 %v853, %v865
        %v893 = vadd.f32 %v854, %v865
        %v894 = vadd.f32 %v855, %v865
        %v895 = vadd.f32 %v856, %v865
        %v896 = vadd.f32 %v857, %v865
        %v897 = vadd.f32 %v858, %v865
        %v898 = vadd.f32 %v859, %v865
        %v899 = vmax.f32 %v867, 0.0
        %v900 = vmax.f32 %v868, 0.0
        %v901 = vmax.f32 %v869, 0.0
        %v902 = vmax.f32 %v870, 0.0
        %v903 = vmax.f32 %v871, 0.0
        %v904 = vmax.f32 %v872, 0.0
        %v905 = vmax.f32 %v873, 0.0
        %v906 = vmax.f32 %v874, 0.0
        %v907 = vmax.f32 %v875, 0.0
        %v908 = vmax.f32 %v876, 0.0
        %v909 = vmax.f32 %v877, 0.0
        %v910 = vmax.f32 %v878, 0.0
        %v911 = vmax.f32 %v879, 0.0
        %v912 = vmax.f32 %v880, 0.0
        %v913 = vmax.f32 %v881, 0.0
        %v914 = vmax.f32 %v882, 0.0
        %v915 = vmax.f32 %v883, 0.0
        %v916 = vmax.f32 %v884, 0.0
        %v917 = vmax.f32 %v885, 0.0
        %v918 = vmax.f32 %v886, 0.0
        %v919 = vmax.f32 %v887, 0.0
        %v920 = vmax.f32 %v888, 0.0
        %v921 = vmax.f32 %v889, 0.0
        %v922 = vmax.f32 %v890, 0.0
        %v923 = vmax.f32 %v891, 0.0
        %v924 = vmax.f32 %v892, 0.0
        %v925 = vmax.f32 %v893, 0.0
        %v926 = vmax.f32 %v894, 0.0
        %v927 = vmax.f32 %v895, 0.0
        %v928 = vmax.f32 %v896, 0.0
        %v929 = vmax.f32 %v897, 0.0
        %v930 = vmax.f32 %v898, 0.0
        %931 = vst [vmem:[%s298] sm:$0xff] %v899
        %932 = vst [vmem:[%s298 + $0x8] sm:$0xff] %v900
        %933 = vst [vmem:[%s298 + $0x10] sm:$0xff] %v901
        %934 = vst [vmem:[%s298 + $0x18] sm:$0xff] %v902
        %935 = vst [vmem:[%s298 + $0x20] sm:$0xff] %v903
        %936 = vst [vmem:[%s298 + $0x28] sm:$0xff] %v904
        %937 = vst [vmem:[%s298 + $0x30] sm:$0xff] %v905
        %938 = vst [vmem:[%s298 + $0x38] sm:$0xff] %v906
        %939 = vst [vmem:[%s298 + $0x40] sm:$0xff] %v907
        %940 = vst [vmem:[%s298 + $0x48] sm:$0xff] %v908
        %941 = vst [vmem:[%s298 + $0x50] sm:$0xff] %v909
        %942 = vst [vmem:[%s298 + $0x58] sm:$0xff] %v910
        %943 = vst [vmem:[%s298 + $0x60] sm:$0xff] %v911
        %944 = vst [vmem:[%s298 + $0x68] sm:$0xff] %v912
        %945 = vst [vmem:[%s298 + $0x70] sm:$0xff] %v913
        %946 = vst [vmem:[%s298 + $0x78] sm:$0xff] %v914
        %947 = vst [vmem:[%s298 + $0x80] sm:$0xff] %v915
        %948 = vst [vmem:[%s298 + $0x88] sm:$0xff] %v916
        %949 = vst [vmem:[%s298 + $0x90] sm:$0xff] %v917
        %950 = vst [vmem:[%s298 + $0x98] sm:$0xff] %v918
        %951 = vst [vmem:[%s298 + $0xa0] sm:$0xff] %v919
        %952 = vst [vmem:[%s298 + $0xa8] sm:$0xff] %v920
        %953 = vst [vmem:[%s298 + $0xb0] sm:$0xff] %v921
        %954 = vst [vmem:[%s298 + $0xb8] sm:$0xff] %v922
        %955 = vst [vmem:[%s298 + $0xc0] sm:$0xff] %v923
        %956 = vst [vmem:[%s298 + $0xc8] sm:$0xff] %v924
        %957 = vst [vmem:[%s298 + $0xd0] sm:$0xff] %v925
        %958 = vst [vmem:[%s298 + $0xd8] sm:$0xff] %v926
        %959 = vst [vmem:[%s298 + $0xe0] sm:$0xff] %v927
        %960 = vst [vmem:[%s298 + $0xe8] sm:$0xff] %v928
        %961 = vst [vmem:[%s298 + $0xf0] sm:$0xff] %v929
        %962 = vst [vmem:[%s298 + $0xf8] sm:$0xff] %v930
      $region44: #{resnet_generator_forward.11} parent=35 // pred_fallthru
        _
      %s963 = smul.u32 32, %s20
      %p964 = scmp.lt.s32.totalorder %s963, 63
      %s965 = scalar_select %p964, %s963, 63
      %p966 = scmp.lt.s32.totalorder %s21, 0
      %s967 = scalar_select %p966, %s21, 0
      %s968 = sadd.s32 %s967, %s965
      %s969 = smul.addr %s968, 8
      %s970 = scalar_lea.vmem %s4, %s969
      // Predicated region
      $region45: #{resnet_generator_forward.11} parent=35 // pred_check
        %p971 = pneg %p162
      $region46: #{resnet_generator_forward.11} parent=35 // pred_check_branch
        %973 = sbr.rel (%p971) target = $region48
      $region47: #{resnet_generator_forward.11} parent=35 // pred_region
        %s974 = smul.u32 32, %s20
      $region48: #{resnet_generator_forward.11} parent=35 // pred_fallthru
        _
    $region36: #{resnet_generator_forward.11} parent=5 // pred_fallthru
      _
    %p975 = scmp.le.s32.totalorder 2, %s10
    // Predicated region
    $region49: #{resnet_generator_forward.11} parent=5 // pred_check
      %p976 = pneg %p975
    $region50: #{resnet_generator_forward.11} parent=5 // pred_check_branch
      %978 = sbr.rel (%p976) target = $region52
    $region51: #{resnet_generator_forward.11} parent=5 // pred_region
      %s979 = ssub.s32 %s10, 2
      // Predicated region
      $region53: #{resnet_generator_forward.11} parent=51 // pred_check
        %p980 = pneg %p168
      $region54: #{resnet_generator_forward.11} parent=51 // pred_check_branch
        %982 = sbr.rel (%p980) target = $region56
      $region55: #{resnet_generator_forward.11} parent=51 // pred_region
        %s983 = smul.u32 32, %s23
        %p984 = scmp.lt.s32.totalorder %s983, 63
        %s985 = scalar_select %p984, %s983, 63
        %p986 = scmp.lt.s32.totalorder %s24, 0
        %s987 = scalar_select %p986, %s24, 0
        %s988 = sadd.s32 %s987, %s985
        %s989 = smul.addr %s988, 8
        %s990 = scalar_lea.vmem %s4, %s989
      $region56: #{resnet_generator_forward.11} parent=51 // pred_fallthru
        _
    $region52: #{resnet_generator_forward.11} parent=5 // pred_fallthru
      _
  $region6: #{resnet_generator_forward.11} parent=0 // loop_footer
    %s14 = sadd.s32 1, %s10
  $region7: #{resnet_generator_forward.11} parent=0 // loop_footer_branch
    %9 = sbr.rel target = $region3
  $region8: #{resnet_generator_forward.11} parent=0 // loop_exit
    _

// kernel: resnet_generator_forward.12
$region0: #{resnet_generator_forward.12}
  #allocation0 [shape = 'u32[]', space=smem, size = 0x4, offset = 0x4, fixed_abs, tag = 'smem constant byte address 0x4 - core index']
  #allocation1 [shape = 'u32[144,128]{1,0:T(1,128)}', space=vmem, size = 0x12000, scoped, tag = 'internal scratch']
  #allocation2 [shape = 'f32[128,128]{1,0:T(8,128)}', space=vmem, size = 0x10000, scoped, tag = 'scratch operand']
  %s0 = inlined_call_operand.vmem [shape: bf16[128,256], index: 0, kind: input, shape index: {}]
  %s1 = inlined_call_operand.vmem [shape: bf16[256,128], index: 1, kind: input, shape index: {}]
  %s2 = inlined_call_operand.vmem [shape: f32[1,128], index: 2, kind: input, shape index: {}]
  %s3 = inlined_call_operand.vmem [shape: f32[1,128], index: 3, kind: input, shape index: {}]
  %s4 = inlined_call_operand.vmem [shape: f32[128,128], index: 4, kind: output, shape index: {}]
  %s5 = sld [smem:[#allocation0]]
  $region34: #{resnet_generator_forward.12} parent=0
    _
  %s7 = ssub.s32 1, %s5
  %s8 = scalar_select 0, %s7, %s5
  // Predicated region
  $region2: #{resnet_generator_forward.12} parent=0 // pred_check
    _
  $region3: #{resnet_generator_forward.12} parent=0 // pred_check_branch
    %10 = sbr.rel (0) target = $region5
  $region4: #{resnet_generator_forward.12} parent=0 // pred_region
    _
  $region5: #{resnet_generator_forward.12} parent=0 // pred_fallthru
    _
  // Predicated region
  $region6: #{resnet_generator_forward.12} parent=0 // pred_check
    _
  $region7: #{resnet_generator_forward.12} parent=0 // pred_check_branch
    %12 = sbr.rel (0) target = $region9
  $region8: #{resnet_generator_forward.12} parent=0 // pred_region
    _
  $region9: #{resnet_generator_forward.12} parent=0 // pred_fallthru
    _
  // Predicated region
  $region10: #{resnet_generator_forward.12} parent=0 // pred_check
    _
  $region11: #{resnet_generator_forward.12} parent=0 // pred_check_branch
    %14 = sbr.rel (0) target = $region13
  $region12: #{resnet_generator_forward.12} parent=0 // pred_region
    _
  $region13: #{resnet_generator_forward.12} parent=0 // pred_fallthru
    _
  // Predicated region
  $region14: #{resnet_generator_forward.12} parent=0 // pred_check
    _
  $region15: #{resnet_generator_forward.12} parent=0 // pred_check_branch
    %16 = sbr.rel (0) target = $region17
  $region16: #{resnet_generator_forward.12} parent=0 // pred_region
    _
  $region17: #{resnet_generator_forward.12} parent=0 // pred_fallthru
    _
  %p18 = scmp.eq.s32.totalorder 0, 0
  // Predicated region
  $region18: #{resnet_generator_forward.12} parent=0 // pred_check
    %p19 = pneg %p18
  $region19: #{resnet_generator_forward.12} parent=0 // pred_check_branch
    %21 = sbr.rel (%p19) target = $region21
  $region20: #{resnet_generator_forward.12} parent=0 // pred_region
    %22 = vst [vmem:[#allocation2] sm:$0xff] 0.0
    %23 = vst [vmem:[#allocation2 + $0x8] sm:$0xff] 0.0
    %24 = vst [vmem:[#allocation2 + $0x10] sm:$0xff] 0.0
    %25 = vst [vmem:[#allocation2 + $0x18] sm:$0xff] 0.0
    %26 = vst [vmem:[#allocation2 + $0x20] sm:$0xff] 0.0
    %27 = vst [vmem:[#allocation2 + $0x28] sm:$0xff] 0.0
    %28 = vst [vmem:[#allocation2 + $0x30] sm:$0xff] 0.0
    %29 = vst [vmem:[#allocation2 + $0x38] sm:$0xff] 0.0
    %30 = vst [vmem:[#allocation2 + $0x40] sm:$0xff] 0.0
    %31 = vst [vmem:[#allocation2 + $0x48] sm:$0xff] 0.0
    %32 = vst [vmem:[#allocation2 + $0x50] sm:$0xff] 0.0
    %33 = vst [vmem:[#allocation2 + $0x58] sm:$0xff] 0.0
    %34 = vst [vmem:[#allocation2 + $0x60] sm:$0xff] 0.0
    %35 = vst [vmem:[#allocation2 + $0x68] sm:$0xff] 0.0
    %36 = vst [vmem:[#allocation2 + $0x70] sm:$0xff] 0.0
    %37 = vst [vmem:[#allocation2 + $0x78] sm:$0xff] 0.0
  $region21: #{resnet_generator_forward.12} parent=0 // pred_fallthru
    _
  %v38 = vld [vmem:[#allocation2] sm:$0xff]
  %v39 = vld [vmem:[#allocation2 + $0x8] sm:$0xff]
  %v40 = vld [vmem:[#allocation2 + $0x10] sm:$0xff]
  %v41 = vld [vmem:[#allocation2 + $0x18] sm:$0xff]
  %v42 = vld [vmem:[#allocation2 + $0x20] sm:$0xff]
  %v43 = vld [vmem:[#allocation2 + $0x28] sm:$0xff]
  %v44 = vld [vmem:[#allocation2 + $0x30] sm:$0xff]
  %v45 = vld [vmem:[#allocation2 + $0x38] sm:$0xff]
  %v46 = vld [vmem:[#allocation2 + $0x40] sm:$0xff]
  %v47 = vld [vmem:[#allocation2 + $0x48] sm:$0xff]
  %v48 = vld [vmem:[#allocation2 + $0x50] sm:$0xff]
  %v49 = vld [vmem:[#allocation2 + $0x58] sm:$0xff]
  %v50 = vld [vmem:[#allocation2 + $0x60] sm:$0xff]
  %v51 = vld [vmem:[#allocation2 + $0x68] sm:$0xff]
  %v52 = vld [vmem:[#allocation2 + $0x70] sm:$0xff]
  %v53 = vld [vmem:[#allocation2 + $0x78] sm:$0xff]
  %v54 = vld [vmem:[%s0] sm:$0xff]
  %v55 = vld [vmem:[%s0 + $0x8] sm:$0xff]
  %v56 = vld [vmem:[%s0 + $0x10] sm:$0xff]
  %v57 = vld [vmem:[%s0 + $0x18] sm:$0xff]
  %v58 = vld [vmem:[%s0 + $0x20] sm:$0xff]
  %v59 = vld [vmem:[%s0 + $0x28] sm:$0xff]
  %v60 = vld [vmem:[%s0 + $0x30] sm:$0xff]
  %v61 = vld [vmem:[%s0 + $0x38] sm:$0xff]
  %v62 = vld [vmem:[%s0 + $0x40] sm:$0xff]
  %v63 = vld [vmem:[%s0 + $0x48] sm:$0xff]
  %v64 = vld [vmem:[%s0 + $0x50] sm:$0xff]
  %v65 = vld [vmem:[%s0 + $0x58] sm:$0xff]
  %v66 = vld [vmem:[%s0 + $0x60] sm:$0xff]
  %v67 = vld [vmem:[%s0 + $0x68] sm:$0xff]
  %v68 = vld [vmem:[%s0 + $0x70] sm:$0xff]
  %v69 = vld [vmem:[%s0 + $0x78] sm:$0xff]
  %v70 = vld [vmem:[%s1] sm:$0xf]
  %v71 = vld [vmem:[%s1 + $0x4] sm:$0xf]
  %v72 = vld [vmem:[%s1 + $0x8] sm:$0xf]
  %v73 = vld [vmem:[%s1 + $0xc] sm:$0xf]
  %v74 = vld [vmem:[%s1 + $0x10] sm:$0xf]
  %v75 = vld [vmem:[%s1 + $0x14] sm:$0xf]
  %v76 = vld [vmem:[%s1 + $0x18] sm:$0xf]
  %v77 = vld [vmem:[%s1 + $0x1c] sm:$0xf]
  %v78 = vld [vmem:[%s1 + $0x20] sm:$0xf]
  %v79 = vld [vmem:[%s1 + $0x24] sm:$0xf]
  %v80 = vld [vmem:[%s1 + $0x28] sm:$0xf]
  %v81 = vld [vmem:[%s1 + $0x2c] sm:$0xf]
  %v82 = vld [vmem:[%s1 + $0x30] sm:$0xf]
  %v83 = vld [vmem:[%s1 + $0x34] sm:$0xf]
  %v84 = vld [vmem:[%s1 + $0x38] sm:$0xf]
  %v85 = vld [vmem:[%s1 + $0x3c] sm:$0xf]
  %v86 = vld [vmem:[%s1 + $0x40] sm:$0xf]
  %v87 = vld [vmem:[%s1 + $0x44] sm:$0xf]
  %v88 = vld [vmem:[%s1 + $0x48] sm:$0xf]
  %v89 = vld [vmem:[%s1 + $0x4c] sm:$0xf]
  %v90 = vld [vmem:[%s1 + $0x50] sm:$0xf]
  %v91 = vld [vmem:[%s1 + $0x54] sm:$0xf]
  %v92 = vld [vmem:[%s1 + $0x58] sm:$0xf]
  %v93 = vld [vmem:[%s1 + $0x5c] sm:$0xf]
  %v94 = vld [vmem:[%s1 + $0x60] sm:$0xf]
  %v95 = vld [vmem:[%s1 + $0x64] sm:$0xf]
  %v96 = vld [vmem:[%s1 + $0x68] sm:$0xf]
  %v97 = vld [vmem:[%s1 + $0x6c] sm:$0xf]
  %v98 = vld [vmem:[%s1 + $0x70] sm:$0xf]
  %v99 = vld [vmem:[%s1 + $0x74] sm:$0xf]
  %v100 = vld [vmem:[%s1 + $0x78] sm:$0xf]
  %v101 = vld [vmem:[%s1 + $0x7c] sm:$0xf]
  %v118 = vunpack.c.l.b16 %v54
  %v119 = vunpack.c.h.b16 %v54
  %v120 = vunpack.c.l.b16 %v55
  %v121 = vunpack.c.h.b16 %v55
  %v122 = vunpack.c.l.b16 %v56
  %v123 = vunpack.c.h.b16 %v56
  %v124 = vunpack.c.l.b16 %v57
  %v125 = vunpack.c.h.b16 %v57
  %v126 = vunpack.c.l.b16 %v58
  %v127 = vunpack.c.h.b16 %v58
  %v128 = vunpack.c.l.b16 %v59
  %v129 = vunpack.c.h.b16 %v59
  %v130 = vunpack.c.l.b16 %v60
  %v131 = vunpack.c.h.b16 %v60
  %v132 = vunpack.c.l.b16 %v61
  %v133 = vunpack.c.h.b16 %v61
  %v134 = vunpack.c.l.b16 %v62
  %v135 = vunpack.c.h.b16 %v62
  %v136 = vunpack.c.l.b16 %v63
  %v137 = vunpack.c.h.b16 %v63
  %v138 = vunpack.c.l.b16 %v64
  %v139 = vunpack.c.h.b16 %v64
  %v140 = vunpack.c.l.b16 %v65
  %v141 = vunpack.c.h.b16 %v65
  %v142 = vunpack.c.l.b16 %v66
  %v143 = vunpack.c.h.b16 %v66
  %v144 = vunpack.c.l.b16 %v67
  %v145 = vunpack.c.h.b16 %v67
  %v146 = vunpack.c.l.b16 %v68
  %v147 = vunpack.c.h.b16 %v68
  %v148 = vunpack.c.l.b16 %v69
  %v149 = vunpack.c.h.b16 %v69
  %v150 = vpack.c.b16 %v120, %v118
  %v151 = vpack.c.b16 %v121, %v119
  %v152 = vpack.c.b16 %v124, %v122
  %v153 = vpack.c.b16 %v125, %v123
  %v154 = vpack.c.b16 %v128, %v126
  %v155 = vpack.c.b16 %v129, %v127
  %v156 = vpack.c.b16 %v132, %v130
  %v157 = vpack.c.b16 %v133, %v131
  %v158 = vpack.c.b16 %v136, %v134
  %v159 = vpack.c.b16 %v137, %v135
  %v160 = vpack.c.b16 %v140, %v138
  %v161 = vpack.c.b16 %v141, %v139
  %v162 = vpack.c.b16 %v144, %v142
  %v163 = vpack.c.b16 %v145, %v143
  %v164 = vpack.c.b16 %v148, %v146
  %v165 = vpack.c.b16 %v149, %v147
  %v214 = vunpack.c.l.b16 %v70
  %v215 = vunpack.c.l.b16 %v71
  %v216 = vunpack.c.l.b16 %v72
  %v217 = vunpack.c.l.b16 %v73
  %v218 = vunpack.c.l.b16 %v74
  %v219 = vunpack.c.l.b16 %v75
  %v220 = vunpack.c.l.b16 %v76
  %v221 = vunpack.c.l.b16 %v77
  %v222 = vunpack.c.l.b16 %v78
  %v223 = vunpack.c.l.b16 %v79
  %v224 = vunpack.c.l.b16 %v80
  %v225 = vunpack.c.l.b16 %v81
  %v226 = vunpack.c.l.b16 %v82
  %v227 = vunpack.c.l.b16 %v83
  %v228 = vunpack.c.l.b16 %v84
  %v229 = vunpack.c.l.b16 %v85
  %v230 = vunpack.c.l.b16 %v86
  %v231 = vunpack.c.l.b16 %v87
  %v232 = vunpack.c.l.b16 %v88
  %v233 = vunpack.c.l.b16 %v89
  %v234 = vunpack.c.l.b16 %v90
  %v235 = vunpack.c.l.b16 %v91
  %v236 = vunpack.c.l.b16 %v92
  %v237 = vunpack.c.l.b16 %v93
  %v238 = vunpack.c.l.b16 %v94
  %v239 = vunpack.c.l.b16 %v95
  %v240 = vunpack.c.l.b16 %v96
  %v241 = vunpack.c.l.b16 %v97
  %v242 = vunpack.c.l.b16 %v98
  %v243 = vunpack.c.l.b16 %v99
  %v244 = vunpack.c.l.b16 %v100
  %v245 = vunpack.c.l.b16 %v101
  %v246 = vpack.c.b16 %v215, %v214
  %v247 = vpack.c.b16 %v217, %v216
  %v248 = vpack.c.b16 %v219, %v218
  %v249 = vpack.c.b16 %v221, %v220
  %v250 = vpack.c.b16 %v223, %v222
  %v251 = vpack.c.b16 %v225, %v224
  %v252 = vpack.c.b16 %v227, %v226
  %v253 = vpack.c.b16 %v229, %v228
  %v254 = vpack.c.b16 %v231, %v230
  %v255 = vpack.c.b16 %v233, %v232
  %v256 = vpack.c.b16 %v235, %v234
  %v257 = vpack.c.b16 %v237, %v236
  %v258 = vpack.c.b16 %v239, %v238
  %v259 = vpack.c.b16 %v241, %v240
  %v260 = vpack.c.b16 %v243, %v242
  %v261 = vpack.c.b16 %v245, %v244
  %278 = vmatprep.subr.bf16.mxu0 0
  %279 = vmatpush1.bf16.msra.mxu0 %v246
  %280 = vmatprep.subr.bf16.mxu0 0
  %281 = vmatpush1.bf16.msra.mxu0 %v247
  %282 = vmatprep.subr.bf16.mxu0 0
  %283 = vmatpush1.bf16.msra.mxu0 %v248
  %284 = vmatprep.subr.bf16.mxu0 0
  %285 = vmatpush1.bf16.msra.mxu0 %v249
  %286 = vmatprep.subr.bf16.mxu0 0
  %287 = vmatpush1.bf16.msra.mxu0 %v250
  %288 = vmatprep.subr.bf16.mxu0 0
  %289 = vmatpush1.bf16.msra.mxu0 %v251
  %290 = vmatprep.subr.bf16.mxu0 0
  %291 = vmatpush1.bf16.msra.mxu0 %v252
  %292 = vmatprep.subr.bf16.mxu0 0
  %293 = vmatpush1.bf16.msra.mxu0 %v253
  %294 = vmatprep.subr.bf16.mxu0 0
  %295 = vmatpush1.bf16.msra.mxu0 %v254
  %296 = vmatprep.subr.bf16.mxu0 0
  %297 = vmatpush1.bf16.msra.mxu0 %v255
  %298 = vmatprep.subr.bf16.mxu0 0
  %299 = vmatpush1.bf16.msra.mxu0 %v256
  %300 = vmatprep.subr.bf16.mxu0 0
  %301 = vmatpush1.bf16.msra.mxu0 %v257
  %302 = vmatprep.subr.bf16.mxu0 0
  %303 = vmatpush1.bf16.msra.mxu0 %v258
  %304 = vmatprep.subr.bf16.mxu0 0
  %305 = vmatpush1.bf16.msra.mxu0 %v259
  %306 = vmatprep.subr.bf16.mxu0 0
  %307 = vmatpush1.bf16.msra.mxu0 %v260
  %308 = vmatprep.subr.bf16.mxu0 0
  %309 = vmatpush1.bf16.msra.mxu0 %v261
  %310 = vmatprep.mubr.bf16.mxu0 %v151
  %311 = vmatmul.mubr.bf16.gmra.mrb[0].mxu0 %v150
  %v312 = vpop.f32.mrb[0].mxu0
  %v313 = vadd.f32 0.0, %v312
  %v314 = vpop.f32.mrb[0].mxu0
  %v315 = vpop.f32.mrb[0].mxu0
  %v316 = vadd.f32 0.0, %v315
  %v317 = vpop.f32.mrb[0].mxu0
  %318 = vmatprep.mubr.bf16.mxu0 %v153
  %319 = vmatmul.mubr.bf16.gmra.mrb[0].mxu0 %v152
  %v320 = vpop.f32.mrb[0].mxu0
  %v321 = vadd.f32 0.0, %v320
  %v322 = vpop.f32.mrb[0].mxu0
  %v323 = vpop.f32.mrb[0].mxu0
  %v324 = vadd.f32 0.0, %v323
  %v325 = vpop.f32.mrb[0].mxu0
  %326 = vmatprep.mubr.bf16.mxu0 %v155
  %327 = vmatmul.mubr.bf16.gmra.mrb[0].mxu0 %v154
  %v328 = vpop.f32.mrb[0].mxu0
  %v329 = vadd.f32 0.0, %v328
  %v330 = vpop.f32.mrb[0].mxu0
  %v331 = vpop.f32.mrb[0].mxu0
  %v332 = vadd.f32 0.0, %v331
  %v333 = vpop.f32.mrb[0].mxu0
  %334 = vmatprep.mubr.bf16.mxu0 %v157
  %335 = vmatmul.mubr.bf16.gmra.mrb[0].mxu0 %v156
  %v336 = vpop.f32.mrb[0].mxu0
  %v337 = vadd.f32 0.0, %v336
  %v338 = vpop.f32.mrb[0].mxu0
  %v339 = vpop.f32.mrb[0].mxu0
  %v340 = vadd.f32 0.0, %v339
  %v341 = vpop.f32.mrb[0].mxu0
  %342 = vmatprep.mubr.bf16.mxu0 %v159
  %343 = vmatmul.mubr.bf16.gmra.mrb[0].mxu0 %v158
  %v344 = vpop.f32.mrb[0].mxu0
  %v345 = vadd.f32 0.0, %v344
  %v346 = vpop.f32.mrb[0].mxu0
  %v347 = vpop.f32.mrb[0].mxu0
  %v348 = vadd.f32 0.0, %v347
  %v349 = vpop.f32.mrb[0].mxu0
  %350 = vmatprep.mubr.bf16.mxu0 %v161
  %351 = vmatmul.mubr.bf16.gmra.mrb[0].mxu0 %v160
  %v352 = vpop.f32.mrb[0].mxu0
  %v353 = vadd.f32 0.0, %v352
  %v354 = vpop.f32.mrb[0].mxu0
  %v355 = vpop.f32.mrb[0].mxu0
  %v356 = vadd.f32 0.0, %v355
  %v357 = vpop.f32.mrb[0].mxu0
  %358 = vmatprep.mubr.bf16.mxu0 %v163
  %359 = vmatmul.mubr.bf16.gmra.mrb[0].mxu0 %v162
  %v360 = vpop.f32.mrb[0].mxu0
  %v361 = vadd.f32 0.0, %v360
  %v362 = vpop.f32.mrb[0].mxu0
  %v363 = vpop.f32.mrb[0].mxu0
  %v364 = vadd.f32 0.0, %v363
  %v365 = vpop.f32.mrb[0].mxu0
  %366 = vmatprep.mubr.bf16.mxu0 %v165
  %367 = vmatmul.mubr.bf16.gmra.mrb[0].mxu0 %v164
  %v368 = vpop.f32.mrb[0].mxu0
  %v369 = vadd.f32 0.0, %v368
  %v370 = vpop.f32.mrb[0].mxu0
  %v371 = vpop.f32.mrb[0].mxu0
  %v372 = vadd.f32 0.0, %v371
  %v373 = vpop.f32.mrb[0].mxu0
  %374 = vdwg.mxu0
  %v375 = vadd.f32 %v38, %v313
  %v376 = vadd.f32 %v39, %v316
  %v377 = vadd.f32 %v40, %v321
  %v378 = vadd.f32 %v41, %v324
  %v379 = vadd.f32 %v42, %v329
  %v380 = vadd.f32 %v43, %v332
  %v381 = vadd.f32 %v44, %v337
  %v382 = vadd.f32 %v45, %v340
  %v383 = vadd.f32 %v46, %v345
  %v384 = vadd.f32 %v47, %v348
  %v385 = vadd.f32 %v48, %v353
  %v386 = vadd.f32 %v49, %v356
  %v387 = vadd.f32 %v50, %v361
  %v388 = vadd.f32 %v51, %v364
  %v389 = vadd.f32 %v52, %v369
  %v390 = vadd.f32 %v53, %v372
  %391 = vst [vmem:[#allocation2] sm:$0xff] %v375
  %392 = vst [vmem:[#allocation2 + $0x8] sm:$0xff] %v376
  %393 = vst [vmem:[#allocation2 + $0x10] sm:$0xff] %v377
  %394 = vst [vmem:[#allocation2 + $0x18] sm:$0xff] %v378
  %395 = vst [vmem:[#allocation2 + $0x20] sm:$0xff] %v379
  %396 = vst [vmem:[#allocation2 + $0x28] sm:$0xff] %v380
  %397 = vst [vmem:[#allocation2 + $0x30] sm:$0xff] %v381
  %398 = vst [vmem:[#allocation2 + $0x38] sm:$0xff] %v382
  %399 = vst [vmem:[#allocation2 + $0x40] sm:$0xff] %v383
  %400 = vst [vmem:[#allocation2 + $0x48] sm:$0xff] %v384
  %401 = vst [vmem:[#allocation2 + $0x50] sm:$0xff] %v385
  %402 = vst [vmem:[#allocation2 + $0x58] sm:$0xff] %v386
  %403 = vst [vmem:[#allocation2 + $0x60] sm:$0xff] %v387
  %404 = vst [vmem:[#allocation2 + $0x68] sm:$0xff] %v388
  %405 = vst [vmem:[#allocation2 + $0x70] sm:$0xff] %v389
  %406 = vst [vmem:[#allocation2 + $0x78] sm:$0xff] %v390
  // Predicated region
  $region22: #{resnet_generator_forward.12} parent=0 // pred_check
    %p407 = pneg %p18
  $region23: #{resnet_generator_forward.12} parent=0 // pred_check_branch
    %409 = sbr.rel (%p407) target = $region25
  $region24: #{resnet_generator_forward.12} parent=0 // pred_region
    %v410 = vld [vmem:[#allocation2] sm:$0xff]
    %v411 = vld [vmem:[#allocation2 + $0x8] sm:$0xff]
    %v412 = vld [vmem:[#allocation2 + $0x10] sm:$0xff]
    %v413 = vld [vmem:[#allocation2 + $0x18] sm:$0xff]
    %v414 = vld [vmem:[#allocation2 + $0x20] sm:$0xff]
    %v415 = vld [vmem:[#allocation2 + $0x28] sm:$0xff]
    %v416 = vld [vmem:[#allocation2 + $0x30] sm:$0xff]
    %v417 = vld [vmem:[#allocation2 + $0x38] sm:$0xff]
    %v418 = vld [vmem:[#allocation2 + $0x40] sm:$0xff]
    %v419 = vld [vmem:[#allocation2 + $0x48] sm:$0xff]
    %v420 = vld [vmem:[#allocation2 + $0x50] sm:$0xff]
    %v421 = vld [vmem:[#allocation2 + $0x58] sm:$0xff]
    %v422 = vld [vmem:[#allocation2 + $0x60] sm:$0xff]
    %v423 = vld [vmem:[#allocation2 + $0x68] sm:$0xff]
    %v424 = vld [vmem:[#allocation2 + $0x70] sm:$0xff]
    %v425 = vld [vmem:[#allocation2 + $0x78] sm:$0xff]
    %v426 = vld [vmem:[%s2] sm:$0x1]
    %v428 = vlaneseq
    %v429 = vshrl.u32 %v428, 7
    %v430 = vsub.s32 0, %v429
    %v431 = vrot.slane %v426, %v430
    %v433 = vmul.f32 %v410, %v431
    %v434 = vmul.f32 %v411, %v431
    %v435 = vmul.f32 %v412, %v431
    %v436 = vmul.f32 %v413, %v431
    %v437 = vmul.f32 %v414, %v431
    %v438 = vmul.f32 %v415, %v431
    %v439 = vmul.f32 %v416, %v431
    %v440 = vmul.f32 %v417, %v431
    %v441 = vmul.f32 %v418, %v431
    %v442 = vmul.f32 %v419, %v431
    %v443 = vmul.f32 %v420, %v431
    %v444 = vmul.f32 %v421, %v431
    %v445 = vmul.f32 %v422, %v431
    %v446 = vmul.f32 %v423, %v431
    %v447 = vmul.f32 %v424, %v431
    %v448 = vmul.f32 %v425, %v431
    %v449 = vld [vmem:[%s3] sm:$0x1]
    %v451 = vlaneseq
    %v452 = vshrl.u32 %v451, 7
    %v453 = vsub.s32 0, %v452
    %v454 = vrot.slane %v449, %v453
    %v456 = vadd.f32 %v433, %v454
    %v457 = vadd.f32 %v434, %v454
    %v458 = vadd.f32 %v435, %v454
    %v459 = vadd.f32 %v436, %v454
    %v460 = vadd.f32 %v437, %v454
    %v461 = vadd.f32 %v438, %v454
    %v462 = vadd.f32 %v439, %v454
    %v463 = vadd.f32 %v440, %v454
    %v464 = vadd.f32 %v441, %v454
    %v465 = vadd.f32 %v442, %v454
    %v466 = vadd.f32 %v443, %v454
    %v467 = vadd.f32 %v444, %v454
    %v468 = vadd.f32 %v445, %v454
    %v469 = vadd.f32 %v446, %v454
    %v470 = vadd.f32 %v447, %v454
    %v471 = vadd.f32 %v448, %v454
    %v472 = vmax.f32 %v456, 0.0
    %v473 = vmax.f32 %v457, 0.0
    %v474 = vmax.f32 %v458, 0.0
    %v475 = vmax.f32 %v459, 0.0
    %v476 = vmax.f32 %v460, 0.0
    %v477 = vmax.f32 %v461, 0.0
    %v478 = vmax.f32 %v462, 0.0
    %v479 = vmax.f32 %v463, 0.0
    %v480 = vmax.f32 %v464, 0.0
    %v481 = vmax.f32 %v465, 0.0
    %v482 = vmax.f32 %v466, 0.0
    %v483 = vmax.f32 %v467, 0.0
    %v484 = vmax.f32 %v468, 0.0
    %v485 = vmax.f32 %v469, 0.0
    %v486 = vmax.f32 %v470, 0.0
    %v487 = vmax.f32 %v471, 0.0
    %488 = vst [vmem:[%s4] sm:$0xff] %v472
    %489 = vst [vmem:[%s4 + $0x8] sm:$0xff] %v473
    %490 = vst [vmem:[%s4 + $0x10] sm:$0xff] %v474
    %491 = vst [vmem:[%s4 + $0x18] sm:$0xff] %v475
    %492 = vst [vmem:[%s4 + $0x20] sm:$0xff] %v476
    %493 = vst [vmem:[%s4 + $0x28] sm:$0xff] %v477
    %494 = vst [vmem:[%s4 + $0x30] sm:$0xff] %v478
    %495 = vst [vmem:[%s4 + $0x38] sm:$0xff] %v479
    %496 = vst [vmem:[%s4 + $0x40] sm:$0xff] %v480
    %497 = vst [vmem:[%s4 + $0x48] sm:$0xff] %v481
    %498 = vst [vmem:[%s4 + $0x50] sm:$0xff] %v482
    %499 = vst [vmem:[%s4 + $0x58] sm:$0xff] %v483
    %500 = vst [vmem:[%s4 + $0x60] sm:$0xff] %v484
    %501 = vst [vmem:[%s4 + $0x68] sm:$0xff] %v485
    %502 = vst [vmem:[%s4 + $0x70] sm:$0xff] %v486
    %503 = vst [vmem:[%s4 + $0x78] sm:$0xff] %v487
  $region25: #{resnet_generator_forward.12} parent=0 // pred_fallthru
    _
  // Predicated region
  $region26: #{resnet_generator_forward.12} parent=0 // pred_check
    _
  $region27: #{resnet_generator_forward.12} parent=0 // pred_check_branch
    %505 = sbr.rel (0) target = $region29
  $region28: #{resnet_generator_forward.12} parent=0 // pred_region
    _
  $region29: #{resnet_generator_forward.12} parent=0 // pred_fallthru
    _
  // Predicated region
  $region30: #{resnet_generator_forward.12} parent=0 // pred_check
    _
  $region31: #{resnet_generator_forward.12} parent=0 // pred_check_branch
    %507 = sbr.rel (0) target = $region33
  $region32: #{resnet_generator_forward.12} parent=0 // pred_region
    _
  $region33: #{resnet_generator_forward.12} parent=0 // pred_fallthru
    _

// kernel: resnet_generator_forward.13
$region0: #{resnet_generator_forward.13}
  #allocation0 [shape = 'u32[]', space=smem, size = 0x4, offset = 0x4, fixed_abs, tag = 'smem constant byte address 0x4 - core index']
  #allocation1 [shape = 'u32[144,128]{1,0:T(1,128)}', space=vmem, size = 0x12000, scoped, tag = 'internal scratch']
  #allocation2 [shape = 'f32[128,128]{1,0:T(8,128)}', space=vmem, size = 0x10000, scoped, tag = 'scratch operand']
  %s0 = inlined_call_operand.vmem [shape: bf16[128,384], index: 0, kind: input, shape index: {}]
  %s1 = inlined_call_operand.vmem [shape: bf16[384,128], index: 1, kind: input, shape index: {}]
  %s2 = inlined_call_operand.vmem [shape: f32[1,128], index: 2, kind: input, shape index: {}]
  %s3 = inlined_call_operand.vmem [shape: f32[1,128], index: 3, kind: input, shape index: {}]
  %s4 = inlined_call_operand.vmem [shape: f32[128,128], index: 4, kind: output, shape index: {}]
  %s5 = sld [smem:[#allocation0]]
  $region34: #{resnet_generator_forward.13} parent=0
    _
  %s7 = ssub.s32 1, %s5
  %s8 = scalar_select 0, %s7, %s5
  // Predicated region
  $region2: #{resnet_generator_forward.13} parent=0 // pred_check
    _
  $region3: #{resnet_generator_forward.13} parent=0 // pred_check_branch
    %10 = sbr.rel (0) target = $region5
  $region4: #{resnet_generator_forward.13} parent=0 // pred_region
    _
  $region5: #{resnet_generator_forward.13} parent=0 // pred_fallthru
    _
  // Predicated region
  $region6: #{resnet_generator_forward.13} parent=0 // pred_check
    _
  $region7: #{resnet_generator_forward.13} parent=0 // pred_check_branch
    %12 = sbr.rel (0) target = $region9
  $region8: #{resnet_generator_forward.13} parent=0 // pred_region
    _
  $region9: #{resnet_generator_forward.13} parent=0 // pred_fallthru
    _
  // Predicated region
  $region10: #{resnet_generator_forward.13} parent=0 // pred_check
    _
  $region11: #{resnet_generator_forward.13} parent=0 // pred_check_branch
    %14 = sbr.rel (0) target = $region13
  $region12: #{resnet_generator_forward.13} parent=0 // pred_region
    _
  $region13: #{resnet_generator_forward.13} parent=0 // pred_fallthru
    _
  // Predicated region
  $region14: #{resnet_generator_forward.13} parent=0 // pred_check
    _
  $region15: #{resnet_generator_forward.13} parent=0 // pred_check_branch
    %16 = sbr.rel (0) target = $region17
  $region16: #{resnet_generator_forward.13} parent=0 // pred_region
    _
  $region17: #{resnet_generator_forward.13} parent=0 // pred_fallthru
    _
  %p18 = scmp.eq.s32.totalorder 0, 0
  // Predicated region
  $region18: #{resnet_generator_forward.13} parent=0 // pred_check
    %p19 = pneg %p18
  $region19: #{resnet_generator_forward.13} parent=0 // pred_check_branch
    %21 = sbr.rel (%p19) target = $region21
  $region20: #{resnet_generator_forward.13} parent=0 // pred_region
    %22 = vst [vmem:[#allocation2] sm:$0xff] 0.0
    %23 = vst [vmem:[#allocation2 + $0x8] sm:$0xff] 0.0
    %24 = vst [vmem:[#allocation2 + $0x10] sm:$0xff] 0.0
    %25 = vst [vmem:[#allocation2 + $0x18] sm:$0xff] 0.0
    %26 = vst [vmem:[#allocation2 + $0x20] sm:$0xff] 0.0
    %27 = vst [vmem:[#allocation2 + $0x28] sm:$0xff] 0.0
    %28 = vst [vmem:[#allocation2 + $0x30] sm:$0xff] 0.0
    %29 = vst [vmem:[#allocation2 + $0x38] sm:$0xff] 0.0
    %30 = vst [vmem:[#allocation2 + $0x40] sm:$0xff] 0.0
    %31 = vst [vmem:[#allocation2 + $0x48] sm:$0xff] 0.0
    %32 = vst [vmem:[#allocation2 + $0x50] sm:$0xff] 0.0
    %33 = vst [vmem:[#allocation2 + $0x58] sm:$0xff] 0.0
    %34 = vst [vmem:[#allocation2 + $0x60] sm:$0xff] 0.0
    %35 = vst [vmem:[#allocation2 + $0x68] sm:$0xff] 0.0
    %36 = vst [vmem:[#allocation2 + $0x70] sm:$0xff] 0.0
    %37 = vst [vmem:[#allocation2 + $0x78] sm:$0xff] 0.0
  $region21: #{resnet_generator_forward.13} parent=0 // pred_fallthru
    _
  %v38 = vld [vmem:[#allocation2] sm:$0xff]
  %v39 = vld [vmem:[#allocation2 + $0x8] sm:$0xff]
  %v40 = vld [vmem:[#allocation2 + $0x10] sm:$0xff]
  %v41 = vld [vmem:[#allocation2 + $0x18] sm:$0xff]
  %v42 = vld [vmem:[#allocation2 + $0x20] sm:$0xff]
  %v43 = vld [vmem:[#allocation2 + $0x28] sm:$0xff]
  %v44 = vld [vmem:[#allocation2 + $0x30] sm:$0xff]
  %v45 = vld [vmem:[#allocation2 + $0x38] sm:$0xff]
  %v46 = vld [vmem:[#allocation2 + $0x40] sm:$0xff]
  %v47 = vld [vmem:[#allocation2 + $0x48] sm:$0xff]
  %v48 = vld [vmem:[#allocation2 + $0x50] sm:$0xff]
  %v49 = vld [vmem:[#allocation2 + $0x58] sm:$0xff]
  %v50 = vld [vmem:[#allocation2 + $0x60] sm:$0xff]
  %v51 = vld [vmem:[#allocation2 + $0x68] sm:$0xff]
  %v52 = vld [vmem:[#allocation2 + $0x70] sm:$0xff]
  %v53 = vld [vmem:[#allocation2 + $0x78] sm:$0xff]
  %v54 = vld [vmem:[%s0] sm:$0xff]
  %v55 = vld [vmem:[%s0 + $0x8] sm:$0xf]
  %v56 = vld [vmem:[%s0 + $0xc] sm:$0xff]
  %v57 = vld [vmem:[%s0 + $0x14] sm:$0xf]
  %v58 = vld [vmem:[%s0 + $0x18] sm:$0xff]
  %v59 = vld [vmem:[%s0 + $0x20] sm:$0xf]
  %v60 = vld [vmem:[%s0 + $0x24] sm:$0xff]
  %v61 = vld [vmem:[%s0 + $0x2c] sm:$0xf]
  %v62 = vld [vmem:[%s0 + $0x30] sm:$0xff]
  %v63 = vld [vmem:[%s0 + $0x38] sm:$0xf]
  %v64 = vld [vmem:[%s0 + $0x3c] sm:$0xff]
  %v65 = vld [vmem:[%s0 + $0x44] sm:$0xf]
  %v66 = vld [vmem:[%s0 + $0x48] sm:$0xff]
  %v67 = vld [vmem:[%s0 + $0x50] sm:$0xf]
  %v68 = vld [vmem:[%s0 + $0x54] sm:$0xff]
  %v69 = vld [vmem:[%s0 + $0x5c] sm:$0xf]
  %v70 = vld [vmem:[%s0 + $0x60] sm:$0xff]
  %v71 = vld [vmem:[%s0 + $0x68] sm:$0xf]
  %v72 = vld [vmem:[%s0 + $0x6c] sm:$0xff]
  %v73 = vld [vmem:[%s0 + $0x74] sm:$0xf]
  %v74 = vld [vmem:[%s0 + $0x78] sm:$0xff]
  %v75 = vld [vmem:[%s0 + $0x80] sm:$0xf]
  %v76 = vld [vmem:[%s0 + $0x84] sm:$0xff]
  %v77 = vld [vmem:[%s0 + $0x8c] sm:$0xf]
  %v78 = vld [vmem:[%s0 + $0x90] sm:$0xff]
  %v79 = vld [vmem:[%s0 + $0x98] sm:$0xf]
  %v80 = vld [vmem:[%s0 + $0x9c] sm:$0xff]
  %v81 = vld [vmem:[%s0 + $0xa4] sm:$0xf]
  %v82 = vld [vmem:[%s0 + $0xa8] sm:$0xff]
  %v83 = vld [vmem:[%s0 + $0xb0] sm:$0xf]
  %v84 = vld [vmem:[%s0 + $0xb4] sm:$0xff]
  %v85 = vld [vmem:[%s0 + $0xbc] sm:$0xf]
  %v86 = vld [vmem:[%s1] sm:$0xf]
  %v87 = vld [vmem:[%s1 + $0x4] sm:$0xf]
  %v88 = vld [vmem:[%s1 + $0x8] sm:$0xf]
  %v89 = vld [vmem:[%s1 + $0xc] sm:$0xf]
  %v90 = vld [vmem:[%s1 + $0x10] sm:$0xf]
  %v91 = vld [vmem:[%s1 + $0x14] sm:$0xf]
  %v92 = vld [vmem:[%s1 + $0x18] sm:$0xf]
  %v93 = vld [vmem:[%s1 + $0x1c] sm:$0xf]
  %v94 = vld [vmem:[%s1 + $0x20] sm:$0xf]
  %v95 = vld [vmem:[%s1 + $0x24] sm:$0xf]
  %v96 = vld [vmem:[%s1 + $0x28] sm:$0xf]
  %v97 = vld [vmem:[%s1 + $0x2c] sm:$0xf]
  %v98 = vld [vmem:[%s1 + $0x30] sm:$0xf]
  %v99 = vld [vmem:[%s1 + $0x34] sm:$0xf]
  %v100 = vld [vmem:[%s1 + $0x38] sm:$0xf]
  %v101 = vld [vmem:[%s1 + $0x3c] sm:$0xf]
  %v102 = vld [vmem:[%s1 + $0x40] sm:$0xf]
  %v103 = vld [vmem:[%s1 + $0x44] sm:$0xf]
  %v104 = vld [vmem:[%s1 + $0x48] sm:$0xf]
  %v105 = vld [vmem:[%s1 + $0x4c] sm:$0xf]
  %v106 = vld [vmem:[%s1 + $0x50] sm:$0xf]
  %v107 = vld [vmem:[%s1 + $0x54] sm:$0xf]
  %v108 = vld [vmem:[%s1 + $0x58] sm:$0xf]
  %v109 = vld [vmem:[%s1 + $0x5c] sm:$0xf]
  %v110 = vld [vmem:[%s1 + $0x60] sm:$0xf]
  %v111 = vld [vmem:[%s1 + $0x64] sm:$0xf]
  %v112 = vld [vmem:[%s1 + $0x68] sm:$0xf]
  %v113 = vld [vmem:[%s1 + $0x6c] sm:$0xf]
  %v114 = vld [vmem:[%s1 + $0x70] sm:$0xf]
  %v115 = vld [vmem:[%s1 + $0x74] sm:$0xf]
  %v116 = vld [vmem:[%s1 + $0x78] sm:$0xf]
  %v117 = vld [vmem:[%s1 + $0x7c] sm:$0xf]
  %v118 = vld [vmem:[%s1 + $0x80] sm:$0xf]
  %v119 = vld [vmem:[%s1 + $0x84] sm:$0xf]
  %v120 = vld [vmem:[%s1 + $0x88] sm:$0xf]
  %v121 = vld [vmem:[%s1 + $0x8c] sm:$0xf]
  %v122 = vld [vmem:[%s1 + $0x90] sm:$0xf]
  %v123 = vld [vmem:[%s1 + $0x94] sm:$0xf]
  %v124 = vld [vmem:[%s1 + $0x98] sm:$0xf]
  %v125 = vld [vmem:[%s1 + $0x9c] sm:$0xf]
  %v126 = vld [vmem:[%s1 + $0xa0] sm:$0xf]
  %v127 = vld [vmem:[%s1 + $0xa4] sm:$0xf]
  %v128 = vld [vmem:[%s1 + $0xa8] sm:$0xf]
  %v129 = vld [vmem:[%s1 + $0xac] sm:$0xf]
  %v130 = vld [vmem:[%s1 + $0xb0] sm:$0xf]
  %v131 = vld [vmem:[%s1 + $0xb4] sm:$0xf]
  %v132 = vld [vmem:[%s1 + $0xb8] sm:$0xf]
  %v133 = vld [vmem:[%s1 + $0xbc] sm:$0xf]
  %v166 = vunpack.c.l.b16 %v54
  %v167 = vunpack.c.h.b16 %v54
  %v168 = vunpack.c.l.b16 %v55
  %v169 = vunpack.c.l.b16 %v56
  %v170 = vunpack.c.h.b16 %v56
  %v171 = vunpack.c.l.b16 %v57
  %v172 = vunpack.c.l.b16 %v58
  %v173 = vunpack.c.h.b16 %v58
  %v174 = vunpack.c.l.b16 %v59
  %v175 = vunpack.c.l.b16 %v60
  %v176 = vunpack.c.h.b16 %v60
  %v177 = vunpack.c.l.b16 %v61
  %v178 = vunpack.c.l.b16 %v62
  %v179 = vunpack.c.h.b16 %v62
  %v180 = vunpack.c.l.b16 %v63
  %v181 = vunpack.c.l.b16 %v64
  %v182 = vunpack.c.h.b16 %v64
  %v183 = vunpack.c.l.b16 %v65
  %v184 = vunpack.c.l.b16 %v66
  %v185 = vunpack.c.h.b16 %v66
  %v186 = vunpack.c.l.b16 %v67
  %v187 = vunpack.c.l.b16 %v68
  %v188 = vunpack.c.h.b16 %v68
  %v189 = vunpack.c.l.b16 %v69
  %v190 = vunpack.c.l.b16 %v70
  %v191 = vunpack.c.h.b16 %v70
  %v192 = vunpack.c.l.b16 %v71
  %v193 = vunpack.c.l.b16 %v72
  %v194 = vunpack.c.h.b16 %v72
  %v195 = vunpack.c.l.b16 %v73
  %v196 = vunpack.c.l.b16 %v74
  %v197 = vunpack.c.h.b16 %v74
  %v198 = vunpack.c.l.b16 %v75
  %v199 = vunpack.c.l.b16 %v76
  %v200 = vunpack.c.h.b16 %v76
  %v201 = vunpack.c.l.b16 %v77
  %v202 = vunpack.c.l.b16 %v78
  %v203 = vunpack.c.h.b16 %v78
  %v204 = vunpack.c.l.b16 %v79
  %v205 = vunpack.c.l.b16 %v80
  %v206 = vunpack.c.h.b16 %v80
  %v207 = vunpack.c.l.b16 %v81
  %v208 = vunpack.c.l.b16 %v82
  %v209 = vunpack.c.h.b16 %v82
  %v210 = vunpack.c.l.b16 %v83
  %v211 = vunpack.c.l.b16 %v84
  %v212 = vunpack.c.h.b16 %v84
  %v213 = vunpack.c.l.b16 %v85
  %v214 = vpack.c.b16 %v169, %v166
  %v215 = vpack.c.b16 %v170, %v167
  %v216 = vpack.c.b16 %v171, %v168
  %v217 = vpack.c.b16 %v175, %v172
  %v218 = vpack.c.b16 %v176, %v173
  %v219 = vpack.c.b16 %v177, %v174
  %v220 = vpack.c.b16 %v181, %v178
  %v221 = vpack.c.b16 %v182, %v179
  %v222 = vpack.c.b16 %v183, %v180
  %v223 = vpack.c.b16 %v187, %v184
  %v224 = vpack.c.b16 %v188, %v185
  %v225 = vpack.c.b16 %v189, %v186
  %v226 = vpack.c.b16 %v193, %v190
  %v227 = vpack.c.b16 %v194, %v191
  %v228 = vpack.c.b16 %v195, %v192
  %v229 = vpack.c.b16 %v199, %v196
  %v230 = vpack.c.b16 %v200, %v197
  %v231 = vpack.c.b16 %v201, %v198
  %v232 = vpack.c.b16 %v205, %v202
  %v233 = vpack.c.b16 %v206, %v203
  %v234 = vpack.c.b16 %v207, %v204
  %v235 = vpack.c.b16 %v211, %v208
  %v236 = vpack.c.b16 %v212, %v209
  %v237 = vpack.c.b16 %v213, %v210
  %v310 = vunpack.c.l.b16 %v86
  %v311 = vunpack.c.l.b16 %v87
  %v312 = vunpack.c.l.b16 %v88
  %v313 = vunpack.c.l.b16 %v89
  %v314 = vunpack.c.l.b16 %v90
  %v315 = vunpack.c.l.b16 %v91
  %v316 = vunpack.c.l.b16 %v92
  %v317 = vunpack.c.l.b16 %v93
  %v318 = vunpack.c.l.b16 %v94
  %v319 = vunpack.c.l.b16 %v95
  %v320 = vunpack.c.l.b16 %v96
  %v321 = vunpack.c.l.b16 %v97
  %v322 = vunpack.c.l.b16 %v98
  %v323 = vunpack.c.l.b16 %v99
  %v324 = vunpack.c.l.b16 %v100
  %v325 = vunpack.c.l.b16 %v101
  %v326 = vunpack.c.l.b16 %v102
  %v327 = vunpack.c.l.b16 %v103
  %v328 = vunpack.c.l.b16 %v104
  %v329 = vunpack.c.l.b16 %v105
  %v330 = vunpack.c.l.b16 %v106
  %v331 = vunpack.c.l.b16 %v107
  %v332 = vunpack.c.l.b16 %v108
  %v333 = vunpack.c.l.b16 %v109
  %v334 = vunpack.c.l.b16 %v110
  %v335 = vunpack.c.l.b16 %v111
  %v336 = vunpack.c.l.b16 %v112
  %v337 = vunpack.c.l.b16 %v113
  %v338 = vunpack.c.l.b16 %v114
  %v339 = vunpack.c.l.b16 %v115
  %v340 = vunpack.c.l.b16 %v116
  %v341 = vunpack.c.l.b16 %v117
  %v342 = vunpack.c.l.b16 %v118
  %v343 = vunpack.c.l.b16 %v119
  %v344 = vunpack.c.l.b16 %v120
  %v345 = vunpack.c.l.b16 %v121
  %v346 = vunpack.c.l.b16 %v122
  %v347 = vunpack.c.l.b16 %v123
  %v348 = vunpack.c.l.b16 %v124
  %v349 = vunpack.c.l.b16 %v125
  %v350 = vunpack.c.l.b16 %v126
  %v351 = vunpack.c.l.b16 %v127
  %v352 = vunpack.c.l.b16 %v128
  %v353 = vunpack.c.l.b16 %v129
  %v354 = vunpack.c.l.b16 %v130
  %v355 = vunpack.c.l.b16 %v131
  %v356 = vunpack.c.l.b16 %v132
  %v357 = vunpack.c.l.b16 %v133
  %v358 = vpack.c.b16 %v311, %v310
  %v359 = vpack.c.b16 %v313, %v312
  %v360 = vpack.c.b16 %v315, %v314
  %v361 = vpack.c.b16 %v317, %v316
  %v362 = vpack.c.b16 %v319, %v318
  %v363 = vpack.c.b16 %v321, %v320
  %v364 = vpack.c.b16 %v323, %v322
  %v365 = vpack.c.b16 %v325, %v324
  %v366 = vpack.c.b16 %v327, %v326
  %v367 = vpack.c.b16 %v329, %v328
  %v368 = vpack.c.b16 %v331, %v330
  %v369 = vpack.c.b16 %v333, %v332
  %v370 = vpack.c.b16 %v335, %v334
  %v371 = vpack.c.b16 %v337, %v336
  %v372 = vpack.c.b16 %v339, %v338
  %v373 = vpack.c.b16 %v341, %v340
  %v374 = vpack.c.b16 %v343, %v342
  %v375 = vpack.c.b16 %v345, %v344
  %v376 = vpack.c.b16 %v347, %v346
  %v377 = vpack.c.b16 %v349, %v348
  %v378 = vpack.c.b16 %v351, %v350
  %v379 = vpack.c.b16 %v353, %v352
  %v380 = vpack.c.b16 %v355, %v354
  %v381 = vpack.c.b16 %v357, %v356
  %406 = vmatprep.subr.bf16.mxu0 0
  %407 = vmatpush1.bf16.msra.mxu0 %v358
  %408 = vmatprep.subr.bf16.mxu0 0
  %409 = vmatpush1.bf16.msra.mxu0 %v359
  %410 = vmatprep.subr.bf16.mxu0 0
  %411 = vmatpush1.bf16.msra.mxu0 %v360
  %412 = vmatprep.subr.bf16.mxu0 0
  %413 = vmatpush1.bf16.msra.mxu0 %v361
  %414 = vmatprep.subr.bf16.mxu0 0
  %415 = vmatpush1.bf16.msra.mxu0 %v362
  %416 = vmatprep.subr.bf16.mxu0 0
  %417 = vmatpush1.bf16.msra.mxu0 %v363
  %418 = vmatprep.subr.bf16.mxu0 0
  %419 = vmatpush1.bf16.msra.mxu0 %v364
  %420 = vmatprep.subr.bf16.mxu0 0
  %421 = vmatpush1.bf16.msra.mxu0 %v365
  %422 = vmatprep.subr.bf16.mxu0 0
  %423 = vmatpush1.bf16.msra.mxu0 %v366
  %424 = vmatprep.subr.bf16.mxu0 0
  %425 = vmatpush1.bf16.msra.mxu0 %v367
  %426 = vmatprep.subr.bf16.mxu0 0
  %427 = vmatpush1.bf16.msra.mxu0 %v368
  %428 = vmatprep.subr.bf16.mxu0 0
  %429 = vmatpush1.bf16.msra.mxu0 %v369
  %430 = vmatprep.subr.bf16.mxu0 0
  %431 = vmatpush1.bf16.msra.mxu0 %v370
  %432 = vmatprep.subr.bf16.mxu0 0
  %433 = vmatpush1.bf16.msra.mxu0 %v371
  %434 = vmatprep.subr.bf16.mxu0 0
  %435 = vmatpush1.bf16.msra.mxu0 %v372
  %436 = vmatprep.subr.bf16.mxu0 0
  %437 = vmatpush1.bf16.msra.mxu0 %v373
  %438 = vmatprep.mubr.bf16.mxu0 %v215
  %439 = vmatmul.mubr.bf16.gmra.mrb[0].mxu0 %v214
  %v440 = vpop.f32.mrb[0].mxu0
  %v441 = vadd.f32 0.0, %v440
  %v442 = vpop.f32.mrb[0].mxu0
  %v443 = vpop.f32.mrb[0].mxu0
  %v444 = vadd.f32 0.0, %v443
  %v445 = vpop.f32.mrb[0].mxu0
  %446 = vmatprep.mubr.bf16.mxu0 %v218
  %447 = vmatmul.mubr.bf16.gmra.mrb[0].mxu0 %v217
  %v448 = vpop.f32.mrb[0].mxu0
  %v449 = vadd.f32 0.0, %v448
  %v450 = vpop.f32.mrb[0].mxu0
  %v451 = vpop.f32.mrb[0].mxu0
  %v452 = vadd.f32 0.0, %v451
  %v453 = vpop.f32.mrb[0].mxu0
  %454 = vmatprep.mubr.bf16.mxu0 %v221
  %455 = vmatmul.mubr.bf16.gmra.mrb[0].mxu0 %v220
  %v456 = vpop.f32.mrb[0].mxu0
  %v457 = vadd.f32 0.0, %v456
  %v458 = vpop.f32.mrb[0].mxu0
  %v459 = vpop.f32.mrb[0].mxu0
  %v460 = vadd.f32 0.0, %v459
  %v461 = vpop.f32.mrb[0].mxu0
  %462 = vmatprep.mubr.bf16.mxu0 %v224
  %463 = vmatmul.mubr.bf16.gmra.mrb[0].mxu0 %v223
  %v464 = vpop.f32.mrb[0].mxu0
  %v465 = vadd.f32 0.0, %v464
  %v466 = vpop.f32.mrb[0].mxu0
  %v467 = vpop.f32.mrb[0].mxu0
  %v468 = vadd.f32 0.0, %v467
  %v469 = vpop.f32.mrb[0].mxu0
  %470 = vmatprep.mubr.bf16.mxu0 %v227
  %471 = vmatmul.mubr.bf16.gmra.mrb[0].mxu0 %v226
  %v472 = vpop.f32.mrb[0].mxu0
  %v473 = vadd.f32 0.0, %v472
  %v474 = vpop.f32.mrb[0].mxu0
  %v475 = vpop.f32.mrb[0].mxu0
  %v476 = vadd.f32 0.0, %v475
  %v477 = vpop.f32.mrb[0].mxu0
  %478 = vmatprep.mubr.bf16.mxu0 %v230
  %479 = vmatmul.mubr.bf16.gmra.mrb[0].mxu0 %v229
  %v480 = vpop.f32.mrb[0].mxu0
  %v481 = vadd.f32 0.0, %v480
  %v482 = vpop.f32.mrb[0].mxu0
  %v483 = vpop.f32.mrb[0].mxu0
  %v484 = vadd.f32 0.0, %v483
  %v485 = vpop.f32.mrb[0].mxu0
  %486 = vmatprep.mubr.bf16.mxu0 %v233
  %487 = vmatmul.mubr.bf16.gmra.mrb[0].mxu0 %v232
  %v488 = vpop.f32.mrb[0].mxu0
  %v489 = vadd.f32 0.0, %v488
  %v490 = vpop.f32.mrb[0].mxu0
  %v491 = vpop.f32.mrb[0].mxu0
  %v492 = vadd.f32 0.0, %v491
  %v493 = vpop.f32.mrb[0].mxu0
  %494 = vmatprep.mubr.bf16.mxu0 %v236
  %495 = vmatmul.mubr.bf16.gmra.mrb[0].mxu0 %v235
  %v496 = vpop.f32.mrb[0].mxu0
  %v497 = vadd.f32 0.0, %v496
  %v498 = vpop.f32.mrb[0].mxu0
  %v499 = vpop.f32.mrb[0].mxu0
  %v500 = vadd.f32 0.0, %v499
  %v501 = vpop.f32.mrb[0].mxu0
  %502 = vdwg.mxu0
  %503 = vmatprep.subr.bf16.mxu0 0
  %504 = vmatpush1.bf16.msra.mxu0 %v374
  %505 = vmatprep.subr.bf16.mxu0 0
  %506 = vmatpush1.bf16.msra.mxu0 %v375
  %507 = vmatprep.subr.bf16.mxu0 0
  %508 = vmatpush1.bf16.msra.mxu0 %v376
  %509 = vmatprep.subr.bf16.mxu0 0
  %510 = vmatpush1.bf16.msra.mxu0 %v377
  %511 = vmatprep.subr.bf16.mxu0 0
  %512 = vmatpush1.bf16.msra.mxu0 %v378
  %513 = vmatprep.subr.bf16.mxu0 0
  %514 = vmatpush1.bf16.msra.mxu0 %v379
  %515 = vmatprep.subr.bf16.mxu0 0
  %516 = vmatpush1.bf16.msra.mxu0 %v380
  %517 = vmatprep.subr.bf16.mxu0 0
  %518 = vmatpush1.bf16.msra.mxu0 %v381
  %519 = vmatprep.subr.bf16.mxu0 0
  %520 = vmatpush1.bf16.msra.mxu0 0
  %521 = vmatprep.subr.bf16.mxu0 0
  %522 = vmatpush1.bf16.msra.mxu0 0
  %523 = vmatprep.subr.bf16.mxu0 0
  %524 = vmatpush1.bf16.msra.mxu0 0
  %525 = vmatprep.subr.bf16.mxu0 0
  %526 = vmatpush1.bf16.msra.mxu0 0
  %527 = vmatprep.subr.bf16.mxu0 0
  %528 = vmatpush1.bf16.msra.mxu0 0
  %529 = vmatprep.subr.bf16.mxu0 0
  %530 = vmatpush1.bf16.msra.mxu0 0
  %531 = vmatprep.subr.bf16.mxu0 0
  %532 = vmatpush1.bf16.msra.mxu0 0
  %533 = vmatprep.subr.bf16.mxu0 0
  %534 = vmatpush1.bf16.msra.mxu0 0
  %535 = vmatprep.mubr.bf16.mxu0 0
  %536 = vmatmul.mubr.bf16.gmra.mrb[0].mxu0 %v216
  %v537 = vpop.f32.mrb[0].mxu0
  %v538 = vadd.f32 %v441, %v537
  %v539 = vpop.f32.mrb[0].mxu0
  %v540 = vpop.f32.mrb[0].mxu0
  %v541 = vadd.f32 %v444, %v540
  %v542 = vpop.f32.mrb[0].mxu0
  %543 = vmatprep.mubr.bf16.mxu0 0
  %544 = vmatmul.mubr.bf16.gmra.mrb[0].mxu0 %v219
  %v545 = vpop.f32.mrb[0].mxu0
  %v546 = vadd.f32 %v449, %v545
  %v547 = vpop.f32.mrb[0].mxu0
  %v548 = vpop.f32.mrb[0].mxu0
  %v549 = vadd.f32 %v452, %v548
  %v550 = vpop.f32.mrb[0].mxu0
  %551 = vmatprep.mubr.bf16.mxu0 0
  %552 = vmatmul.mubr.bf16.gmra.mrb[0].mxu0 %v222
  %v553 = vpop.f32.mrb[0].mxu0
  %v554 = vadd.f32 %v457, %v553
  %v555 = vpop.f32.mrb[0].mxu0
  %v556 = vpop.f32.mrb[0].mxu0
  %v557 = vadd.f32 %v460, %v556
  %v558 = vpop.f32.mrb[0].mxu0
  %559 = vmatprep.mubr.bf16.mxu0 0
  %560 = vmatmul.mubr.bf16.gmra.mrb[0].mxu0 %v225
  %v561 = vpop.f32.mrb[0].mxu0
  %v562 = vadd.f32 %v465, %v561
  %v563 = vpop.f32.mrb[0].mxu0
  %v564 = vpop.f32.mrb[0].mxu0
  %v565 = vadd.f32 %v468, %v564
  %v566 = vpop.f32.mrb[0].mxu0
  %567 = vmatprep.mubr.bf16.mxu0 0
  %568 = vmatmul.mubr.bf16.gmra.mrb[0].mxu0 %v228
  %v569 = vpop.f32.mrb[0].mxu0
  %v570 = vadd.f32 %v473, %v569
  %v571 = vpop.f32.mrb[0].mxu0
  %v572 = vpop.f32.mrb[0].mxu0
  %v573 = vadd.f32 %v476, %v572
  %v574 = vpop.f32.mrb[0].mxu0
  %575 = vmatprep.mubr.bf16.mxu0 0
  %576 = vmatmul.mubr.bf16.gmra.mrb[0].mxu0 %v231
  %v577 = vpop.f32.mrb[0].mxu0
  %v578 = vadd.f32 %v481, %v577
  %v579 = vpop.f32.mrb[0].mxu0
  %v580 = vpop.f32.mrb[0].mxu0
  %v581 = vadd.f32 %v484, %v580
  %v582 = vpop.f32.mrb[0].mxu0
  %583 = vmatprep.mubr.bf16.mxu0 0
  %584 = vmatmul.mubr.bf16.gmra.mrb[0].mxu0 %v234
  %v585 = vpop.f32.mrb[0].mxu0
  %v586 = vadd.f32 %v489, %v585
  %v587 = vpop.f32.mrb[0].mxu0
  %v588 = vpop.f32.mrb[0].mxu0
  %v589 = vadd.f32 %v492, %v588
  %v590 = vpop.f32.mrb[0].mxu0
  %591 = vmatprep.mubr.bf16.mxu0 0
  %592 = vmatmul.mubr.bf16.gmra.mrb[0].mxu0 %v237
  %v593 = vpop.f32.mrb[0].mxu0
  %v594 = vadd.f32 %v497, %v593
  %v595 = vpop.f32.mrb[0].mxu0
  %v596 = vpop.f32.mrb[0].mxu0
  %v597 = vadd.f32 %v500, %v596
  %v598 = vpop.f32.mrb[0].mxu0
  %599 = vdwg.mxu0
  %v600 = vadd.f32 %v38, %v538
  %v601 = vadd.f32 %v39, %v541
  %v602 = vadd.f32 %v40, %v546
  %v603 = vadd.f32 %v41, %v549
  %v604 = vadd.f32 %v42, %v554
  %v605 = vadd.f32 %v43, %v557
  %v606 = vadd.f32 %v44, %v562
  %v607 = vadd.f32 %v45, %v565
  %v608 = vadd.f32 %v46, %v570
  %v609 = vadd.f32 %v47, %v573
  %v610 = vadd.f32 %v48, %v578
  %v611 = vadd.f32 %v49, %v581
  %v612 = vadd.f32 %v50, %v586
  %v613 = vadd.f32 %v51, %v589
  %v614 = vadd.f32 %v52, %v594
  %v615 = vadd.f32 %v53, %v597
  %616 = vst [vmem:[#allocation2] sm:$0xff] %v600
  %617 = vst [vmem:[#allocation2 + $0x8] sm:$0xff] %v601
  %618 = vst [vmem:[#allocation2 + $0x10] sm:$0xff] %v602
  %619 = vst [vmem:[#allocation2 + $0x18] sm:$0xff] %v603
  %620 = vst [vmem:[#allocation2 + $0x20] sm:$0xff] %v604
  %621 = vst [vmem:[#allocation2 + $0x28] sm:$0xff] %v605
  %622 = vst [vmem:[#allocation2 + $0x30] sm:$0xff] %v606
  %623 = vst [vmem:[#allocation2 + $0x38] sm:$0xff] %v607
  %624 = vst [vmem:[#allocation2 + $0x40] sm:$0xff] %v608
  %625 = vst [vmem:[#allocation2 + $0x48] sm:$0xff] %v609
  %626 = vst [vmem:[#allocation2 + $0x50] sm:$0xff] %v610
  %627 = vst [vmem:[#allocation2 + $0x58] sm:$0xff] %v611
  %628 = vst [vmem:[#allocation2 + $0x60] sm:$0xff] %v612
  %629 = vst [vmem:[#allocation2 + $0x68] sm:$0xff] %v613
  %630 = vst [vmem:[#allocation2 + $0x70] sm:$0xff] %v614
  %631 = vst [vmem:[#allocation2 + $0x78] sm:$0xff] %v615
  // Predicated region
  $region22: #{resnet_generator_forward.13} parent=0 // pred_check
    %p632 = pneg %p18
  $region23: #{resnet_generator_forward.13} parent=0 // pred_check_branch
    %634 = sbr.rel (%p632) target = $region25
  $region24: #{resnet_generator_forward.13} parent=0 // pred_region
    %v635 = vld [vmem:[#allocation2] sm:$0xff]
    %v636 = vld [vmem:[#allocation2 + $0x8] sm:$0xff]
    %v637 = vld [vmem:[#allocation2 + $0x10] sm:$0xff]
    %v638 = vld [vmem:[#allocation2 + $0x18] sm:$0xff]
    %v639 = vld [vmem:[#allocation2 + $0x20] sm:$0xff]
    %v640 = vld [vmem:[#allocation2 + $0x28] sm:$0xff]
    %v641 = vld [vmem:[#allocation2 + $0x30] sm:$0xff]
    %v642 = vld [vmem:[#allocation2 + $0x38] sm:$0xff]
    %v643 = vld [vmem:[#allocation2 + $0x40] sm:$0xff]
    %v644 = vld [vmem:[#allocation2 + $0x48] sm:$0xff]
    %v645 = vld [vmem:[#allocation2 + $0x50] sm:$0xff]
    %v646 = vld [vmem:[#allocation2 + $0x58] sm:$0xff]
    %v647 = vld [vmem:[#allocation2 + $0x60] sm:$0xff]
    %v648 = vld [vmem:[#allocation2 + $0x68] sm:$0xff]
    %v649 = vld [vmem:[#allocation2 + $0x70] sm:$0xff]
    %v650 = vld [vmem:[#allocation2 + $0x78] sm:$0xff]
    %v651 = vld [vmem:[%s2] sm:$0x1]
    %v653 = vlaneseq
    %v654 = vshrl.u32 %v653, 7
    %v655 = vsub.s32 0, %v654
    %v656 = vrot.slane %v651, %v655
    %v658 = vmul.f32 %v635, %v656
    %v659 = vmul.f32 %v636, %v656
    %v660 = vmul.f32 %v637, %v656
    %v661 = vmul.f32 %v638, %v656
    %v662 = vmul.f32 %v639, %v656
    %v663 = vmul.f32 %v640, %v656
    %v664 = vmul.f32 %v641, %v656
    %v665 = vmul.f32 %v642, %v656
    %v666 = vmul.f32 %v643, %v656
    %v667 = vmul.f32 %v644, %v656
    %v668 = vmul.f32 %v645, %v656
    %v669 = vmul.f32 %v646, %v656
    %v670 = vmul.f32 %v647, %v656
    %v671 = vmul.f32 %v648, %v656
    %v672 = vmul.f32 %v649, %v656
    %v673 = vmul.f32 %v650, %v656
    %v674 = vld [vmem:[%s3] sm:$0x1]
    %v676 = vlaneseq
    %v677 = vshrl.u32 %v676, 7
    %v678 = vsub.s32 0, %v677
    %v679 = vrot.slane %v674, %v678
    %v681 = vadd.f32 %v658, %v679
    %v682 = vadd.f32 %v659, %v679
    %v683 = vadd.f32 %v660, %v679
    %v684 = vadd.f32 %v661, %v679
    %v685 = vadd.f32 %v662, %v679
    %v686 = vadd.f32 %v663, %v679
    %v687 = vadd.f32 %v664, %v679
    %v688 = vadd.f32 %v665, %v679
    %v689 = vadd.f32 %v666, %v679
    %v690 = vadd.f32 %v667, %v679
    %v691 = vadd.f32 %v668, %v679
    %v692 = vadd.f32 %v669, %v679
    %v693 = vadd.f32 %v670, %v679
    %v694 = vadd.f32 %v671, %v679
    %v695 = vadd.f32 %v672, %v679
    %v696 = vadd.f32 %v673, %v679
    %v697 = vmax.f32 %v681, 0.0
    %v698 = vmax.f32 %v682, 0.0
    %v699 = vmax.f32 %v683, 0.0
    %v700 = vmax.f32 %v684, 0.0
    %v701 = vmax.f32 %v685, 0.0
    %v702 = vmax.f32 %v686, 0.0
    %v703 = vmax.f32 %v687, 0.0
    %v704 = vmax.f32 %v688, 0.0
    %v705 = vmax.f32 %v689, 0.0
    %v706 = vmax.f32 %v690, 0.0
    %v707 = vmax.f32 %v691, 0.0
    %v708 = vmax.f32 %v692, 0.0
    %v709 = vmax.f32 %v693, 0.0
    %v710 = vmax.f32 %v694, 0.0
    %v711 = vmax.f32 %v695, 0.0
    %v712 = vmax.f32 %v696, 0.0
    %713 = vst [vmem:[%s4] sm:$0xff] %v697
    %714 = vst [vmem:[%s4 + $0x8] sm:$0xff] %v698
    %715 = vst [vmem:[%s4 + $0x10] sm:$0xff] %v699
    %716 = vst [vmem:[%s4 + $0x18] sm:$0xff] %v700
    %717 = vst [vmem:[%s4 + $0x20] sm:$0xff] %v701
    %718 = vst [vmem:[%s4 + $0x28] sm:$0xff] %v702
    %719 = vst [vmem:[%s4 + $0x30] sm:$0xff] %v703
    %720 = vst [vmem:[%s4 + $0x38] sm:$0xff] %v704
    %721 = vst [vmem:[%s4 + $0x40] sm:$0xff] %v705
    %722 = vst [vmem:[%s4 + $0x48] sm:$0xff] %v706
    %723 = vst [vmem:[%s4 + $0x50] sm:$0xff] %v707
    %724 = vst [vmem:[%s4 + $0x58] sm:$0xff] %v708
    %725 = vst [vmem:[%s4 + $0x60] sm:$0xff] %v709
    %726 = vst [vmem:[%s4 + $0x68] sm:$0xff] %v710
    %727 = vst [vmem:[%s4 + $0x70] sm:$0xff] %v711
    %728 = vst [vmem:[%s4 + $0x78] sm:$0xff] %v712
  $region25: #{resnet_generator_forward.13} parent=0 // pred_fallthru
    _
  // Predicated region
  $region26: #{resnet_generator_forward.13} parent=0 // pred_check
    _
  $region27: #{resnet_generator_forward.13} parent=0 // pred_check_branch
    %730 = sbr.rel (0) target = $region29
  $region28: #{resnet_generator_forward.13} parent=0 // pred_region
    _
  $region29: #{resnet_generator_forward.13} parent=0 // pred_fallthru
    _
  // Predicated region
  $region30: #{resnet_generator_forward.13} parent=0 // pred_check
    _
  $region31: #{resnet_generator_forward.13} parent=0 // pred_check_branch
    %732 = sbr.rel (0) target = $region33
  $region32: #{resnet_generator_forward.13} parent=0 // pred_region
    _
  $region33: #{resnet_generator_forward.13} parent=0 // pred_fallthru
    _

// kernel: resnet_generator_forward.14
$region0: #{resnet_generator_forward.14}
  #allocation0 [shape = 'u32[]', space=smem, size = 0x4, offset = 0x4, fixed_abs, tag = 'smem constant byte address 0x4 - core index']
  #allocation1 [shape = 'u32[144,128]{1,0:T(1,128)}', space=vmem, size = 0x12000, scoped, tag = 'internal scratch']
  #allocation2 [shape = 'f32[128,128]{1,0:T(8,128)}', space=vmem, size = 0x10000, scoped, tag = 'scratch operand']
  %s0 = inlined_call_operand.vmem [shape: bf16[128,384], index: 0, kind: input, shape index: {}]
  %s1 = inlined_call_operand.vmem [shape: bf16[384,128], index: 1, kind: input, shape index: {}]
  %s2 = inlined_call_operand.vmem [shape: f32[1,128], index: 2, kind: input, shape index: {}]
  %s3 = inlined_call_operand.vmem [shape: f32[1,128], index: 3, kind: input, shape index: {}]
  %s4 = inlined_call_operand.vmem [shape: f32[128,128], index: 4, kind: input, shape index: {}]
  %s5 = inlined_call_operand.vmem [shape: f32[128,128], index: 5, kind: output, shape index: {}]
  %s6 = sld [smem:[#allocation0]]
  $region38: #{resnet_generator_forward.14} parent=0
    _
  %s8 = ssub.s32 1, %s6
  %s9 = scalar_select 0, %s8, %s6
  // Predicated region
  $region2: #{resnet_generator_forward.14} parent=0 // pred_check
    _
  $region3: #{resnet_generator_forward.14} parent=0 // pred_check_branch
    %11 = sbr.rel (0) target = $region5
  $region4: #{resnet_generator_forward.14} parent=0 // pred_region
    _
  $region5: #{resnet_generator_forward.14} parent=0 // pred_fallthru
    _
  // Predicated region
  $region6: #{resnet_generator_forward.14} parent=0 // pred_check
    _
  $region7: #{resnet_generator_forward.14} parent=0 // pred_check_branch
    %13 = sbr.rel (0) target = $region9
  $region8: #{resnet_generator_forward.14} parent=0 // pred_region
    _
  $region9: #{resnet_generator_forward.14} parent=0 // pred_fallthru
    _
  // Predicated region
  $region10: #{resnet_generator_forward.14} parent=0 // pred_check
    _
  $region11: #{resnet_generator_forward.14} parent=0 // pred_check_branch
    %15 = sbr.rel (0) target = $region13
  $region12: #{resnet_generator_forward.14} parent=0 // pred_region
    _
  $region13: #{resnet_generator_forward.14} parent=0 // pred_fallthru
    _
  // Predicated region
  $region14: #{resnet_generator_forward.14} parent=0 // pred_check
    _
  $region15: #{resnet_generator_forward.14} parent=0 // pred_check_branch
    %17 = sbr.rel (0) target = $region17
  $region16: #{resnet_generator_forward.14} parent=0 // pred_region
    _
  $region17: #{resnet_generator_forward.14} parent=0 // pred_fallthru
    _
  // Predicated region
  $region18: #{resnet_generator_forward.14} parent=0 // pred_check
    _
  $region19: #{resnet_generator_forward.14} parent=0 // pred_check_branch
    %19 = sbr.rel (0) target = $region21
  $region20: #{resnet_generator_forward.14} parent=0 // pred_region
    _
  $region21: #{resnet_generator_forward.14} parent=0 // pred_fallthru
    _
  %p21 = scmp.eq.s32.totalorder 0, 0
  // Predicated region
  $region22: #{resnet_generator_forward.14} parent=0 // pred_check
    %p22 = pneg %p21
  $region23: #{resnet_generator_forward.14} parent=0 // pred_check_branch
    %24 = sbr.rel (%p22) target = $region25
  $region24: #{resnet_generator_forward.14} parent=0 // pred_region
    %25 = vst [vmem:[#allocation2] sm:$0xff] 0.0
    %26 = vst [vmem:[#allocation2 + $0x8] sm:$0xff] 0.0
    %27 = vst [vmem:[#allocation2 + $0x10] sm:$0xff] 0.0
    %28 = vst [vmem:[#allocation2 + $0x18] sm:$0xff] 0.0
    %29 = vst [vmem:[#allocation2 + $0x20] sm:$0xff] 0.0
    %30 = vst [vmem:[#allocation2 + $0x28] sm:$0xff] 0.0
    %31 = vst [vmem:[#allocation2 + $0x30] sm:$0xff] 0.0
    %32 = vst [vmem:[#allocation2 + $0x38] sm:$0xff] 0.0
    %33 = vst [vmem:[#allocation2 + $0x40] sm:$0xff] 0.0
    %34 = vst [vmem:[#allocation2 + $0x48] sm:$0xff] 0.0
    %35 = vst [vmem:[#allocation2 + $0x50] sm:$0xff] 0.0
    %36 = vst [vmem:[#allocation2 + $0x58] sm:$0xff] 0.0
    %37 = vst [vmem:[#allocation2 + $0x60] sm:$0xff] 0.0
    %38 = vst [vmem:[#allocation2 + $0x68] sm:$0xff] 0.0
    %39 = vst [vmem:[#allocation2 + $0x70] sm:$0xff] 0.0
    %40 = vst [vmem:[#allocation2 + $0x78] sm:$0xff] 0.0
  $region25: #{resnet_generator_forward.14} parent=0 // pred_fallthru
    _
  %v41 = vld [vmem:[#allocation2] sm:$0xff]
  %v42 = vld [vmem:[#allocation2 + $0x8] sm:$0xff]
  %v43 = vld [vmem:[#allocation2 + $0x10] sm:$0xff]
  %v44 = vld [vmem:[#allocation2 + $0x18] sm:$0xff]
  %v45 = vld [vmem:[#allocation2 + $0x20] sm:$0xff]
  %v46 = vld [vmem:[#allocation2 + $0x28] sm:$0xff]
  %v47 = vld [vmem:[#allocation2 + $0x30] sm:$0xff]
  %v48 = vld [vmem:[#allocation2 + $0x38] sm:$0xff]
  %v49 = vld [vmem:[#allocation2 + $0x40] sm:$0xff]
  %v50 = vld [vmem:[#allocation2 + $0x48] sm:$0xff]
  %v51 = vld [vmem:[#allocation2 + $0x50] sm:$0xff]
  %v52 = vld [vmem:[#allocation2 + $0x58] sm:$0xff]
  %v53 = vld [vmem:[#allocation2 + $0x60] sm:$0xff]
  %v54 = vld [vmem:[#allocation2 + $0x68] sm:$0xff]
  %v55 = vld [vmem:[#allocation2 + $0x70] sm:$0xff]
  %v56 = vld [vmem:[#allocation2 + $0x78] sm:$0xff]
  %v57 = vld [vmem:[%s0] sm:$0xff]
  %v58 = vld [vmem:[%s0 + $0x8] sm:$0xf]
  %v59 = vld [vmem:[%s0 + $0xc] sm:$0xff]
  %v60 = vld [vmem:[%s0 + $0x14] sm:$0xf]
  %v61 = vld [vmem:[%s0 + $0x18] sm:$0xff]
  %v62 = vld [vmem:[%s0 + $0x20] sm:$0xf]
  %v63 = vld [vmem:[%s0 + $0x24] sm:$0xff]
  %v64 = vld [vmem:[%s0 + $0x2c] sm:$0xf]
  %v65 = vld [vmem:[%s0 + $0x30] sm:$0xff]
  %v66 = vld [vmem:[%s0 + $0x38] sm:$0xf]
  %v67 = vld [vmem:[%s0 + $0x3c] sm:$0xff]
  %v68 = vld [vmem:[%s0 + $0x44] sm:$0xf]
  %v69 = vld [vmem:[%s0 + $0x48] sm:$0xff]
  %v70 = vld [vmem:[%s0 + $0x50] sm:$0xf]
  %v71 = vld [vmem:[%s0 + $0x54] sm:$0xff]
  %v72 = vld [vmem:[%s0 + $0x5c] sm:$0xf]
  %v73 = vld [vmem:[%s0 + $0x60] sm:$0xff]
  %v74 = vld [vmem:[%s0 + $0x68] sm:$0xf]
  %v75 = vld [vmem:[%s0 + $0x6c] sm:$0xff]
  %v76 = vld [vmem:[%s0 + $0x74] sm:$0xf]
  %v77 = vld [vmem:[%s0 + $0x78] sm:$0xff]
  %v78 = vld [vmem:[%s0 + $0x80] sm:$0xf]
  %v79 = vld [vmem:[%s0 + $0x84] sm:$0xff]
  %v80 = vld [vmem:[%s0 + $0x8c] sm:$0xf]
  %v81 = vld [vmem:[%s0 + $0x90] sm:$0xff]
  %v82 = vld [vmem:[%s0 + $0x98] sm:$0xf]
  %v83 = vld [vmem:[%s0 + $0x9c] sm:$0xff]
  %v84 = vld [vmem:[%s0 + $0xa4] sm:$0xf]
  %v85 = vld [vmem:[%s0 + $0xa8] sm:$0xff]
  %v86 = vld [vmem:[%s0 + $0xb0] sm:$0xf]
  %v87 = vld [vmem:[%s0 + $0xb4] sm:$0xff]
  %v88 = vld [vmem:[%s0 + $0xbc] sm:$0xf]
  %v89 = vld [vmem:[%s1] sm:$0xf]
  %v90 = vld [vmem:[%s1 + $0x4] sm:$0xf]
  %v91 = vld [vmem:[%s1 + $0x8] sm:$0xf]
  %v92 = vld [vmem:[%s1 + $0xc] sm:$0xf]
  %v93 = vld [vmem:[%s1 + $0x10] sm:$0xf]
  %v94 = vld [vmem:[%s1 + $0x14] sm:$0xf]
  %v95 = vld [vmem:[%s1 + $0x18] sm:$0xf]
  %v96 = vld [vmem:[%s1 + $0x1c] sm:$0xf]
  %v97 = vld [vmem:[%s1 + $0x20] sm:$0xf]
  %v98 = vld [vmem:[%s1 + $0x24] sm:$0xf]
  %v99 = vld [vmem:[%s1 + $0x28] sm:$0xf]
  %v100 = vld [vmem:[%s1 + $0x2c] sm:$0xf]
  %v101 = vld [vmem:[%s1 + $0x30] sm:$0xf]
  %v102 = vld [vmem:[%s1 + $0x34] sm:$0xf]
  %v103 = vld [vmem:[%s1 + $0x38] sm:$0xf]
  %v104 = vld [vmem:[%s1 + $0x3c] sm:$0xf]
  %v105 = vld [vmem:[%s1 + $0x40] sm:$0xf]
  %v106 = vld [vmem:[%s1 + $0x44] sm:$0xf]
  %v107 = vld [vmem:[%s1 + $0x48] sm:$0xf]
  %v108 = vld [vmem:[%s1 + $0x4c] sm:$0xf]
  %v109 = vld [vmem:[%s1 + $0x50] sm:$0xf]
  %v110 = vld [vmem:[%s1 + $0x54] sm:$0xf]
  %v111 = vld [vmem:[%s1 + $0x58] sm:$0xf]
  %v112 = vld [vmem:[%s1 + $0x5c] sm:$0xf]
  %v113 = vld [vmem:[%s1 + $0x60] sm:$0xf]
  %v114 = vld [vmem:[%s1 + $0x64] sm:$0xf]
  %v115 = vld [vmem:[%s1 + $0x68] sm:$0xf]
  %v116 = vld [vmem:[%s1 + $0x6c] sm:$0xf]
  %v117 = vld [vmem:[%s1 + $0x70] sm:$0xf]
  %v118 = vld [vmem:[%s1 + $0x74] sm:$0xf]
  %v119 = vld [vmem:[%s1 + $0x78] sm:$0xf]
  %v120 = vld [vmem:[%s1 + $0x7c] sm:$0xf]
  %v121 = vld [vmem:[%s1 + $0x80] sm:$0xf]
  %v122 = vld [vmem:[%s1 + $0x84] sm:$0xf]
  %v123 = vld [vmem:[%s1 + $0x88] sm:$0xf]
  %v124 = vld [vmem:[%s1 + $0x8c] sm:$0xf]
  %v125 = vld [vmem:[%s1 + $0x90] sm:$0xf]
  %v126 = vld [vmem:[%s1 + $0x94] sm:$0xf]
  %v127 = vld [vmem:[%s1 + $0x98] sm:$0xf]
  %v128 = vld [vmem:[%s1 + $0x9c] sm:$0xf]
  %v129 = vld [vmem:[%s1 + $0xa0] sm:$0xf]
  %v130 = vld [vmem:[%s1 + $0xa4] sm:$0xf]
  %v131 = vld [vmem:[%s1 + $0xa8] sm:$0xf]
  %v132 = vld [vmem:[%s1 + $0xac] sm:$0xf]
  %v133 = vld [vmem:[%s1 + $0xb0] sm:$0xf]
  %v134 = vld [vmem:[%s1 + $0xb4] sm:$0xf]
  %v135 = vld [vmem:[%s1 + $0xb8] sm:$0xf]
  %v136 = vld [vmem:[%s1 + $0xbc] sm:$0xf]
  %v169 = vunpack.c.l.b16 %v57
  %v170 = vunpack.c.h.b16 %v57
  %v171 = vunpack.c.l.b16 %v58
  %v172 = vunpack.c.l.b16 %v59
  %v173 = vunpack.c.h.b16 %v59
  %v174 = vunpack.c.l.b16 %v60
  %v175 = vunpack.c.l.b16 %v61
  %v176 = vunpack.c.h.b16 %v61
  %v177 = vunpack.c.l.b16 %v62
  %v178 = vunpack.c.l.b16 %v63
  %v179 = vunpack.c.h.b16 %v63
  %v180 = vunpack.c.l.b16 %v64
  %v181 = vunpack.c.l.b16 %v65
  %v182 = vunpack.c.h.b16 %v65
  %v183 = vunpack.c.l.b16 %v66
  %v184 = vunpack.c.l.b16 %v67
  %v185 = vunpack.c.h.b16 %v67
  %v186 = vunpack.c.l.b16 %v68
  %v187 = vunpack.c.l.b16 %v69
  %v188 = vunpack.c.h.b16 %v69
  %v189 = vunpack.c.l.b16 %v70
  %v190 = vunpack.c.l.b16 %v71
  %v191 = vunpack.c.h.b16 %v71
  %v192 = vunpack.c.l.b16 %v72
  %v193 = vunpack.c.l.b16 %v73
  %v194 = vunpack.c.h.b16 %v73
  %v195 = vunpack.c.l.b16 %v74
  %v196 = vunpack.c.l.b16 %v75
  %v197 = vunpack.c.h.b16 %v75
  %v198 = vunpack.c.l.b16 %v76
  %v199 = vunpack.c.l.b16 %v77
  %v200 = vunpack.c.h.b16 %v77
  %v201 = vunpack.c.l.b16 %v78
  %v202 = vunpack.c.l.b16 %v79
  %v203 = vunpack.c.h.b16 %v79
  %v204 = vunpack.c.l.b16 %v80
  %v205 = vunpack.c.l.b16 %v81
  %v206 = vunpack.c.h.b16 %v81
  %v207 = vunpack.c.l.b16 %v82
  %v208 = vunpack.c.l.b16 %v83
  %v209 = vunpack.c.h.b16 %v83
  %v210 = vunpack.c.l.b16 %v84
  %v211 = vunpack.c.l.b16 %v85
  %v212 = vunpack.c.h.b16 %v85
  %v213 = vunpack.c.l.b16 %v86
  %v214 = vunpack.c.l.b16 %v87
  %v215 = vunpack.c.h.b16 %v87
  %v216 = vunpack.c.l.b16 %v88
  %v217 = vpack.c.b16 %v172, %v169
  %v218 = vpack.c.b16 %v173, %v170
  %v219 = vpack.c.b16 %v174, %v171
  %v220 = vpack.c.b16 %v178, %v175
  %v221 = vpack.c.b16 %v179, %v176
  %v222 = vpack.c.b16 %v180, %v177
  %v223 = vpack.c.b16 %v184, %v181
  %v224 = vpack.c.b16 %v185, %v182
  %v225 = vpack.c.b16 %v186, %v183
  %v226 = vpack.c.b16 %v190, %v187
  %v227 = vpack.c.b16 %v191, %v188
  %v228 = vpack.c.b16 %v192, %v189
  %v229 = vpack.c.b16 %v196, %v193
  %v230 = vpack.c.b16 %v197, %v194
  %v231 = vpack.c.b16 %v198, %v195
  %v232 = vpack.c.b16 %v202, %v199
  %v233 = vpack.c.b16 %v203, %v200
  %v234 = vpack.c.b16 %v204, %v201
  %v235 = vpack.c.b16 %v208, %v205
  %v236 = vpack.c.b16 %v209, %v206
  %v237 = vpack.c.b16 %v210, %v207
  %v238 = vpack.c.b16 %v214, %v211
  %v239 = vpack.c.b16 %v215, %v212
  %v240 = vpack.c.b16 %v216, %v213
  %v313 = vunpack.c.l.b16 %v89
  %v314 = vunpack.c.l.b16 %v90
  %v315 = vunpack.c.l.b16 %v91
  %v316 = vunpack.c.l.b16 %v92
  %v317 = vunpack.c.l.b16 %v93
  %v318 = vunpack.c.l.b16 %v94
  %v319 = vunpack.c.l.b16 %v95
  %v320 = vunpack.c.l.b16 %v96
  %v321 = vunpack.c.l.b16 %v97
  %v322 = vunpack.c.l.b16 %v98
  %v323 = vunpack.c.l.b16 %v99
  %v324 = vunpack.c.l.b16 %v100
  %v325 = vunpack.c.l.b16 %v101
  %v326 = vunpack.c.l.b16 %v102
  %v327 = vunpack.c.l.b16 %v103
  %v328 = vunpack.c.l.b16 %v104
  %v329 = vunpack.c.l.b16 %v105
  %v330 = vunpack.c.l.b16 %v106
  %v331 = vunpack.c.l.b16 %v107
  %v332 = vunpack.c.l.b16 %v108
  %v333 = vunpack.c.l.b16 %v109
  %v334 = vunpack.c.l.b16 %v110
  %v335 = vunpack.c.l.b16 %v111
  %v336 = vunpack.c.l.b16 %v112
  %v337 = vunpack.c.l.b16 %v113
  %v338 = vunpack.c.l.b16 %v114
  %v339 = vunpack.c.l.b16 %v115
  %v340 = vunpack.c.l.b16 %v116
  %v341 = vunpack.c.l.b16 %v117
  %v342 = vunpack.c.l.b16 %v118
  %v343 = vunpack.c.l.b16 %v119
  %v344 = vunpack.c.l.b16 %v120
  %v345 = vunpack.c.l.b16 %v121
  %v346 = vunpack.c.l.b16 %v122
  %v347 = vunpack.c.l.b16 %v123
  %v348 = vunpack.c.l.b16 %v124
  %v349 = vunpack.c.l.b16 %v125
  %v350 = vunpack.c.l.b16 %v126
  %v351 = vunpack.c.l.b16 %v127
  %v352 = vunpack.c.l.b16 %v128
  %v353 = vunpack.c.l.b16 %v129
  %v354 = vunpack.c.l.b16 %v130
  %v355 = vunpack.c.l.b16 %v131
  %v356 = vunpack.c.l.b16 %v132
  %v357 = vunpack.c.l.b16 %v133
  %v358 = vunpack.c.l.b16 %v134
  %v359 = vunpack.c.l.b16 %v135
  %v360 = vunpack.c.l.b16 %v136
  %v361 = vpack.c.b16 %v314, %v313
  %v362 = vpack.c.b16 %v316, %v315
  %v363 = vpack.c.b16 %v318, %v317
  %v364 = vpack.c.b16 %v320, %v319
  %v365 = vpack.c.b16 %v322, %v321
  %v366 = vpack.c.b16 %v324, %v323
  %v367 = vpack.c.b16 %v326, %v325
  %v368 = vpack.c.b16 %v328, %v327
  %v369 = vpack.c.b16 %v330, %v329
  %v370 = vpack.c.b16 %v332, %v331
  %v371 = vpack.c.b16 %v334, %v333
  %v372 = vpack.c.b16 %v336, %v335
  %v373 = vpack.c.b16 %v338, %v337
  %v374 = vpack.c.b16 %v340, %v339
  %v375 = vpack.c.b16 %v342, %v341
  %v376 = vpack.c.b16 %v344, %v343
  %v377 = vpack.c.b16 %v346, %v345
  %v378 = vpack.c.b16 %v348, %v347
  %v379 = vpack.c.b16 %v350, %v349
  %v380 = vpack.c.b16 %v352, %v351
  %v381 = vpack.c.b16 %v354, %v353
  %v382 = vpack.c.b16 %v356, %v355
  %v383 = vpack.c.b16 %v358, %v357
  %v384 = vpack.c.b16 %v360, %v359
  %409 = vmatprep.subr.bf16.mxu0 0
  %410 = vmatpush1.bf16.msra.mxu0 %v361
  %411 = vmatprep.subr.bf16.mxu0 0
  %412 = vmatpush1.bf16.msra.mxu0 %v362
  %413 = vmatprep.subr.bf16.mxu0 0
  %414 = vmatpush1.bf16.msra.mxu0 %v363
  %415 = vmatprep.subr.bf16.mxu0 0
  %416 = vmatpush1.bf16.msra.mxu0 %v364
  %417 = vmatprep.subr.bf16.mxu0 0
  %418 = vmatpush1.bf16.msra.mxu0 %v365
  %419 = vmatprep.subr.bf16.mxu0 0
  %420 = vmatpush1.bf16.msra.mxu0 %v366
  %421 = vmatprep.subr.bf16.mxu0 0
  %422 = vmatpush1.bf16.msra.mxu0 %v367
  %423 = vmatprep.subr.bf16.mxu0 0
  %424 = vmatpush1.bf16.msra.mxu0 %v368
  %425 = vmatprep.subr.bf16.mxu0 0
  %426 = vmatpush1.bf16.msra.mxu0 %v369
  %427 = vmatprep.subr.bf16.mxu0 0
  %428 = vmatpush1.bf16.msra.mxu0 %v370
  %429 = vmatprep.subr.bf16.mxu0 0
  %430 = vmatpush1.bf16.msra.mxu0 %v371
  %431 = vmatprep.subr.bf16.mxu0 0
  %432 = vmatpush1.bf16.msra.mxu0 %v372
  %433 = vmatprep.subr.bf16.mxu0 0
  %434 = vmatpush1.bf16.msra.mxu0 %v373
  %435 = vmatprep.subr.bf16.mxu0 0
  %436 = vmatpush1.bf16.msra.mxu0 %v374
  %437 = vmatprep.subr.bf16.mxu0 0
  %438 = vmatpush1.bf16.msra.mxu0 %v375
  %439 = vmatprep.subr.bf16.mxu0 0
  %440 = vmatpush1.bf16.msra.mxu0 %v376
  %441 = vmatprep.mubr.bf16.mxu0 %v218
  %442 = vmatmul.mubr.bf16.gmra.mrb[0].mxu0 %v217
  %v443 = vpop.f32.mrb[0].mxu0
  %v444 = vadd.f32 0.0, %v443
  %v445 = vpop.f32.mrb[0].mxu0
  %v446 = vpop.f32.mrb[0].mxu0
  %v447 = vadd.f32 0.0, %v446
  %v448 = vpop.f32.mrb[0].mxu0
  %449 = vmatprep.mubr.bf16.mxu0 %v221
  %450 = vmatmul.mubr.bf16.gmra.mrb[0].mxu0 %v220
  %v451 = vpop.f32.mrb[0].mxu0
  %v452 = vadd.f32 0.0, %v451
  %v453 = vpop.f32.mrb[0].mxu0
  %v454 = vpop.f32.mrb[0].mxu0
  %v455 = vadd.f32 0.0, %v454
  %v456 = vpop.f32.mrb[0].mxu0
  %457 = vmatprep.mubr.bf16.mxu0 %v224
  %458 = vmatmul.mubr.bf16.gmra.mrb[0].mxu0 %v223
  %v459 = vpop.f32.mrb[0].mxu0
  %v460 = vadd.f32 0.0, %v459
  %v461 = vpop.f32.mrb[0].mxu0
  %v462 = vpop.f32.mrb[0].mxu0
  %v463 = vadd.f32 0.0, %v462
  %v464 = vpop.f32.mrb[0].mxu0
  %465 = vmatprep.mubr.bf16.mxu0 %v227
  %466 = vmatmul.mubr.bf16.gmra.mrb[0].mxu0 %v226
  %v467 = vpop.f32.mrb[0].mxu0
  %v468 = vadd.f32 0.0, %v467
  %v469 = vpop.f32.mrb[0].mxu0
  %v470 = vpop.f32.mrb[0].mxu0
  %v471 = vadd.f32 0.0, %v470
  %v472 = vpop.f32.mrb[0].mxu0
  %473 = vmatprep.mubr.bf16.mxu0 %v230
  %474 = vmatmul.mubr.bf16.gmra.mrb[0].mxu0 %v229
  %v475 = vpop.f32.mrb[0].mxu0
  %v476 = vadd.f32 0.0, %v475
  %v477 = vpop.f32.mrb[0].mxu0
  %v478 = vpop.f32.mrb[0].mxu0
  %v479 = vadd.f32 0.0, %v478
  %v480 = vpop.f32.mrb[0].mxu0
  %481 = vmatprep.mubr.bf16.mxu0 %v233
  %482 = vmatmul.mubr.bf16.gmra.mrb[0].mxu0 %v232
  %v483 = vpop.f32.mrb[0].mxu0
  %v484 = vadd.f32 0.0, %v483
  %v485 = vpop.f32.mrb[0].mxu0
  %v486 = vpop.f32.mrb[0].mxu0
  %v487 = vadd.f32 0.0, %v486
  %v488 = vpop.f32.mrb[0].mxu0
  %489 = vmatprep.mubr.bf16.mxu0 %v236
  %490 = vmatmul.mubr.bf16.gmra.mrb[0].mxu0 %v235
  %v491 = vpop.f32.mrb[0].mxu0
  %v492 = vadd.f32 0.0, %v491
  %v493 = vpop.f32.mrb[0].mxu0
  %v494 = vpop.f32.mrb[0].mxu0
  %v495 = vadd.f32 0.0, %v494
  %v496 = vpop.f32.mrb[0].mxu0
  %497 = vmatprep.mubr.bf16.mxu0 %v239
  %498 = vmatmul.mubr.bf16.gmra.mrb[0].mxu0 %v238
  %v499 = vpop.f32.mrb[0].mxu0
  %v500 = vadd.f32 0.0, %v499
  %v501 = vpop.f32.mrb[0].mxu0
  %v502 = vpop.f32.mrb[0].mxu0
  %v503 = vadd.f32 0.0, %v502
  %v504 = vpop.f32.mrb[0].mxu0
  %505 = vdwg.mxu0
  %506 = vmatprep.subr.bf16.mxu0 0
  %507 = vmatpush1.bf16.msra.mxu0 %v377
  %508 = vmatprep.subr.bf16.mxu0 0
  %509 = vmatpush1.bf16.msra.mxu0 %v378
  %510 = vmatprep.subr.bf16.mxu0 0
  %511 = vmatpush1.bf16.msra.mxu0 %v379
  %512 = vmatprep.subr.bf16.mxu0 0
  %513 = vmatpush1.bf16.msra.mxu0 %v380
  %514 = vmatprep.subr.bf16.mxu0 0
  %515 = vmatpush1.bf16.msra.mxu0 %v381
  %516 = vmatprep.subr.bf16.mxu0 0
  %517 = vmatpush1.bf16.msra.mxu0 %v382
  %518 = vmatprep.subr.bf16.mxu0 0
  %519 = vmatpush1.bf16.msra.mxu0 %v383
  %520 = vmatprep.subr.bf16.mxu0 0
  %521 = vmatpush1.bf16.msra.mxu0 %v384
  %522 = vmatprep.subr.bf16.mxu0 0
  %523 = vmatpush1.bf16.msra.mxu0 0
  %524 = vmatprep.subr.bf16.mxu0 0
  %525 = vmatpush1.bf16.msra.mxu0 0
  %526 = vmatprep.subr.bf16.mxu0 0
  %527 = vmatpush1.bf16.msra.mxu0 0
  %528 = vmatprep.subr.bf16.mxu0 0
  %529 = vmatpush1.bf16.msra.mxu0 0
  %530 = vmatprep.subr.bf16.mxu0 0
  %531 = vmatpush1.bf16.msra.mxu0 0
  %532 = vmatprep.subr.bf16.mxu0 0
  %533 = vmatpush1.bf16.msra.mxu0 0
  %534 = vmatprep.subr.bf16.mxu0 0
  %535 = vmatpush1.bf16.msra.mxu0 0
  %536 = vmatprep.subr.bf16.mxu0 0
  %537 = vmatpush1.bf16.msra.mxu0 0
  %538 = vmatprep.mubr.bf16.mxu0 0
  %539 = vmatmul.mubr.bf16.gmra.mrb[0].mxu0 %v219
  %v540 = vpop.f32.mrb[0].mxu0
  %v541 = vadd.f32 %v444, %v540
  %v542 = vpop.f32.mrb[0].mxu0
  %v543 = vpop.f32.mrb[0].mxu0
  %v544 = vadd.f32 %v447, %v543
  %v545 = vpop.f32.mrb[0].mxu0
  %546 = vmatprep.mubr.bf16.mxu0 0
  %547 = vmatmul.mubr.bf16.gmra.mrb[0].mxu0 %v222
  %v548 = vpop.f32.mrb[0].mxu0
  %v549 = vadd.f32 %v452, %v548
  %v550 = vpop.f32.mrb[0].mxu0
  %v551 = vpop.f32.mrb[0].mxu0
  %v552 = vadd.f32 %v455, %v551
  %v553 = vpop.f32.mrb[0].mxu0
  %554 = vmatprep.mubr.bf16.mxu0 0
  %555 = vmatmul.mubr.bf16.gmra.mrb[0].mxu0 %v225
  %v556 = vpop.f32.mrb[0].mxu0
  %v557 = vadd.f32 %v460, %v556
  %v558 = vpop.f32.mrb[0].mxu0
  %v559 = vpop.f32.mrb[0].mxu0
  %v560 = vadd.f32 %v463, %v559
  %v561 = vpop.f32.mrb[0].mxu0
  %562 = vmatprep.mubr.bf16.mxu0 0
  %563 = vmatmul.mubr.bf16.gmra.mrb[0].mxu0 %v228
  %v564 = vpop.f32.mrb[0].mxu0
  %v565 = vadd.f32 %v468, %v564
  %v566 = vpop.f32.mrb[0].mxu0
  %v567 = vpop.f32.mrb[0].mxu0
  %v568 = vadd.f32 %v471, %v567
  %v569 = vpop.f32.mrb[0].mxu0
  %570 = vmatprep.mubr.bf16.mxu0 0
  %571 = vmatmul.mubr.bf16.gmra.mrb[0].mxu0 %v231
  %v572 = vpop.f32.mrb[0].mxu0
  %v573 = vadd.f32 %v476, %v572
  %v574 = vpop.f32.mrb[0].mxu0
  %v575 = vpop.f32.mrb[0].mxu0
  %v576 = vadd.f32 %v479, %v575
  %v577 = vpop.f32.mrb[0].mxu0
  %578 = vmatprep.mubr.bf16.mxu0 0
  %579 = vmatmul.mubr.bf16.gmra.mrb[0].mxu0 %v234
  %v580 = vpop.f32.mrb[0].mxu0
  %v581 = vadd.f32 %v484, %v580
  %v582 = vpop.f32.mrb[0].mxu0
  %v583 = vpop.f32.mrb[0].mxu0
  %v584 = vadd.f32 %v487, %v583
  %v585 = vpop.f32.mrb[0].mxu0
  %586 = vmatprep.mubr.bf16.mxu0 0
  %587 = vmatmul.mubr.bf16.gmra.mrb[0].mxu0 %v237
  %v588 = vpop.f32.mrb[0].mxu0
  %v589 = vadd.f32 %v492, %v588
  %v590 = vpop.f32.mrb[0].mxu0
  %v591 = vpop.f32.mrb[0].mxu0
  %v592 = vadd.f32 %v495, %v591
  %v593 = vpop.f32.mrb[0].mxu0
  %594 = vmatprep.mubr.bf16.mxu0 0
  %595 = vmatmul.mubr.bf16.gmra.mrb[0].mxu0 %v240
  %v596 = vpop.f32.mrb[0].mxu0
  %v597 = vadd.f32 %v500, %v596
  %v598 = vpop.f32.mrb[0].mxu0
  %v599 = vpop.f32.mrb[0].mxu0
  %v600 = vadd.f32 %v503, %v599
  %v601 = vpop.f32.mrb[0].mxu0
  %602 = vdwg.mxu0
  %v603 = vadd.f32 %v41, %v541
  %v604 = vadd.f32 %v42, %v544
  %v605 = vadd.f32 %v43, %v549
  %v606 = vadd.f32 %v44, %v552
  %v607 = vadd.f32 %v45, %v557
  %v608 = vadd.f32 %v46, %v560
  %v609 = vadd.f32 %v47, %v565
  %v610 = vadd.f32 %v48, %v568
  %v611 = vadd.f32 %v49, %v573
  %v612 = vadd.f32 %v50, %v576
  %v613 = vadd.f32 %v51, %v581
  %v614 = vadd.f32 %v52, %v584
  %v615 = vadd.f32 %v53, %v589
  %v616 = vadd.f32 %v54, %v592
  %v617 = vadd.f32 %v55, %v597
  %v618 = vadd.f32 %v56, %v600
  %619 = vst [vmem:[#allocation2] sm:$0xff] %v603
  %620 = vst [vmem:[#allocation2 + $0x8] sm:$0xff] %v604
  %621 = vst [vmem:[#allocation2 + $0x10] sm:$0xff] %v605
  %622 = vst [vmem:[#allocation2 + $0x18] sm:$0xff] %v606
  %623 = vst [vmem:[#allocation2 + $0x20] sm:$0xff] %v607
  %624 = vst [vmem:[#allocation2 + $0x28] sm:$0xff] %v608
  %625 = vst [vmem:[#allocation2 + $0x30] sm:$0xff] %v609
  %626 = vst [vmem:[#allocation2 + $0x38] sm:$0xff] %v610
  %627 = vst [vmem:[#allocation2 + $0x40] sm:$0xff] %v611
  %628 = vst [vmem:[#allocation2 + $0x48] sm:$0xff] %v612
  %629 = vst [vmem:[#allocation2 + $0x50] sm:$0xff] %v613
  %630 = vst [vmem:[#allocation2 + $0x58] sm:$0xff] %v614
  %631 = vst [vmem:[#allocation2 + $0x60] sm:$0xff] %v615
  %632 = vst [vmem:[#allocation2 + $0x68] sm:$0xff] %v616
  %633 = vst [vmem:[#allocation2 + $0x70] sm:$0xff] %v617
  %634 = vst [vmem:[#allocation2 + $0x78] sm:$0xff] %v618
  // Predicated region
  $region26: #{resnet_generator_forward.14} parent=0 // pred_check
    %p635 = pneg %p21
  $region27: #{resnet_generator_forward.14} parent=0 // pred_check_branch
    %637 = sbr.rel (%p635) target = $region29
  $region28: #{resnet_generator_forward.14} parent=0 // pred_region
    %v638 = vld [vmem:[#allocation2] sm:$0xff]
    %v639 = vld [vmem:[#allocation2 + $0x8] sm:$0xff]
    %v640 = vld [vmem:[#allocation2 + $0x10] sm:$0xff]
    %v641 = vld [vmem:[#allocation2 + $0x18] sm:$0xff]
    %v642 = vld [vmem:[#allocation2 + $0x20] sm:$0xff]
    %v643 = vld [vmem:[#allocation2 + $0x28] sm:$0xff]
    %v644 = vld [vmem:[#allocation2 + $0x30] sm:$0xff]
    %v645 = vld [vmem:[#allocation2 + $0x38] sm:$0xff]
    %v646 = vld [vmem:[#allocation2 + $0x40] sm:$0xff]
    %v647 = vld [vmem:[#allocation2 + $0x48] sm:$0xff]
    %v648 = vld [vmem:[#allocation2 + $0x50] sm:$0xff]
    %v649 = vld [vmem:[#allocation2 + $0x58] sm:$0xff]
    %v650 = vld [vmem:[#allocation2 + $0x60] sm:$0xff]
    %v651 = vld [vmem:[#allocation2 + $0x68] sm:$0xff]
    %v652 = vld [vmem:[#allocation2 + $0x70] sm:$0xff]
    %v653 = vld [vmem:[#allocation2 + $0x78] sm:$0xff]
    %v654 = vld [vmem:[%s2] sm:$0x1]
    %v656 = vlaneseq
    %v657 = vshrl.u32 %v656, 7
    %v658 = vsub.s32 0, %v657
    %v659 = vrot.slane %v654, %v658
    %v661 = vmul.f32 %v638, %v659
    %v662 = vmul.f32 %v639, %v659
    %v663 = vmul.f32 %v640, %v659
    %v664 = vmul.f32 %v641, %v659
    %v665 = vmul.f32 %v642, %v659
    %v666 = vmul.f32 %v643, %v659
    %v667 = vmul.f32 %v644, %v659
    %v668 = vmul.f32 %v645, %v659
    %v669 = vmul.f32 %v646, %v659
    %v670 = vmul.f32 %v647, %v659
    %v671 = vmul.f32 %v648, %v659
    %v672 = vmul.f32 %v649, %v659
    %v673 = vmul.f32 %v650, %v659
    %v674 = vmul.f32 %v651, %v659
    %v675 = vmul.f32 %v652, %v659
    %v676 = vmul.f32 %v653, %v659
    %v677 = vld [vmem:[%s3] sm:$0x1]
    %v679 = vlaneseq
    %v680 = vshrl.u32 %v679, 7
    %v681 = vsub.s32 0, %v680
    %v682 = vrot.slane %v677, %v681
    %v684 = vadd.f32 %v661, %v682
    %v685 = vadd.f32 %v662, %v682
    %v686 = vadd.f32 %v663, %v682
    %v687 = vadd.f32 %v664, %v682
    %v688 = vadd.f32 %v665, %v682
    %v689 = vadd.f32 %v666, %v682
    %v690 = vadd.f32 %v667, %v682
    %v691 = vadd.f32 %v668, %v682
    %v692 = vadd.f32 %v669, %v682
    %v693 = vadd.f32 %v670, %v682
    %v694 = vadd.f32 %v671, %v682
    %v695 = vadd.f32 %v672, %v682
    %v696 = vadd.f32 %v673, %v682
    %v697 = vadd.f32 %v674, %v682
    %v698 = vadd.f32 %v675, %v682
    %v699 = vadd.f32 %v676, %v682
    %v700 = vld [vmem:[%s4] sm:$0xff]
    %v701 = vld [vmem:[%s4 + $0x8] sm:$0xff]
    %v702 = vld [vmem:[%s4 + $0x10] sm:$0xff]
    %v703 = vld [vmem:[%s4 + $0x18] sm:$0xff]
    %v704 = vld [vmem:[%s4 + $0x20] sm:$0xff]
    %v705 = vld [vmem:[%s4 + $0x28] sm:$0xff]
    %v706 = vld [vmem:[%s4 + $0x30] sm:$0xff]
    %v707 = vld [vmem:[%s4 + $0x38] sm:$0xff]
    %v708 = vld [vmem:[%s4 + $0x40] sm:$0xff]
    %v709 = vld [vmem:[%s4 + $0x48] sm:$0xff]
    %v710 = vld [vmem:[%s4 + $0x50] sm:$0xff]
    %v711 = vld [vmem:[%s4 + $0x58] sm:$0xff]
    %v712 = vld [vmem:[%s4 + $0x60] sm:$0xff]
    %v713 = vld [vmem:[%s4 + $0x68] sm:$0xff]
    %v714 = vld [vmem:[%s4 + $0x70] sm:$0xff]
    %v715 = vld [vmem:[%s4 + $0x78] sm:$0xff]
    %v716 = vadd.f32 %v684, %v700
    %v717 = vadd.f32 %v685, %v701
    %v718 = vadd.f32 %v686, %v702
    %v719 = vadd.f32 %v687, %v703
    %v720 = vadd.f32 %v688, %v704
    %v721 = vadd.f32 %v689, %v705
    %v722 = vadd.f32 %v690, %v706
    %v723 = vadd.f32 %v691, %v707
    %v724 = vadd.f32 %v692, %v708
    %v725 = vadd.f32 %v693, %v709
    %v726 = vadd.f32 %v694, %v710
    %v727 = vadd.f32 %v695, %v711
    %v728 = vadd.f32 %v696, %v712
    %v729 = vadd.f32 %v697, %v713
    %v730 = vadd.f32 %v698, %v714
    %v731 = vadd.f32 %v699, %v715
    %732 = vst [vmem:[%s5] sm:$0xff] %v716
    %733 = vst [vmem:[%s5 + $0x8] sm:$0xff] %v717
    %734 = vst [vmem:[%s5 + $0x10] sm:$0xff] %v718
    %735 = vst [vmem:[%s5 + $0x18] sm:$0xff] %v719
    %736 = vst [vmem:[%s5 + $0x20] sm:$0xff] %v720
    %737 = vst [vmem:[%s5 + $0x28] sm:$0xff] %v721
    %738 = vst [vmem:[%s5 + $0x30] sm:$0xff] %v722
    %739 = vst [vmem:[%s5 + $0x38] sm:$0xff] %v723
    %740 = vst [vmem:[%s5 + $0x40] sm:$0xff] %v724
    %741 = vst [vmem:[%s5 + $0x48] sm:$0xff] %v725
    %742 = vst [vmem:[%s5 + $0x50] sm:$0xff] %v726
    %743 = vst [vmem:[%s5 + $0x58] sm:$0xff] %v727
    %744 = vst [vmem:[%s5 + $0x60] sm:$0xff] %v728
    %745 = vst [vmem:[%s5 + $0x68] sm:$0xff] %v729
    %746 = vst [vmem:[%s5 + $0x70] sm:$0xff] %v730
    %747 = vst [vmem:[%s5 + $0x78] sm:$0xff] %v731
  $region29: #{resnet_generator_forward.14} parent=0 // pred_fallthru
    _
  // Predicated region
  $region30: #{resnet_generator_forward.14} parent=0 // pred_check
    _
  $region31: #{resnet_generator_forward.14} parent=0 // pred_check_branch
    %749 = sbr.rel (0) target = $region33
  $region32: #{resnet_generator_forward.14} parent=0 // pred_region
    _
  $region33: #{resnet_generator_forward.14} parent=0 // pred_fallthru
    _
  // Predicated region
  $region34: #{resnet_generator_forward.14} parent=0 // pred_check
    _
  $region35: #{resnet_generator_forward.14} parent=0 // pred_check_branch
    %751 = sbr.rel (0) target = $region37
  $region36: #{resnet_generator_forward.14} parent=0 // pred_region
    _
  $region37: #{resnet_generator_forward.14} parent=0 // pred_fallthru
    _

// kernel: resnet_generator_forward.17
$region0: #{resnet_generator_forward.17}
  #allocation0 [shape = 'u32[]', space=smem, size = 0x4, offset = 0x4, fixed_abs, tag = 'smem constant byte address 0x4 - core index']
  #allocation1 [shape = 'u32[144,128]{1,0:T(1,128)}', space=vmem, size = 0x12000, scoped, tag = 'internal scratch']
  #allocation2 [shape = 'f32[256,128]{1,0:T(8,128)}', space=vmem, size = 0x20000, scoped, tag = 'scratch operand']
  %s0 = inlined_call_operand.vmem [shape: bf16[512,384], index: 0, kind: input, shape index: {}]
  %s1 = inlined_call_operand.vmem [shape: bf16[384,128], index: 1, kind: input, shape index: {}]
  %s2 = inlined_call_operand.vmem [shape: f32[1,128], index: 2, kind: input, shape index: {}]
  %s3 = inlined_call_operand.vmem [shape: f32[1,128], index: 3, kind: input, shape index: {}]
  %s4 = inlined_call_operand.vmem [shape: f32[512,128], index: 4, kind: output, shape index: {}]
  %s5 = sld [smem:[#allocation0]]
  $region57: #{resnet_generator_forward.17} parent=0
    _
  %s7 = ssub.s32 1, %s5
  %s8 = scalar_select 0, %s7, %s5
  loop: start=0, step=1, limit=4
  $region2: #{resnet_generator_forward.17} parent=0 // loop_pre_header
    _
  $region3: #{resnet_generator_forward.17} parent=0 // loop_header
    %s10 = sphi 0, %s14
    %p11 = scmp.ge.s32.totalorder %s10, 4
    %s17 = sphi 0, %s36
    %s18 = sphi 0, %s32
    %s19 = sphi 0, %s28
    %s20 = sphi 0, %s17
    %s21 = sphi 0, %s18
    %s22 = sphi 0, %s19
    %s23 = sphi 0, %s20
    %s24 = sphi 0, %s21
    %s25 = sphi 0, %s22
    %s41 = sphi 0, %s43
    %s44 = sphi 0, %s41
    %s45 = sphi 0, %s44
    %s61 = sphi 0, %s45
    %s69 = sphi 0, %s71
    %s72 = sphi 0, %s69
    %s73 = sphi 0, %s72
    %s89 = sphi 0, %s73
    %s95 = sphi 0, %s97
    %s98 = sphi 0, %s95
    %s99 = sphi 0, %s98
    %s115 = sphi 0, %s99
    %s121 = sphi 0, %s123
    %s124 = sphi 0, %s121
    %s125 = sphi 0, %s124
    %s141 = sphi 0, %s125
    %s149 = sphi 0, %s151
    %s152 = sphi 0, %s149
    %s153 = sphi 0, %s152
    %s169 = sphi 0, %s153
  $region4: #{resnet_generator_forward.17} parent=0 // loop_header_branch
    %13 = sbr.rel (%p11) target = $region8
  $region5: #{resnet_generator_forward.17} parent=0 // loop_body
    %s15 = ssub.s32 %s10, 1
    %s16 = ssub.s32 %s10, 2
    %s26 = sadd.s32 1, %s19
    %p27 = scmp.ge.s32.totalorder %s26, 1
    %s28 = scalar_select %p27, 0, %s26
    %s29 = sadd.s32 1, %s18
    %s30 = scalar_select %p27, %s29, %s18
    %p31 = scmp.ge.s32.totalorder %s30, 1
    %s32 = scalar_select %p31, 0, %s30
    %s33 = sadd.s32 1, %s17
    %s34 = scalar_select %p31, %s33, %s17
    %p35 = scmp.ge.s32.totalorder %s34, 2
    %s36 = scalar_select %p35, 0, %s34
    %s37 = ssub.s32 %s17, %s36
    %s38 = ssub.s32 %s19, %s28
    %s39 = sor.u32 %s37, %s38
    %p40 = scmp.eq.s32.totalorder %s39, 0
    %s42 = sadd.s32 %s41, 1
    %s43 = scalar_select %p40, %s41, %s42
    %p46 = pneg %p40
    %p47 = scmp.eq.s32.totalorder %s10, 1
    %p48 = por %p46, %p47
    %p49 = scmp.ne.s32.totalorder %s41, %s44
    %p50 = scmp.eq.s32.totalorder %s10, 0
    %p51 = por %p49, %p50
    %p52 = scmp.ne.s32.totalorder %s41, %s44
    %p53 = scmp.eq.s32.totalorder %s15, 1
    %p54 = por %p52, %p53
    %p55 = scmp.ne.s32.totalorder %s44, %s45
    %p56 = scmp.eq.s32.totalorder %s15, 0
    %p57 = por %p55, %p56
    %p58 = scmp.ne.s32.totalorder %s44, %s45
    %p59 = scmp.eq.s32.totalorder %s16, 1
    %p60 = por %p58, %p59
    %p62 = scmp.ne.s32.totalorder %s45, %s61
    %p63 = scmp.eq.s32.totalorder %s16, 0
    %p64 = por %p62, %p63
    %s65 = ssub.s32 %s19, %s28
    %s66 = ssub.s32 %s18, %s32
    %s67 = sor.u32 %s65, %s66
    %p68 = scmp.eq.s32.totalorder %s67, 0
    %s70 = sadd.s32 %s69, 1
    %s71 = scalar_select %p68, %s69, %s70
    %p74 = pneg %p68
    %p75 = scmp.eq.s32.totalorder %s10, 1
    %p76 = por %p74, %p75
    %p77 = scmp.ne.s32.totalorder %s69, %s72
    %p78 = scmp.eq.s32.totalorder %s10, 0
    %p79 = por %p77, %p78
    %p80 = scmp.ne.s32.totalorder %s69, %s72
    %p81 = scmp.eq.s32.totalorder %s15, 1
    %p82 = por %p80, %p81
    %p83 = scmp.ne.s32.totalorder %s72, %s73
    %p84 = scmp.eq.s32.totalorder %s15, 0
    %p85 = por %p83, %p84
    %p86 = scmp.ne.s32.totalorder %s72, %s73
    %p87 = scmp.eq.s32.totalorder %s16, 1
    %p88 = por %p86, %p87
    %p90 = scmp.ne.s32.totalorder %s73, %s89
    %p91 = scmp.eq.s32.totalorder %s16, 0
    %p92 = por %p90, %p91
    %s93 = ssub.s32 %s18, %s32
    %p94 = scmp.eq.s32.totalorder %s93, 0
    %s96 = sadd.s32 %s95, 1
    %s97 = scalar_select %p94, %s95, %s96
    %p100 = pneg %p94
    %p101 = scmp.eq.s32.totalorder %s10, 1
    %p102 = por %p100, %p101
    %p103 = scmp.ne.s32.totalorder %s95, %s98
    %p104 = scmp.eq.s32.totalorder %s10, 0
    %p105 = por %p103, %p104
    %p106 = scmp.ne.s32.totalorder %s95, %s98
    %p107 = scmp.eq.s32.totalorder %s15, 1
    %p108 = por %p106, %p107
    %p109 = scmp.ne.s32.totalorder %s98, %s99
    %p110 = scmp.eq.s32.totalorder %s15, 0
    %p111 = por %p109, %p110
    %p112 = scmp.ne.s32.totalorder %s98, %s99
    %p113 = scmp.eq.s32.totalorder %s16, 1
    %p114 = por %p112, %p113
    %p116 = scmp.ne.s32.totalorder %s99, %s115
    %p117 = scmp.eq.s32.totalorder %s16, 0
    %p118 = por %p116, %p117
    %s119 = ssub.s32 %s18, %s32
    %p120 = scmp.eq.s32.totalorder %s119, 0
    %s122 = sadd.s32 %s121, 1
    %s123 = scalar_select %p120, %s121, %s122
    %p126 = pneg %p120
    %p127 = scmp.eq.s32.totalorder %s10, 1
    %p128 = por %p126, %p127
    %p129 = scmp.ne.s32.totalorder %s121, %s124
    %p130 = scmp.eq.s32.totalorder %s10, 0
    %p131 = por %p129, %p130
    %p132 = scmp.ne.s32.totalorder %s121, %s124
    %p133 = scmp.eq.s32.totalorder %s15, 1
    %p134 = por %p132, %p133
    %p135 = scmp.ne.s32.totalorder %s124, %s125
    %p136 = scmp.eq.s32.totalorder %s15, 0
    %p137 = por %p135, %p136
    %p138 = scmp.ne.s32.totalorder %s124, %s125
    %p139 = scmp.eq.s32.totalorder %s16, 1
    %p140 = por %p138, %p139
    %p142 = scmp.ne.s32.totalorder %s125, %s141
    %p143 = scmp.eq.s32.totalorder %s16, 0
    %p144 = por %p142, %p143
    %s145 = ssub.s32 %s17, %s36
    %s146 = ssub.s32 %s18, %s32
    %s147 = sor.u32 %s145, %s146
    %p148 = scmp.eq.s32.totalorder %s147, 0
    %s150 = sadd.s32 %s149, 1
    %s151 = scalar_select %p148, %s149, %s150
    %p154 = pneg %p148
    %p155 = scmp.eq.s32.totalorder %s10, 1
    %p156 = por %p154, %p155
    %p157 = scmp.ne.s32.totalorder %s149, %s152
    %p158 = scmp.eq.s32.totalorder %s10, 0
    %p159 = por %p157, %p158
    %p160 = scmp.ne.s32.totalorder %s149, %s152
    %p161 = scmp.eq.s32.totalorder %s15, 1
    %p162 = por %p160, %p161
    %p163 = scmp.ne.s32.totalorder %s152, %s153
    %p164 = scmp.eq.s32.totalorder %s15, 0
    %p165 = por %p163, %p164
    %p166 = scmp.ne.s32.totalorder %s152, %s153
    %p167 = scmp.eq.s32.totalorder %s16, 1
    %p168 = por %p166, %p167
    %p170 = scmp.ne.s32.totalorder %s153, %s169
    %p171 = scmp.eq.s32.totalorder %s16, 0
    %p172 = por %p170, %p171
    %p173 = scmp.le.s32.totalorder 1, %s10
    %p174 = scmp.lt.s32.totalorder %s10, 3
    %p175 = pnand %p173, %p174
    %p176 = pneg %p175
    // Predicated region
    $region9: #{resnet_generator_forward.17} parent=5 // pred_check
      _
    $region10: #{resnet_generator_forward.17} parent=5 // pred_check_branch
      %178 = sbr.rel (%p175) target = $region12
    $region11: #{resnet_generator_forward.17} parent=5 // pred_region
      %s179 = ssub.s32 %s10, 1
      // Predicated region
      $region13: #{resnet_generator_forward.17} parent=11 // pred_check
        %p180 = pneg %p85
      $region14: #{resnet_generator_forward.17} parent=11 // pred_check_branch
        %182 = sbr.rel (%p180) target = $region16
      $region15: #{resnet_generator_forward.17} parent=11 // pred_region
        %s183 = smul.u32 48, %s22
        %p184 = scmp.lt.s32.totalorder %s183, 47
        %s185 = scalar_select %p184, %s183, 47
        %p186 = scmp.lt.s32.totalorder %s21, 0
        %s187 = scalar_select %p186, %s21, 0
        %s188 = sadd.s32 %s187, %s185
        %s189 = smul.addr %s188, 4
        %s190 = scalar_lea.vmem %s1, %s189
        %s191 = smul.u32 48, %s22
      $region16: #{resnet_generator_forward.17} parent=11 // pred_fallthru
        _
      // Predicated region
      $region17: #{resnet_generator_forward.17} parent=11 // pred_check
        %p192 = pneg %p111
      $region18: #{resnet_generator_forward.17} parent=11 // pred_check_branch
        %194 = sbr.rel (%p192) target = $region20
      $region19: #{resnet_generator_forward.17} parent=11 // pred_region
        %p195 = scmp.lt.s32.totalorder %s21, 0
        %s196 = scalar_select %p195, %s21, 0
        %s197 = scalar_lea.vmem %s2, %s196
      $region20: #{resnet_generator_forward.17} parent=11 // pred_fallthru
        _
      // Predicated region
      $region21: #{resnet_generator_forward.17} parent=11 // pred_check
        %p198 = pneg %p137
      $region22: #{resnet_generator_forward.17} parent=11 // pred_check_branch
        %200 = sbr.rel (%p198) target = $region24
      $region23: #{resnet_generator_forward.17} parent=11 // pred_region
        %p201 = scmp.lt.s32.totalorder %s21, 0
        %s202 = scalar_select %p201, %s21, 0
        %s203 = scalar_lea.vmem %s3, %s202
      $region24: #{resnet_generator_forward.17} parent=11 // pred_fallthru
        _
    $region12: #{resnet_generator_forward.17} parent=5 // pred_fallthru
      _
    %p204 = scmp.lt.s32.totalorder %s10, 2
    // Predicated region
    $region25: #{resnet_generator_forward.17} parent=5 // pred_check
      %p205 = pneg %p204
    $region26: #{resnet_generator_forward.17} parent=5 // pred_check_branch
      %207 = sbr.rel (%p205) target = $region28
    $region27: #{resnet_generator_forward.17} parent=5 // pred_region
      // Predicated region
      $region29: #{resnet_generator_forward.17} parent=27 // pred_check
        %p208 = pneg %p51
      $region30: #{resnet_generator_forward.17} parent=27 // pred_check_branch
        %210 = sbr.rel (%p208) target = $region32
      $region31: #{resnet_generator_forward.17} parent=27 // pred_region
        %s211 = smul.u32 32, %s17
        %s212 = smul.u32 3, %s19
        %p213 = scmp.lt.s32.totalorder %s211, 63
        %s214 = scalar_select %p213, %s211, 63
        %p215 = scmp.lt.s32.totalorder %s212, 2
        %s216 = scalar_select %p215, %s212, 2
        %s217 = smul.addr %s214, 3
        %s218 = sadd.s32 %s216, %s217
        %s219 = smul.addr %s218, 4
        %s220 = scalar_lea.vmem %s0, %s219
        %s221 = smul.u32 32, %s17
        %s222 = smul.u32 3, %s19
      $region32: #{resnet_generator_forward.17} parent=27 // pred_fallthru
        _
    $region28: #{resnet_generator_forward.17} parent=5 // pred_fallthru
      _
    %p223 = scmp.le.s32.totalorder 1, %s10
    %p224 = scmp.lt.s32.totalorder %s10, 3
    %p225 = pnand %p223, %p224
    %p226 = pneg %p225
    // Predicated region
    $region33: #{resnet_generator_forward.17} parent=5 // pred_check
      _
    $region34: #{resnet_generator_forward.17} parent=5 // pred_check_branch
      %228 = sbr.rel (%p225) target = $region36
    $region35: #{resnet_generator_forward.17} parent=5 // pred_region
      %s229 = ssub.s32 %s10, 1
      %s230 = smul.u32 32, %s20
      %s231 = smul.u32 3, %s22
      %p232 = scmp.lt.s32.totalorder %s230, 63
      %s233 = scalar_select %p232, %s230, 63
      %p234 = scmp.lt.s32.totalorder %s231, 2
      %s235 = scalar_select %p234, %s231, 2
      %s236 = smul.addr %s233, 3
      %s237 = sadd.s32 %s235, %s236
      %s238 = smul.addr %s237, 4
      %s239 = scalar_lea.vmem %s0, %s238
      %p240 = pneg %p57
      %p241 = pneg %p54
      %s242 = smul.u32 48, %s22
      %p243 = scmp.lt.s32.totalorder %s242, 47
      %s244 = scalar_select %p243, %s242, 47
      %p245 = scmp.lt.s32.totalorder %s21, 0
      %s246 = scalar_select %p245, %s21, 0
      %s247 = sadd.s32 %s246, %s244
      %s248 = smul.addr %s247, 4
      %s249 = scalar_lea.vmem %s1, %s248
      %p250 = pneg %p85
      %p251 = pneg %p82
      %p252 = scmp.lt.s32.totalorder %s21, 0
      %s253 = scalar_select %p252, %s21, 0
      %s254 = scalar_lea.vmem %s2, %s253
      %p255 = pneg %p111
      %p256 = pneg %p108
      %p257 = scmp.lt.s32.totalorder %s21, 0
      %s258 = scalar_select %p257, %s21, 0
      %s259 = scalar_lea.vmem %s3, %s258
      %p260 = pneg %p137
      %p261 = pneg %p134
      %p262 = pneg %p165
      %p263 = pneg %p162
      %s264 = smul.u32 32, %s20
      %p265 = scmp.lt.s32.totalorder %s264, 63
      %s266 = scalar_select %p265, %s264, 63
      %p267 = scmp.lt.s32.totalorder %s21, 0
      %s268 = scalar_select %p267, %s21, 0
      %s269 = sadd.s32 %s268, %s266
      %s270 = smul.addr %s269, 8
      %s271 = scalar_lea.vmem %s4, %s270
      %s272 = smul.u32 32, %s20
      %s273 = smul.u32 3, %s22
      %p274 = scmp.lt.s32.totalorder %s272, 63
      %s275 = scalar_select %p274, %s272, 63
      %p276 = scmp.lt.s32.totalorder %s273, 2
      %s277 = scalar_select %p276, %s273, 2
      %s278 = smul.addr %s275, 3
      %s279 = sadd.s32 %s277, %s278
      %s280 = smul.addr %s279, 4
      %s281 = scalar_lea.vmem %s0, %s280
      %s282 = smul.u32 32, %s20
      %s283 = smul.u32 3, %s22
      %s284 = smul.u32 48, %s22
      %p285 = scmp.lt.s32.totalorder %s284, 47
      %s286 = scalar_select %p285, %s284, 47
      %p287 = scmp.lt.s32.totalorder %s21, 0
      %s288 = scalar_select %p287, %s21, 0
      %s289 = sadd.s32 %s288, %s286
      %s290 = smul.addr %s289, 4
      %s291 = scalar_lea.vmem %s1, %s290
      %s292 = smul.u32 48, %s22
      %p293 = scmp.lt.s32.totalorder %s21, 0
      %s294 = scalar_select %p293, %s21, 0
      %s295 = scalar_lea.vmem %s2, %s294
      %p296 = scmp.lt.s32.totalorder %s21, 0
      %s297 = scalar_select %p296, %s21, 0
      %s298 = scalar_lea.vmem %s3, %s297
      %s299 = smul.u32 32, %s20
      %p300 = scmp.lt.s32.totalorder %s299, 63
      %s301 = scalar_select %p300, %s299, 63
      %p302 = scmp.lt.s32.totalorder %s21, 0
      %s303 = scalar_select %p302, %s21, 0
      %s304 = sadd.s32 %s303, %s301
      %s305 = smul.addr %s304, 8
      %s306 = scalar_lea.vmem %s4, %s305
      %s307 = smul.u32 32, %s20
      %p309 = scmp.eq.s32.totalorder %s22, 0
      // Predicated region
      $region37: #{resnet_generator_forward.17} parent=35 // pred_check
        %p310 = pneg %p309
      $region38: #{resnet_generator_forward.17} parent=35 // pred_check_branch
        %312 = sbr.rel (%p310) target = $region40
      $region39: #{resnet_generator_forward.17} parent=35 // pred_region
        %313 = vst [vmem:[#allocation2] sm:$0xff] 0.0
        %314 = vst [vmem:[#allocation2 + $0x8] sm:$0xff] 0.0
        %315 = vst [vmem:[#allocation2 + $0x10] sm:$0xff] 0.0
        %316 = vst [vmem:[#allocation2 + $0x18] sm:$0xff] 0.0
        %317 = vst [vmem:[#allocation2 + $0x20] sm:$0xff] 0.0
        %318 = vst [vmem:[#allocation2 + $0x28] sm:$0xff] 0.0
        %319 = vst [vmem:[#allocation2 + $0x30] sm:$0xff] 0.0
        %320 = vst [vmem:[#allocation2 + $0x38] sm:$0xff] 0.0
        %321 = vst [vmem:[#allocation2 + $0x40] sm:$0xff] 0.0
        %322 = vst [vmem:[#allocation2 + $0x48] sm:$0xff] 0.0
        %323 = vst [vmem:[#allocation2 + $0x50] sm:$0xff] 0.0
        %324 = vst [vmem:[#allocation2 + $0x58] sm:$0xff] 0.0
        %325 = vst [vmem:[#allocation2 + $0x60] sm:$0xff] 0.0
        %326 = vst [vmem:[#allocation2 + $0x68] sm:$0xff] 0.0
        %327 = vst [vmem:[#allocation2 + $0x70] sm:$0xff] 0.0
        %328 = vst [vmem:[#allocation2 + $0x78] sm:$0xff] 0.0
        %329 = vst [vmem:[#allocation2 + $0x80] sm:$0xff] 0.0
        %330 = vst [vmem:[#allocation2 + $0x88] sm:$0xff] 0.0
        %331 = vst [vmem:[#allocation2 + $0x90] sm:$0xff] 0.0
        %332 = vst [vmem:[#allocation2 + $0x98] sm:$0xff] 0.0
        %333 = vst [vmem:[#allocation2 + $0xa0] sm:$0xff] 0.0
        %334 = vst [vmem:[#allocation2 + $0xa8] sm:$0xff] 0.0
        %335 = vst [vmem:[#allocation2 + $0xb0] sm:$0xff] 0.0
        %336 = vst [vmem:[#allocation2 + $0xb8] sm:$0xff] 0.0
        %337 = vst [vmem:[#allocation2 + $0xc0] sm:$0xff] 0.0
        %338 = vst [vmem:[#allocation2 + $0xc8] sm:$0xff] 0.0
        %339 = vst [vmem:[#allocation2 + $0xd0] sm:$0xff] 0.0
        %340 = vst [vmem:[#allocation2 + $0xd8] sm:$0xff] 0.0
        %341 = vst [vmem:[#allocation2 + $0xe0] sm:$0xff] 0.0
        %342 = vst [vmem:[#allocation2 + $0xe8] sm:$0xff] 0.0
        %343 = vst [vmem:[#allocation2 + $0xf0] sm:$0xff] 0.0
        %344 = vst [vmem:[#allocation2 + $0xf8] sm:$0xff] 0.0
      $region40: #{resnet_generator_forward.17} parent=35 // pred_fallthru
        _
      %v345 = vld [vmem:[#allocation2] sm:$0xff]
      %v346 = vld [vmem:[#allocation2 + $0x8] sm:$0xff]
      %v347 = vld [vmem:[#allocation2 + $0x10] sm:$0xff]
      %v348 = vld [vmem:[#allocation2 + $0x18] sm:$0xff]
      %v349 = vld [vmem:[#allocation2 + $0x20] sm:$0xff]
      %v350 = vld [vmem:[#allocation2 + $0x28] sm:$0xff]
      %v351 = vld [vmem:[#allocation2 + $0x30] sm:$0xff]
      %v352 = vld [vmem:[#allocation2 + $0x38] sm:$0xff]
      %v353 = vld [vmem:[#allocation2 + $0x40] sm:$0xff]
      %v354 = vld [vmem:[#allocation2 + $0x48] sm:$0xff]
      %v355 = vld [vmem:[#allocation2 + $0x50] sm:$0xff]
      %v356 = vld [vmem:[#allocation2 + $0x58] sm:$0xff]
      %v357 = vld [vmem:[#allocation2 + $0x60] sm:$0xff]
      %v358 = vld [vmem:[#allocation2 + $0x68] sm:$0xff]
      %v359 = vld [vmem:[#allocation2 + $0x70] sm:$0xff]
      %v360 = vld [vmem:[#allocation2 + $0x78] sm:$0xff]
      %v361 = vld [vmem:[#allocation2 + $0x80] sm:$0xff]
      %v362 = vld [vmem:[#allocation2 + $0x88] sm:$0xff]
      %v363 = vld [vmem:[#allocation2 + $0x90] sm:$0xff]
      %v364 = vld [vmem:[#allocation2 + $0x98] sm:$0xff]
      %v365 = vld [vmem:[#allocation2 + $0xa0] sm:$0xff]
      %v366 = vld [vmem:[#allocation2 + $0xa8] sm:$0xff]
      %v367 = vld [vmem:[#allocation2 + $0xb0] sm:$0xff]
      %v368 = vld [vmem:[#allocation2 + $0xb8] sm:$0xff]
      %v369 = vld [vmem:[#allocation2 + $0xc0] sm:$0xff]
      %v370 = vld [vmem:[#allocation2 + $0xc8] sm:$0xff]
      %v371 = vld [vmem:[#allocation2 + $0xd0] sm:$0xff]
      %v372 = vld [vmem:[#allocation2 + $0xd8] sm:$0xff]
      %v373 = vld [vmem:[#allocation2 + $0xe0] sm:$0xff]
      %v374 = vld [vmem:[#allocation2 + $0xe8] sm:$0xff]
      %v375 = vld [vmem:[#allocation2 + $0xf0] sm:$0xff]
      %v376 = vld [vmem:[#allocation2 + $0xf8] sm:$0xff]
      %v377 = vld [vmem:[%s281] sm:$0xff]
      %v378 = vld [vmem:[%s281 + $0x8] sm:$0xf]
      %v379 = vld [vmem:[%s281 + $0xc] sm:$0xff]
      %v380 = vld [vmem:[%s281 + $0x14] sm:$0xf]
      %v381 = vld [vmem:[%s281 + $0x18] sm:$0xff]
      %v382 = vld [vmem:[%s281 + $0x20] sm:$0xf]
      %v383 = vld [vmem:[%s281 + $0x24] sm:$0xff]
      %v384 = vld [vmem:[%s281 + $0x2c] sm:$0xf]
      %v385 = vld [vmem:[%s281 + $0x30] sm:$0xff]
      %v386 = vld [vmem:[%s281 + $0x38] sm:$0xf]
      %v387 = vld [vmem:[%s281 + $0x3c] sm:$0xff]
      %v388 = vld [vmem:[%s281 + $0x44] sm:$0xf]
      %v389 = vld [vmem:[%s281 + $0x48] sm:$0xff]
      %v390 = vld [vmem:[%s281 + $0x50] sm:$0xf]
      %v391 = vld [vmem:[%s281 + $0x54] sm:$0xff]
      %v392 = vld [vmem:[%s281 + $0x5c] sm:$0xf]
      %v393 = vld [vmem:[%s281 + $0x60] sm:$0xff]
      %v394 = vld [vmem:[%s281 + $0x68] sm:$0xf]
      %v395 = vld [vmem:[%s281 + $0x6c] sm:$0xff]
      %v396 = vld [vmem:[%s281 + $0x74] sm:$0xf]
      %v397 = vld [vmem:[%s281 + $0x78] sm:$0xff]
      %v398 = vld [vmem:[%s281 + $0x80] sm:$0xf]
      %v399 = vld [vmem:[%s281 + $0x84] sm:$0xff]
      %v400 = vld [vmem:[%s281 + $0x8c] sm:$0xf]
      %v401 = vld [vmem:[%s281 + $0x90] sm:$0xff]
      %v402 = vld [vmem:[%s281 + $0x98] sm:$0xf]
      %v403 = vld [vmem:[%s281 + $0x9c] sm:$0xff]
      %v404 = vld [vmem:[%s281 + $0xa4] sm:$0xf]
      %v405 = vld [vmem:[%s281 + $0xa8] sm:$0xff]
      %v406 = vld [vmem:[%s281 + $0xb0] sm:$0xf]
      %v407 = vld [vmem:[%s281 + $0xb4] sm:$0xff]
      %v408 = vld [vmem:[%s281 + $0xbc] sm:$0xf]
      %v409 = vld [vmem:[%s281 + $0xc0] sm:$0xff]
      %v410 = vld [vmem:[%s281 + $0xc8] sm:$0xf]
      %v411 = vld [vmem:[%s281 + $0xcc] sm:$0xff]
      %v412 = vld [vmem:[%s281 + $0xd4] sm:$0xf]
      %v413 = vld [vmem:[%s281 + $0xd8] sm:$0xff]
      %v414 = vld [vmem:[%s281 + $0xe0] sm:$0xf]
      %v415 = vld [vmem:[%s281 + $0xe4] sm:$0xff]
      %v416 = vld [vmem:[%s281 + $0xec] sm:$0xf]
      %v417 = vld [vmem:[%s281 + $0xf0] sm:$0xff]
      %v418 = vld [vmem:[%s281 + $0xf8] sm:$0xf]
      %v419 = vld [vmem:[%s281 + $0xfc] sm:$0xff]
      %v420 = vld [vmem:[%s281 + $0x104] sm:$0xf]
      %v421 = vld [vmem:[%s281 + $0x108] sm:$0xff]
      %v422 = vld [vmem:[%s281 + $0x110] sm:$0xf]
      %v423 = vld [vmem:[%s281 + $0x114] sm:$0xff]
      %v424 = vld [vmem:[%s281 + $0x11c] sm:$0xf]
      %v425 = vld [vmem:[%s281 + $0x120] sm:$0xff]
      %v426 = vld [vmem:[%s281 + $0x128] sm:$0xf]
      %v427 = vld [vmem:[%s281 + $0x12c] sm:$0xff]
      %v428 = vld [vmem:[%s281 + $0x134] sm:$0xf]
      %v429 = vld [vmem:[%s281 + $0x138] sm:$0xff]
      %v430 = vld [vmem:[%s281 + $0x140] sm:$0xf]
      %v431 = vld [vmem:[%s281 + $0x144] sm:$0xff]
      %v432 = vld [vmem:[%s281 + $0x14c] sm:$0xf]
      %v433 = vld [vmem:[%s281 + $0x150] sm:$0xff]
      %v434 = vld [vmem:[%s281 + $0x158] sm:$0xf]
      %v435 = vld [vmem:[%s281 + $0x15c] sm:$0xff]
      %v436 = vld [vmem:[%s281 + $0x164] sm:$0xf]
      %v437 = vld [vmem:[%s281 + $0x168] sm:$0xff]
      %v438 = vld [vmem:[%s281 + $0x170] sm:$0xf]
      %v439 = vld [vmem:[%s281 + $0x174] sm:$0xff]
      %v440 = vld [vmem:[%s281 + $0x17c] sm:$0xf]
      %v441 = vld [vmem:[%s291] sm:$0xf]
      %v442 = vld [vmem:[%s291 + $0x4] sm:$0xf]
      %v443 = vld [vmem:[%s291 + $0x8] sm:$0xf]
      %v444 = vld [vmem:[%s291 + $0xc] sm:$0xf]
      %v445 = vld [vmem:[%s291 + $0x10] sm:$0xf]
      %v446 = vld [vmem:[%s291 + $0x14] sm:$0xf]
      %v447 = vld [vmem:[%s291 + $0x18] sm:$0xf]
      %v448 = vld [vmem:[%s291 + $0x1c] sm:$0xf]
      %v449 = vld [vmem:[%s291 + $0x20] sm:$0xf]
      %v450 = vld [vmem:[%s291 + $0x24] sm:$0xf]
      %v451 = vld [vmem:[%s291 + $0x28] sm:$0xf]
      %v452 = vld [vmem:[%s291 + $0x2c] sm:$0xf]
      %v453 = vld [vmem:[%s291 + $0x30] sm:$0xf]
      %v454 = vld [vmem:[%s291 + $0x34] sm:$0xf]
      %v455 = vld [vmem:[%s291 + $0x38] sm:$0xf]
      %v456 = vld [vmem:[%s291 + $0x3c] sm:$0xf]
      %v457 = vld [vmem:[%s291 + $0x40] sm:$0xf]
      %v458 = vld [vmem:[%s291 + $0x44] sm:$0xf]
      %v459 = vld [vmem:[%s291 + $0x48] sm:$0xf]
      %v460 = vld [vmem:[%s291 + $0x4c] sm:$0xf]
      %v461 = vld [vmem:[%s291 + $0x50] sm:$0xf]
      %v462 = vld [vmem:[%s291 + $0x54] sm:$0xf]
      %v463 = vld [vmem:[%s291 + $0x58] sm:$0xf]
      %v464 = vld [vmem:[%s291 + $0x5c] sm:$0xf]
      %v465 = vld [vmem:[%s291 + $0x60] sm:$0xf]
      %v466 = vld [vmem:[%s291 + $0x64] sm:$0xf]
      %v467 = vld [vmem:[%s291 + $0x68] sm:$0xf]
      %v468 = vld [vmem:[%s291 + $0x6c] sm:$0xf]
      %v469 = vld [vmem:[%s291 + $0x70] sm:$0xf]
      %v470 = vld [vmem:[%s291 + $0x74] sm:$0xf]
      %v471 = vld [vmem:[%s291 + $0x78] sm:$0xf]
      %v472 = vld [vmem:[%s291 + $0x7c] sm:$0xf]
      %v473 = vld [vmem:[%s291 + $0x80] sm:$0xf]
      %v474 = vld [vmem:[%s291 + $0x84] sm:$0xf]
      %v475 = vld [vmem:[%s291 + $0x88] sm:$0xf]
      %v476 = vld [vmem:[%s291 + $0x8c] sm:$0xf]
      %v477 = vld [vmem:[%s291 + $0x90] sm:$0xf]
      %v478 = vld [vmem:[%s291 + $0x94] sm:$0xf]
      %v479 = vld [vmem:[%s291 + $0x98] sm:$0xf]
      %v480 = vld [vmem:[%s291 + $0x9c] sm:$0xf]
      %v481 = vld [vmem:[%s291 + $0xa0] sm:$0xf]
      %v482 = vld [vmem:[%s291 + $0xa4] sm:$0xf]
      %v483 = vld [vmem:[%s291 + $0xa8] sm:$0xf]
      %v484 = vld [vmem:[%s291 + $0xac] sm:$0xf]
      %v485 = vld [vmem:[%s291 + $0xb0] sm:$0xf]
      %v486 = vld [vmem:[%s291 + $0xb4] sm:$0xf]
      %v487 = vld [vmem:[%s291 + $0xb8] sm:$0xf]
      %v488 = vld [vmem:[%s291 + $0xbc] sm:$0xf]
      %v553 = vunpack.c.l.b16 %v377
      %v554 = vunpack.c.h.b16 %v377
      %v555 = vunpack.c.l.b16 %v378
      %v556 = vunpack.c.l.b16 %v379
      %v557 = vunpack.c.h.b16 %v379
      %v558 = vunpack.c.l.b16 %v380
      %v559 = vunpack.c.l.b16 %v381
      %v560 = vunpack.c.h.b16 %v381
      %v561 = vunpack.c.l.b16 %v382
      %v562 = vunpack.c.l.b16 %v383
      %v563 = vunpack.c.h.b16 %v383
      %v564 = vunpack.c.l.b16 %v384
      %v565 = vunpack.c.l.b16 %v385
      %v566 = vunpack.c.h.b16 %v385
      %v567 = vunpack.c.l.b16 %v386
      %v568 = vunpack.c.l.b16 %v387
      %v569 = vunpack.c.h.b16 %v387
      %v570 = vunpack.c.l.b16 %v388
      %v571 = vunpack.c.l.b16 %v389
      %v572 = vunpack.c.h.b16 %v389
      %v573 = vunpack.c.l.b16 %v390
      %v574 = vunpack.c.l.b16 %v391
      %v575 = vunpack.c.h.b16 %v391
      %v576 = vunpack.c.l.b16 %v392
      %v577 = vunpack.c.l.b16 %v393
      %v578 = vunpack.c.h.b16 %v393
      %v579 = vunpack.c.l.b16 %v394
      %v580 = vunpack.c.l.b16 %v395
      %v581 = vunpack.c.h.b16 %v395
      %v582 = vunpack.c.l.b16 %v396
      %v583 = vunpack.c.l.b16 %v397
      %v584 = vunpack.c.h.b16 %v397
      %v585 = vunpack.c.l.b16 %v398
      %v586 = vunpack.c.l.b16 %v399
      %v587 = vunpack.c.h.b16 %v399
      %v588 = vunpack.c.l.b16 %v400
      %v589 = vunpack.c.l.b16 %v401
      %v590 = vunpack.c.h.b16 %v401
      %v591 = vunpack.c.l.b16 %v402
      %v592 = vunpack.c.l.b16 %v403
      %v593 = vunpack.c.h.b16 %v403
      %v594 = vunpack.c.l.b16 %v404
      %v595 = vunpack.c.l.b16 %v405
      %v596 = vunpack.c.h.b16 %v405
      %v597 = vunpack.c.l.b16 %v406
      %v598 = vunpack.c.l.b16 %v407
      %v599 = vunpack.c.h.b16 %v407
      %v600 = vunpack.c.l.b16 %v408
      %v601 = vunpack.c.l.b16 %v409
      %v602 = vunpack.c.h.b16 %v409
      %v603 = vunpack.c.l.b16 %v410
      %v604 = vunpack.c.l.b16 %v411
      %v605 = vunpack.c.h.b16 %v411
      %v606 = vunpack.c.l.b16 %v412
      %v607 = vunpack.c.l.b16 %v413
      %v608 = vunpack.c.h.b16 %v413
      %v609 = vunpack.c.l.b16 %v414
      %v610 = vunpack.c.l.b16 %v415
      %v611 = vunpack.c.h.b16 %v415
      %v612 = vunpack.c.l.b16 %v416
      %v613 = vunpack.c.l.b16 %v417
      %v614 = vunpack.c.h.b16 %v417
      %v615 = vunpack.c.l.b16 %v418
      %v616 = vunpack.c.l.b16 %v419
      %v617 = vunpack.c.h.b16 %v419
      %v618 = vunpack.c.l.b16 %v420
      %v619 = vunpack.c.l.b16 %v421
      %v620 = vunpack.c.h.b16 %v421
      %v621 = vunpack.c.l.b16 %v422
      %v622 = vunpack.c.l.b16 %v423
      %v623 = vunpack.c.h.b16 %v423
      %v624 = vunpack.c.l.b16 %v424
      %v625 = vunpack.c.l.b16 %v425
      %v626 = vunpack.c.h.b16 %v425
      %v627 = vunpack.c.l.b16 %v426
      %v628 = vunpack.c.l.b16 %v427
      %v629 = vunpack.c.h.b16 %v427
      %v630 = vunpack.c.l.b16 %v428
      %v631 = vunpack.c.l.b16 %v429
      %v632 = vunpack.c.h.b16 %v429
      %v633 = vunpack.c.l.b16 %v430
      %v634 = vunpack.c.l.b16 %v431
      %v635 = vunpack.c.h.b16 %v431
      %v636 = vunpack.c.l.b16 %v432
      %v637 = vunpack.c.l.b16 %v433
      %v638 = vunpack.c.h.b16 %v433
      %v639 = vunpack.c.l.b16 %v434
      %v640 = vunpack.c.l.b16 %v435
      %v641 = vunpack.c.h.b16 %v435
      %v642 = vunpack.c.l.b16 %v436
      %v643 = vunpack.c.l.b16 %v437
      %v644 = vunpack.c.h.b16 %v437
      %v645 = vunpack.c.l.b16 %v438
      %v646 = vunpack.c.l.b16 %v439
      %v647 = vunpack.c.h.b16 %v439
      %v648 = vunpack.c.l.b16 %v440
      %v649 = vpack.c.b16 %v556, %v553
      %v650 = vpack.c.b16 %v557, %v554
      %v651 = vpack.c.b16 %v558, %v555
      %v652 = vpack.c.b16 %v562, %v559
      %v653 = vpack.c.b16 %v563, %v560
      %v654 = vpack.c.b16 %v564, %v561
      %v655 = vpack.c.b16 %v568, %v565
      %v656 = vpack.c.b16 %v569, %v566
      %v657 = vpack.c.b16 %v570, %v567
      %v658 = vpack.c.b16 %v574, %v571
      %v659 = vpack.c.b16 %v575, %v572
      %v660 = vpack.c.b16 %v576, %v573
      %v661 = vpack.c.b16 %v580, %v577
      %v662 = vpack.c.b16 %v581, %v578
      %v663 = vpack.c.b16 %v582, %v579
      %v664 = vpack.c.b16 %v586, %v583
      %v665 = vpack.c.b16 %v587, %v584
      %v666 = vpack.c.b16 %v588, %v585
      %v667 = vpack.c.b16 %v592, %v589
      %v668 = vpack.c.b16 %v593, %v590
      %v669 = vpack.c.b16 %v594, %v591
      %v670 = vpack.c.b16 %v598, %v595
      %v671 = vpack.c.b16 %v599, %v596
      %v672 = vpack.c.b16 %v600, %v597
      %v673 = vpack.c.b16 %v604, %v601
      %v674 = vpack.c.b16 %v605, %v602
      %v675 = vpack.c.b16 %v606, %v603
      %v676 = vpack.c.b16 %v610, %v607
      %v677 = vpack.c.b16 %v611, %v608
      %v678 = vpack.c.b16 %v612, %v609
      %v679 = vpack.c.b16 %v616, %v613
      %v680 = vpack.c.b16 %v617, %v614
      %v681 = vpack.c.b16 %v618, %v615
      %v682 = vpack.c.b16 %v622, %v619
      %v683 = vpack.c.b16 %v623, %v620
      %v684 = vpack.c.b16 %v624, %v621
      %v685 = vpack.c.b16 %v628, %v625
      %v686 = vpack.c.b16 %v629, %v626
      %v687 = vpack.c.b16 %v630, %v627
      %v688 = vpack.c.b16 %v634, %v631
      %v689 = vpack.c.b16 %v635, %v632
      %v690 = vpack.c.b16 %v636, %v633
      %v691 = vpack.c.b16 %v640, %v637
      %v692 = vpack.c.b16 %v641, %v638
      %v693 = vpack.c.b16 %v642, %v639
      %v694 = vpack.c.b16 %v646, %v643
      %v695 = vpack.c.b16 %v647, %v644
      %v696 = vpack.c.b16 %v648, %v645
      %v793 = vunpack.c.l.b16 %v441
      %v794 = vunpack.c.l.b16 %v442
      %v795 = vunpack.c.l.b16 %v443
      %v796 = vunpack.c.l.b16 %v444
      %v797 = vunpack.c.l.b16 %v445
      %v798 = vunpack.c.l.b16 %v446
      %v799 = vunpack.c.l.b16 %v447
      %v800 = vunpack.c.l.b16 %v448
      %v801 = vunpack.c.l.b16 %v449
      %v802 = vunpack.c.l.b16 %v450
      %v803 = vunpack.c.l.b16 %v451
      %v804 = vunpack.c.l.b16 %v452
      %v805 = vunpack.c.l.b16 %v453
      %v806 = vunpack.c.l.b16 %v454
      %v807 = vunpack.c.l.b16 %v455
      %v808 = vunpack.c.l.b16 %v456
      %v809 = vunpack.c.l.b16 %v457
      %v810 = vunpack.c.l.b16 %v458
      %v811 = vunpack.c.l.b16 %v459
      %v812 = vunpack.c.l.b16 %v460
      %v813 = vunpack.c.l.b16 %v461
      %v814 = vunpack.c.l.b16 %v462
      %v815 = vunpack.c.l.b16 %v463
      %v816 = vunpack.c.l.b16 %v464
      %v817 = vunpack.c.l.b16 %v465
      %v818 = vunpack.c.l.b16 %v466
      %v819 = vunpack.c.l.b16 %v467
      %v820 = vunpack.c.l.b16 %v468
      %v821 = vunpack.c.l.b16 %v469
      %v822 = vunpack.c.l.b16 %v470
      %v823 = vunpack.c.l.b16 %v471
      %v824 = vunpack.c.l.b16 %v472
      %v825 = vunpack.c.l.b16 %v473
      %v826 = vunpack.c.l.b16 %v474
      %v827 = vunpack.c.l.b16 %v475
      %v828 = vunpack.c.l.b16 %v476
      %v829 = vunpack.c.l.b16 %v477
      %v830 = vunpack.c.l.b16 %v478
      %v831 = vunpack.c.l.b16 %v479
      %v832 = vunpack.c.l.b16 %v480
      %v833 = vunpack.c.l.b16 %v481
      %v834 = vunpack.c.l.b16 %v482
      %v835 = vunpack.c.l.b16 %v483
      %v836 = vunpack.c.l.b16 %v484
      %v837 = vunpack.c.l.b16 %v485
      %v838 = vunpack.c.l.b16 %v486
      %v839 = vunpack.c.l.b16 %v487
      %v840 = vunpack.c.l.b16 %v488
      %v841 = vpack.c.b16 %v794, %v793
      %v842 = vpack.c.b16 %v796, %v795
      %v843 = vpack.c.b16 %v798, %v797
      %v844 = vpack.c.b16 %v800, %v799
      %v845 = vpack.c.b16 %v802, %v801
      %v846 = vpack.c.b16 %v804, %v803
      %v847 = vpack.c.b16 %v806, %v805
      %v848 = vpack.c.b16 %v808, %v807
      %v849 = vpack.c.b16 %v810, %v809
      %v850 = vpack.c.b16 %v812, %v811
      %v851 = vpack.c.b16 %v814, %v813
      %v852 = vpack.c.b16 %v816, %v815
      %v853 = vpack.c.b16 %v818, %v817
      %v854 = vpack.c.b16 %v820, %v819
      %v855 = vpack.c.b16 %v822, %v821
      %v856 = vpack.c.b16 %v824, %v823
      %v857 = vpack.c.b16 %v826, %v825
      %v858 = vpack.c.b16 %v828, %v827
      %v859 = vpack.c.b16 %v830, %v829
      %v860 = vpack.c.b16 %v832, %v831
      %v861 = vpack.c.b16 %v834, %v833
      %v862 = vpack.c.b16 %v836, %v835
      %v863 = vpack.c.b16 %v838, %v837
      %v864 = vpack.c.b16 %v840, %v839
      %889 = vmatprep.subr.bf16.mxu0 0
      %890 = vmatpush1.bf16.msra.mxu0 %v841
      %891 = vmatprep.subr.bf16.mxu0 0
      %892 = vmatpush1.bf16.msra.mxu0 %v842
      %893 = vmatprep.subr.bf16.mxu0 0
      %894 = vmatpush1.bf16.msra.mxu0 %v843
      %895 = vmatprep.subr.bf16.mxu0 0
      %896 = vmatpush1.bf16.msra.mxu0 %v844
      %897 = vmatprep.subr.bf16.mxu0 0
      %898 = vmatpush1.bf16.msra.mxu0 %v845
      %899 = vmatprep.subr.bf16.mxu0 0
      %900 = vmatpush1.bf16.msra.mxu0 %v846
      %901 = vmatprep.subr.bf16.mxu0 0
      %902 = vmatpush1.bf16.msra.mxu0 %v847
      %903 = vmatprep.subr.bf16.mxu0 0
      %904 = vmatpush1.bf16.msra.mxu0 %v848
      %905 = vmatprep.subr.bf16.mxu0 0
      %906 = vmatpush1.bf16.msra.mxu0 %v849
      %907 = vmatprep.subr.bf16.mxu0 0
      %908 = vmatpush1.bf16.msra.mxu0 %v850
      %909 = vmatprep.subr.bf16.mxu0 0
      %910 = vmatpush1.bf16.msra.mxu0 %v851
      %911 = vmatprep.subr.bf16.mxu0 0
      %912 = vmatpush1.bf16.msra.mxu0 %v852
      %913 = vmatprep.subr.bf16.mxu0 0
      %914 = vmatpush1.bf16.msra.mxu0 %v853
      %915 = vmatprep.subr.bf16.mxu0 0
      %916 = vmatpush1.bf16.msra.mxu0 %v854
      %917 = vmatprep.subr.bf16.mxu0 0
      %918 = vmatpush1.bf16.msra.mxu0 %v855
      %919 = vmatprep.subr.bf16.mxu0 0
      %920 = vmatpush1.bf16.msra.mxu0 %v856
      %921 = vmatprep.mubr.bf16.mxu0 %v650
      %922 = vmatmul.mubr.bf16.gmra.mrb[0].mxu0 %v649
      %v923 = vpop.f32.mrb[0].mxu0
      %v924 = vadd.f32 0.0, %v923
      %v925 = vpop.f32.mrb[0].mxu0
      %v926 = vpop.f32.mrb[0].mxu0
      %v927 = vadd.f32 0.0, %v926
      %v928 = vpop.f32.mrb[0].mxu0
      %929 = vmatprep.mubr.bf16.mxu0 %v653
      %930 = vmatmul.mubr.bf16.gmra.mrb[0].mxu0 %v652
      %v931 = vpop.f32.mrb[0].mxu0
      %v932 = vadd.f32 0.0, %v931
      %v933 = vpop.f32.mrb[0].mxu0
      %v934 = vpop.f32.mrb[0].mxu0
      %v935 = vadd.f32 0.0, %v934
      %v936 = vpop.f32.mrb[0].mxu0
      %937 = vmatprep.mubr.bf16.mxu0 %v656
      %938 = vmatmul.mubr.bf16.gmra.mrb[0].mxu0 %v655
      %v939 = vpop.f32.mrb[0].mxu0
      %v940 = vadd.f32 0.0, %v939
      %v941 = vpop.f32.mrb[0].mxu0
      %v942 = vpop.f32.mrb[0].mxu0
      %v943 = vadd.f32 0.0, %v942
      %v944 = vpop.f32.mrb[0].mxu0
      %945 = vmatprep.mubr.bf16.mxu0 %v659
      %946 = vmatmul.mubr.bf16.gmra.mrb[0].mxu0 %v658
      %v947 = vpop.f32.mrb[0].mxu0
      %v948 = vadd.f32 0.0, %v947
      %v949 = vpop.f32.mrb[0].mxu0
      %v950 = vpop.f32.mrb[0].mxu0
      %v951 = vadd.f32 0.0, %v950
      %v952 = vpop.f32.mrb[0].mxu0
      %953 = vmatprep.mubr.bf16.mxu0 %v662
      %954 = vmatmul.mubr.bf16.gmra.mrb[0].mxu0 %v661
      %v955 = vpop.f32.mrb[0].mxu0
      %v956 = vadd.f32 0.0, %v955
      %v957 = vpop.f32.mrb[0].mxu0
      %v958 = vpop.f32.mrb[0].mxu0
      %v959 = vadd.f32 0.0, %v958
      %v960 = vpop.f32.mrb[0].mxu0
      %961 = vmatprep.mubr.bf16.mxu0 %v665
      %962 = vmatmul.mubr.bf16.gmra.mrb[0].mxu0 %v664
      %v963 = vpop.f32.mrb[0].mxu0
      %v964 = vadd.f32 0.0, %v963
      %v965 = vpop.f32.mrb[0].mxu0
      %v966 = vpop.f32.mrb[0].mxu0
      %v967 = vadd.f32 0.0, %v966
      %v968 = vpop.f32.mrb[0].mxu0
      %969 = vmatprep.mubr.bf16.mxu0 %v668
      %970 = vmatmul.mubr.bf16.gmra.mrb[0].mxu0 %v667
      %v971 = vpop.f32.mrb[0].mxu0
      %v972 = vadd.f32 0.0, %v971
      %v973 = vpop.f32.mrb[0].mxu0
      %v974 = vpop.f32.mrb[0].mxu0
      %v975 = vadd.f32 0.0, %v974
      %v976 = vpop.f32.mrb[0].mxu0
      %977 = vmatprep.mubr.bf16.mxu0 %v671
      %978 = vmatmul.mubr.bf16.gmra.mrb[0].mxu0 %v670
      %v979 = vpop.f32.mrb[0].mxu0
      %v980 = vadd.f32 0.0, %v979
      %v981 = vpop.f32.mrb[0].mxu0
      %v982 = vpop.f32.mrb[0].mxu0
      %v983 = vadd.f32 0.0, %v982
      %v984 = vpop.f32.mrb[0].mxu0
      %985 = vmatprep.mubr.bf16.mxu0 %v674
      %986 = vmatmul.mubr.bf16.gmra.mrb[0].mxu0 %v673
      %v987 = vpop.f32.mrb[0].mxu0
      %v988 = vadd.f32 0.0, %v987
      %v989 = vpop.f32.mrb[0].mxu0
      %v990 = vpop.f32.mrb[0].mxu0
      %v991 = vadd.f32 0.0, %v990
      %v992 = vpop.f32.mrb[0].mxu0
      %993 = vmatprep.mubr.bf16.mxu0 %v677
      %994 = vmatmul.mubr.bf16.gmra.mrb[0].mxu0 %v676
      %v995 = vpop.f32.mrb[0].mxu0
      %v996 = vadd.f32 0.0, %v995
      %v997 = vpop.f32.mrb[0].mxu0
      %v998 = vpop.f32.mrb[0].mxu0
      %v999 = vadd.f32 0.0, %v998
      %v1000 = vpop.f32.mrb[0].mxu0
      %1001 = vmatprep.mubr.bf16.mxu0 %v680
      %1002 = vmatmul.mubr.bf16.gmra.mrb[0].mxu0 %v679
      %v1003 = vpop.f32.mrb[0].mxu0
      %v1004 = vadd.f32 0.0, %v1003
      %v1005 = vpop.f32.mrb[0].mxu0
      %v1006 = vpop.f32.mrb[0].mxu0
      %v1007 = vadd.f32 0.0, %v1006
      %v1008 = vpop.f32.mrb[0].mxu0
      %1009 = vmatprep.mubr.bf16.mxu0 %v683
      %1010 = vmatmul.mubr.bf16.gmra.mrb[0].mxu0 %v682
      %v1011 = vpop.f32.mrb[0].mxu0
      %v1012 = vadd.f32 0.0, %v1011
      %v1013 = vpop.f32.mrb[0].mxu0
      %v1014 = vpop.f32.mrb[0].mxu0
      %v1015 = vadd.f32 0.0, %v1014
      %v1016 = vpop.f32.mrb[0].mxu0
      %1017 = vmatprep.mubr.bf16.mxu0 %v686
      %1018 = vmatmul.mubr.bf16.gmra.mrb[0].mxu0 %v685
      %v1019 = vpop.f32.mrb[0].mxu0
      %v1020 = vadd.f32 0.0, %v1019
      %v1021 = vpop.f32.mrb[0].mxu0
      %v1022 = vpop.f32.mrb[0].mxu0
      %v1023 = vadd.f32 0.0, %v1022
      %v1024 = vpop.f32.mrb[0].mxu0
      %1025 = vmatprep.mubr.bf16.mxu0 %v689
      %1026 = vmatmul.mubr.bf16.gmra.mrb[0].mxu0 %v688
      %v1027 = vpop.f32.mrb[0].mxu0
      %v1028 = vadd.f32 0.0, %v1027
      %v1029 = vpop.f32.mrb[0].mxu0
      %v1030 = vpop.f32.mrb[0].mxu0
      %v1031 = vadd.f32 0.0, %v1030
      %v1032 = vpop.f32.mrb[0].mxu0
      %1033 = vmatprep.mubr.bf16.mxu0 %v692
      %1034 = vmatmul.mubr.bf16.gmra.mrb[0].mxu0 %v691
      %v1035 = vpop.f32.mrb[0].mxu0
      %v1036 = vadd.f32 0.0, %v1035
      %v1037 = vpop.f32.mrb[0].mxu0
      %v1038 = vpop.f32.mrb[0].mxu0
      %v1039 = vadd.f32 0.0, %v1038
      %v1040 = vpop.f32.mrb[0].mxu0
      %1041 = vmatprep.mubr.bf16.mxu0 %v695
      %1042 = vmatmul.mubr.bf16.gmra.mrb[0].mxu0 %v694
      %v1043 = vpop.f32.mrb[0].mxu0
      %v1044 = vadd.f32 0.0, %v1043
      %v1045 = vpop.f32.mrb[0].mxu0
      %v1046 = vpop.f32.mrb[0].mxu0
      %v1047 = vadd.f32 0.0, %v1046
      %v1048 = vpop.f32.mrb[0].mxu0
      %1049 = vdwg.mxu0
      %1050 = vmatprep.subr.bf16.mxu0 0
      %1051 = vmatpush1.bf16.msra.mxu0 %v857
      %1052 = vmatprep.subr.bf16.mxu0 0
      %1053 = vmatpush1.bf16.msra.mxu0 %v858
      %1054 = vmatprep.subr.bf16.mxu0 0
      %1055 = vmatpush1.bf16.msra.mxu0 %v859
      %1056 = vmatprep.subr.bf16.mxu0 0
      %1057 = vmatpush1.bf16.msra.mxu0 %v860
      %1058 = vmatprep.subr.bf16.mxu0 0
      %1059 = vmatpush1.bf16.msra.mxu0 %v861
      %1060 = vmatprep.subr.bf16.mxu0 0
      %1061 = vmatpush1.bf16.msra.mxu0 %v862
      %1062 = vmatprep.subr.bf16.mxu0 0
      %1063 = vmatpush1.bf16.msra.mxu0 %v863
      %1064 = vmatprep.subr.bf16.mxu0 0
      %1065 = vmatpush1.bf16.msra.mxu0 %v864
      %1066 = vmatprep.subr.bf16.mxu0 0
      %1067 = vmatpush1.bf16.msra.mxu0 0
      %1068 = vmatprep.subr.bf16.mxu0 0
      %1069 = vmatpush1.bf16.msra.mxu0 0
      %1070 = vmatprep.subr.bf16.mxu0 0
      %1071 = vmatpush1.bf16.msra.mxu0 0
      %1072 = vmatprep.subr.bf16.mxu0 0
      %1073 = vmatpush1.bf16.msra.mxu0 0
      %1074 = vmatprep.subr.bf16.mxu0 0
      %1075 = vmatpush1.bf16.msra.mxu0 0
      %1076 = vmatprep.subr.bf16.mxu0 0
      %1077 = vmatpush1.bf16.msra.mxu0 0
      %1078 = vmatprep.subr.bf16.mxu0 0
      %1079 = vmatpush1.bf16.msra.mxu0 0
      %1080 = vmatprep.subr.bf16.mxu0 0
      %1081 = vmatpush1.bf16.msra.mxu0 0
      %1082 = vmatprep.mubr.bf16.mxu0 0
      %1083 = vmatmul.mubr.bf16.gmra.mrb[0].mxu0 %v651
      %v1084 = vpop.f32.mrb[0].mxu0
      %v1085 = vadd.f32 %v924, %v1084
      %v1086 = vpop.f32.mrb[0].mxu0
      %v1087 = vpop.f32.mrb[0].mxu0
      %v1088 = vadd.f32 %v927, %v1087
      %v1089 = vpop.f32.mrb[0].mxu0
      %1090 = vmatprep.mubr.bf16.mxu0 0
      %1091 = vmatmul.mubr.bf16.gmra.mrb[0].mxu0 %v654
      %v1092 = vpop.f32.mrb[0].mxu0
      %v1093 = vadd.f32 %v932, %v1092
      %v1094 = vpop.f32.mrb[0].mxu0
      %v1095 = vpop.f32.mrb[0].mxu0
      %v1096 = vadd.f32 %v935, %v1095
      %v1097 = vpop.f32.mrb[0].mxu0
      %1098 = vmatprep.mubr.bf16.mxu0 0
      %1099 = vmatmul.mubr.bf16.gmra.mrb[0].mxu0 %v657
      %v1100 = vpop.f32.mrb[0].mxu0
      %v1101 = vadd.f32 %v940, %v1100
      %v1102 = vpop.f32.mrb[0].mxu0
      %v1103 = vpop.f32.mrb[0].mxu0
      %v1104 = vadd.f32 %v943, %v1103
      %v1105 = vpop.f32.mrb[0].mxu0
      %1106 = vmatprep.mubr.bf16.mxu0 0
      %1107 = vmatmul.mubr.bf16.gmra.mrb[0].mxu0 %v660
      %v1108 = vpop.f32.mrb[0].mxu0
      %v1109 = vadd.f32 %v948, %v1108
      %v1110 = vpop.f32.mrb[0].mxu0
      %v1111 = vpop.f32.mrb[0].mxu0
      %v1112 = vadd.f32 %v951, %v1111
      %v1113 = vpop.f32.mrb[0].mxu0
      %1114 = vmatprep.mubr.bf16.mxu0 0
      %1115 = vmatmul.mubr.bf16.gmra.mrb[0].mxu0 %v663
      %v1116 = vpop.f32.mrb[0].mxu0
      %v1117 = vadd.f32 %v956, %v1116
      %v1118 = vpop.f32.mrb[0].mxu0
      %v1119 = vpop.f32.mrb[0].mxu0
      %v1120 = vadd.f32 %v959, %v1119
      %v1121 = vpop.f32.mrb[0].mxu0
      %1122 = vmatprep.mubr.bf16.mxu0 0
      %1123 = vmatmul.mubr.bf16.gmra.mrb[0].mxu0 %v666
      %v1124 = vpop.f32.mrb[0].mxu0
      %v1125 = vadd.f32 %v964, %v1124
      %v1126 = vpop.f32.mrb[0].mxu0
      %v1127 = vpop.f32.mrb[0].mxu0
      %v1128 = vadd.f32 %v967, %v1127
      %v1129 = vpop.f32.mrb[0].mxu0
      %1130 = vmatprep.mubr.bf16.mxu0 0
      %1131 = vmatmul.mubr.bf16.gmra.mrb[0].mxu0 %v669
      %v1132 = vpop.f32.mrb[0].mxu0
      %v1133 = vadd.f32 %v972, %v1132
      %v1134 = vpop.f32.mrb[0].mxu0
      %v1135 = vpop.f32.mrb[0].mxu0
      %v1136 = vadd.f32 %v975, %v1135
      %v1137 = vpop.f32.mrb[0].mxu0
      %1138 = vmatprep.mubr.bf16.mxu0 0
      %1139 = vmatmul.mubr.bf16.gmra.mrb[0].mxu0 %v672
      %v1140 = vpop.f32.mrb[0].mxu0
      %v1141 = vadd.f32 %v980, %v1140
      %v1142 = vpop.f32.mrb[0].mxu0
      %v1143 = vpop.f32.mrb[0].mxu0
      %v1144 = vadd.f32 %v983, %v1143
      %v1145 = vpop.f32.mrb[0].mxu0
      %1146 = vmatprep.mubr.bf16.mxu0 0
      %1147 = vmatmul.mubr.bf16.gmra.mrb[0].mxu0 %v675
      %v1148 = vpop.f32.mrb[0].mxu0
      %v1149 = vadd.f32 %v988, %v1148
      %v1150 = vpop.f32.mrb[0].mxu0
      %v1151 = vpop.f32.mrb[0].mxu0
      %v1152 = vadd.f32 %v991, %v1151
      %v1153 = vpop.f32.mrb[0].mxu0
      %1154 = vmatprep.mubr.bf16.mxu0 0
      %1155 = vmatmul.mubr.bf16.gmra.mrb[0].mxu0 %v678
      %v1156 = vpop.f32.mrb[0].mxu0
      %v1157 = vadd.f32 %v996, %v1156
      %v1158 = vpop.f32.mrb[0].mxu0
      %v1159 = vpop.f32.mrb[0].mxu0
      %v1160 = vadd.f32 %v999, %v1159
      %v1161 = vpop.f32.mrb[0].mxu0
      %1162 = vmatprep.mubr.bf16.mxu0 0
      %1163 = vmatmul.mubr.bf16.gmra.mrb[0].mxu0 %v681
      %v1164 = vpop.f32.mrb[0].mxu0
      %v1165 = vadd.f32 %v1004, %v1164
      %v1166 = vpop.f32.mrb[0].mxu0
      %v1167 = vpop.f32.mrb[0].mxu0
      %v1168 = vadd.f32 %v1007, %v1167
      %v1169 = vpop.f32.mrb[0].mxu0
      %1170 = vmatprep.mubr.bf16.mxu0 0
      %1171 = vmatmul.mubr.bf16.gmra.mrb[0].mxu0 %v684
      %v1172 = vpop.f32.mrb[0].mxu0
      %v1173 = vadd.f32 %v1012, %v1172
      %v1174 = vpop.f32.mrb[0].mxu0
      %v1175 = vpop.f32.mrb[0].mxu0
      %v1176 = vadd.f32 %v1015, %v1175
      %v1177 = vpop.f32.mrb[0].mxu0
      %1178 = vmatprep.mubr.bf16.mxu0 0
      %1179 = vmatmul.mubr.bf16.gmra.mrb[0].mxu0 %v687
      %v1180 = vpop.f32.mrb[0].mxu0
      %v1181 = vadd.f32 %v1020, %v1180
      %v1182 = vpop.f32.mrb[0].mxu0
      %v1183 = vpop.f32.mrb[0].mxu0
      %v1184 = vadd.f32 %v1023, %v1183
      %v1185 = vpop.f32.mrb[0].mxu0
      %1186 = vmatprep.mubr.bf16.mxu0 0
      %1187 = vmatmul.mubr.bf16.gmra.mrb[0].mxu0 %v690
      %v1188 = vpop.f32.mrb[0].mxu0
      %v1189 = vadd.f32 %v1028, %v1188
      %v1190 = vpop.f32.mrb[0].mxu0
      %v1191 = vpop.f32.mrb[0].mxu0
      %v1192 = vadd.f32 %v1031, %v1191
      %v1193 = vpop.f32.mrb[0].mxu0
      %1194 = vmatprep.mubr.bf16.mxu0 0
      %1195 = vmatmul.mubr.bf16.gmra.mrb[0].mxu0 %v693
      %v1196 = vpop.f32.mrb[0].mxu0
      %v1197 = vadd.f32 %v1036, %v1196
      %v1198 = vpop.f32.mrb[0].mxu0
      %v1199 = vpop.f32.mrb[0].mxu0
      %v1200 = vadd.f32 %v1039, %v1199
      %v1201 = vpop.f32.mrb[0].mxu0
      %1202 = vmatprep.mubr.bf16.mxu0 0
      %1203 = vmatmul.mubr.bf16.gmra.mrb[0].mxu0 %v696
      %v1204 = vpop.f32.mrb[0].mxu0
      %v1205 = vadd.f32 %v1044, %v1204
      %v1206 = vpop.f32.mrb[0].mxu0
      %v1207 = vpop.f32.mrb[0].mxu0
      %v1208 = vadd.f32 %v1047, %v1207
      %v1209 = vpop.f32.mrb[0].mxu0
      %1210 = vdwg.mxu0
      %v1211 = vadd.f32 %v345, %v1085
      %v1212 = vadd.f32 %v346, %v1088
      %v1213 = vadd.f32 %v347, %v1093
      %v1214 = vadd.f32 %v348, %v1096
      %v1215 = vadd.f32 %v349, %v1101
      %v1216 = vadd.f32 %v350, %v1104
      %v1217 = vadd.f32 %v351, %v1109
      %v1218 = vadd.f32 %v352, %v1112
      %v1219 = vadd.f32 %v353, %v1117
      %v1220 = vadd.f32 %v354, %v1120
      %v1221 = vadd.f32 %v355, %v1125
      %v1222 = vadd.f32 %v356, %v1128
      %v1223 = vadd.f32 %v357, %v1133
      %v1224 = vadd.f32 %v358, %v1136
      %v1225 = vadd.f32 %v359, %v1141
      %v1226 = vadd.f32 %v360, %v1144
      %v1227 = vadd.f32 %v361, %v1149
      %v1228 = vadd.f32 %v362, %v1152
      %v1229 = vadd.f32 %v363, %v1157
      %v1230 = vadd.f32 %v364, %v1160
      %v1231 = vadd.f32 %v365, %v1165
      %v1232 = vadd.f32 %v366, %v1168
      %v1233 = vadd.f32 %v367, %v1173
      %v1234 = vadd.f32 %v368, %v1176
      %v1235 = vadd.f32 %v369, %v1181
      %v1236 = vadd.f32 %v370, %v1184
      %v1237 = vadd.f32 %v371, %v1189
      %v1238 = vadd.f32 %v372, %v1192
      %v1239 = vadd.f32 %v373, %v1197
      %v1240 = vadd.f32 %v374, %v1200
      %v1241 = vadd.f32 %v375, %v1205
      %v1242 = vadd.f32 %v376, %v1208
      %1243 = vst [vmem:[#allocation2] sm:$0xff] %v1211
      %1244 = vst [vmem:[#allocation2 + $0x8] sm:$0xff] %v1212
      %1245 = vst [vmem:[#allocation2 + $0x10] sm:$0xff] %v1213
      %1246 = vst [vmem:[#allocation2 + $0x18] sm:$0xff] %v1214
      %1247 = vst [vmem:[#allocation2 + $0x20] sm:$0xff] %v1215
      %1248 = vst [vmem:[#allocation2 + $0x28] sm:$0xff] %v1216
      %1249 = vst [vmem:[#allocation2 + $0x30] sm:$0xff] %v1217
      %1250 = vst [vmem:[#allocation2 + $0x38] sm:$0xff] %v1218
      %1251 = vst [vmem:[#allocation2 + $0x40] sm:$0xff] %v1219
      %1252 = vst [vmem:[#allocation2 + $0x48] sm:$0xff] %v1220
      %1253 = vst [vmem:[#allocation2 + $0x50] sm:$0xff] %v1221
      %1254 = vst [vmem:[#allocation2 + $0x58] sm:$0xff] %v1222
      %1255 = vst [vmem:[#allocation2 + $0x60] sm:$0xff] %v1223
      %1256 = vst [vmem:[#allocation2 + $0x68] sm:$0xff] %v1224
      %1257 = vst [vmem:[#allocation2 + $0x70] sm:$0xff] %v1225
      %1258 = vst [vmem:[#allocation2 + $0x78] sm:$0xff] %v1226
      %1259 = vst [vmem:[#allocation2 + $0x80] sm:$0xff] %v1227
      %1260 = vst [vmem:[#allocation2 + $0x88] sm:$0xff] %v1228
      %1261 = vst [vmem:[#allocation2 + $0x90] sm:$0xff] %v1229
      %1262 = vst [vmem:[#allocation2 + $0x98] sm:$0xff] %v1230
      %1263 = vst [vmem:[#allocation2 + $0xa0] sm:$0xff] %v1231
      %1264 = vst [vmem:[#allocation2 + $0xa8] sm:$0xff] %v1232
      %1265 = vst [vmem:[#allocation2 + $0xb0] sm:$0xff] %v1233
      %1266 = vst [vmem:[#allocation2 + $0xb8] sm:$0xff] %v1234
      %1267 = vst [vmem:[#allocation2 + $0xc0] sm:$0xff] %v1235
      %1268 = vst [vmem:[#allocation2 + $0xc8] sm:$0xff] %v1236
      %1269 = vst [vmem:[#allocation2 + $0xd0] sm:$0xff] %v1237
      %1270 = vst [vmem:[#allocation2 + $0xd8] sm:$0xff] %v1238
      %1271 = vst [vmem:[#allocation2 + $0xe0] sm:$0xff] %v1239
      %1272 = vst [vmem:[#allocation2 + $0xe8] sm:$0xff] %v1240
      %1273 = vst [vmem:[#allocation2 + $0xf0] sm:$0xff] %v1241
      %1274 = vst [vmem:[#allocation2 + $0xf8] sm:$0xff] %v1242
      // Predicated region
      $region41: #{resnet_generator_forward.17} parent=35 // pred_check
        %p1275 = pneg %p309
      $region42: #{resnet_generator_forward.17} parent=35 // pred_check_branch
        %1277 = sbr.rel (%p1275) target = $region44
      $region43: #{resnet_generator_forward.17} parent=35 // pred_region
        %v1278 = vld [vmem:[#allocation2] sm:$0xff]
        %v1279 = vld [vmem:[#allocation2 + $0x8] sm:$0xff]
        %v1280 = vld [vmem:[#allocation2 + $0x10] sm:$0xff]
        %v1281 = vld [vmem:[#allocation2 + $0x18] sm:$0xff]
        %v1282 = vld [vmem:[#allocation2 + $0x20] sm:$0xff]
        %v1283 = vld [vmem:[#allocation2 + $0x28] sm:$0xff]
        %v1284 = vld [vmem:[#allocation2 + $0x30] sm:$0xff]
        %v1285 = vld [vmem:[#allocation2 + $0x38] sm:$0xff]
        %v1286 = vld [vmem:[#allocation2 + $0x40] sm:$0xff]
        %v1287 = vld [vmem:[#allocation2 + $0x48] sm:$0xff]
        %v1288 = vld [vmem:[#allocation2 + $0x50] sm:$0xff]
        %v1289 = vld [vmem:[#allocation2 + $0x58] sm:$0xff]
        %v1290 = vld [vmem:[#allocation2 + $0x60] sm:$0xff]
        %v1291 = vld [vmem:[#allocation2 + $0x68] sm:$0xff]
        %v1292 = vld [vmem:[#allocation2 + $0x70] sm:$0xff]
        %v1293 = vld [vmem:[#allocation2 + $0x78] sm:$0xff]
        %v1294 = vld [vmem:[#allocation2 + $0x80] sm:$0xff]
        %v1295 = vld [vmem:[#allocation2 + $0x88] sm:$0xff]
        %v1296 = vld [vmem:[#allocation2 + $0x90] sm:$0xff]
        %v1297 = vld [vmem:[#allocation2 + $0x98] sm:$0xff]
        %v1298 = vld [vmem:[#allocation2 + $0xa0] sm:$0xff]
        %v1299 = vld [vmem:[#allocation2 + $0xa8] sm:$0xff]
        %v1300 = vld [vmem:[#allocation2 + $0xb0] sm:$0xff]
        %v1301 = vld [vmem:[#allocation2 + $0xb8] sm:$0xff]
        %v1302 = vld [vmem:[#allocation2 + $0xc0] sm:$0xff]
        %v1303 = vld [vmem:[#allocation2 + $0xc8] sm:$0xff]
        %v1304 = vld [vmem:[#allocation2 + $0xd0] sm:$0xff]
        %v1305 = vld [vmem:[#allocation2 + $0xd8] sm:$0xff]
        %v1306 = vld [vmem:[#allocation2 + $0xe0] sm:$0xff]
        %v1307 = vld [vmem:[#allocation2 + $0xe8] sm:$0xff]
        %v1308 = vld [vmem:[#allocation2 + $0xf0] sm:$0xff]
        %v1309 = vld [vmem:[#allocation2 + $0xf8] sm:$0xff]
        %v1310 = vld [vmem:[%s295] sm:$0x1]
        %v1312 = vlaneseq
        %v1313 = vshrl.u32 %v1312, 7
        %v1314 = vsub.s32 0, %v1313
        %v1315 = vrot.slane %v1310, %v1314
        %v1317 = vmul.f32 %v1278, %v1315
        %v1318 = vmul.f32 %v1279, %v1315
        %v1319 = vmul.f32 %v1280, %v1315
        %v1320 = vmul.f32 %v1281, %v1315
        %v1321 = vmul.f32 %v1282, %v1315
        %v1322 = vmul.f32 %v1283, %v1315
        %v1323 = vmul.f32 %v1284, %v1315
        %v1324 = vmul.f32 %v1285, %v1315
        %v1325 = vmul.f32 %v1286, %v1315
        %v1326 = vmul.f32 %v1287, %v1315
        %v1327 = vmul.f32 %v1288, %v1315
        %v1328 = vmul.f32 %v1289, %v1315
        %v1329 = vmul.f32 %v1290, %v1315
        %v1330 = vmul.f32 %v1291, %v1315
        %v1331 = vmul.f32 %v1292, %v1315
        %v1332 = vmul.f32 %v1293, %v1315
        %v1333 = vmul.f32 %v1294, %v1315
        %v1334 = vmul.f32 %v1295, %v1315
        %v1335 = vmul.f32 %v1296, %v1315
        %v1336 = vmul.f32 %v1297, %v1315
        %v1337 = vmul.f32 %v1298, %v1315
        %v1338 = vmul.f32 %v1299, %v1315
        %v1339 = vmul.f32 %v1300, %v1315
        %v1340 = vmul.f32 %v1301, %v1315
        %v1341 = vmul.f32 %v1302, %v1315
        %v1342 = vmul.f32 %v1303, %v1315
        %v1343 = vmul.f32 %v1304, %v1315
        %v1344 = vmul.f32 %v1305, %v1315
        %v1345 = vmul.f32 %v1306, %v1315
        %v1346 = vmul.f32 %v1307, %v1315
        %v1347 = vmul.f32 %v1308, %v1315
        %v1348 = vmul.f32 %v1309, %v1315
        %v1349 = vld [vmem:[%s298] sm:$0x1]
        %v1351 = vlaneseq
        %v1352 = vshrl.u32 %v1351, 7
        %v1353 = vsub.s32 0, %v1352
        %v1354 = vrot.slane %v1349, %v1353
        %v1356 = vadd.f32 %v1317, %v1354
        %v1357 = vadd.f32 %v1318, %v1354
        %v1358 = vadd.f32 %v1319, %v1354
        %v1359 = vadd.f32 %v1320, %v1354
        %v1360 = vadd.f32 %v1321, %v1354
        %v1361 = vadd.f32 %v1322, %v1354
        %v1362 = vadd.f32 %v1323, %v1354
        %v1363 = vadd.f32 %v1324, %v1354
        %v1364 = vadd.f32 %v1325, %v1354
        %v1365 = vadd.f32 %v1326, %v1354
        %v1366 = vadd.f32 %v1327, %v1354
        %v1367 = vadd.f32 %v1328, %v1354
        %v1368 = vadd.f32 %v1329, %v1354
        %v1369 = vadd.f32 %v1330, %v1354
        %v1370 = vadd.f32 %v1331, %v1354
        %v1371 = vadd.f32 %v1332, %v1354
        %v1372 = vadd.f32 %v1333, %v1354
        %v1373 = vadd.f32 %v1334, %v1354
        %v1374 = vadd.f32 %v1335, %v1354
        %v1375 = vadd.f32 %v1336, %v1354
        %v1376 = vadd.f32 %v1337, %v1354
        %v1377 = vadd.f32 %v1338, %v1354
        %v1378 = vadd.f32 %v1339, %v1354
        %v1379 = vadd.f32 %v1340, %v1354
        %v1380 = vadd.f32 %v1341, %v1354
        %v1381 = vadd.f32 %v1342, %v1354
        %v1382 = vadd.f32 %v1343, %v1354
        %v1383 = vadd.f32 %v1344, %v1354
        %v1384 = vadd.f32 %v1345, %v1354
        %v1385 = vadd.f32 %v1346, %v1354
        %v1386 = vadd.f32 %v1347, %v1354
        %v1387 = vadd.f32 %v1348, %v1354
        %v1388 = vmax.f32 %v1356, 0.0
        %v1389 = vmax.f32 %v1357, 0.0
        %v1390 = vmax.f32 %v1358, 0.0
        %v1391 = vmax.f32 %v1359, 0.0
        %v1392 = vmax.f32 %v1360, 0.0
        %v1393 = vmax.f32 %v1361, 0.0
        %v1394 = vmax.f32 %v1362, 0.0
        %v1395 = vmax.f32 %v1363, 0.0
        %v1396 = vmax.f32 %v1364, 0.0
        %v1397 = vmax.f32 %v1365, 0.0
        %v1398 = vmax.f32 %v1366, 0.0
        %v1399 = vmax.f32 %v1367, 0.0
        %v1400 = vmax.f32 %v1368, 0.0
        %v1401 = vmax.f32 %v1369, 0.0
        %v1402 = vmax.f32 %v1370, 0.0
        %v1403 = vmax.f32 %v1371, 0.0
        %v1404 = vmax.f32 %v1372, 0.0
        %v1405 = vmax.f32 %v1373, 0.0
        %v1406 = vmax.f32 %v1374, 0.0
        %v1407 = vmax.f32 %v1375, 0.0
        %v1408 = vmax.f32 %v1376, 0.0
        %v1409 = vmax.f32 %v1377, 0.0
        %v1410 = vmax.f32 %v1378, 0.0
        %v1411 = vmax.f32 %v1379, 0.0
        %v1412 = vmax.f32 %v1380, 0.0
        %v1413 = vmax.f32 %v1381, 0.0
        %v1414 = vmax.f32 %v1382, 0.0
        %v1415 = vmax.f32 %v1383, 0.0
        %v1416 = vmax.f32 %v1384, 0.0
        %v1417 = vmax.f32 %v1385, 0.0
        %v1418 = vmax.f32 %v1386, 0.0
        %v1419 = vmax.f32 %v1387, 0.0
        %1420 = vst [vmem:[%s306] sm:$0xff] %v1388
        %1421 = vst [vmem:[%s306 + $0x8] sm:$0xff] %v1389
        %1422 = vst [vmem:[%s306 + $0x10] sm:$0xff] %v1390
        %1423 = vst [vmem:[%s306 + $0x18] sm:$0xff] %v1391
        %1424 = vst [vmem:[%s306 + $0x20] sm:$0xff] %v1392
        %1425 = vst [vmem:[%s306 + $0x28] sm:$0xff] %v1393
        %1426 = vst [vmem:[%s306 + $0x30] sm:$0xff] %v1394
        %1427 = vst [vmem:[%s306 + $0x38] sm:$0xff] %v1395
        %1428 = vst [vmem:[%s306 + $0x40] sm:$0xff] %v1396
        %1429 = vst [vmem:[%s306 + $0x48] sm:$0xff] %v1397
        %1430 = vst [vmem:[%s306 + $0x50] sm:$0xff] %v1398
        %1431 = vst [vmem:[%s306 + $0x58] sm:$0xff] %v1399
        %1432 = vst [vmem:[%s306 + $0x60] sm:$0xff] %v1400
        %1433 = vst [vmem:[%s306 + $0x68] sm:$0xff] %v1401
        %1434 = vst [vmem:[%s306 + $0x70] sm:$0xff] %v1402
        %1435 = vst [vmem:[%s306 + $0x78] sm:$0xff] %v1403
        %1436 = vst [vmem:[%s306 + $0x80] sm:$0xff] %v1404
        %1437 = vst [vmem:[%s306 + $0x88] sm:$0xff] %v1405
        %1438 = vst [vmem:[%s306 + $0x90] sm:$0xff] %v1406
        %1439 = vst [vmem:[%s306 + $0x98] sm:$0xff] %v1407
        %1440 = vst [vmem:[%s306 + $0xa0] sm:$0xff] %v1408
        %1441 = vst [vmem:[%s306 + $0xa8] sm:$0xff] %v1409
        %1442 = vst [vmem:[%s306 + $0xb0] sm:$0xff] %v1410
        %1443 = vst [vmem:[%s306 + $0xb8] sm:$0xff] %v1411
        %1444 = vst [vmem:[%s306 + $0xc0] sm:$0xff] %v1412
        %1445 = vst [vmem:[%s306 + $0xc8] sm:$0xff] %v1413
        %1446 = vst [vmem:[%s306 + $0xd0] sm:$0xff] %v1414
        %1447 = vst [vmem:[%s306 + $0xd8] sm:$0xff] %v1415
        %1448 = vst [vmem:[%s306 + $0xe0] sm:$0xff] %v1416
        %1449 = vst [vmem:[%s306 + $0xe8] sm:$0xff] %v1417
        %1450 = vst [vmem:[%s306 + $0xf0] sm:$0xff] %v1418
        %1451 = vst [vmem:[%s306 + $0xf8] sm:$0xff] %v1419
      $region44: #{resnet_generator_forward.17} parent=35 // pred_fallthru
        _
      %s1452 = smul.u32 32, %s20
      %p1453 = scmp.lt.s32.totalorder %s1452, 63
      %s1454 = scalar_select %p1453, %s1452, 63
      %p1455 = scmp.lt.s32.totalorder %s21, 0
      %s1456 = scalar_select %p1455, %s21, 0
      %s1457 = sadd.s32 %s1456, %s1454
      %s1458 = smul.addr %s1457, 8
      %s1459 = scalar_lea.vmem %s4, %s1458
      // Predicated region
      $region45: #{resnet_generator_forward.17} parent=35 // pred_check
        %p1460 = pneg %p162
      $region46: #{resnet_generator_forward.17} parent=35 // pred_check_branch
        %1462 = sbr.rel (%p1460) target = $region48
      $region47: #{resnet_generator_forward.17} parent=35 // pred_region
        %s1463 = smul.u32 32, %s20
      $region48: #{resnet_generator_forward.17} parent=35 // pred_fallthru
        _
    $region36: #{resnet_generator_forward.17} parent=5 // pred_fallthru
      _
    %p1464 = scmp.le.s32.totalorder 2, %s10
    // Predicated region
    $region49: #{resnet_generator_forward.17} parent=5 // pred_check
      %p1465 = pneg %p1464
    $region50: #{resnet_generator_forward.17} parent=5 // pred_check_branch
      %1467 = sbr.rel (%p1465) target = $region52
    $region51: #{resnet_generator_forward.17} parent=5 // pred_region
      %s1468 = ssub.s32 %s10, 2
      // Predicated region
      $region53: #{resnet_generator_forward.17} parent=51 // pred_check
        %p1469 = pneg %p168
      $region54: #{resnet_generator_forward.17} parent=51 // pred_check_branch
        %1471 = sbr.rel (%p1469) target = $region56
      $region55: #{resnet_generator_forward.17} parent=51 // pred_region
        %s1472 = smul.u32 32, %s23
        %p1473 = scmp.lt.s32.totalorder %s1472, 63
        %s1474 = scalar_select %p1473, %s1472, 63
        %p1475 = scmp.lt.s32.totalorder %s24, 0
        %s1476 = scalar_select %p1475, %s24, 0
        %s1477 = sadd.s32 %s1476, %s1474
        %s1478 = smul.addr %s1477, 8
        %s1479 = scalar_lea.vmem %s4, %s1478
      $region56: #{resnet_generator_forward.17} parent=51 // pred_fallthru
        _
    $region52: #{resnet_generator_forward.17} parent=5 // pred_fallthru
      _
  $region6: #{resnet_generator_forward.17} parent=0 // loop_footer
    %s14 = sadd.s32 1, %s10
  $region7: #{resnet_generator_forward.17} parent=0 // loop_footer_branch
    %9 = sbr.rel target = $region3
  $region8: #{resnet_generator_forward.17} parent=0 // loop_exit
    _

// kernel: resnet_generator_forward.19
$region0: #{resnet_generator_forward.19}
  #allocation0 [shape = 'u32[]', space=smem, size = 0x4, offset = 0x4, fixed_abs, tag = 'smem constant byte address 0x4 - core index']
  #allocation1 [shape = 'u32[144,128]{1,0:T(1,128)}', space=vmem, size = 0x12000, scoped, tag = 'internal scratch']
  #allocation2 [shape = 'f32[256,128]{1,0:T(8,128)}', space=vmem, size = 0x20000, scoped, tag = 'scratch operand']
  %s0 = inlined_call_operand.vmem [shape: bf16[2048,512], index: 0, kind: input, shape index: {}]
  %s1 = inlined_call_operand.vmem [shape: bf16[512,128], index: 1, kind: input, shape index: {}]
  %s2 = inlined_call_operand.vmem [shape: f32[1,128], index: 2, kind: input, shape index: {}]
  %s3 = inlined_call_operand.vmem [shape: f32[1,128], index: 3, kind: input, shape index: {}]
  %s4 = inlined_call_operand.vmem [shape: f32[2048,128], index: 4, kind: output, shape index: {}]
  %s5 = sld [smem:[#allocation0]]
  $region57: #{resnet_generator_forward.19} parent=0
    _
  %s7 = ssub.s32 1, %s5
  %s8 = scalar_select 0, %s7, %s5
  loop: start=0, step=1, limit=10
  $region2: #{resnet_generator_forward.19} parent=0 // loop_pre_header
    _
  $region3: #{resnet_generator_forward.19} parent=0 // loop_header
    %s10 = sphi 0, %s14
    %p11 = scmp.ge.s32.totalorder %s10, 10
    %s17 = sphi 0, %s36
    %s18 = sphi 0, %s32
    %s19 = sphi 0, %s28
    %s20 = sphi 0, %s17
    %s21 = sphi 0, %s18
    %s22 = sphi 0, %s19
    %s23 = sphi 0, %s20
    %s24 = sphi 0, %s21
    %s25 = sphi 0, %s22
    %s41 = sphi 0, %s43
    %s44 = sphi 0, %s41
    %s45 = sphi 0, %s44
    %s61 = sphi 0, %s45
    %s69 = sphi 0, %s71
    %s72 = sphi 0, %s69
    %s73 = sphi 0, %s72
    %s89 = sphi 0, %s73
    %s95 = sphi 0, %s97
    %s98 = sphi 0, %s95
    %s99 = sphi 0, %s98
    %s115 = sphi 0, %s99
    %s121 = sphi 0, %s123
    %s124 = sphi 0, %s121
    %s125 = sphi 0, %s124
    %s141 = sphi 0, %s125
    %s149 = sphi 0, %s151
    %s152 = sphi 0, %s149
    %s153 = sphi 0, %s152
    %s169 = sphi 0, %s153
  $region4: #{resnet_generator_forward.19} parent=0 // loop_header_branch
    %13 = sbr.rel (%p11) target = $region8
  $region5: #{resnet_generator_forward.19} parent=0 // loop_body
    %s15 = ssub.s32 %s10, 1
    %s16 = ssub.s32 %s10, 2
    %s26 = sadd.s32 1, %s19
    %p27 = scmp.ge.s32.totalorder %s26, 1
    %s28 = scalar_select %p27, 0, %s26
    %s29 = sadd.s32 1, %s18
    %s30 = scalar_select %p27, %s29, %s18
    %p31 = scmp.ge.s32.totalorder %s30, 1
    %s32 = scalar_select %p31, 0, %s30
    %s33 = sadd.s32 1, %s17
    %s34 = scalar_select %p31, %s33, %s17
    %p35 = scmp.ge.s32.totalorder %s34, 8
    %s36 = scalar_select %p35, 0, %s34
    %s37 = ssub.s32 %s17, %s36
    %s38 = ssub.s32 %s19, %s28
    %s39 = sor.u32 %s37, %s38
    %p40 = scmp.eq.s32.totalorder %s39, 0
    %s42 = sadd.s32 %s41, 1
    %s43 = scalar_select %p40, %s41, %s42
    %p46 = pneg %p40
    %p47 = scmp.eq.s32.totalorder %s10, 7
    %p48 = por %p46, %p47
    %p49 = scmp.ne.s32.totalorder %s41, %s44
    %p50 = scmp.eq.s32.totalorder %s10, 0
    %p51 = por %p49, %p50
    %p52 = scmp.ne.s32.totalorder %s41, %s44
    %p53 = scmp.eq.s32.totalorder %s15, 7
    %p54 = por %p52, %p53
    %p55 = scmp.ne.s32.totalorder %s44, %s45
    %p56 = scmp.eq.s32.totalorder %s15, 0
    %p57 = por %p55, %p56
    %p58 = scmp.ne.s32.totalorder %s44, %s45
    %p59 = scmp.eq.s32.totalorder %s16, 7
    %p60 = por %p58, %p59
    %p62 = scmp.ne.s32.totalorder %s45, %s61
    %p63 = scmp.eq.s32.totalorder %s16, 0
    %p64 = por %p62, %p63
    %s65 = ssub.s32 %s19, %s28
    %s66 = ssub.s32 %s18, %s32
    %s67 = sor.u32 %s65, %s66
    %p68 = scmp.eq.s32.totalorder %s67, 0
    %s70 = sadd.s32 %s69, 1
    %s71 = scalar_select %p68, %s69, %s70
    %p74 = pneg %p68
    %p75 = scmp.eq.s32.totalorder %s10, 7
    %p76 = por %p74, %p75
    %p77 = scmp.ne.s32.totalorder %s69, %s72
    %p78 = scmp.eq.s32.totalorder %s10, 0
    %p79 = por %p77, %p78
    %p80 = scmp.ne.s32.totalorder %s69, %s72
    %p81 = scmp.eq.s32.totalorder %s15, 7
    %p82 = por %p80, %p81
    %p83 = scmp.ne.s32.totalorder %s72, %s73
    %p84 = scmp.eq.s32.totalorder %s15, 0
    %p85 = por %p83, %p84
    %p86 = scmp.ne.s32.totalorder %s72, %s73
    %p87 = scmp.eq.s32.totalorder %s16, 7
    %p88 = por %p86, %p87
    %p90 = scmp.ne.s32.totalorder %s73, %s89
    %p91 = scmp.eq.s32.totalorder %s16, 0
    %p92 = por %p90, %p91
    %s93 = ssub.s32 %s18, %s32
    %p94 = scmp.eq.s32.totalorder %s93, 0
    %s96 = sadd.s32 %s95, 1
    %s97 = scalar_select %p94, %s95, %s96
    %p100 = pneg %p94
    %p101 = scmp.eq.s32.totalorder %s10, 7
    %p102 = por %p100, %p101
    %p103 = scmp.ne.s32.totalorder %s95, %s98
    %p104 = scmp.eq.s32.totalorder %s10, 0
    %p105 = por %p103, %p104
    %p106 = scmp.ne.s32.totalorder %s95, %s98
    %p107 = scmp.eq.s32.totalorder %s15, 7
    %p108 = por %p106, %p107
    %p109 = scmp.ne.s32.totalorder %s98, %s99
    %p110 = scmp.eq.s32.totalorder %s15, 0
    %p111 = por %p109, %p110
    %p112 = scmp.ne.s32.totalorder %s98, %s99
    %p113 = scmp.eq.s32.totalorder %s16, 7
    %p114 = por %p112, %p113
    %p116 = scmp.ne.s32.totalorder %s99, %s115
    %p117 = scmp.eq.s32.totalorder %s16, 0
    %p118 = por %p116, %p117
    %s119 = ssub.s32 %s18, %s32
    %p120 = scmp.eq.s32.totalorder %s119, 0
    %s122 = sadd.s32 %s121, 1
    %s123 = scalar_select %p120, %s121, %s122
    %p126 = pneg %p120
    %p127 = scmp.eq.s32.totalorder %s10, 7
    %p128 = por %p126, %p127
    %p129 = scmp.ne.s32.totalorder %s121, %s124
    %p130 = scmp.eq.s32.totalorder %s10, 0
    %p131 = por %p129, %p130
    %p132 = scmp.ne.s32.totalorder %s121, %s124
    %p133 = scmp.eq.s32.totalorder %s15, 7
    %p134 = por %p132, %p133
    %p135 = scmp.ne.s32.totalorder %s124, %s125
    %p136 = scmp.eq.s32.totalorder %s15, 0
    %p137 = por %p135, %p136
    %p138 = scmp.ne.s32.totalorder %s124, %s125
    %p139 = scmp.eq.s32.totalorder %s16, 7
    %p140 = por %p138, %p139
    %p142 = scmp.ne.s32.totalorder %s125, %s141
    %p143 = scmp.eq.s32.totalorder %s16, 0
    %p144 = por %p142, %p143
    %s145 = ssub.s32 %s17, %s36
    %s146 = ssub.s32 %s18, %s32
    %s147 = sor.u32 %s145, %s146
    %p148 = scmp.eq.s32.totalorder %s147, 0
    %s150 = sadd.s32 %s149, 1
    %s151 = scalar_select %p148, %s149, %s150
    %p154 = pneg %p148
    %p155 = scmp.eq.s32.totalorder %s10, 7
    %p156 = por %p154, %p155
    %p157 = scmp.ne.s32.totalorder %s149, %s152
    %p158 = scmp.eq.s32.totalorder %s10, 0
    %p159 = por %p157, %p158
    %p160 = scmp.ne.s32.totalorder %s149, %s152
    %p161 = scmp.eq.s32.totalorder %s15, 7
    %p162 = por %p160, %p161
    %p163 = scmp.ne.s32.totalorder %s152, %s153
    %p164 = scmp.eq.s32.totalorder %s15, 0
    %p165 = por %p163, %p164
    %p166 = scmp.ne.s32.totalorder %s152, %s153
    %p167 = scmp.eq.s32.totalorder %s16, 7
    %p168 = por %p166, %p167
    %p170 = scmp.ne.s32.totalorder %s153, %s169
    %p171 = scmp.eq.s32.totalorder %s16, 0
    %p172 = por %p170, %p171
    %p173 = scmp.le.s32.totalorder 1, %s10
    %p174 = scmp.lt.s32.totalorder %s10, 9
    %p175 = pnand %p173, %p174
    %p176 = pneg %p175
    // Predicated region
    $region9: #{resnet_generator_forward.19} parent=5 // pred_check
      _
    $region10: #{resnet_generator_forward.19} parent=5 // pred_check_branch
      %178 = sbr.rel (%p175) target = $region12
    $region11: #{resnet_generator_forward.19} parent=5 // pred_region
      %s179 = ssub.s32 %s10, 1
      // Predicated region
      $region13: #{resnet_generator_forward.19} parent=11 // pred_check
        %p180 = pneg %p85
      $region14: #{resnet_generator_forward.19} parent=11 // pred_check_branch
        %182 = sbr.rel (%p180) target = $region16
      $region15: #{resnet_generator_forward.19} parent=11 // pred_region
        %s183 = smul.u32 64, %s22
        %p184 = scmp.lt.s32.totalorder %s183, 63
        %s185 = scalar_select %p184, %s183, 63
        %p186 = scmp.lt.s32.totalorder %s21, 0
        %s187 = scalar_select %p186, %s21, 0
        %s188 = sadd.s32 %s187, %s185
        %s189 = smul.addr %s188, 4
        %s190 = scalar_lea.vmem %s1, %s189
        %s191 = smul.u32 64, %s22
      $region16: #{resnet_generator_forward.19} parent=11 // pred_fallthru
        _
      // Predicated region
      $region17: #{resnet_generator_forward.19} parent=11 // pred_check
        %p192 = pneg %p111
      $region18: #{resnet_generator_forward.19} parent=11 // pred_check_branch
        %194 = sbr.rel (%p192) target = $region20
      $region19: #{resnet_generator_forward.19} parent=11 // pred_region
        %p195 = scmp.lt.s32.totalorder %s21, 0
        %s196 = scalar_select %p195, %s21, 0
        %s197 = scalar_lea.vmem %s2, %s196
      $region20: #{resnet_generator_forward.19} parent=11 // pred_fallthru
        _
      // Predicated region
      $region21: #{resnet_generator_forward.19} parent=11 // pred_check
        %p198 = pneg %p137
      $region22: #{resnet_generator_forward.19} parent=11 // pred_check_branch
        %200 = sbr.rel (%p198) target = $region24
      $region23: #{resnet_generator_forward.19} parent=11 // pred_region
        %p201 = scmp.lt.s32.totalorder %s21, 0
        %s202 = scalar_select %p201, %s21, 0
        %s203 = scalar_lea.vmem %s3, %s202
      $region24: #{resnet_generator_forward.19} parent=11 // pred_fallthru
        _
    $region12: #{resnet_generator_forward.19} parent=5 // pred_fallthru
      _
    %p204 = scmp.lt.s32.totalorder %s10, 8
    // Predicated region
    $region25: #{resnet_generator_forward.19} parent=5 // pred_check
      %p205 = pneg %p204
    $region26: #{resnet_generator_forward.19} parent=5 // pred_check_branch
      %207 = sbr.rel (%p205) target = $region28
    $region27: #{resnet_generator_forward.19} parent=5 // pred_region
      // Predicated region
      $region29: #{resnet_generator_forward.19} parent=27 // pred_check
        %p208 = pneg %p51
      $region30: #{resnet_generator_forward.19} parent=27 // pred_check_branch
        %210 = sbr.rel (%p208) target = $region32
      $region31: #{resnet_generator_forward.19} parent=27 // pred_region
        %s211 = smul.u32 32, %s17
        %s212 = smul.u32 4, %s19
        %p213 = scmp.lt.s32.totalorder %s211, 255
        %s214 = scalar_select %p213, %s211, 255
        %p215 = scmp.lt.s32.totalorder %s212, 3
        %s216 = scalar_select %p215, %s212, 3
        %s217 = smul.addr %s214, 4
        %s218 = sadd.s32 %s216, %s217
        %s219 = smul.addr %s218, 4
        %s220 = scalar_lea.vmem %s0, %s219
        %s221 = smul.u32 32, %s17
        %s222 = smul.u32 4, %s19
      $region32: #{resnet_generator_forward.19} parent=27 // pred_fallthru
        _
    $region28: #{resnet_generator_forward.19} parent=5 // pred_fallthru
      _
    %p223 = scmp.le.s32.totalorder 1, %s10
    %p224 = scmp.lt.s32.totalorder %s10, 9
    %p225 = pnand %p223, %p224
    %p226 = pneg %p225
    // Predicated region
    $region33: #{resnet_generator_forward.19} parent=5 // pred_check
      _
    $region34: #{resnet_generator_forward.19} parent=5 // pred_check_branch
      %228 = sbr.rel (%p225) target = $region36
    $region35: #{resnet_generator_forward.19} parent=5 // pred_region
      %s229 = ssub.s32 %s10, 1
      %s230 = smul.u32 32, %s20
      %s231 = smul.u32 4, %s22
      %p232 = scmp.lt.s32.totalorder %s230, 255
      %s233 = scalar_select %p232, %s230, 255
      %p234 = scmp.lt.s32.totalorder %s231, 3
      %s235 = scalar_select %p234, %s231, 3
      %s236 = smul.addr %s233, 4
      %s237 = sadd.s32 %s235, %s236
      %s238 = smul.addr %s237, 4
      %s239 = scalar_lea.vmem %s0, %s238
      %p240 = pneg %p57
      %p241 = pneg %p54
      %s242 = smul.u32 64, %s22
      %p243 = scmp.lt.s32.totalorder %s242, 63
      %s244 = scalar_select %p243, %s242, 63
      %p245 = scmp.lt.s32.totalorder %s21, 0
      %s246 = scalar_select %p245, %s21, 0
      %s247 = sadd.s32 %s246, %s244
      %s248 = smul.addr %s247, 4
      %s249 = scalar_lea.vmem %s1, %s248
      %p250 = pneg %p85
      %p251 = pneg %p82
      %p252 = scmp.lt.s32.totalorder %s21, 0
      %s253 = scalar_select %p252, %s21, 0
      %s254 = scalar_lea.vmem %s2, %s253
      %p255 = pneg %p111
      %p256 = pneg %p108
      %p257 = scmp.lt.s32.totalorder %s21, 0
      %s258 = scalar_select %p257, %s21, 0
      %s259 = scalar_lea.vmem %s3, %s258
      %p260 = pneg %p137
      %p261 = pneg %p134
      %p262 = pneg %p165
      %p263 = pneg %p162
      %s264 = smul.u32 32, %s20
      %p265 = scmp.lt.s32.totalorder %s264, 255
      %s266 = scalar_select %p265, %s264, 255
      %p267 = scmp.lt.s32.totalorder %s21, 0
      %s268 = scalar_select %p267, %s21, 0
      %s269 = sadd.s32 %s268, %s266
      %s270 = smul.addr %s269, 8
      %s271 = scalar_lea.vmem %s4, %s270
      %s272 = smul.u32 32, %s20
      %s273 = smul.u32 4, %s22
      %p274 = scmp.lt.s32.totalorder %s272, 255
      %s275 = scalar_select %p274, %s272, 255
      %p276 = scmp.lt.s32.totalorder %s273, 3
      %s277 = scalar_select %p276, %s273, 3
      %s278 = smul.addr %s275, 4
      %s279 = sadd.s32 %s277, %s278
      %s280 = smul.addr %s279, 4
      %s281 = scalar_lea.vmem %s0, %s280
      %s282 = smul.u32 32, %s20
      %s283 = smul.u32 4, %s22
      %s284 = smul.u32 64, %s22
      %p285 = scmp.lt.s32.totalorder %s284, 63
      %s286 = scalar_select %p285, %s284, 63
      %p287 = scmp.lt.s32.totalorder %s21, 0
      %s288 = scalar_select %p287, %s21, 0
      %s289 = sadd.s32 %s288, %s286
      %s290 = smul.addr %s289, 4
      %s291 = scalar_lea.vmem %s1, %s290
      %s292 = smul.u32 64, %s22
      %p293 = scmp.lt.s32.totalorder %s21, 0
      %s294 = scalar_select %p293, %s21, 0
      %s295 = scalar_lea.vmem %s2, %s294
      %p296 = scmp.lt.s32.totalorder %s21, 0
      %s297 = scalar_select %p296, %s21, 0
      %s298 = scalar_lea.vmem %s3, %s297
      %s299 = smul.u32 32, %s20
      %p300 = scmp.lt.s32.totalorder %s299, 255
      %s301 = scalar_select %p300, %s299, 255
      %p302 = scmp.lt.s32.totalorder %s21, 0
      %s303 = scalar_select %p302, %s21, 0
      %s304 = sadd.s32 %s303, %s301
      %s305 = smul.addr %s304, 8
      %s306 = scalar_lea.vmem %s4, %s305
      %s307 = smul.u32 32, %s20
      %p309 = scmp.eq.s32.totalorder %s22, 0
      // Predicated region
      $region37: #{resnet_generator_forward.19} parent=35 // pred_check
        %p310 = pneg %p309
      $region38: #{resnet_generator_forward.19} parent=35 // pred_check_branch
        %312 = sbr.rel (%p310) target = $region40
      $region39: #{resnet_generator_forward.19} parent=35 // pred_region
        %313 = vst [vmem:[#allocation2] sm:$0xff] 0.0
        %314 = vst [vmem:[#allocation2 + $0x8] sm:$0xff] 0.0
        %315 = vst [vmem:[#allocation2 + $0x10] sm:$0xff] 0.0
        %316 = vst [vmem:[#allocation2 + $0x18] sm:$0xff] 0.0
        %317 = vst [vmem:[#allocation2 + $0x20] sm:$0xff] 0.0
        %318 = vst [vmem:[#allocation2 + $0x28] sm:$0xff] 0.0
        %319 = vst [vmem:[#allocation2 + $0x30] sm:$0xff] 0.0
        %320 = vst [vmem:[#allocation2 + $0x38] sm:$0xff] 0.0
        %321 = vst [vmem:[#allocation2 + $0x40] sm:$0xff] 0.0
        %322 = vst [vmem:[#allocation2 + $0x48] sm:$0xff] 0.0
        %323 = vst [vmem:[#allocation2 + $0x50] sm:$0xff] 0.0
        %324 = vst [vmem:[#allocation2 + $0x58] sm:$0xff] 0.0
        %325 = vst [vmem:[#allocation2 + $0x60] sm:$0xff] 0.0
        %326 = vst [vmem:[#allocation2 + $0x68] sm:$0xff] 0.0
        %327 = vst [vmem:[#allocation2 + $0x70] sm:$0xff] 0.0
        %328 = vst [vmem:[#allocation2 + $0x78] sm:$0xff] 0.0
        %329 = vst [vmem:[#allocation2 + $0x80] sm:$0xff] 0.0
        %330 = vst [vmem:[#allocation2 + $0x88] sm:$0xff] 0.0
        %331 = vst [vmem:[#allocation2 + $0x90] sm:$0xff] 0.0
        %332 = vst [vmem:[#allocation2 + $0x98] sm:$0xff] 0.0
        %333 = vst [vmem:[#allocation2 + $0xa0] sm:$0xff] 0.0
        %334 = vst [vmem:[#allocation2 + $0xa8] sm:$0xff] 0.0
        %335 = vst [vmem:[#allocation2 + $0xb0] sm:$0xff] 0.0
        %336 = vst [vmem:[#allocation2 + $0xb8] sm:$0xff] 0.0
        %337 = vst [vmem:[#allocation2 + $0xc0] sm:$0xff] 0.0
        %338 = vst [vmem:[#allocation2 + $0xc8] sm:$0xff] 0.0
        %339 = vst [vmem:[#allocation2 + $0xd0] sm:$0xff] 0.0
        %340 = vst [vmem:[#allocation2 + $0xd8] sm:$0xff] 0.0
        %341 = vst [vmem:[#allocation2 + $0xe0] sm:$0xff] 0.0
        %342 = vst [vmem:[#allocation2 + $0xe8] sm:$0xff] 0.0
        %343 = vst [vmem:[#allocation2 + $0xf0] sm:$0xff] 0.0
        %344 = vst [vmem:[#allocation2 + $0xf8] sm:$0xff] 0.0
      $region40: #{resnet_generator_forward.19} parent=35 // pred_fallthru
        _
      %v345 = vld [vmem:[#allocation2] sm:$0xff]
      %v346 = vld [vmem:[#allocation2 + $0x8] sm:$0xff]
      %v347 = vld [vmem:[#allocation2 + $0x10] sm:$0xff]
      %v348 = vld [vmem:[#allocation2 + $0x18] sm:$0xff]
      %v349 = vld [vmem:[#allocation2 + $0x20] sm:$0xff]
      %v350 = vld [vmem:[#allocation2 + $0x28] sm:$0xff]
      %v351 = vld [vmem:[#allocation2 + $0x30] sm:$0xff]
      %v352 = vld [vmem:[#allocation2 + $0x38] sm:$0xff]
      %v353 = vld [vmem:[#allocation2 + $0x40] sm:$0xff]
      %v354 = vld [vmem:[#allocation2 + $0x48] sm:$0xff]
      %v355 = vld [vmem:[#allocation2 + $0x50] sm:$0xff]
      %v356 = vld [vmem:[#allocation2 + $0x58] sm:$0xff]
      %v357 = vld [vmem:[#allocation2 + $0x60] sm:$0xff]
      %v358 = vld [vmem:[#allocation2 + $0x68] sm:$0xff]
      %v359 = vld [vmem:[#allocation2 + $0x70] sm:$0xff]
      %v360 = vld [vmem:[#allocation2 + $0x78] sm:$0xff]
      %v361 = vld [vmem:[#allocation2 + $0x80] sm:$0xff]
      %v362 = vld [vmem:[#allocation2 + $0x88] sm:$0xff]
      %v363 = vld [vmem:[#allocation2 + $0x90] sm:$0xff]
      %v364 = vld [vmem:[#allocation2 + $0x98] sm:$0xff]
      %v365 = vld [vmem:[#allocation2 + $0xa0] sm:$0xff]
      %v366 = vld [vmem:[#allocation2 + $0xa8] sm:$0xff]
      %v367 = vld [vmem:[#allocation2 + $0xb0] sm:$0xff]
      %v368 = vld [vmem:[#allocation2 + $0xb8] sm:$0xff]
      %v369 = vld [vmem:[#allocation2 + $0xc0] sm:$0xff]
      %v370 = vld [vmem:[#allocation2 + $0xc8] sm:$0xff]
      %v371 = vld [vmem:[#allocation2 + $0xd0] sm:$0xff]
      %v372 = vld [vmem:[#allocation2 + $0xd8] sm:$0xff]
      %v373 = vld [vmem:[#allocation2 + $0xe0] sm:$0xff]
      %v374 = vld [vmem:[#allocation2 + $0xe8] sm:$0xff]
      %v375 = vld [vmem:[#allocation2 + $0xf0] sm:$0xff]
      %v376 = vld [vmem:[#allocation2 + $0xf8] sm:$0xff]
      %v377 = vld [vmem:[%s281] sm:$0xff]
      %v378 = vld [vmem:[%s281 + $0x8] sm:$0xff]
      %v379 = vld [vmem:[%s281 + $0x10] sm:$0xff]
      %v380 = vld [vmem:[%s281 + $0x18] sm:$0xff]
      %v381 = vld [vmem:[%s281 + $0x20] sm:$0xff]
      %v382 = vld [vmem:[%s281 + $0x28] sm:$0xff]
      %v383 = vld [vmem:[%s281 + $0x30] sm:$0xff]
      %v384 = vld [vmem:[%s281 + $0x38] sm:$0xff]
      %v385 = vld [vmem:[%s281 + $0x40] sm:$0xff]
      %v386 = vld [vmem:[%s281 + $0x48] sm:$0xff]
      %v387 = vld [vmem:[%s281 + $0x50] sm:$0xff]
      %v388 = vld [vmem:[%s281 + $0x58] sm:$0xff]
      %v389 = vld [vmem:[%s281 + $0x60] sm:$0xff]
      %v390 = vld [vmem:[%s281 + $0x68] sm:$0xff]
      %v391 = vld [vmem:[%s281 + $0x70] sm:$0xff]
      %v392 = vld [vmem:[%s281 + $0x78] sm:$0xff]
      %v393 = vld [vmem:[%s281 + $0x80] sm:$0xff]
      %v394 = vld [vmem:[%s281 + $0x88] sm:$0xff]
      %v395 = vld [vmem:[%s281 + $0x90] sm:$0xff]
      %v396 = vld [vmem:[%s281 + $0x98] sm:$0xff]
      %v397 = vld [vmem:[%s281 + $0xa0] sm:$0xff]
      %v398 = vld [vmem:[%s281 + $0xa8] sm:$0xff]
      %v399 = vld [vmem:[%s281 + $0xb0] sm:$0xff]
      %v400 = vld [vmem:[%s281 + $0xb8] sm:$0xff]
      %v401 = vld [vmem:[%s281 + $0xc0] sm:$0xff]
      %v402 = vld [vmem:[%s281 + $0xc8] sm:$0xff]
      %v403 = vld [vmem:[%s281 + $0xd0] sm:$0xff]
      %v404 = vld [vmem:[%s281 + $0xd8] sm:$0xff]
      %v405 = vld [vmem:[%s281 + $0xe0] sm:$0xff]
      %v406 = vld [vmem:[%s281 + $0xe8] sm:$0xff]
      %v407 = vld [vmem:[%s281 + $0xf0] sm:$0xff]
      %v408 = vld [vmem:[%s281 + $0xf8] sm:$0xff]
      %v409 = vld [vmem:[%s281 + $0x100] sm:$0xff]
      %v410 = vld [vmem:[%s281 + $0x108] sm:$0xff]
      %v411 = vld [vmem:[%s281 + $0x110] sm:$0xff]
      %v412 = vld [vmem:[%s281 + $0x118] sm:$0xff]
      %v413 = vld [vmem:[%s281 + $0x120] sm:$0xff]
      %v414 = vld [vmem:[%s281 + $0x128] sm:$0xff]
      %v415 = vld [vmem:[%s281 + $0x130] sm:$0xff]
      %v416 = vld [vmem:[%s281 + $0x138] sm:$0xff]
      %v417 = vld [vmem:[%s281 + $0x140] sm:$0xff]
      %v418 = vld [vmem:[%s281 + $0x148] sm:$0xff]
      %v419 = vld [vmem:[%s281 + $0x150] sm:$0xff]
      %v420 = vld [vmem:[%s281 + $0x158] sm:$0xff]
      %v421 = vld [vmem:[%s281 + $0x160] sm:$0xff]
      %v422 = vld [vmem:[%s281 + $0x168] sm:$0xff]
      %v423 = vld [vmem:[%s281 + $0x170] sm:$0xff]
      %v424 = vld [vmem:[%s281 + $0x178] sm:$0xff]
      %v425 = vld [vmem:[%s281 + $0x180] sm:$0xff]
      %v426 = vld [vmem:[%s281 + $0x188] sm:$0xff]
      %v427 = vld [vmem:[%s281 + $0x190] sm:$0xff]
      %v428 = vld [vmem:[%s281 + $0x198] sm:$0xff]
      %v429 = vld [vmem:[%s281 + $0x1a0] sm:$0xff]
      %v430 = vld [vmem:[%s281 + $0x1a8] sm:$0xff]
      %v431 = vld [vmem:[%s281 + $0x1b0] sm:$0xff]
      %v432 = vld [vmem:[%s281 + $0x1b8] sm:$0xff]
      %v433 = vld [vmem:[%s281 + $0x1c0] sm:$0xff]
      %v434 = vld [vmem:[%s281 + $0x1c8] sm:$0xff]
      %v435 = vld [vmem:[%s281 + $0x1d0] sm:$0xff]
      %v436 = vld [vmem:[%s281 + $0x1d8] sm:$0xff]
      %v437 = vld [vmem:[%s281 + $0x1e0] sm:$0xff]
      %v438 = vld [vmem:[%s281 + $0x1e8] sm:$0xff]
      %v439 = vld [vmem:[%s281 + $0x1f0] sm:$0xff]
      %v440 = vld [vmem:[%s281 + $0x1f8] sm:$0xff]
      %v441 = vld [vmem:[%s291] sm:$0xf]
      %v442 = vld [vmem:[%s291 + $0x4] sm:$0xf]
      %v443 = vld [vmem:[%s291 + $0x8] sm:$0xf]
      %v444 = vld [vmem:[%s291 + $0xc] sm:$0xf]
      %v445 = vld [vmem:[%s291 + $0x10] sm:$0xf]
      %v446 = vld [vmem:[%s291 + $0x14] sm:$0xf]
      %v447 = vld [vmem:[%s291 + $0x18] sm:$0xf]
      %v448 = vld [vmem:[%s291 + $0x1c] sm:$0xf]
      %v449 = vld [vmem:[%s291 + $0x20] sm:$0xf]
      %v450 = vld [vmem:[%s291 + $0x24] sm:$0xf]
      %v451 = vld [vmem:[%s291 + $0x28] sm:$0xf]
      %v452 = vld [vmem:[%s291 + $0x2c] sm:$0xf]
      %v453 = vld [vmem:[%s291 + $0x30] sm:$0xf]
      %v454 = vld [vmem:[%s291 + $0x34] sm:$0xf]
      %v455 = vld [vmem:[%s291 + $0x38] sm:$0xf]
      %v456 = vld [vmem:[%s291 + $0x3c] sm:$0xf]
      %v457 = vld [vmem:[%s291 + $0x40] sm:$0xf]
      %v458 = vld [vmem:[%s291 + $0x44] sm:$0xf]
      %v459 = vld [vmem:[%s291 + $0x48] sm:$0xf]
      %v460 = vld [vmem:[%s291 + $0x4c] sm:$0xf]
      %v461 = vld [vmem:[%s291 + $0x50] sm:$0xf]
      %v462 = vld [vmem:[%s291 + $0x54] sm:$0xf]
      %v463 = vld [vmem:[%s291 + $0x58] sm:$0xf]
      %v464 = vld [vmem:[%s291 + $0x5c] sm:$0xf]
      %v465 = vld [vmem:[%s291 + $0x60] sm:$0xf]
      %v466 = vld [vmem:[%s291 + $0x64] sm:$0xf]
      %v467 = vld [vmem:[%s291 + $0x68] sm:$0xf]
      %v468 = vld [vmem:[%s291 + $0x6c] sm:$0xf]
      %v469 = vld [vmem:[%s291 + $0x70] sm:$0xf]
      %v470 = vld [vmem:[%s291 + $0x74] sm:$0xf]
      %v471 = vld [vmem:[%s291 + $0x78] sm:$0xf]
      %v472 = vld [vmem:[%s291 + $0x7c] sm:$0xf]
      %v473 = vld [vmem:[%s291 + $0x80] sm:$0xf]
      %v474 = vld [vmem:[%s291 + $0x84] sm:$0xf]
      %v475 = vld [vmem:[%s291 + $0x88] sm:$0xf]
      %v476 = vld [vmem:[%s291 + $0x8c] sm:$0xf]
      %v477 = vld [vmem:[%s291 + $0x90] sm:$0xf]
      %v478 = vld [vmem:[%s291 + $0x94] sm:$0xf]
      %v479 = vld [vmem:[%s291 + $0x98] sm:$0xf]
      %v480 = vld [vmem:[%s291 + $0x9c] sm:$0xf]
      %v481 = vld [vmem:[%s291 + $0xa0] sm:$0xf]
      %v482 = vld [vmem:[%s291 + $0xa4] sm:$0xf]
      %v483 = vld [vmem:[%s291 + $0xa8] sm:$0xf]
      %v484 = vld [vmem:[%s291 + $0xac] sm:$0xf]
      %v485 = vld [vmem:[%s291 + $0xb0] sm:$0xf]
      %v486 = vld [vmem:[%s291 + $0xb4] sm:$0xf]
      %v487 = vld [vmem:[%s291 + $0xb8] sm:$0xf]
      %v488 = vld [vmem:[%s291 + $0xbc] sm:$0xf]
      %v489 = vld [vmem:[%s291 + $0xc0] sm:$0xf]
      %v490 = vld [vmem:[%s291 + $0xc4] sm:$0xf]
      %v491 = vld [vmem:[%s291 + $0xc8] sm:$0xf]
      %v492 = vld [vmem:[%s291 + $0xcc] sm:$0xf]
      %v493 = vld [vmem:[%s291 + $0xd0] sm:$0xf]
      %v494 = vld [vmem:[%s291 + $0xd4] sm:$0xf]
      %v495 = vld [vmem:[%s291 + $0xd8] sm:$0xf]
      %v496 = vld [vmem:[%s291 + $0xdc] sm:$0xf]
      %v497 = vld [vmem:[%s291 + $0xe0] sm:$0xf]
      %v498 = vld [vmem:[%s291 + $0xe4] sm:$0xf]
      %v499 = vld [vmem:[%s291 + $0xe8] sm:$0xf]
      %v500 = vld [vmem:[%s291 + $0xec] sm:$0xf]
      %v501 = vld [vmem:[%s291 + $0xf0] sm:$0xf]
      %v502 = vld [vmem:[%s291 + $0xf4] sm:$0xf]
      %v503 = vld [vmem:[%s291 + $0xf8] sm:$0xf]
      %v504 = vld [vmem:[%s291 + $0xfc] sm:$0xf]
      %v569 = vunpack.c.l.b16 %v377
      %v570 = vunpack.c.h.b16 %v377
      %v571 = vunpack.c.l.b16 %v378
      %v572 = vunpack.c.h.b16 %v378
      %v573 = vunpack.c.l.b16 %v379
      %v574 = vunpack.c.h.b16 %v379
      %v575 = vunpack.c.l.b16 %v380
      %v576 = vunpack.c.h.b16 %v380
      %v577 = vunpack.c.l.b16 %v381
      %v578 = vunpack.c.h.b16 %v381
      %v579 = vunpack.c.l.b16 %v382
      %v580 = vunpack.c.h.b16 %v382
      %v581 = vunpack.c.l.b16 %v383
      %v582 = vunpack.c.h.b16 %v383
      %v583 = vunpack.c.l.b16 %v384
      %v584 = vunpack.c.h.b16 %v384
      %v585 = vunpack.c.l.b16 %v385
      %v586 = vunpack.c.h.b16 %v385
      %v587 = vunpack.c.l.b16 %v386
      %v588 = vunpack.c.h.b16 %v386
      %v589 = vunpack.c.l.b16 %v387
      %v590 = vunpack.c.h.b16 %v387
      %v591 = vunpack.c.l.b16 %v388
      %v592 = vunpack.c.h.b16 %v388
      %v593 = vunpack.c.l.b16 %v389
      %v594 = vunpack.c.h.b16 %v389
      %v595 = vunpack.c.l.b16 %v390
      %v596 = vunpack.c.h.b16 %v390
      %v597 = vunpack.c.l.b16 %v391
      %v598 = vunpack.c.h.b16 %v391
      %v599 = vunpack.c.l.b16 %v392
      %v600 = vunpack.c.h.b16 %v392
      %v601 = vunpack.c.l.b16 %v393
      %v602 = vunpack.c.h.b16 %v393
      %v603 = vunpack.c.l.b16 %v394
      %v604 = vunpack.c.h.b16 %v394
      %v605 = vunpack.c.l.b16 %v395
      %v606 = vunpack.c.h.b16 %v395
      %v607 = vunpack.c.l.b16 %v396
      %v608 = vunpack.c.h.b16 %v396
      %v609 = vunpack.c.l.b16 %v397
      %v610 = vunpack.c.h.b16 %v397
      %v611 = vunpack.c.l.b16 %v398
      %v612 = vunpack.c.h.b16 %v398
      %v613 = vunpack.c.l.b16 %v399
      %v614 = vunpack.c.h.b16 %v399
      %v615 = vunpack.c.l.b16 %v400
      %v616 = vunpack.c.h.b16 %v400
      %v617 = vunpack.c.l.b16 %v401
      %v618 = vunpack.c.h.b16 %v401
      %v619 = vunpack.c.l.b16 %v402
      %v620 = vunpack.c.h.b16 %v402
      %v621 = vunpack.c.l.b16 %v403
      %v622 = vunpack.c.h.b16 %v403
      %v623 = vunpack.c.l.b16 %v404
      %v624 = vunpack.c.h.b16 %v404
      %v625 = vunpack.c.l.b16 %v405
      %v626 = vunpack.c.h.b16 %v405
      %v627 = vunpack.c.l.b16 %v406
      %v628 = vunpack.c.h.b16 %v406
      %v629 = vunpack.c.l.b16 %v407
      %v630 = vunpack.c.h.b16 %v407
      %v631 = vunpack.c.l.b16 %v408
      %v632 = vunpack.c.h.b16 %v408
      %v633 = vunpack.c.l.b16 %v409
      %v634 = vunpack.c.h.b16 %v409
      %v635 = vunpack.c.l.b16 %v410
      %v636 = vunpack.c.h.b16 %v410
      %v637 = vunpack.c.l.b16 %v411
      %v638 = vunpack.c.h.b16 %v411
      %v639 = vunpack.c.l.b16 %v412
      %v640 = vunpack.c.h.b16 %v412
      %v641 = vunpack.c.l.b16 %v413
      %v642 = vunpack.c.h.b16 %v413
      %v643 = vunpack.c.l.b16 %v414
      %v644 = vunpack.c.h.b16 %v414
      %v645 = vunpack.c.l.b16 %v415
      %v646 = vunpack.c.h.b16 %v415
      %v647 = vunpack.c.l.b16 %v416
      %v648 = vunpack.c.h.b16 %v416
      %v649 = vunpack.c.l.b16 %v417
      %v650 = vunpack.c.h.b16 %v417
      %v651 = vunpack.c.l.b16 %v418
      %v652 = vunpack.c.h.b16 %v418
      %v653 = vunpack.c.l.b16 %v419
      %v654 = vunpack.c.h.b16 %v419
      %v655 = vunpack.c.l.b16 %v420
      %v656 = vunpack.c.h.b16 %v420
      %v657 = vunpack.c.l.b16 %v421
      %v658 = vunpack.c.h.b16 %v421
      %v659 = vunpack.c.l.b16 %v422
      %v660 = vunpack.c.h.b16 %v422
      %v661 = vunpack.c.l.b16 %v423
      %v662 = vunpack.c.h.b16 %v423
      %v663 = vunpack.c.l.b16 %v424
      %v664 = vunpack.c.h.b16 %v424
      %v665 = vunpack.c.l.b16 %v425
      %v666 = vunpack.c.h.b16 %v425
      %v667 = vunpack.c.l.b16 %v426
      %v668 = vunpack.c.h.b16 %v426
      %v669 = vunpack.c.l.b16 %v427
      %v670 = vunpack.c.h.b16 %v427
      %v671 = vunpack.c.l.b16 %v428
      %v672 = vunpack.c.h.b16 %v428
      %v673 = vunpack.c.l.b16 %v429
      %v674 = vunpack.c.h.b16 %v429
      %v675 = vunpack.c.l.b16 %v430
      %v676 = vunpack.c.h.b16 %v430
      %v677 = vunpack.c.l.b16 %v431
      %v678 = vunpack.c.h.b16 %v431
      %v679 = vunpack.c.l.b16 %v432
      %v680 = vunpack.c.h.b16 %v432
      %v681 = vunpack.c.l.b16 %v433
      %v682 = vunpack.c.h.b16 %v433
      %v683 = vunpack.c.l.b16 %v434
      %v684 = vunpack.c.h.b16 %v434
      %v685 = vunpack.c.l.b16 %v435
      %v686 = vunpack.c.h.b16 %v435
      %v687 = vunpack.c.l.b16 %v436
      %v688 = vunpack.c.h.b16 %v436
      %v689 = vunpack.c.l.b16 %v437
      %v690 = vunpack.c.h.b16 %v437
      %v691 = vunpack.c.l.b16 %v438
      %v692 = vunpack.c.h.b16 %v438
      %v693 = vunpack.c.l.b16 %v439
      %v694 = vunpack.c.h.b16 %v439
      %v695 = vunpack.c.l.b16 %v440
      %v696 = vunpack.c.h.b16 %v440
      %v697 = vpack.c.b16 %v573, %v569
      %v698 = vpack.c.b16 %v574, %v570
      %v699 = vpack.c.b16 %v575, %v571
      %v700 = vpack.c.b16 %v576, %v572
      %v701 = vpack.c.b16 %v581, %v577
      %v702 = vpack.c.b16 %v582, %v578
      %v703 = vpack.c.b16 %v583, %v579
      %v704 = vpack.c.b16 %v584, %v580
      %v705 = vpack.c.b16 %v589, %v585
      %v706 = vpack.c.b16 %v590, %v586
      %v707 = vpack.c.b16 %v591, %v587
      %v708 = vpack.c.b16 %v592, %v588
      %v709 = vpack.c.b16 %v597, %v593
      %v710 = vpack.c.b16 %v598, %v594
      %v711 = vpack.c.b16 %v599, %v595
      %v712 = vpack.c.b16 %v600, %v596
      %v713 = vpack.c.b16 %v605, %v601
      %v714 = vpack.c.b16 %v606, %v602
      %v715 = vpack.c.b16 %v607, %v603
      %v716 = vpack.c.b16 %v608, %v604
      %v717 = vpack.c.b16 %v613, %v609
      %v718 = vpack.c.b16 %v614, %v610
      %v719 = vpack.c.b16 %v615, %v611
      %v720 = vpack.c.b16 %v616, %v612
      %v721 = vpack.c.b16 %v621, %v617
      %v722 = vpack.c.b16 %v622, %v618
      %v723 = vpack.c.b16 %v623, %v619
      %v724 = vpack.c.b16 %v624, %v620
      %v725 = vpack.c.b16 %v629, %v625
      %v726 = vpack.c.b16 %v630, %v626
      %v727 = vpack.c.b16 %v631, %v627
      %v728 = vpack.c.b16 %v632, %v628
      %v729 = vpack.c.b16 %v637, %v633
      %v730 = vpack.c.b16 %v638, %v634
      %v731 = vpack.c.b16 %v639, %v635
      %v732 = vpack.c.b16 %v640, %v636
      %v733 = vpack.c.b16 %v645, %v641
      %v734 = vpack.c.b16 %v646, %v642
      %v735 = vpack.c.b16 %v647, %v643
      %v736 = vpack.c.b16 %v648, %v644
      %v737 = vpack.c.b16 %v653, %v649
      %v738 = vpack.c.b16 %v654, %v650
      %v739 = vpack.c.b16 %v655, %v651
      %v740 = vpack.c.b16 %v656, %v652
      %v741 = vpack.c.b16 %v661, %v657
      %v742 = vpack.c.b16 %v662, %v658
      %v743 = vpack.c.b16 %v663, %v659
      %v744 = vpack.c.b16 %v664, %v660
      %v745 = vpack.c.b16 %v669, %v665
      %v746 = vpack.c.b16 %v670, %v666
      %v747 = vpack.c.b16 %v671, %v667
      %v748 = vpack.c.b16 %v672, %v668
      %v749 = vpack.c.b16 %v677, %v673
      %v750 = vpack.c.b16 %v678, %v674
      %v751 = vpack.c.b16 %v679, %v675
      %v752 = vpack.c.b16 %v680, %v676
      %v753 = vpack.c.b16 %v685, %v681
      %v754 = vpack.c.b16 %v686, %v682
      %v755 = vpack.c.b16 %v687, %v683
      %v756 = vpack.c.b16 %v688, %v684
      %v757 = vpack.c.b16 %v693, %v689
      %v758 = vpack.c.b16 %v694, %v690
      %v759 = vpack.c.b16 %v695, %v691
      %v760 = vpack.c.b16 %v696, %v692
      %v889 = vunpack.c.l.b16 %v441
      %v890 = vunpack.c.l.b16 %v442
      %v891 = vunpack.c.l.b16 %v443
      %v892 = vunpack.c.l.b16 %v444
      %v893 = vunpack.c.l.b16 %v445
      %v894 = vunpack.c.l.b16 %v446
      %v895 = vunpack.c.l.b16 %v447
      %v896 = vunpack.c.l.b16 %v448
      %v897 = vunpack.c.l.b16 %v449
      %v898 = vunpack.c.l.b16 %v450
      %v899 = vunpack.c.l.b16 %v451
      %v900 = vunpack.c.l.b16 %v452
      %v901 = vunpack.c.l.b16 %v453
      %v902 = vunpack.c.l.b16 %v454
      %v903 = vunpack.c.l.b16 %v455
      %v904 = vunpack.c.l.b16 %v456
      %v905 = vunpack.c.l.b16 %v457
      %v906 = vunpack.c.l.b16 %v458
      %v907 = vunpack.c.l.b16 %v459
      %v908 = vunpack.c.l.b16 %v460
      %v909 = vunpack.c.l.b16 %v461
      %v910 = vunpack.c.l.b16 %v462
      %v911 = vunpack.c.l.b16 %v463
      %v912 = vunpack.c.l.b16 %v464
      %v913 = vunpack.c.l.b16 %v465
      %v914 = vunpack.c.l.b16 %v466
      %v915 = vunpack.c.l.b16 %v467
      %v916 = vunpack.c.l.b16 %v468
      %v917 = vunpack.c.l.b16 %v469
      %v918 = vunpack.c.l.b16 %v470
      %v919 = vunpack.c.l.b16 %v471
      %v920 = vunpack.c.l.b16 %v472
      %v921 = vunpack.c.l.b16 %v473
      %v922 = vunpack.c.l.b16 %v474
      %v923 = vunpack.c.l.b16 %v475
      %v924 = vunpack.c.l.b16 %v476
      %v925 = vunpack.c.l.b16 %v477
      %v926 = vunpack.c.l.b16 %v478
      %v927 = vunpack.c.l.b16 %v479
      %v928 = vunpack.c.l.b16 %v480
      %v929 = vunpack.c.l.b16 %v481
      %v930 = vunpack.c.l.b16 %v482
      %v931 = vunpack.c.l.b16 %v483
      %v932 = vunpack.c.l.b16 %v484
      %v933 = vunpack.c.l.b16 %v485
      %v934 = vunpack.c.l.b16 %v486
      %v935 = vunpack.c.l.b16 %v487
      %v936 = vunpack.c.l.b16 %v488
      %v937 = vunpack.c.l.b16 %v489
      %v938 = vunpack.c.l.b16 %v490
      %v939 = vunpack.c.l.b16 %v491
      %v940 = vunpack.c.l.b16 %v492
      %v941 = vunpack.c.l.b16 %v493
      %v942 = vunpack.c.l.b16 %v494
      %v943 = vunpack.c.l.b16 %v495
      %v944 = vunpack.c.l.b16 %v496
      %v945 = vunpack.c.l.b16 %v497
      %v946 = vunpack.c.l.b16 %v498
      %v947 = vunpack.c.l.b16 %v499
      %v948 = vunpack.c.l.b16 %v500
      %v949 = vunpack.c.l.b16 %v501
      %v950 = vunpack.c.l.b16 %v502
      %v951 = vunpack.c.l.b16 %v503
      %v952 = vunpack.c.l.b16 %v504
      %v953 = vpack.c.b16 %v890, %v889
      %v954 = vpack.c.b16 %v892, %v891
      %v955 = vpack.c.b16 %v894, %v893
      %v956 = vpack.c.b16 %v896, %v895
      %v957 = vpack.c.b16 %v898, %v897
      %v958 = vpack.c.b16 %v900, %v899
      %v959 = vpack.c.b16 %v902, %v901
      %v960 = vpack.c.b16 %v904, %v903
      %v961 = vpack.c.b16 %v906, %v905
      %v962 = vpack.c.b16 %v908, %v907
      %v963 = vpack.c.b16 %v910, %v909
      %v964 = vpack.c.b16 %v912, %v911
      %v965 = vpack.c.b16 %v914, %v913
      %v966 = vpack.c.b16 %v916, %v915
      %v967 = vpack.c.b16 %v918, %v917
      %v968 = vpack.c.b16 %v920, %v919
      %v969 = vpack.c.b16 %v922, %v921
      %v970 = vpack.c.b16 %v924, %v923
      %v971 = vpack.c.b16 %v926, %v925
      %v972 = vpack.c.b16 %v928, %v927
      %v973 = vpack.c.b16 %v930, %v929
      %v974 = vpack.c.b16 %v932, %v931
      %v975 = vpack.c.b16 %v934, %v933
      %v976 = vpack.c.b16 %v936, %v935
      %v977 = vpack.c.b16 %v938, %v937
      %v978 = vpack.c.b16 %v940, %v939
      %v979 = vpack.c.b16 %v942, %v941
      %v980 = vpack.c.b16 %v944, %v943
      %v981 = vpack.c.b16 %v946, %v945
      %v982 = vpack.c.b16 %v948, %v947
      %v983 = vpack.c.b16 %v950, %v949
      %v984 = vpack.c.b16 %v952, %v951
      %1017 = vmatprep.subr.bf16.mxu0 0
      %1018 = vmatpush1.bf16.msra.mxu0 %v953
      %1019 = vmatprep.subr.bf16.mxu0 0
      %1020 = vmatpush1.bf16.msra.mxu0 %v954
      %1021 = vmatprep.subr.bf16.mxu0 0
      %1022 = vmatpush1.bf16.msra.mxu0 %v955
      %1023 = vmatprep.subr.bf16.mxu0 0
      %1024 = vmatpush1.bf16.msra.mxu0 %v956
      %1025 = vmatprep.subr.bf16.mxu0 0
      %1026 = vmatpush1.bf16.msra.mxu0 %v957
      %1027 = vmatprep.subr.bf16.mxu0 0
      %1028 = vmatpush1.bf16.msra.mxu0 %v958
      %1029 = vmatprep.subr.bf16.mxu0 0
      %1030 = vmatpush1.bf16.msra.mxu0 %v959
      %1031 = vmatprep.subr.bf16.mxu0 0
      %1032 = vmatpush1.bf16.msra.mxu0 %v960
      %1033 = vmatprep.subr.bf16.mxu0 0
      %1034 = vmatpush1.bf16.msra.mxu0 %v961
      %1035 = vmatprep.subr.bf16.mxu0 0
      %1036 = vmatpush1.bf16.msra.mxu0 %v962
      %1037 = vmatprep.subr.bf16.mxu0 0
      %1038 = vmatpush1.bf16.msra.mxu0 %v963
      %1039 = vmatprep.subr.bf16.mxu0 0
      %1040 = vmatpush1.bf16.msra.mxu0 %v964
      %1041 = vmatprep.subr.bf16.mxu0 0
      %1042 = vmatpush1.bf16.msra.mxu0 %v965
      %1043 = vmatprep.subr.bf16.mxu0 0
      %1044 = vmatpush1.bf16.msra.mxu0 %v966
      %1045 = vmatprep.subr.bf16.mxu0 0
      %1046 = vmatpush1.bf16.msra.mxu0 %v967
      %1047 = vmatprep.subr.bf16.mxu0 0
      %1048 = vmatpush1.bf16.msra.mxu0 %v968
      %1049 = vmatprep.mubr.bf16.mxu0 %v698
      %1050 = vmatmul.mubr.bf16.gmra.mrb[0].mxu0 %v697
      %v1051 = vpop.f32.mrb[0].mxu0
      %v1052 = vadd.f32 0.0, %v1051
      %v1053 = vpop.f32.mrb[0].mxu0
      %v1054 = vpop.f32.mrb[0].mxu0
      %v1055 = vadd.f32 0.0, %v1054
      %v1056 = vpop.f32.mrb[0].mxu0
      %1057 = vmatprep.mubr.bf16.mxu0 %v702
      %1058 = vmatmul.mubr.bf16.gmra.mrb[0].mxu0 %v701
      %v1059 = vpop.f32.mrb[0].mxu0
      %v1060 = vadd.f32 0.0, %v1059
      %v1061 = vpop.f32.mrb[0].mxu0
      %v1062 = vpop.f32.mrb[0].mxu0
      %v1063 = vadd.f32 0.0, %v1062
      %v1064 = vpop.f32.mrb[0].mxu0
      %1065 = vmatprep.mubr.bf16.mxu0 %v706
      %1066 = vmatmul.mubr.bf16.gmra.mrb[0].mxu0 %v705
      %v1067 = vpop.f32.mrb[0].mxu0
      %v1068 = vadd.f32 0.0, %v1067
      %v1069 = vpop.f32.mrb[0].mxu0
      %v1070 = vpop.f32.mrb[0].mxu0
      %v1071 = vadd.f32 0.0, %v1070
      %v1072 = vpop.f32.mrb[0].mxu0
      %1073 = vmatprep.mubr.bf16.mxu0 %v710
      %1074 = vmatmul.mubr.bf16.gmra.mrb[0].mxu0 %v709
      %v1075 = vpop.f32.mrb[0].mxu0
      %v1076 = vadd.f32 0.0, %v1075
      %v1077 = vpop.f32.mrb[0].mxu0
      %v1078 = vpop.f32.mrb[0].mxu0
      %v1079 = vadd.f32 0.0, %v1078
      %v1080 = vpop.f32.mrb[0].mxu0
      %1081 = vmatprep.mubr.bf16.mxu0 %v714
      %1082 = vmatmul.mubr.bf16.gmra.mrb[0].mxu0 %v713
      %v1083 = vpop.f32.mrb[0].mxu0
      %v1084 = vadd.f32 0.0, %v1083
      %v1085 = vpop.f32.mrb[0].mxu0
      %v1086 = vpop.f32.mrb[0].mxu0
      %v1087 = vadd.f32 0.0, %v1086
      %v1088 = vpop.f32.mrb[0].mxu0
      %1089 = vmatprep.mubr.bf16.mxu0 %v718
      %1090 = vmatmul.mubr.bf16.gmra.mrb[0].mxu0 %v717
      %v1091 = vpop.f32.mrb[0].mxu0
      %v1092 = vadd.f32 0.0, %v1091
      %v1093 = vpop.f32.mrb[0].mxu0
      %v1094 = vpop.f32.mrb[0].mxu0
      %v1095 = vadd.f32 0.0, %v1094
      %v1096 = vpop.f32.mrb[0].mxu0
      %1097 = vmatprep.mubr.bf16.mxu0 %v722
      %1098 = vmatmul.mubr.bf16.gmra.mrb[0].mxu0 %v721
      %v1099 = vpop.f32.mrb[0].mxu0
      %v1100 = vadd.f32 0.0, %v1099
      %v1101 = vpop.f32.mrb[0].mxu0
      %v1102 = vpop.f32.mrb[0].mxu0
      %v1103 = vadd.f32 0.0, %v1102
      %v1104 = vpop.f32.mrb[0].mxu0
      %1105 = vmatprep.mubr.bf16.mxu0 %v726
      %1106 = vmatmul.mubr.bf16.gmra.mrb[0].mxu0 %v725
      %v1107 = vpop.f32.mrb[0].mxu0
      %v1108 = vadd.f32 0.0, %v1107
      %v1109 = vpop.f32.mrb[0].mxu0
      %v1110 = vpop.f32.mrb[0].mxu0
      %v1111 = vadd.f32 0.0, %v1110
      %v1112 = vpop.f32.mrb[0].mxu0
      %1113 = vmatprep.mubr.bf16.mxu0 %v730
      %1114 = vmatmul.mubr.bf16.gmra.mrb[0].mxu0 %v729
      %v1115 = vpop.f32.mrb[0].mxu0
      %v1116 = vadd.f32 0.0, %v1115
      %v1117 = vpop.f32.mrb[0].mxu0
      %v1118 = vpop.f32.mrb[0].mxu0
      %v1119 = vadd.f32 0.0, %v1118
      %v1120 = vpop.f32.mrb[0].mxu0
      %1121 = vmatprep.mubr.bf16.mxu0 %v734
      %1122 = vmatmul.mubr.bf16.gmra.mrb[0].mxu0 %v733
      %v1123 = vpop.f32.mrb[0].mxu0
      %v1124 = vadd.f32 0.0, %v1123
      %v1125 = vpop.f32.mrb[0].mxu0
      %v1126 = vpop.f32.mrb[0].mxu0
      %v1127 = vadd.f32 0.0, %v1126
      %v1128 = vpop.f32.mrb[0].mxu0
      %1129 = vmatprep.mubr.bf16.mxu0 %v738
      %1130 = vmatmul.mubr.bf16.gmra.mrb[0].mxu0 %v737
      %v1131 = vpop.f32.mrb[0].mxu0
      %v1132 = vadd.f32 0.0, %v1131
      %v1133 = vpop.f32.mrb[0].mxu0
      %v1134 = vpop.f32.mrb[0].mxu0
      %v1135 = vadd.f32 0.0, %v1134
      %v1136 = vpop.f32.mrb[0].mxu0
      %1137 = vmatprep.mubr.bf16.mxu0 %v742
      %1138 = vmatmul.mubr.bf16.gmra.mrb[0].mxu0 %v741
      %v1139 = vpop.f32.mrb[0].mxu0
      %v1140 = vadd.f32 0.0, %v1139
      %v1141 = vpop.f32.mrb[0].mxu0
      %v1142 = vpop.f32.mrb[0].mxu0
      %v1143 = vadd.f32 0.0, %v1142
      %v1144 = vpop.f32.mrb[0].mxu0
      %1145 = vmatprep.mubr.bf16.mxu0 %v746
      %1146 = vmatmul.mubr.bf16.gmra.mrb[0].mxu0 %v745
      %v1147 = vpop.f32.mrb[0].mxu0
      %v1148 = vadd.f32 0.0, %v1147
      %v1149 = vpop.f32.mrb[0].mxu0
      %v1150 = vpop.f32.mrb[0].mxu0
      %v1151 = vadd.f32 0.0, %v1150
      %v1152 = vpop.f32.mrb[0].mxu0
      %1153 = vmatprep.mubr.bf16.mxu0 %v750
      %1154 = vmatmul.mubr.bf16.gmra.mrb[0].mxu0 %v749
      %v1155 = vpop.f32.mrb[0].mxu0
      %v1156 = vadd.f32 0.0, %v1155
      %v1157 = vpop.f32.mrb[0].mxu0
      %v1158 = vpop.f32.mrb[0].mxu0
      %v1159 = vadd.f32 0.0, %v1158
      %v1160 = vpop.f32.mrb[0].mxu0
      %1161 = vmatprep.mubr.bf16.mxu0 %v754
      %1162 = vmatmul.mubr.bf16.gmra.mrb[0].mxu0 %v753
      %v1163 = vpop.f32.mrb[0].mxu0
      %v1164 = vadd.f32 0.0, %v1163
      %v1165 = vpop.f32.mrb[0].mxu0
      %v1166 = vpop.f32.mrb[0].mxu0
      %v1167 = vadd.f32 0.0, %v1166
      %v1168 = vpop.f32.mrb[0].mxu0
      %1169 = vmatprep.mubr.bf16.mxu0 %v758
      %1170 = vmatmul.mubr.bf16.gmra.mrb[0].mxu0 %v757
      %v1171 = vpop.f32.mrb[0].mxu0
      %v1172 = vadd.f32 0.0, %v1171
      %v1173 = vpop.f32.mrb[0].mxu0
      %v1174 = vpop.f32.mrb[0].mxu0
      %v1175 = vadd.f32 0.0, %v1174
      %v1176 = vpop.f32.mrb[0].mxu0
      %1177 = vdwg.mxu0
      %1178 = vmatprep.subr.bf16.mxu0 0
      %1179 = vmatpush1.bf16.msra.mxu0 %v969
      %1180 = vmatprep.subr.bf16.mxu0 0
      %1181 = vmatpush1.bf16.msra.mxu0 %v970
      %1182 = vmatprep.subr.bf16.mxu0 0
      %1183 = vmatpush1.bf16.msra.mxu0 %v971
      %1184 = vmatprep.subr.bf16.mxu0 0
      %1185 = vmatpush1.bf16.msra.mxu0 %v972
      %1186 = vmatprep.subr.bf16.mxu0 0
      %1187 = vmatpush1.bf16.msra.mxu0 %v973
      %1188 = vmatprep.subr.bf16.mxu0 0
      %1189 = vmatpush1.bf16.msra.mxu0 %v974
      %1190 = vmatprep.subr.bf16.mxu0 0
      %1191 = vmatpush1.bf16.msra.mxu0 %v975
      %1192 = vmatprep.subr.bf16.mxu0 0
      %1193 = vmatpush1.bf16.msra.mxu0 %v976
      %1194 = vmatprep.subr.bf16.mxu0 0
      %1195 = vmatpush1.bf16.msra.mxu0 %v977
      %1196 = vmatprep.subr.bf16.mxu0 0
      %1197 = vmatpush1.bf16.msra.mxu0 %v978
      %1198 = vmatprep.subr.bf16.mxu0 0
      %1199 = vmatpush1.bf16.msra.mxu0 %v979
      %1200 = vmatprep.subr.bf16.mxu0 0
      %1201 = vmatpush1.bf16.msra.mxu0 %v980
      %1202 = vmatprep.subr.bf16.mxu0 0
      %1203 = vmatpush1.bf16.msra.mxu0 %v981
      %1204 = vmatprep.subr.bf16.mxu0 0
      %1205 = vmatpush1.bf16.msra.mxu0 %v982
      %1206 = vmatprep.subr.bf16.mxu0 0
      %1207 = vmatpush1.bf16.msra.mxu0 %v983
      %1208 = vmatprep.subr.bf16.mxu0 0
      %1209 = vmatpush1.bf16.msra.mxu0 %v984
      %1210 = vmatprep.mubr.bf16.mxu0 %v700
      %1211 = vmatmul.mubr.bf16.gmra.mrb[0].mxu0 %v699
      %v1212 = vpop.f32.mrb[0].mxu0
      %v1213 = vadd.f32 %v1052, %v1212
      %v1214 = vpop.f32.mrb[0].mxu0
      %v1215 = vpop.f32.mrb[0].mxu0
      %v1216 = vadd.f32 %v1055, %v1215
      %v1217 = vpop.f32.mrb[0].mxu0
      %1218 = vmatprep.mubr.bf16.mxu0 %v704
      %1219 = vmatmul.mubr.bf16.gmra.mrb[0].mxu0 %v703
      %v1220 = vpop.f32.mrb[0].mxu0
      %v1221 = vadd.f32 %v1060, %v1220
      %v1222 = vpop.f32.mrb[0].mxu0
      %v1223 = vpop.f32.mrb[0].mxu0
      %v1224 = vadd.f32 %v1063, %v1223
      %v1225 = vpop.f32.mrb[0].mxu0
      %1226 = vmatprep.mubr.bf16.mxu0 %v708
      %1227 = vmatmul.mubr.bf16.gmra.mrb[0].mxu0 %v707
      %v1228 = vpop.f32.mrb[0].mxu0
      %v1229 = vadd.f32 %v1068, %v1228
      %v1230 = vpop.f32.mrb[0].mxu0
      %v1231 = vpop.f32.mrb[0].mxu0
      %v1232 = vadd.f32 %v1071, %v1231
      %v1233 = vpop.f32.mrb[0].mxu0
      %1234 = vmatprep.mubr.bf16.mxu0 %v712
      %1235 = vmatmul.mubr.bf16.gmra.mrb[0].mxu0 %v711
      %v1236 = vpop.f32.mrb[0].mxu0
      %v1237 = vadd.f32 %v1076, %v1236
      %v1238 = vpop.f32.mrb[0].mxu0
      %v1239 = vpop.f32.mrb[0].mxu0
      %v1240 = vadd.f32 %v1079, %v1239
      %v1241 = vpop.f32.mrb[0].mxu0
      %1242 = vmatprep.mubr.bf16.mxu0 %v716
      %1243 = vmatmul.mubr.bf16.gmra.mrb[0].mxu0 %v715
      %v1244 = vpop.f32.mrb[0].mxu0
      %v1245 = vadd.f32 %v1084, %v1244
      %v1246 = vpop.f32.mrb[0].mxu0
      %v1247 = vpop.f32.mrb[0].mxu0
      %v1248 = vadd.f32 %v1087, %v1247
      %v1249 = vpop.f32.mrb[0].mxu0
      %1250 = vmatprep.mubr.bf16.mxu0 %v720
      %1251 = vmatmul.mubr.bf16.gmra.mrb[0].mxu0 %v719
      %v1252 = vpop.f32.mrb[0].mxu0
      %v1253 = vadd.f32 %v1092, %v1252
      %v1254 = vpop.f32.mrb[0].mxu0
      %v1255 = vpop.f32.mrb[0].mxu0
      %v1256 = vadd.f32 %v1095, %v1255
      %v1257 = vpop.f32.mrb[0].mxu0
      %1258 = vmatprep.mubr.bf16.mxu0 %v724
      %1259 = vmatmul.mubr.bf16.gmra.mrb[0].mxu0 %v723
      %v1260 = vpop.f32.mrb[0].mxu0
      %v1261 = vadd.f32 %v1100, %v1260
      %v1262 = vpop.f32.mrb[0].mxu0
      %v1263 = vpop.f32.mrb[0].mxu0
      %v1264 = vadd.f32 %v1103, %v1263
      %v1265 = vpop.f32.mrb[0].mxu0
      %1266 = vmatprep.mubr.bf16.mxu0 %v728
      %1267 = vmatmul.mubr.bf16.gmra.mrb[0].mxu0 %v727
      %v1268 = vpop.f32.mrb[0].mxu0
      %v1269 = vadd.f32 %v1108, %v1268
      %v1270 = vpop.f32.mrb[0].mxu0
      %v1271 = vpop.f32.mrb[0].mxu0
      %v1272 = vadd.f32 %v1111, %v1271
      %v1273 = vpop.f32.mrb[0].mxu0
      %1274 = vmatprep.mubr.bf16.mxu0 %v732
      %1275 = vmatmul.mubr.bf16.gmra.mrb[0].mxu0 %v731
      %v1276 = vpop.f32.mrb[0].mxu0
      %v1277 = vadd.f32 %v1116, %v1276
      %v1278 = vpop.f32.mrb[0].mxu0
      %v1279 = vpop.f32.mrb[0].mxu0
      %v1280 = vadd.f32 %v1119, %v1279
      %v1281 = vpop.f32.mrb[0].mxu0
      %1282 = vmatprep.mubr.bf16.mxu0 %v736
      %1283 = vmatmul.mubr.bf16.gmra.mrb[0].mxu0 %v735
      %v1284 = vpop.f32.mrb[0].mxu0
      %v1285 = vadd.f32 %v1124, %v1284
      %v1286 = vpop.f32.mrb[0].mxu0
      %v1287 = vpop.f32.mrb[0].mxu0
      %v1288 = vadd.f32 %v1127, %v1287
      %v1289 = vpop.f32.mrb[0].mxu0
      %1290 = vmatprep.mubr.bf16.mxu0 %v740
      %1291 = vmatmul.mubr.bf16.gmra.mrb[0].mxu0 %v739
      %v1292 = vpop.f32.mrb[0].mxu0
      %v1293 = vadd.f32 %v1132, %v1292
      %v1294 = vpop.f32.mrb[0].mxu0
      %v1295 = vpop.f32.mrb[0].mxu0
      %v1296 = vadd.f32 %v1135, %v1295
      %v1297 = vpop.f32.mrb[0].mxu0
      %1298 = vmatprep.mubr.bf16.mxu0 %v744
      %1299 = vmatmul.mubr.bf16.gmra.mrb[0].mxu0 %v743
      %v1300 = vpop.f32.mrb[0].mxu0
      %v1301 = vadd.f32 %v1140, %v1300
      %v1302 = vpop.f32.mrb[0].mxu0
      %v1303 = vpop.f32.mrb[0].mxu0
      %v1304 = vadd.f32 %v1143, %v1303
      %v1305 = vpop.f32.mrb[0].mxu0
      %1306 = vmatprep.mubr.bf16.mxu0 %v748
      %1307 = vmatmul.mubr.bf16.gmra.mrb[0].mxu0 %v747
      %v1308 = vpop.f32.mrb[0].mxu0
      %v1309 = vadd.f32 %v1148, %v1308
      %v1310 = vpop.f32.mrb[0].mxu0
      %v1311 = vpop.f32.mrb[0].mxu0
      %v1312 = vadd.f32 %v1151, %v1311
      %v1313 = vpop.f32.mrb[0].mxu0
      %1314 = vmatprep.mubr.bf16.mxu0 %v752
      %1315 = vmatmul.mubr.bf16.gmra.mrb[0].mxu0 %v751
      %v1316 = vpop.f32.mrb[0].mxu0
      %v1317 = vadd.f32 %v1156, %v1316
      %v1318 = vpop.f32.mrb[0].mxu0
      %v1319 = vpop.f32.mrb[0].mxu0
      %v1320 = vadd.f32 %v1159, %v1319
      %v1321 = vpop.f32.mrb[0].mxu0
      %1322 = vmatprep.mubr.bf16.mxu0 %v756
      %1323 = vmatmul.mubr.bf16.gmra.mrb[0].mxu0 %v755
      %v1324 = vpop.f32.mrb[0].mxu0
      %v1325 = vadd.f32 %v1164, %v1324
      %v1326 = vpop.f32.mrb[0].mxu0
      %v1327 = vpop.f32.mrb[0].mxu0
      %v1328 = vadd.f32 %v1167, %v1327
      %v1329 = vpop.f32.mrb[0].mxu0
      %1330 = vmatprep.mubr.bf16.mxu0 %v760
      %1331 = vmatmul.mubr.bf16.gmra.mrb[0].mxu0 %v759
      %v1332 = vpop.f32.mrb[0].mxu0
      %v1333 = vadd.f32 %v1172, %v1332
      %v1334 = vpop.f32.mrb[0].mxu0
      %v1335 = vpop.f32.mrb[0].mxu0
      %v1336 = vadd.f32 %v1175, %v1335
      %v1337 = vpop.f32.mrb[0].mxu0
      %1338 = vdwg.mxu0
      %v1339 = vadd.f32 %v345, %v1213
      %v1340 = vadd.f32 %v346, %v1216
      %v1341 = vadd.f32 %v347, %v1221
      %v1342 = vadd.f32 %v348, %v1224
      %v1343 = vadd.f32 %v349, %v1229
      %v1344 = vadd.f32 %v350, %v1232
      %v1345 = vadd.f32 %v351, %v1237
      %v1346 = vadd.f32 %v352, %v1240
      %v1347 = vadd.f32 %v353, %v1245
      %v1348 = vadd.f32 %v354, %v1248
      %v1349 = vadd.f32 %v355, %v1253
      %v1350 = vadd.f32 %v356, %v1256
      %v1351 = vadd.f32 %v357, %v1261
      %v1352 = vadd.f32 %v358, %v1264
      %v1353 = vadd.f32 %v359, %v1269
      %v1354 = vadd.f32 %v360, %v1272
      %v1355 = vadd.f32 %v361, %v1277
      %v1356 = vadd.f32 %v362, %v1280
      %v1357 = vadd.f32 %v363, %v1285
      %v1358 = vadd.f32 %v364, %v1288
      %v1359 = vadd.f32 %v365, %v1293
      %v1360 = vadd.f32 %v366, %v1296
      %v1361 = vadd.f32 %v367, %v1301
      %v1362 = vadd.f32 %v368, %v1304
      %v1363 = vadd.f32 %v369, %v1309
      %v1364 = vadd.f32 %v370, %v1312
      %v1365 = vadd.f32 %v371, %v1317
      %v1366 = vadd.f32 %v372, %v1320
      %v1367 = vadd.f32 %v373, %v1325
      %v1368 = vadd.f32 %v374, %v1328
      %v1369 = vadd.f32 %v375, %v1333
      %v1370 = vadd.f32 %v376, %v1336
      %1371 = vst [vmem:[#allocation2] sm:$0xff] %v1339
      %1372 = vst [vmem:[#allocation2 + $0x8] sm:$0xff] %v1340
      %1373 = vst [vmem:[#allocation2 + $0x10] sm:$0xff] %v1341
      %1374 = vst [vmem:[#allocation2 + $0x18] sm:$0xff] %v1342
      %1375 = vst [vmem:[#allocation2 + $0x20] sm:$0xff] %v1343
      %1376 = vst [vmem:[#allocation2 + $0x28] sm:$0xff] %v1344
      %1377 = vst [vmem:[#allocation2 + $0x30] sm:$0xff] %v1345
      %1378 = vst [vmem:[#allocation2 + $0x38] sm:$0xff] %v1346
      %1379 = vst [vmem:[#allocation2 + $0x40] sm:$0xff] %v1347
      %1380 = vst [vmem:[#allocation2 + $0x48] sm:$0xff] %v1348
      %1381 = vst [vmem:[#allocation2 + $0x50] sm:$0xff] %v1349
      %1382 = vst [vmem:[#allocation2 + $0x58] sm:$0xff] %v1350
      %1383 = vst [vmem:[#allocation2 + $0x60] sm:$0xff] %v1351
      %1384 = vst [vmem:[#allocation2 + $0x68] sm:$0xff] %v1352
      %1385 = vst [vmem:[#allocation2 + $0x70] sm:$0xff] %v1353
      %1386 = vst [vmem:[#allocation2 + $0x78] sm:$0xff] %v1354
      %1387 = vst [vmem:[#allocation2 + $0x80] sm:$0xff] %v1355
      %1388 = vst [vmem:[#allocation2 + $0x88] sm:$0xff] %v1356
      %1389 = vst [vmem:[#allocation2 + $0x90] sm:$0xff] %v1357
      %1390 = vst [vmem:[#allocation2 + $0x98] sm:$0xff] %v1358
      %1391 = vst [vmem:[#allocation2 + $0xa0] sm:$0xff] %v1359
      %1392 = vst [vmem:[#allocation2 + $0xa8] sm:$0xff] %v1360
      %1393 = vst [vmem:[#allocation2 + $0xb0] sm:$0xff] %v1361
      %1394 = vst [vmem:[#allocation2 + $0xb8] sm:$0xff] %v1362
      %1395 = vst [vmem:[#allocation2 + $0xc0] sm:$0xff] %v1363
      %1396 = vst [vmem:[#allocation2 + $0xc8] sm:$0xff] %v1364
      %1397 = vst [vmem:[#allocation2 + $0xd0] sm:$0xff] %v1365
      %1398 = vst [vmem:[#allocation2 + $0xd8] sm:$0xff] %v1366
      %1399 = vst [vmem:[#allocation2 + $0xe0] sm:$0xff] %v1367
      %1400 = vst [vmem:[#allocation2 + $0xe8] sm:$0xff] %v1368
      %1401 = vst [vmem:[#allocation2 + $0xf0] sm:$0xff] %v1369
      %1402 = vst [vmem:[#allocation2 + $0xf8] sm:$0xff] %v1370
      // Predicated region
      $region41: #{resnet_generator_forward.19} parent=35 // pred_check
        %p1403 = pneg %p309
      $region42: #{resnet_generator_forward.19} parent=35 // pred_check_branch
        %1405 = sbr.rel (%p1403) target = $region44
      $region43: #{resnet_generator_forward.19} parent=35 // pred_region
        %v1406 = vld [vmem:[#allocation2] sm:$0xff]
        %v1407 = vld [vmem:[#allocation2 + $0x8] sm:$0xff]
        %v1408 = vld [vmem:[#allocation2 + $0x10] sm:$0xff]
        %v1409 = vld [vmem:[#allocation2 + $0x18] sm:$0xff]
        %v1410 = vld [vmem:[#allocation2 + $0x20] sm:$0xff]
        %v1411 = vld [vmem:[#allocation2 + $0x28] sm:$0xff]
        %v1412 = vld [vmem:[#allocation2 + $0x30] sm:$0xff]
        %v1413 = vld [vmem:[#allocation2 + $0x38] sm:$0xff]
        %v1414 = vld [vmem:[#allocation2 + $0x40] sm:$0xff]
        %v1415 = vld [vmem:[#allocation2 + $0x48] sm:$0xff]
        %v1416 = vld [vmem:[#allocation2 + $0x50] sm:$0xff]
        %v1417 = vld [vmem:[#allocation2 + $0x58] sm:$0xff]
        %v1418 = vld [vmem:[#allocation2 + $0x60] sm:$0xff]
        %v1419 = vld [vmem:[#allocation2 + $0x68] sm:$0xff]
        %v1420 = vld [vmem:[#allocation2 + $0x70] sm:$0xff]
        %v1421 = vld [vmem:[#allocation2 + $0x78] sm:$0xff]
        %v1422 = vld [vmem:[#allocation2 + $0x80] sm:$0xff]
        %v1423 = vld [vmem:[#allocation2 + $0x88] sm:$0xff]
        %v1424 = vld [vmem:[#allocation2 + $0x90] sm:$0xff]
        %v1425 = vld [vmem:[#allocation2 + $0x98] sm:$0xff]
        %v1426 = vld [vmem:[#allocation2 + $0xa0] sm:$0xff]
        %v1427 = vld [vmem:[#allocation2 + $0xa8] sm:$0xff]
        %v1428 = vld [vmem:[#allocation2 + $0xb0] sm:$0xff]
        %v1429 = vld [vmem:[#allocation2 + $0xb8] sm:$0xff]
        %v1430 = vld [vmem:[#allocation2 + $0xc0] sm:$0xff]
        %v1431 = vld [vmem:[#allocation2 + $0xc8] sm:$0xff]
        %v1432 = vld [vmem:[#allocation2 + $0xd0] sm:$0xff]
        %v1433 = vld [vmem:[#allocation2 + $0xd8] sm:$0xff]
        %v1434 = vld [vmem:[#allocation2 + $0xe0] sm:$0xff]
        %v1435 = vld [vmem:[#allocation2 + $0xe8] sm:$0xff]
        %v1436 = vld [vmem:[#allocation2 + $0xf0] sm:$0xff]
        %v1437 = vld [vmem:[#allocation2 + $0xf8] sm:$0xff]
        %v1438 = vld [vmem:[%s295] sm:$0x1]
        %v1440 = vlaneseq
        %v1441 = vshrl.u32 %v1440, 7
        %v1442 = vsub.s32 0, %v1441
        %v1443 = vrot.slane %v1438, %v1442
        %v1445 = vmul.f32 %v1406, %v1443
        %v1446 = vmul.f32 %v1407, %v1443
        %v1447 = vmul.f32 %v1408, %v1443
        %v1448 = vmul.f32 %v1409, %v1443
        %v1449 = vmul.f32 %v1410, %v1443
        %v1450 = vmul.f32 %v1411, %v1443
        %v1451 = vmul.f32 %v1412, %v1443
        %v1452 = vmul.f32 %v1413, %v1443
        %v1453 = vmul.f32 %v1414, %v1443
        %v1454 = vmul.f32 %v1415, %v1443
        %v1455 = vmul.f32 %v1416, %v1443
        %v1456 = vmul.f32 %v1417, %v1443
        %v1457 = vmul.f32 %v1418, %v1443
        %v1458 = vmul.f32 %v1419, %v1443
        %v1459 = vmul.f32 %v1420, %v1443
        %v1460 = vmul.f32 %v1421, %v1443
        %v1461 = vmul.f32 %v1422, %v1443
        %v1462 = vmul.f32 %v1423, %v1443
        %v1463 = vmul.f32 %v1424, %v1443
        %v1464 = vmul.f32 %v1425, %v1443
        %v1465 = vmul.f32 %v1426, %v1443
        %v1466 = vmul.f32 %v1427, %v1443
        %v1467 = vmul.f32 %v1428, %v1443
        %v1468 = vmul.f32 %v1429, %v1443
        %v1469 = vmul.f32 %v1430, %v1443
        %v1470 = vmul.f32 %v1431, %v1443
        %v1471 = vmul.f32 %v1432, %v1443
        %v1472 = vmul.f32 %v1433, %v1443
        %v1473 = vmul.f32 %v1434, %v1443
        %v1474 = vmul.f32 %v1435, %v1443
        %v1475 = vmul.f32 %v1436, %v1443
        %v1476 = vmul.f32 %v1437, %v1443
        %v1477 = vld [vmem:[%s298] sm:$0x1]
        %v1479 = vlaneseq
        %v1480 = vshrl.u32 %v1479, 7
        %v1481 = vsub.s32 0, %v1480
        %v1482 = vrot.slane %v1477, %v1481
        %v1484 = vadd.f32 %v1445, %v1482
        %v1485 = vadd.f32 %v1446, %v1482
        %v1486 = vadd.f32 %v1447, %v1482
        %v1487 = vadd.f32 %v1448, %v1482
        %v1488 = vadd.f32 %v1449, %v1482
        %v1489 = vadd.f32 %v1450, %v1482
        %v1490 = vadd.f32 %v1451, %v1482
        %v1491 = vadd.f32 %v1452, %v1482
        %v1492 = vadd.f32 %v1453, %v1482
        %v1493 = vadd.f32 %v1454, %v1482
        %v1494 = vadd.f32 %v1455, %v1482
        %v1495 = vadd.f32 %v1456, %v1482
        %v1496 = vadd.f32 %v1457, %v1482
        %v1497 = vadd.f32 %v1458, %v1482
        %v1498 = vadd.f32 %v1459, %v1482
        %v1499 = vadd.f32 %v1460, %v1482
        %v1500 = vadd.f32 %v1461, %v1482
        %v1501 = vadd.f32 %v1462, %v1482
        %v1502 = vadd.f32 %v1463, %v1482
        %v1503 = vadd.f32 %v1464, %v1482
        %v1504 = vadd.f32 %v1465, %v1482
        %v1505 = vadd.f32 %v1466, %v1482
        %v1506 = vadd.f32 %v1467, %v1482
        %v1507 = vadd.f32 %v1468, %v1482
        %v1508 = vadd.f32 %v1469, %v1482
        %v1509 = vadd.f32 %v1470, %v1482
        %v1510 = vadd.f32 %v1471, %v1482
        %v1511 = vadd.f32 %v1472, %v1482
        %v1512 = vadd.f32 %v1473, %v1482
        %v1513 = vadd.f32 %v1474, %v1482
        %v1514 = vadd.f32 %v1475, %v1482
        %v1515 = vadd.f32 %v1476, %v1482
        %1516 = vst [vmem:[%s306] sm:$0xff] %v1484
        %1517 = vst [vmem:[%s306 + $0x8] sm:$0xff] %v1485
        %1518 = vst [vmem:[%s306 + $0x10] sm:$0xff] %v1486
        %1519 = vst [vmem:[%s306 + $0x18] sm:$0xff] %v1487
        %1520 = vst [vmem:[%s306 + $0x20] sm:$0xff] %v1488
        %1521 = vst [vmem:[%s306 + $0x28] sm:$0xff] %v1489
        %1522 = vst [vmem:[%s306 + $0x30] sm:$0xff] %v1490
        %1523 = vst [vmem:[%s306 + $0x38] sm:$0xff] %v1491
        %1524 = vst [vmem:[%s306 + $0x40] sm:$0xff] %v1492
        %1525 = vst [vmem:[%s306 + $0x48] sm:$0xff] %v1493
        %1526 = vst [vmem:[%s306 + $0x50] sm:$0xff] %v1494
        %1527 = vst [vmem:[%s306 + $0x58] sm:$0xff] %v1495
        %1528 = vst [vmem:[%s306 + $0x60] sm:$0xff] %v1496
        %1529 = vst [vmem:[%s306 + $0x68] sm:$0xff] %v1497
        %1530 = vst [vmem:[%s306 + $0x70] sm:$0xff] %v1498
        %1531 = vst [vmem:[%s306 + $0x78] sm:$0xff] %v1499
        %1532 = vst [vmem:[%s306 + $0x80] sm:$0xff] %v1500
        %1533 = vst [vmem:[%s306 + $0x88] sm:$0xff] %v1501
        %1534 = vst [vmem:[%s306 + $0x90] sm:$0xff] %v1502
        %1535 = vst [vmem:[%s306 + $0x98] sm:$0xff] %v1503
        %1536 = vst [vmem:[%s306 + $0xa0] sm:$0xff] %v1504
        %1537 = vst [vmem:[%s306 + $0xa8] sm:$0xff] %v1505
        %1538 = vst [vmem:[%s306 + $0xb0] sm:$0xff] %v1506
        %1539 = vst [vmem:[%s306 + $0xb8] sm:$0xff] %v1507
        %1540 = vst [vmem:[%s306 + $0xc0] sm:$0xff] %v1508
        %1541 = vst [vmem:[%s306 + $0xc8] sm:$0xff] %v1509
        %1542 = vst [vmem:[%s306 + $0xd0] sm:$0xff] %v1510
        %1543 = vst [vmem:[%s306 + $0xd8] sm:$0xff] %v1511
        %1544 = vst [vmem:[%s306 + $0xe0] sm:$0xff] %v1512
        %1545 = vst [vmem:[%s306 + $0xe8] sm:$0xff] %v1513
        %1546 = vst [vmem:[%s306 + $0xf0] sm:$0xff] %v1514
        %1547 = vst [vmem:[%s306 + $0xf8] sm:$0xff] %v1515
      $region44: #{resnet_generator_forward.19} parent=35 // pred_fallthru
        _
      %s1548 = smul.u32 32, %s20
      %p1549 = scmp.lt.s32.totalorder %s1548, 255
      %s1550 = scalar_select %p1549, %s1548, 255
      %p1551 = scmp.lt.s32.totalorder %s21, 0
      %s1552 = scalar_select %p1551, %s21, 0
      %s1553 = sadd.s32 %s1552, %s1550
      %s1554 = smul.addr %s1553, 8
      %s1555 = scalar_lea.vmem %s4, %s1554
      // Predicated region
      $region45: #{resnet_generator_forward.19} parent=35 // pred_check
        %p1556 = pneg %p162
      $region46: #{resnet_generator_forward.19} parent=35 // pred_check_branch
        %1558 = sbr.rel (%p1556) target = $region48
      $region47: #{resnet_generator_forward.19} parent=35 // pred_region
        %s1559 = smul.u32 32, %s20
      $region48: #{resnet_generator_forward.19} parent=35 // pred_fallthru
        _
    $region36: #{resnet_generator_forward.19} parent=5 // pred_fallthru
      _
    %p1560 = scmp.le.s32.totalorder 2, %s10
    // Predicated region
    $region49: #{resnet_generator_forward.19} parent=5 // pred_check
      %p1561 = pneg %p1560
    $region50: #{resnet_generator_forward.19} parent=5 // pred_check_branch
      %1563 = sbr.rel (%p1561) target = $region52
    $region51: #{resnet_generator_forward.19} parent=5 // pred_region
      %s1564 = ssub.s32 %s10, 2
      // Predicated region
      $region53: #{resnet_generator_forward.19} parent=51 // pred_check
        %p1565 = pneg %p168
      $region54: #{resnet_generator_forward.19} parent=51 // pred_check_branch
        %1567 = sbr.rel (%p1565) target = $region56
      $region55: #{resnet_generator_forward.19} parent=51 // pred_region
        %s1568 = smul.u32 32, %s23
        %p1569 = scmp.lt.s32.totalorder %s1568, 255
        %s1570 = scalar_select %p1569, %s1568, 255
        %p1571 = scmp.lt.s32.totalorder %s24, 0
        %s1572 = scalar_select %p1571, %s24, 0
        %s1573 = sadd.s32 %s1572, %s1570
        %s1574 = smul.addr %s1573, 8
        %s1575 = scalar_lea.vmem %s4, %s1574
      $region56: #{resnet_generator_forward.19} parent=51 // pred_fallthru
        _
    $region52: #{resnet_generator_forward.19} parent=5 // pred_fallthru
      _
  $region6: #{resnet_generator_forward.19} parent=0 // loop_footer
    %s14 = sadd.s32 1, %s10
  $region7: #{resnet_generator_forward.19} parent=0 // loop_footer_branch
    %9 = sbr.rel target = $region3
  $region8: #{resnet_generator_forward.19} parent=0 // loop_exit
    _

</llo_original>
